<compile_context>
chip_gen: v6e
topology: v6e:2x2x1
jax: 0.10.0
libtpu: 0.0.40
codegen_flags: <defaults>
</compile_context>

<pallas_src>
import jax
import jax.numpy as jnp
import numpy as np
from jax import lax
from jax.experimental import pallas as pl
from jax.experimental.pallas import tpu as pltpu


# ---------------------------------------------------------------------------
# Wrapper-side weight composition (tiny, parameter-only einsum).
# ---------------------------------------------------------------------------
def _compose_weights(w_t, b_t, w_c):
    """Fold ConvTranspose2d(k=2,s=2) + Conv2d(k=3,p=1) into 16 (Cin+1, Cout)
    matrices, one per (output parity (a,b), 2x2 low-res tap (t,s))."""
    Cin, Cout = w_t.shape[0], w_t.shape[1]
    # All-ones input channel carries the deconv bias so the conv's zero
    # padding border is handled exactly.
    wt_aug = jnp.concatenate(
        [w_t, jnp.broadcast_to(b_t[None, :, None, None], (1, Cout, 2, 2))],
        axis=0)                                                   # (Cin+1, Cout, 2, 2)
    # Selector A[a, t, dh, rho]: conv tap dh (needing deconv parity rho)
    # contributes to output parity a via low-res tap offset t in {0, 1}.
    A = np.zeros((2, 2, 3, 2), np.float32)
    A[0, 0, 0, 1] = 1.0
    A[0, 1, 1, 0] = 1.0
    A[0, 1, 2, 1] = 1.0
    A[1, 0, 0, 0] = 1.0
    A[1, 0, 1, 1] = 1.0
    A[1, 1, 2, 0] = 1.0
    A = jnp.asarray(A)
    # E[a,t,b,s,ci,co] = sum_{dh,rr,dw,rc,c1} A[a,t,dh,rr] * A[b,s,dw,rc]
    #                       * wt_aug[ci,c1,rr,rc] * w_c[co,c1,dh,dw]
    # (HIGHEST precision: tiny parameter-only contraction, keeps E at f32.)
    E = jnp.einsum("athr,bswq,imrq,omhw->atbsio", A, A, wt_aug, w_c,
                   precision=lax.Precision.HIGHEST)
    E = jnp.transpose(E, (0, 2, 1, 3, 4, 5))          # (a, b, t, s, ci, co)
    return E.reshape(16, Cin + 1, Cout)


# ---------------------------------------------------------------------------
# Kernel 1: fused (deconv o conv3x3) per image + per-image BN partial stats.
# Grid over batch ("parallel"); per step everything lives in VMEM.
# ---------------------------------------------------------------------------
def _fused_deconv_conv_kernel(x_ref, e_ref, bc_ref, out_ref, stats_ref, xp_ref):
    H, W, Cin = x_ref.shape[1], x_ref.shape[2], x_ref.shape[3]
    C = out_ref.shape[-1]

    # Zero-padded input with an extra all-ones channel, built in VMEM
    # (no HBM jnp.pad round trip).
    xp_ref[...] = jnp.zeros_like(xp_ref)
    xp_ref[1:H + 1, 1:W + 1, 0:Cin] = x_ref[0]
    xp_ref[1:H + 1, 1:W + 1, Cin:Cin + 1] = jnp.ones((H, W, 1), jnp.float32)

    bc = bc_ref[...]                                   # (1, C) conv bias
    s_acc = jnp.zeros((1, C), jnp.float32)
    q_acc = jnp.zeros((1, C), jnp.float32)

    for a in range(2):                                 # output row parity
        for b in range(2):                             # output col parity
            acc = jnp.zeros((H * W, C), jnp.float32)
            for t in range(2):                         # low-res row tap
                for s in range(2):                     # low-res col tap
                    tap = xp_ref[a + t:a + t + H, b + s:b + s + W, :]
                    # Default MXU precision (bf16 inputs, f32 accumulation).
                    acc = acc + jnp.dot(
                        tap.reshape(H * W, Cin + 1),
                        e_ref[(a * 2 + b) * 4 + t * 2 + s],
                        preferred_element_type=jnp.float32)
            y = acc + bc                               # (H*W, C) conv output
            out_ref[a * 2 + b] = y.reshape(H, W, C)
            s_acc = s_acc + jnp.sum(y, axis=0, keepdims=True)
            q_acc = q_acc + jnp.sum(y * y, axis=0, keepdims=True)

    # Per-image partial sums for BatchNorm (row 0 = sum, row 1 = sum of sq).
    stats_ref[...] = jnp.zeros_like(stats_ref)
    stats_ref[0, 0:1, :] = s_acc
    stats_ref[0, 1:2, :] = q_acc


# ---------------------------------------------------------------------------
# Kernel 2: BatchNorm affine (precomputed scale/shift) + ReLU, lane-dense,
# row-tiled, "parallel" grid.
# ---------------------------------------------------------------------------
def _bn_relu_kernel(x_ref, scale_ref, shift_ref, o_ref):
    o_ref[...] = jnp.maximum(x_ref[...] * scale_ref[...] + shift_ref[...], 0.0)


def _pick_row_tile(rows, cols, itemsize=4, max_bytes=1 << 20, min_grid=2):
    """Largest row tile that divides `rows`, keeps sublane alignment, stays
    well under the VMEM budget (blocks are double-buffered) and leaves at
    least `min_grid` grid steps so v7x megacore gets a parallel axis."""
    candidates = [rt for rt in range(1, rows + 1)
                  if rows % rt == 0
                  and (rt % 8 == 0 or rt == rows)
                  and rt * cols * itemsize <= max_bytes]
    preferred = [rt for rt in candidates if rows // rt >= min_grid]
    pool = preferred if preferred else candidates
    return max(pool) if pool else rows


# ---------------------------------------------------------------------------
# Full Deconv2DBlock forward (NCHW in, NCHW out — matches PyTorch).
# ---------------------------------------------------------------------------
@jax.jit
def deconv2d_block(x_nchw, w_t, b_t, w_c, b_c, gamma, beta, eps=1e-5):
    N, Cin, H, W = x_nchw.shape
    Cout = w_t.shape[1]

    x_nhwc = jnp.transpose(x_nchw, (0, 2, 3, 1))       # input-side glue (small)
    e_mats = _compose_weights(w_t, b_t, w_c)           # (16, Cin+1, Cout)
    bc_row = b_c.reshape(1, Cout)

    # --- Kernel 1: fused deconv+conv, output layout (N*4, H, W, C) where the
    #     leading dim packs (n, parity a, parity b) -------------------------
    conv_out, stats = pl.pallas_call(
        _fused_deconv_conv_kernel,
        out_shape=(jax.ShapeDtypeStruct((N * 4, H, W, Cout), jnp.float32),
                   jax.ShapeDtypeStruct((N, 8, Cout), jnp.float32)),
        grid=(N,),
        in_specs=[
            pl.BlockSpec((1, H, W, Cin), lambda n: (n, 0, 0, 0)),
            pl.BlockSpec((16, Cin + 1, Cout), lambda n: (0, 0, 0)),
            pl.BlockSpec((1, Cout), lambda n: (0, 0)),
        ],
        out_specs=(
            pl.BlockSpec((4, H, W, Cout), lambda n: (n, 0, 0, 0)),
            pl.BlockSpec((1, 8, Cout), lambda n: (n, 0, 0)),
        ),
        scratch_shapes=[pltpu.VMEM((H + 2, W + 2, Cin + 1), jnp.float32)],
        compiler_params=pltpu.CompilerParams(dimension_semantics=("parallel",)),
    )(x_nhwc, e_mats, bc_row)

    # --- tiny (N, C)-sized reduction of partial sums -> BN scale/shift ------
    count = jnp.float32(N * 4 * H * W)                 # = N * 2H * 2W
    mean = jnp.sum(stats[:, 0, :], axis=0) / count
    var = jnp.sum(stats[:, 1, :], axis=0) / count - mean * mean   # biased var
    inv = lax.rsqrt(var + eps)
    scale = gamma * inv
    shift = beta - mean * scale

    # --- Kernel 2: BN affine + ReLU on a lane-dense (rows, W*C) flat view ---
    rows, cols = N * 4 * H, W * Cout
    x2d = conv_out.reshape(rows, cols)                 # free row-major reshape
    scale_row = jnp.tile(scale, W).reshape(1, cols)    # channel pattern, period C
    shift_row = jnp.tile(shift, W).reshape(1, cols)
    rt = _pick_row_tile(rows, cols)

    y2d = pl.pallas_call(
        _bn_relu_kernel,
        out_shape=jax.ShapeDtypeStruct((rows, cols), jnp.float32),
        grid=(rows // rt,),
        in_specs=[
            pl.BlockSpec((rt, cols), lambda i: (i, 0)),
            pl.BlockSpec((1, cols), lambda i: (0, 0)),
            pl.BlockSpec((1, cols), lambda i: (0, 0)),
        ],
        out_specs=pl.BlockSpec((rt, cols), lambda i: (i, 0)),
        compiler_params=pltpu.CompilerParams(dimension_semantics=("parallel",)),
    )(x2d, scale_row, shift_row)

    # Sub-pixel interleave folded into the single final NCHW transpose.
    y = y2d.reshape(N, 2, 2, H, W, Cout)               # (n, a, b, i, j, c)
    y = jnp.transpose(y, (0, 5, 3, 1, 4, 2))           # (n, c, i, a, j, b)
    return y.reshape(N, Cout, 2 * H, 2 * W)


# ---------------------------------------------------------------------------
# Pure-JAX reference (independent formulation) for correctness checking.
# ---------------------------------------------------------------------------
def reference(x, w_t, b_t, w_c, b_c, gamma, beta, eps=1e-5):
    N, Cin, H, W = x.shape
    Cout = w_t.shape[1]
    hi = lax.Precision.HIGHEST
    # ConvTranspose2d(k=2, s=2)
    d = jnp.einsum("nihw,ioab->nohawb", x, w_t, precision=hi)
    d = d.reshape(N, Cout, 2 * H, 2 * W) + b_t[None, :, None, None]
    # Conv2d(k=3, p=1)
    c = lax.conv_general_dilated(
        d, w_c, window_strides=(1, 1), padding=((1, 1), (1, 1)),
        dimension_numbers=("NCHW", "OIHW", "NCHW"), precision=hi)
    c = c + b_c[None, :, None, None]
    # BatchNorm2d (training-mode biased batch stats) + ReLU
    mean = jnp.mean(c, axis=(0, 2, 3), keepdims=True)
    var = jnp.mean((c - mean) ** 2, axis=(0, 2, 3), keepdims=True)
    y = (c - mean) / jnp.sqrt(var + eps)
    y = y * gamma[None, :, None, None] + beta[None, :, None, None]
    return jnp.maximum(y, 0.0)


if __name__ == "__main__":
    N, Cin, H, W = 2, 4, 16, 16
    Cout = 8

    key = jax.random.PRNGKey(0)
    k1, k2, k3, k4, k5 = jax.random.split(key, 5)
    x = jax.random.normal(k1, (N, Cin, H, W), jnp.float32)

    # Parameter shapes follow the PyTorch module.
    w_t = 0.1 * jax.random.normal(k2, (Cin, Cout, 2, 2), jnp.float32)   # ConvTranspose2d.weight
    b_t = 0.1 * jax.random.normal(k3, (Cout,), jnp.float32)             # ConvTranspose2d.bias
    w_c = 0.1 * jax.random.normal(k4, (Cout, Cout, 3, 3), jnp.float32)  # Conv2d.weight
    b_c = 0.1 * jax.random.normal(k5, (Cout,), jnp.float32)             # Conv2d.bias
    gamma = jnp.ones((Cout,), jnp.float32)                              # BatchNorm2d.weight
    beta = jnp.zeros((Cout,), jnp.float32)                              # BatchNorm2d.bias

    out = jax.block_until_ready(deconv2d_block(x, w_t, b_t, w_c, b_c, gamma, beta))
    assert out.shape == (N, Cout, 2 * H, 2 * W)

    ref = jax.block_until_ready(reference(x, w_t, b_t, w_c, b_c, gamma, beta))
    # Kernel matmuls run at default MXU precision (bf16 inputs, f32 accum);
    # after BatchNorm normalisation that is ~1e-2 max deviation vs the f32
    # reference, hence the 2e-2 tolerance.
    np.testing.assert_allclose(np.asarray(out), np.asarray(ref),
                               rtol=2e-2, atol=2e-2)
    print("KERNEL_OK")
</pallas_src>

<mosaic_0001>
module attributes {stable_mosaic.version = 11 : i64} {
  func.func @_fused_deconv_conv_kernel(%arg0: i32, %arg1: memref<1x16x16x4xf32, #tpu.memory_space<vmem>>, %arg2: memref<16x5x8xf32, #tpu.memory_space<vmem>>, %arg3: memref<1x8xf32, #tpu.memory_space<vmem>>, %arg4: memref<4x16x16x8xf32, #tpu.memory_space<vmem>>, %arg5: memref<1x8x8xf32, #tpu.memory_space<vmem>>, %arg6: memref<18x18x5xf32, #tpu.memory_space<vmem>>) attributes {dimension_semantics = [#tpu.dimension_semantics<parallel>], iteration_bounds = array<i64: 2>, scalar_prefetch = 0 : i64, scratch_operands = 1 : i64, tpu.core_type = #tpu.core_type<tc>, window_params = [{transform_indices = @transform_0, window_bounds = array<i64: 1, 16, 16, 4>}, {pipeline_mode = #tpu.pipeline_mode<synchronous>, transform_indices = @transform_1, window_bounds = array<i64: 16, 5, 8>}, {pipeline_mode = #tpu.pipeline_mode<synchronous>, transform_indices = @transform_2, window_bounds = array<i64: 1, 8>}, {transform_indices = @transform_3, window_bounds = array<i64: 4, 16, 16, 8>}, {transform_indices = @transform_4, window_bounds = array<i64: 1, 8, 8>}]} {
    %cst = arith.constant 0.000000e+00 : f32
    %0 = vector.broadcast %cst : f32 to vector<18x18x5xf32>
    %c0 = arith.constant 0 : index
    %c0_0 = arith.constant 0 : index
    %c0_1 = arith.constant 0 : index
    %1 = vector.load %arg6[%c0, %c0_0, %c0_1] : memref<18x18x5xf32, #tpu.memory_space<vmem>>, vector<18x18x5xf32>
    tpu.vector_store %arg6[%c0, %c0_0, %c0_1], %0 {strides = array<i32>} : memref<18x18x5xf32, #tpu.memory_space<vmem>>, vector<18x18x5xf32>,
    %c0_2 = arith.constant 0 : index
    %c0_3 = arith.constant 0 : index
    %c0_4 = arith.constant 0 : index
    %c0_5 = arith.constant 0 : index
    %2 = vector.load %arg1[%c0_2, %c0_3, %c0_4, %c0_5] : memref<1x16x16x4xf32, #tpu.memory_space<vmem>>, vector<1x16x16x4xf32>
    %3 = vector.shape_cast %2 : vector<1x16x16x4xf32> to vector<16x16x4xf32>
    %c1 = arith.constant 1 : index
    %c1_6 = arith.constant 1 : index
    %c0_7 = arith.constant 0 : index
    %4 = vector.load %arg6[%c1, %c1_6, %c0_7] : memref<18x18x5xf32, #tpu.memory_space<vmem>>, vector<16x16x4xf32>
    tpu.vector_store %arg6[%c1, %c1_6, %c0_7], %3 {strides = array<i32>} : memref<18x18x5xf32, #tpu.memory_space<vmem>>, vector<16x16x4xf32>,
    %cst_8 = arith.constant 1.000000e+00 : f32
    %5 = vector.broadcast %cst_8 : f32 to vector<16x16x1xf32>
    %c1_9 = arith.constant 1 : index
    %c1_10 = arith.constant 1 : index
    %c4 = arith.constant 4 : index
    %6 = vector.load %arg6[%c1_9, %c1_10, %c4] : memref<18x18x5xf32, #tpu.memory_space<vmem>>, vector<16x16x1xf32>
    tpu.vector_store %arg6[%c1_9, %c1_10, %c4], %5 {strides = array<i32>} : memref<18x18x5xf32, #tpu.memory_space<vmem>>, vector<16x16x1xf32>,
    %c0_11 = arith.constant 0 : index
    %c0_12 = arith.constant 0 : index
    %7 = vector.load %arg3[%c0_11, %c0_12] : memref<1x8xf32, #tpu.memory_space<vmem>>, vector<1x8xf32>
    %cst_13 = arith.constant 0.000000e+00 : f32
    %8 = vector.broadcast %cst_13 : f32 to vector<1x8xf32>
    %cst_14 = arith.constant 0.000000e+00 : f32
    %9 = vector.broadcast %cst_14 : f32 to vector<1x8xf32>
    %cst_15 = arith.constant 0.000000e+00 : f32
    %10 = vector.broadcast %cst_15 : f32 to vector<256x8xf32>
    %c0_16 = arith.constant 0 : index
    %c0_17 = arith.constant 0 : index
    %c0_18 = arith.constant 0 : index
    %11 = vector.load %arg6[%c0_16, %c0_17, %c0_18] : memref<18x18x5xf32, #tpu.memory_space<vmem>>, vector<16x16x5xf32>
    %12 = vector.shape_cast %11 : vector<16x16x5xf32> to vector<256x5xf32>
    %c0_19 = arith.constant 0 : index
    %c0_20 = arith.constant 0 : index
    %c0_21 = arith.constant 0 : index
    %13 = vector.load %arg2[%c0_19, %c0_20, %c0_21] : memref<16x5x8xf32, #tpu.memory_space<vmem>>, vector<1x5x8xf32>
    %14 = vector.shape_cast %13 : vector<1x5x8xf32> to vector<5x8xf32>
    %cst_22 = arith.constant dense<0.000000e+00> : vector<256x8xf32>
    %15 = tpu.matmul %12, %14, %cst_22 {dimension_numbers = #tpu.dot_dimension_numbers<[1], [0], [0], [1], [0, 0, 1, 1], [], []>} : vector<256x5xf32>, vector<5x8xf32>, vector<256x8xf32> -> vector<256x8xf32>
    %16 = arith.addf %10, %15 : vector<256x8xf32>
    %c0_23 = arith.constant 0 : index
    %c1_24 = arith.constant 1 : index
    %c0_25 = arith.constant 0 : index
    %17 = vector.load %arg6[%c0_23, %c1_24, %c0_25] : memref<18x18x5xf32, #tpu.memory_space<vmem>>, vector<16x16x5xf32>
    %18 = vector.shape_cast %17 : vector<16x16x5xf32> to vector<256x5xf32>
    %c1_26 = arith.constant 1 : index
    %c0_27 = arith.constant 0 : index
    %c0_28 = arith.constant 0 : index
    %19 = vector.load %arg2[%c1_26, %c0_27, %c0_28] : memref<16x5x8xf32, #tpu.memory_space<vmem>>, vector<1x5x8xf32>
    %20 = vector.shape_cast %19 : vector<1x5x8xf32> to vector<5x8xf32>
    %cst_29 = arith.constant dense<0.000000e+00> : vector<256x8xf32>
    %21 = tpu.matmul %18, %20, %cst_29 {dimension_numbers = #tpu.dot_dimension_numbers<[1], [0], [0], [1], [0, 0, 1, 1], [], []>} : vector<256x5xf32>, vector<5x8xf32>, vector<256x8xf32> -> vector<256x8xf32>
    %22 = arith.addf %16, %21 : vector<256x8xf32>
    %c1_30 = arith.constant 1 : index
    %c0_31 = arith.constant 0 : index
    %c0_32 = arith.constant 0 : index
    %23 = vector.load %arg6[%c1_30, %c0_31, %c0_32] : memref<18x18x5xf32, #tpu.memory_space<vmem>>, vector<16x16x5xf32>
    %24 = vector.shape_cast %23 : vector<16x16x5xf32> to vector<256x5xf32>
    %c2 = arith.constant 2 : index
    %c0_33 = arith.constant 0 : index
    %c0_34 = arith.constant 0 : index
    %25 = vector.load %arg2[%c2, %c0_33, %c0_34] : memref<16x5x8xf32, #tpu.memory_space<vmem>>, vector<1x5x8xf32>
    %26 = vector.shape_cast %25 : vector<1x5x8xf32> to vector<5x8xf32>
    %cst_35 = arith.constant dense<0.000000e+00> : vector<256x8xf32>
    %27 = tpu.matmul %24, %26, %cst_35 {dimension_numbers = #tpu.dot_dimension_numbers<[1], [0], [0], [1], [0, 0, 1, 1], [], []>} : vector<256x5xf32>, vector<5x8xf32>, vector<256x8xf32> -> vector<256x8xf32>
    %28 = arith.addf %22, %27 : vector<256x8xf32>
    %c1_36 = arith.constant 1 : index
    %c1_37 = arith.constant 1 : index
    %c0_38 = arith.constant 0 : index
    %29 = vector.load %arg6[%c1_36, %c1_37, %c0_38] : memref<18x18x5xf32, #tpu.memory_space<vmem>>, vector<16x16x5xf32>
    %30 = vector.shape_cast %29 : vector<16x16x5xf32> to vector<256x5xf32>
    %c3 = arith.constant 3 : index
    %c0_39 = arith.constant 0 : index
    %c0_40 = arith.constant 0 : index
    %31 = vector.load %arg2[%c3, %c0_39, %c0_40] : memref<16x5x8xf32, #tpu.memory_space<vmem>>, vector<1x5x8xf32>
    %32 = vector.shape_cast %31 : vector<1x5x8xf32> to vector<5x8xf32>
    %cst_41 = arith.constant dense<0.000000e+00> : vector<256x8xf32>
    %33 = tpu.matmul %30, %32, %cst_41 {dimension_numbers = #tpu.dot_dimension_numbers<[1], [0], [0], [1], [0, 0, 1, 1], [], []>} : vector<256x5xf32>, vector<5x8xf32>, vector<256x8xf32> -> vector<256x8xf32>
    %34 = arith.addf %28, %33 : vector<256x8xf32>
    %35 = vector.broadcast %7 : vector<1x8xf32> to vector<256x8xf32>
    %36 = arith.addf %34, %35 : vector<256x8xf32>
    %37 = vector.shape_cast %36 : vector<256x8xf32> to vector<16x16x8xf32>
    %c0_42 = arith.constant 0 : index
    %c0_43 = arith.constant 0 : index
    %c0_44 = arith.constant 0 : index
    %c0_45 = arith.constant 0 : index
    %38 = vector.load %arg4[%c0_42, %c0_43, %c0_44, %c0_45] : memref<4x16x16x8xf32, #tpu.memory_space<vmem>>, vector<1x16x16x8xf32>
    %39 = vector.shape_cast %38 : vector<1x16x16x8xf32> to vector<16x16x8xf32>
    %40 = vector.shape_cast %37 : vector<16x16x8xf32> to vector<1x16x16x8xf32>
    tpu.vector_store %arg4[%c0_42, %c0_43, %c0_44, %c0_45], %40 {strides = array<i32>} : memref<4x16x16x8xf32, #tpu.memory_space<vmem>>, vector<1x16x16x8xf32>,
    %cst_46 = arith.constant dense<0.000000e+00> : vector<8xf32>
    %41 = vector.multi_reduction <add>, %36, %cst_46 [0] : vector<256x8xf32> to vector<8xf32>
    %42 = vector.shape_cast %41 : vector<8xf32> to vector<1x8xf32>
    %43 = arith.addf %8, %42 : vector<1x8xf32>
    %44 = arith.mulf %36, %36 : vector<256x8xf32>
    %cst_47 = arith.constant dense<0.000000e+00> : vector<8xf32>
    %45 = vector.multi_reduction <add>, %44, %cst_47 [0] : vector<256x8xf32> to vector<8xf32>
    %46 = vector.shape_cast %45 : vector<8xf32> to vector<1x8xf32>
    %47 = arith.addf %9, %46 : vector<1x8xf32>
    %cst_48 = arith.constant 0.000000e+00 : f32
    %48 = vector.broadcast %cst_48 : f32 to vector<256x8xf32>
    %c0_49 = arith.constant 0 : index
    %c1_50 = arith.constant 1 : index
    %c0_51 = arith.constant 0 : index
    %49 = vector.load %arg6[%c0_49, %c1_50, %c0_51] : memref<18x18x5xf32, #tpu.memory_space<vmem>>, vector<16x16x5xf32>
    %50 = vector.shape_cast %49 : vector<16x16x5xf32> to vector<256x5xf32>
    %c4_52 = arith.constant 4 : index
    %c0_53 = arith.constant 0 : index
    %c0_54 = arith.constant 0 : index
    %51 = vector.load %arg2[%c4_52, %c0_53, %c0_54] : memref<16x5x8xf32, #tpu.memory_space<vmem>>, vector<1x5x8xf32>
    %52 = vector.shape_cast %51 : vector<1x5x8xf32> to vector<5x8xf32>
    %cst_55 = arith.constant dense<0.000000e+00> : vector<256x8xf32>
    %53 = tpu.matmul %50, %52, %cst_55 {dimension_numbers = #tpu.dot_dimension_numbers<[1], [0], [0], [1], [0, 0, 1, 1], [], []>} : vector<256x5xf32>, vector<5x8xf32>, vector<256x8xf32> -> vector<256x8xf32>
    %54 = arith.addf %48, %53 : vector<256x8xf32>
    %c0_56 = arith.constant 0 : index
    %c2_57 = arith.constant 2 : index
    %c0_58 = arith.constant 0 : index
    %55 = vector.load %arg6[%c0_56, %c2_57, %c0_58] : memref<18x18x5xf32, #tpu.memory_space<vmem>>, vector<16x16x5xf32>
    %56 = vector.shape_cast %55 : vector<16x16x5xf32> to vector<256x5xf32>
    %c5 = arith.constant 5 : index
    %c0_59 = arith.constant 0 : index
    %c0_60 = arith.constant 0 : index
    %57 = vector.load %arg2[%c5, %c0_59, %c0_60] : memref<16x5x8xf32, #tpu.memory_space<vmem>>, vector<1x5x8xf32>
    %58 = vector.shape_cast %57 : vector<1x5x8xf32> to vector<5x8xf32>
    %cst_61 = arith.constant dense<0.000000e+00> : vector<256x8xf32>
    %59 = tpu.matmul %56, %58, %cst_61 {dimension_numbers = #tpu.dot_dimension_numbers<[1], [0], [0], [1], [0, 0, 1, 1], [], []>} : vector<256x5xf32>, vector<5x8xf32>, vector<256x8xf32> -> vector<256x8xf32>
    %60 = arith.addf %54, %59 : vector<256x8xf32>
    %c1_62 = arith.constant 1 : index
    %c1_63 = arith.constant 1 : index
    %c0_64 = arith.constant 0 : index
    %61 = vector.load %arg6[%c1_62, %c1_63, %c0_64] : memref<18x18x5xf32, #tpu.memory_space<vmem>>, vector<16x16x5xf32>
    %62 = vector.shape_cast %61 : vector<16x16x5xf32> to vector<256x5xf32>
    %c6 = arith.constant 6 : index
    %c0_65 = arith.constant 0 : index
    %c0_66 = arith.constant 0 : index
    %63 = vector.load %arg2[%c6, %c0_65, %c0_66] : memref<16x5x8xf32, #tpu.memory_space<vmem>>, vector<1x5x8xf32>
    %64 = vector.shape_cast %63 : vector<1x5x8xf32> to vector<5x8xf32>
    %cst_67 = arith.constant dense<0.000000e+00> : vector<256x8xf32>
    %65 = tpu.matmul %62, %64, %cst_67 {dimension_numbers = #tpu.dot_dimension_numbers<[1], [0], [0], [1], [0, 0, 1, 1], [], []>} : vector<256x5xf32>, vector<5x8xf32>, vector<256x8xf32> -> vector<256x8xf32>
    %66 = arith.addf %60, %65 : vector<256x8xf32>
    %c1_68 = arith.constant 1 : index
    %c2_69 = arith.constant 2 : index
    %c0_70 = arith.constant 0 : index
    %67 = vector.load %arg6[%c1_68, %c2_69, %c0_70] : memref<18x18x5xf32, #tpu.memory_space<vmem>>, vector<16x16x5xf32>
    %68 = vector.shape_cast %67 : vector<16x16x5xf32> to vector<256x5xf32>
    %c7 = arith.constant 7 : index
    %c0_71 = arith.constant 0 : index
    %c0_72 = arith.constant 0 : index
    %69 = vector.load %arg2[%c7, %c0_71, %c0_72] : memref<16x5x8xf32, #tpu.memory_space<vmem>>, vector<1x5x8xf32>
    %70 = vector.shape_cast %69 : vector<1x5x8xf32> to vector<5x8xf32>
    %cst_73 = arith.constant dense<0.000000e+00> : vector<256x8xf32>
    %71 = tpu.matmul %68, %70, %cst_73 {dimension_numbers = #tpu.dot_dimension_numbers<[1], [0], [0], [1], [0, 0, 1, 1], [], []>} : vector<256x5xf32>, vector<5x8xf32>, vector<256x8xf32> -> vector<256x8xf32>
    %72 = arith.addf %66, %71 : vector<256x8xf32>
    %73 = vector.broadcast %7 : vector<1x8xf32> to vector<256x8xf32>
    %74 = arith.addf %72, %73 : vector<256x8xf32>
    %75 = vector.shape_cast %74 : vector<256x8xf32> to vector<16x16x8xf32>
    %c1_74 = arith.constant 1 : index
    %c0_75 = arith.constant 0 : index
    %c0_76 = arith.constant 0 : index
    %c0_77 = arith.constant 0 : index
    %76 = vector.load %arg4[%c1_74, %c0_75, %c0_76, %c0_77] : memref<4x16x16x8xf32, #tpu.memory_space<vmem>>, vector<1x16x16x8xf32>
    %77 = vector.shape_cast %76 : vector<1x16x16x8xf32> to vector<16x16x8xf32>
    %78 = vector.shape_cast %75 : vector<16x16x8xf32> to vector<1x16x16x8xf32>
    tpu.vector_store %arg4[%c1_74, %c0_75, %c0_76, %c0_77], %78 {strides = array<i32>} : memref<4x16x16x8xf32, #tpu.memory_space<vmem>>, vector<1x16x16x8xf32>,
    %cst_78 = arith.constant dense<0.000000e+00> : vector<8xf32>
    %79 = vector.multi_reduction <add>, %74, %cst_78 [0] : vector<256x8xf32> to vector<8xf32>
    %80 = vector.shape_cast %79 : vector<8xf32> to vector<1x8xf32>
    %81 = arith.addf %43, %80 : vector<1x8xf32>
    %82 = arith.mulf %74, %74 : vector<256x8xf32>
    %cst_79 = arith.constant dense<0.000000e+00> : vector<8xf32>
    %83 = vector.multi_reduction <add>, %82, %cst_79 [0] : vector<256x8xf32> to vector<8xf32>
    %84 = vector.shape_cast %83 : vector<8xf32> to vector<1x8xf32>
    %85 = arith.addf %47, %84 : vector<1x8xf32>
    %cst_80 = arith.constant 0.000000e+00 : f32
    %86 = vector.broadcast %cst_80 : f32 to vector<256x8xf32>
    %c1_81 = arith.constant 1 : index
    %c0_82 = arith.constant 0 : index
    %c0_83 = arith.constant 0 : index
    %87 = vector.load %arg6[%c1_81, %c0_82, %c0_83] : memref<18x18x5xf32, #tpu.memory_space<vmem>>, vector<16x16x5xf32>
    %88 = vector.shape_cast %87 : vector<16x16x5xf32> to vector<256x5xf32>
    %c8 = arith.constant 8 : index
    %c0_84 = arith.constant 0 : index
    %c0_85 = arith.constant 0 : index
    %89 = vector.load %arg2[%c8, %c0_84, %c0_85] : memref<16x5x8xf32, #tpu.memory_space<vmem>>, vector<1x5x8xf32>
    %90 = vector.shape_cast %89 : vector<1x5x8xf32> to vector<5x8xf32>
    %cst_86 = arith.constant dense<0.000000e+00> : vector<256x8xf32>
    %91 = tpu.matmul %88, %90, %cst_86 {dimension_numbers = #tpu.dot_dimension_numbers<[1], [0], [0], [1], [0, 0, 1, 1], [], []>} : vector<256x5xf32>, vector<5x8xf32>, vector<256x8xf32> -> vector<256x8xf32>
    %92 = arith.addf %86, %91 : vector<256x8xf32>
    %c1_87 = arith.constant 1 : index
    %c1_88 = arith.constant 1 : index
    %c0_89 = arith.constant 0 : index
    %93 = vector.load %arg6[%c1_87, %c1_88, %c0_89] : memref<18x18x5xf32, #tpu.memory_space<vmem>>, vector<16x16x5xf32>
    %94 = vector.shape_cast %93 : vector<16x16x5xf32> to vector<256x5xf32>
    %c9 = arith.constant 9 : index
    %c0_90 = arith.constant 0 : index
    %c0_91 = arith.constant 0 : index
    %95 = vector.load %arg2[%c9, %c0_90, %c0_91] : memref<16x5x8xf32, #tpu.memory_space<vmem>>, vector<1x5x8xf32>
    %96 = vector.shape_cast %95 : vector<1x5x8xf32> to vector<5x8xf32>
    %cst_92 = arith.constant dense<0.000000e+00> : vector<256x8xf32>
    %97 = tpu.matmul %94, %96, %cst_92 {dimension_numbers = #tpu.dot_dimension_numbers<[1], [0], [0], [1], [0, 0, 1, 1], [], []>} : vector<256x5xf32>, vector<5x8xf32>, vector<256x8xf32> -> vector<256x8xf32>
    %98 = arith.addf %92, %97 : vector<256x8xf32>
    %c2_93 = arith.constant 2 : index
    %c0_94 = arith.constant 0 : index
    %c0_95 = arith.constant 0 : index
    %99 = vector.load %arg6[%c2_93, %c0_94, %c0_95] : memref<18x18x5xf32, #tpu.memory_space<vmem>>, vector<16x16x5xf32>
    %100 = vector.shape_cast %99 : vector<16x16x5xf32> to vector<256x5xf32>
    %c10 = arith.constant 10 : index
    %c0_96 = arith.constant 0 : index
    %c0_97 = arith.constant 0 : index
    %101 = vector.load %arg2[%c10, %c0_96, %c0_97] : memref<16x5x8xf32, #tpu.memory_space<vmem>>, vector<1x5x8xf32>
    %102 = vector.shape_cast %101 : vector<1x5x8xf32> to vector<5x8xf32>
    %cst_98 = arith.constant dense<0.000000e+00> : vector<256x8xf32>
    %103 = tpu.matmul %100, %102, %cst_98 {dimension_numbers = #tpu.dot_dimension_numbers<[1], [0], [0], [1], [0, 0, 1, 1], [], []>} : vector<256x5xf32>, vector<5x8xf32>, vector<256x8xf32> -> vector<256x8xf32>
    %104 = arith.addf %98, %103 : vector<256x8xf32>
    %c2_99 = arith.constant 2 : index
    %c1_100 = arith.constant 1 : index
    %c0_101 = arith.constant 0 : index
    %105 = vector.load %arg6[%c2_99, %c1_100, %c0_101] : memref<18x18x5xf32, #tpu.memory_space<vmem>>, vector<16x16x5xf32>
    %106 = vector.shape_cast %105 : vector<16x16x5xf32> to vector<256x5xf32>
    %c11 = arith.constant 11 : index
    %c0_102 = arith.constant 0 : index
    %c0_103 = arith.constant 0 : index
    %107 = vector.load %arg2[%c11, %c0_102, %c0_103] : memref<16x5x8xf32, #tpu.memory_space<vmem>>, vector<1x5x8xf32>
    %108 = vector.shape_cast %107 : vector<1x5x8xf32> to vector<5x8xf32>
    %cst_104 = arith.constant dense<0.000000e+00> : vector<256x8xf32>
    %109 = tpu.matmul %106, %108, %cst_104 {dimension_numbers = #tpu.dot_dimension_numbers<[1], [0], [0], [1], [0, 0, 1, 1], [], []>} : vector<256x5xf32>, vector<5x8xf32>, vector<256x8xf32> -> vector<256x8xf32>
    %110 = arith.addf %104, %109 : vector<256x8xf32>
    %111 = vector.broadcast %7 : vector<1x8xf32> to vector<256x8xf32>
    %112 = arith.addf %110, %111 : vector<256x8xf32>
    %113 = vector.shape_cast %112 : vector<256x8xf32> to vector<16x16x8xf32>
    %c2_105 = arith.constant 2 : index
    %c0_106 = arith.constant 0 : index
    %c0_107 = arith.constant 0 : index
    %c0_108 = arith.constant 0 : index
    %114 = vector.load %arg4[%c2_105, %c0_106, %c0_107, %c0_108] : memref<4x16x16x8xf32, #tpu.memory_space<vmem>>, vector<1x16x16x8xf32>
    %115 = vector.shape_cast %114 : vector<1x16x16x8xf32> to vector<16x16x8xf32>
    %116 = vector.shape_cast %113 : vector<16x16x8xf32> to vector<1x16x16x8xf32>
    tpu.vector_store %arg4[%c2_105, %c0_106, %c0_107, %c0_108], %116 {strides = array<i32>} : memref<4x16x16x8xf32, #tpu.memory_space<vmem>>, vector<1x16x16x8xf32>,
    %cst_109 = arith.constant dense<0.000000e+00> : vector<8xf32>
    %117 = vector.multi_reduction <add>, %112, %cst_109 [0] : vector<256x8xf32> to vector<8xf32>
    %118 = vector.shape_cast %117 : vector<8xf32> to vector<1x8xf32>
    %119 = arith.addf %81, %118 : vector<1x8xf32>
    %120 = arith.mulf %112, %112 : vector<256x8xf32>
    %cst_110 = arith.constant dense<0.000000e+00> : vector<8xf32>
    %121 = vector.multi_reduction <add>, %120, %cst_110 [0] : vector<256x8xf32> to vector<8xf32>
    %122 = vector.shape_cast %121 : vector<8xf32> to vector<1x8xf32>
    %123 = arith.addf %85, %122 : vector<1x8xf32>
    %cst_111 = arith.constant 0.000000e+00 : f32
    %124 = vector.broadcast %cst_111 : f32 to vector<256x8xf32>
    %c1_112 = arith.constant 1 : index
    %c1_113 = arith.constant 1 : index
    %c0_114 = arith.constant 0 : index
    %125 = vector.load %arg6[%c1_112, %c1_113, %c0_114] : memref<18x18x5xf32, #tpu.memory_space<vmem>>, vector<16x16x5xf32>
    %126 = vector.shape_cast %125 : vector<16x16x5xf32> to vector<256x5xf32>
    %c12 = arith.constant 12 : index
    %c0_115 = arith.constant 0 : index
    %c0_116 = arith.constant 0 : index
    %127 = vector.load %arg2[%c12, %c0_115, %c0_116] : memref<16x5x8xf32, #tpu.memory_space<vmem>>, vector<1x5x8xf32>
    %128 = vector.shape_cast %127 : vector<1x5x8xf32> to vector<5x8xf32>
    %cst_117 = arith.constant dense<0.000000e+00> : vector<256x8xf32>
    %129 = tpu.matmul %126, %128, %cst_117 {dimension_numbers = #tpu.dot_dimension_numbers<[1], [0], [0], [1], [0, 0, 1, 1], [], []>} : vector<256x5xf32>, vector<5x8xf32>, vector<256x8xf32> -> vector<256x8xf32>
    %130 = arith.addf %124, %129 : vector<256x8xf32>
    %c1_118 = arith.constant 1 : index
    %c2_119 = arith.constant 2 : index
    %c0_120 = arith.constant 0 : index
    %131 = vector.load %arg6[%c1_118, %c2_119, %c0_120] : memref<18x18x5xf32, #tpu.memory_space<vmem>>, vector<16x16x5xf32>
    %132 = vector.shape_cast %131 : vector<16x16x5xf32> to vector<256x5xf32>
    %c13 = arith.constant 13 : index
    %c0_121 = arith.constant 0 : index
    %c0_122 = arith.constant 0 : index
    %133 = vector.load %arg2[%c13, %c0_121, %c0_122] : memref<16x5x8xf32, #tpu.memory_space<vmem>>, vector<1x5x8xf32>
    %134 = vector.shape_cast %133 : vector<1x5x8xf32> to vector<5x8xf32>
    %cst_123 = arith.constant dense<0.000000e+00> : vector<256x8xf32>
    %135 = tpu.matmul %132, %134, %cst_123 {dimension_numbers = #tpu.dot_dimension_numbers<[1], [0], [0], [1], [0, 0, 1, 1], [], []>} : vector<256x5xf32>, vector<5x8xf32>, vector<256x8xf32> -> vector<256x8xf32>
    %136 = arith.addf %130, %135 : vector<256x8xf32>
    %c2_124 = arith.constant 2 : index
    %c1_125 = arith.constant 1 : index
    %c0_126 = arith.constant 0 : index
    %137 = vector.load %arg6[%c2_124, %c1_125, %c0_126] : memref<18x18x5xf32, #tpu.memory_space<vmem>>, vector<16x16x5xf32>
    %138 = vector.shape_cast %137 : vector<16x16x5xf32> to vector<256x5xf32>
    %c14 = arith.constant 14 : index
    %c0_127 = arith.constant 0 : index
    %c0_128 = arith.constant 0 : index
    %139 = vector.load %arg2[%c14, %c0_127, %c0_128] : memref<16x5x8xf32, #tpu.memory_space<vmem>>, vector<1x5x8xf32>
    %140 = vector.shape_cast %139 : vector<1x5x8xf32> to vector<5x8xf32>
    %cst_129 = arith.constant dense<0.000000e+00> : vector<256x8xf32>
    %141 = tpu.matmul %138, %140, %cst_129 {dimension_numbers = #tpu.dot_dimension_numbers<[1], [0], [0], [1], [0, 0, 1, 1], [], []>} : vector<256x5xf32>, vector<5x8xf32>, vector<256x8xf32> -> vector<256x8xf32>
    %142 = arith.addf %136, %141 : vector<256x8xf32>
    %c2_130 = arith.constant 2 : index
    %c2_131 = arith.constant 2 : index
    %c0_132 = arith.constant 0 : index
    %143 = vector.load %arg6[%c2_130, %c2_131, %c0_132] : memref<18x18x5xf32, #tpu.memory_space<vmem>>, vector<16x16x5xf32>
    %144 = vector.shape_cast %143 : vector<16x16x5xf32> to vector<256x5xf32>
    %c15 = arith.constant 15 : index
    %c0_133 = arith.constant 0 : index
    %c0_134 = arith.constant 0 : index
    %145 = vector.load %arg2[%c15, %c0_133, %c0_134] : memref<16x5x8xf32, #tpu.memory_space<vmem>>, vector<1x5x8xf32>
    %146 = vector.shape_cast %145 : vector<1x5x8xf32> to vector<5x8xf32>
    %cst_135 = arith.constant dense<0.000000e+00> : vector<256x8xf32>
    %147 = tpu.matmul %144, %146, %cst_135 {dimension_numbers = #tpu.dot_dimension_numbers<[1], [0], [0], [1], [0, 0, 1, 1], [], []>} : vector<256x5xf32>, vector<5x8xf32>, vector<256x8xf32> -> vector<256x8xf32>
    %148 = arith.addf %142, %147 : vector<256x8xf32>
    %149 = vector.broadcast %7 : vector<1x8xf32> to vector<256x8xf32>
    %150 = arith.addf %148, %149 : vector<256x8xf32>
    %151 = vector.shape_cast %150 : vector<256x8xf32> to vector<16x16x8xf32>
    %c3_136 = arith.constant 3 : index
    %c0_137 = arith.constant 0 : index
    %c0_138 = arith.constant 0 : index
    %c0_139 = arith.constant 0 : index
    %152 = vector.load %arg4[%c3_136, %c0_137, %c0_138, %c0_139] : memref<4x16x16x8xf32, #tpu.memory_space<vmem>>, vector<1x16x16x8xf32>
    %153 = vector.shape_cast %152 : vector<1x16x16x8xf32> to vector<16x16x8xf32>
    %154 = vector.shape_cast %151 : vector<16x16x8xf32> to vector<1x16x16x8xf32>
    tpu.vector_store %arg4[%c3_136, %c0_137, %c0_138, %c0_139], %154 {strides = array<i32>} : memref<4x16x16x8xf32, #tpu.memory_space<vmem>>, vector<1x16x16x8xf32>,
    %cst_140 = arith.constant dense<0.000000e+00> : vector<8xf32>
    %155 = vector.multi_reduction <add>, %150, %cst_140 [0] : vector<256x8xf32> to vector<8xf32>
    %156 = vector.shape_cast %155 : vector<8xf32> to vector<1x8xf32>
    %157 = arith.addf %119, %156 : vector<1x8xf32>
    %158 = arith.mulf %150, %150 : vector<256x8xf32>
    %cst_141 = arith.constant dense<0.000000e+00> : vector<8xf32>
    %159 = vector.multi_reduction <add>, %158, %cst_141 [0] : vector<256x8xf32> to vector<8xf32>
    %160 = vector.shape_cast %159 : vector<8xf32> to vector<1x8xf32>
    %161 = arith.addf %123, %160 : vector<1x8xf32>
    %cst_142 = arith.constant 0.000000e+00 : f32
    %162 = vector.broadcast %cst_142 : f32 to vector<1x8x8xf32>
    %c0_143 = arith.constant 0 : index
    %c0_144 = arith.constant 0 : index
    %c0_145 = arith.constant 0 : index
    %163 = vector.load %arg5[%c0_143, %c0_144, %c0_145] : memref<1x8x8xf32, #tpu.memory_space<vmem>>, vector<1x8x8xf32>
    tpu.vector_store %arg5[%c0_143, %c0_144, %c0_145], %162 {strides = array<i32>} : memref<1x8x8xf32, #tpu.memory_space<vmem>>, vector<1x8x8xf32>,
    %c0_146 = arith.constant 0 : index
    %c0_147 = arith.constant 0 : index
    %c0_148 = arith.constant 0 : index
    %164 = vector.load %arg5[%c0_146, %c0_147, %c0_148] : memref<1x8x8xf32, #tpu.memory_space<vmem>>, vector<1x1x8xf32>
    %165 = vector.shape_cast %164 : vector<1x1x8xf32> to vector<1x8xf32>
    %166 = vector.shape_cast %157 : vector<1x8xf32> to vector<1x1x8xf32>
    tpu.vector_store %arg5[%c0_146, %c0_147, %c0_148], %166 {strides = array<i32>} : memref<1x8x8xf32, #tpu.memory_space<vmem>>, vector<1x1x8xf32>,
    %c0_149 = arith.constant 0 : index
    %c1_150 = arith.constant 1 : index
    %c0_151 = arith.constant 0 : index
    %167 = vector.load %arg5[%c0_149, %c1_150, %c0_151] : memref<1x8x8xf32, #tpu.memory_space<vmem>>, vector<1x1x8xf32>
    %168 = vector.shape_cast %167 : vector<1x1x8xf32> to vector<1x8xf32>
    %169 = vector.shape_cast %161 : vector<1x8xf32> to vector<1x1x8xf32>
    tpu.vector_store %arg5[%c0_149, %c1_150, %c0_151], %169 {strides = array<i32>} : memref<1x8x8xf32, #tpu.memory_space<vmem>>, vector<1x1x8xf32>,
    return
  }
  func.func @transform_0(%arg0: i32) -> (i32, i32, i32, i32) {
    %c0_i32 = arith.constant 0 : i32
    %c0_i32_0 = arith.constant 0 : i32
    %c0_i32_1 = arith.constant 0 : i32
    %c0_i32_2 = arith.constant 0 : i32
    return %arg0, %c0_i32, %c0_i32_0, %c0_i32_1 : i32, i32, i32, i32
  }
  func.func @transform_1(%arg0: i32) -> (i32, i32, i32) {
    %c0_i32 = arith.constant 0 : i32
    %c0_i32_0 = arith.constant 0 : i32
    %c0_i32_1 = arith.constant 0 : i32
    %c0_i32_2 = arith.constant 0 : i32
    return %c0_i32, %c0_i32_0, %c0_i32_1 : i32, i32, i32
  }
  func.func @transform_2(%arg0: i32) -> (i32, i32) {
    %c0_i32 = arith.constant 0 : i32
    %c0_i32_0 = arith.constant 0 : i32
    %c0_i32_1 = arith.constant 0 : i32
    return %c0_i32, %c0_i32_0 : i32, i32
  }
  func.func @transform_3(%arg0: i32) -> (i32, i32, i32, i32) {
    %c0_i32 = arith.constant 0 : i32
    %c0_i32_0 = arith.constant 0 : i32
    %c0_i32_1 = arith.constant 0 : i32
    %c0_i32_2 = arith.constant 0 : i32
    return %arg0, %c0_i32, %c0_i32_0, %c0_i32_1 : i32, i32, i32, i32
  }
  func.func @transform_4(%arg0: i32) -> (i32, i32, i32) {
    %c0_i32 = arith.constant 0 : i32
    %c0_i32_0 = arith.constant 0 : i32
    %c0_i32_1 = arith.constant 0 : i32
    return %arg0, %c0_i32, %c0_i32_0 : i32, i32, i32
  }
}

module attributes {stable_mosaic.version = 11 : i64} {
  func.func @_bn_relu_kernel(%arg0: i32, %arg1: memref<64x128xf32, #tpu.memory_space<vmem>>, %arg2: memref<1x128xf32, #tpu.memory_space<vmem>>, %arg3: memref<1x128xf32, #tpu.memory_space<vmem>>, %arg4: memref<64x128xf32, #tpu.memory_space<vmem>>) attributes {dimension_semantics = [#tpu.dimension_semantics<parallel>], iteration_bounds = array<i64: 2>, scalar_prefetch = 0 : i64, scratch_operands = 0 : i64, tpu.core_type = #tpu.core_type<tc>, window_params = [{transform_indices = @transform_0, window_bounds = array<i64: 64, 128>}, {pipeline_mode = #tpu.pipeline_mode<synchronous>, transform_indices = @transform_1, window_bounds = array<i64: 1, 128>}, {pipeline_mode = #tpu.pipeline_mode<synchronous>, transform_indices = @transform_2, window_bounds = array<i64: 1, 128>}, {transform_indices = @transform_3, window_bounds = array<i64: 64, 128>}]} {
    %c0 = arith.constant 0 : index
    %c0_0 = arith.constant 0 : index
    %0 = vector.load %arg1[%c0, %c0_0] : memref<64x128xf32, #tpu.memory_space<vmem>>, vector<64x128xf32>
    %c0_1 = arith.constant 0 : index
    %c0_2 = arith.constant 0 : index
    %1 = vector.load %arg2[%c0_1, %c0_2] : memref<1x128xf32, #tpu.memory_space<vmem>>, vector<1x128xf32>
    %2 = vector.broadcast %1 : vector<1x128xf32> to vector<64x128xf32>
    %3 = arith.mulf %0, %2 : vector<64x128xf32>
    %c0_3 = arith.constant 0 : index
    %c0_4 = arith.constant 0 : index
    %4 = vector.load %arg3[%c0_3, %c0_4] : memref<1x128xf32, #tpu.memory_space<vmem>>, vector<1x128xf32>
    %5 = vector.broadcast %4 : vector<1x128xf32> to vector<64x128xf32>
    %6 = arith.addf %3, %5 : vector<64x128xf32>
    %cst = arith.constant 0.000000e+00 : f32
    %7 = vector.broadcast %cst : f32 to vector<64x128xf32>
    %8 = arith.maximumf %6, %7 : vector<64x128xf32>
    %c0_5 = arith.constant 0 : index
    %c0_6 = arith.constant 0 : index
    %9 = vector.load %arg4[%c0_5, %c0_6] : memref<64x128xf32, #tpu.memory_space<vmem>>, vector<64x128xf32>
    tpu.vector_store %arg4[%c0_5, %c0_6], %8 {strides = array<i32>} : memref<64x128xf32, #tpu.memory_space<vmem>>, vector<64x128xf32>,
    return
  }
  func.func @transform_0(%arg0: i32) -> (i32, i32) {
    %c0_i32 = arith.constant 0 : i32
    %c0_i32_0 = arith.constant 0 : i32
    return %arg0, %c0_i32 : i32, i32
  }
  func.func @transform_1(%arg0: i32) -> (i32, i32) {
    %c0_i32 = arith.constant 0 : i32
    %c0_i32_0 = arith.constant 0 : i32
    %c0_i32_1 = arith.constant 0 : i32
    return %c0_i32, %c0_i32_0 : i32, i32
  }
  func.func @transform_2(%arg0: i32) -> (i32, i32) {
    %c0_i32 = arith.constant 0 : i32
    %c0_i32_0 = arith.constant 0 : i32
    %c0_i32_1 = arith.constant 0 : i32
    return %c0_i32, %c0_i32_0 : i32, i32
  }
  func.func @transform_3(%arg0: i32) -> (i32, i32) {
    %c0_i32 = arith.constant 0 : i32
    %c0_i32_0 = arith.constant 0 : i32
    return %arg0, %c0_i32 : i32, i32
  }
}

</mosaic_0001>

<llo_original>
// kernel: tile.18
$region0: #{tile.18}
  #allocation0 [shape = 's32[1]{0}', space=sflag, size = 0x4, scoped, tag = 'scoped memory for tile.18']
  %s0 = inlined_call_operand.vmem [shape: f32[8], index: 0, kind: input, shape index: {}]
  %s1 = inlined_call_operand.vmem [shape: f32[16,8], index: 1, kind: output, shape index: {}]
  // Predicated region
  $region2: #{tile.18} parent=0 // pred_check
    _
  $region3: #{tile.18} parent=0 // pred_check_branch
    %3 = sbr.rel (0) target = $region5
  $region4: #{tile.18} parent=0 // pred_region
    _
  $region5: #{tile.18} parent=0 // pred_fallthru
    _
  %v4 = vld [vmem:[%s0] ss:$0 sm:$0xff]
  %5 = vst [vmem:[%s1] sm:$0xff] %v4
  %s6 = scalar_lea.vmem %s1, 8
  %7 = vst [vmem:[%s6] sm:$0xff] %v4

// kernel: tile.19
$region0: #{tile.19}
  %s0 = inlined_call_operand.vmem [shape: f32[16,8], index: 0, kind: input, shape index: {}]
  %s1 = inlined_call_operand.vmem [shape: f32[1,128], index: 1, kind: output, shape index: {}]
  $region1: #{tile.19} parent=0
    #allocation0 [shape = 'u8[4096]{0}', space=vmem, size = 0x1000, scoped, tag = 'scoped mem for output reshape']
    %v2 = vld [vmem:[%s0] sm:$0x1]
    %vm3 = vcmask 64512
    %4 = vst.msk [vmem:[#allocation0] sm:$0x1] %vm3, %v2
    %s5 = scalar_lea.vmem %s0, 15
    %v6 = vld [vmem:[%s5] sm:$0x1]
    %7 = vrot.lane.b32.xlu0 %v6, 120
    %v8 = vpop.permute.xlu0 %7
    %vm9 = vcmask 1048512
    %10 = vst.msk [vmem:[#allocation0] sm:$0x1] %vm9, %v8
    %s11 = scalar_lea.vmem %s0, 14
    %v12 = vld [vmem:[%s11] sm:$0x1]
    %13 = vrot.lane.b32.xlu0 %v12, 112
    %v14 = vpop.permute.xlu0 %13
    %vm15 = vcmask 982912
    %16 = vst.msk [vmem:[#allocation0] sm:$0x1] %vm15, %v14
    %s17 = scalar_lea.vmem %s0, 13
    %v18 = vld [vmem:[%s17] sm:$0x1]
    %19 = vrot.lane.b32.xlu0 %v18, 104
    %v20 = vpop.permute.xlu0 %19
    %vm21 = vcmask 917312
    %22 = vst.msk [vmem:[#allocation0] sm:$0x1] %vm21, %v20
    %s23 = scalar_lea.vmem %s0, 12
    %v24 = vld [vmem:[%s23] sm:$0x1]
    %25 = vrot.lane.b32.xlu0 %v24, 96
    %v26 = vpop.permute.xlu0 %25
    %vm27 = vcmask 851712
    %28 = vst.msk [vmem:[#allocation0] sm:$0x1] %vm27, %v26
    %s29 = scalar_lea.vmem %s0, 11
    %v30 = vld [vmem:[%s29] sm:$0x1]
    %31 = vrot.lane.b32.xlu0 %v30, 88
    %v32 = vpop.permute.xlu0 %31
    %vm33 = vcmask 786112
    %34 = vst.msk [vmem:[#allocation0] sm:$0x1] %vm33, %v32
    %s35 = scalar_lea.vmem %s0, 10
    %v36 = vld [vmem:[%s35] sm:$0x1]
    %37 = vrot.lane.b32.xlu0 %v36, 80
    %v38 = vpop.permute.xlu0 %37
    %vm39 = vcmask 720512
    %40 = vst.msk [vmem:[#allocation0] sm:$0x1] %vm39, %v38
    %s41 = scalar_lea.vmem %s0, 9
    %v42 = vld [vmem:[%s41] sm:$0x1]
    %43 = vrot.lane.b32.xlu0 %v42, 72
    %v44 = vpop.permute.xlu0 %43
    %vm45 = vcmask 654912
    %46 = vst.msk [vmem:[#allocation0] sm:$0x1] %vm45, %v44
    %s47 = scalar_lea.vmem %s0, 8
    %v48 = vld [vmem:[%s47] sm:$0x1]
    %49 = vrot.lane.b32.xlu0 %v48, 64
    %v50 = vpop.permute.xlu0 %49
    %vm51 = vcmask 589312
    %52 = vst.msk [vmem:[#allocation0] sm:$0x1] %vm51, %v50
    %s53 = scalar_lea.vmem %s0, 7
    %v54 = vld [vmem:[%s53] sm:$0x1]
    %55 = vrot.lane.b32.xlu0 %v54, 56
    %v56 = vpop.permute.xlu0 %55
    %vm57 = vcmask 523712
    %58 = vst.msk [vmem:[#allocation0] sm:$0x1] %vm57, %v56
    %s59 = scalar_lea.vmem %s0, 6
    %v60 = vld [vmem:[%s59] sm:$0x1]
    %61 = vrot.lane.b32.xlu0 %v60, 48
    %v62 = vpop.permute.xlu0 %61
    %vm63 = vcmask 458112
    %64 = vst.msk [vmem:[#allocation0] sm:$0x1] %vm63, %v62
    %s65 = scalar_lea.vmem %s0, 5
    %v66 = vld [vmem:[%s65] sm:$0x1]
    %67 = vrot.lane.b32.xlu0 %v66, 40
    %v68 = vpop.permute.xlu0 %67
    %vm69 = vcmask 392512
    %70 = vst.msk [vmem:[#allocation0] sm:$0x1] %vm69, %v68
    %s71 = scalar_lea.vmem %s0, 4
    %v72 = vld [vmem:[%s71] sm:$0x1]
    %73 = vrot.lane.b32.xlu0 %v72, 32
    %v74 = vpop.permute.xlu0 %73
    %vm75 = vcmask 326912
    %76 = vst.msk [vmem:[#allocation0] sm:$0x1] %vm75, %v74
    %s77 = scalar_lea.vmem %s0, 3
    %v78 = vld [vmem:[%s77] sm:$0x1]
    %79 = vrot.lane.b32.xlu0 %v78, 24
    %v80 = vpop.permute.xlu0 %79
    %vm81 = vcmask 261312
    %82 = vst.msk [vmem:[#allocation0] sm:$0x1] %vm81, %v80
    %s83 = scalar_lea.vmem %s0, 2
    %v84 = vld [vmem:[%s83] sm:$0x1]
    %85 = vrot.lane.b32.xlu0 %v84, 16
    %v86 = vpop.permute.xlu0 %85
    %vm87 = vcmask 195712
    %88 = vst.msk [vmem:[#allocation0] sm:$0x1] %vm87, %v86
    %s89 = scalar_lea.vmem %s0, 1
    %v90 = vld [vmem:[%s89] sm:$0x1]
    %91 = vrot.lane.b32.xlu0 %v90, 8
    %v92 = vpop.permute.xlu0 %91
    %vm93 = vcmask 130112
    %94 = vst.msk [vmem:[#allocation0] sm:$0x1] %vm93, %v92
    %s96 = sshll.u32 1, 1
    %s97 = ssub.s32 %s96, 1
    %v99 = vld [vmem:[#allocation0] sm:%s97]
    %s100 = sshll.u32 1, 1
    %s101 = ssub.s32 %s100, 1
    %102 = vst [vmem:[%s1] sm:%s101] %v99

// kernel: deconv2d_block.3
$region0: #{deconv2d_block.3}
  #allocation0 [shape = 'u32[]', space=smem, size = 0x4, offset = 0x4, fixed_abs, tag = 'smem constant byte address 0x4 - core index']
  #allocation1 [shape = 'u32[144,128]{1,0:T(1,128)}', space=vmem, size = 0x12000, scoped, tag = 'internal scratch']
  %s0 = inlined_call_operand.vmem [shape: f32[128,128], index: 0, kind: input, shape index: {}]
  %s1 = inlined_call_operand.vmem [shape: f32[1,128], index: 1, kind: input, shape index: {}]
  %s2 = inlined_call_operand.vmem [shape: f32[1,128], index: 2, kind: input, shape index: {}]
  %s3 = inlined_call_operand.vmem [shape: f32[128,128], index: 3, kind: output, shape index: {}]
  %s4 = sld [smem:[#allocation0]]
  $region45: #{deconv2d_block.3} parent=0
    _
  %s6 = ssub.s32 1, %s4
  %s7 = scalar_select 0, %s6, %s4
  loop: start=0, step=1, limit=4
  $region2: #{deconv2d_block.3} parent=0 // loop_pre_header
    _
  $region3: #{deconv2d_block.3} parent=0 // loop_header
    %s9 = sphi 0, %s13
    %p10 = scmp.ge.s32.totalorder %s9, 4
    %s19 = sphi 0, %s21
    %s22 = sphi 0, %s19
    %s23 = sphi 0, %s22
    %s39 = sphi 0, %s23
    %s43 = sphi 0, %s43
    %s45 = sphi 0, %s43
    %s46 = sphi 0, %s45
    %s60 = sphi 0, %s46
    %s64 = sphi 0, %s64
    %s66 = sphi 0, %s64
    %s67 = sphi 0, %s66
    %s81 = sphi 0, %s67
    %s87 = sphi 0, %s89
    %s90 = sphi 0, %s87
    %s91 = sphi 0, %s90
    %s107 = sphi 0, %s91
  $region4: #{deconv2d_block.3} parent=0 // loop_header_branch
    %12 = sbr.rel (%p10) target = $region8
  $region5: #{deconv2d_block.3} parent=0 // loop_body
    %s14 = ssub.s32 %s9, 1
    %s15 = ssub.s32 %s9, 2
    %s16 = sadd.s32 %s9, 1
    %s17 = ssub.s32 %s9, %s16
    %p18 = scmp.eq.s32.totalorder %s17, 0
    %s20 = sadd.s32 %s19, 1
    %s21 = scalar_select %p18, %s19, %s20
    %p24 = pneg %p18
    %p25 = scmp.eq.s32.totalorder %s9, 1
    %p26 = por %p24, %p25
    %p27 = scmp.ne.s32.totalorder %s19, %s22
    %p28 = scmp.eq.s32.totalorder %s9, 0
    %p29 = por %p27, %p28
    %p30 = scmp.ne.s32.totalorder %s19, %s22
    %p31 = scmp.eq.s32.totalorder %s14, 1
    %p32 = por %p30, %p31
    %p33 = scmp.ne.s32.totalorder %s22, %s23
    %p34 = scmp.eq.s32.totalorder %s14, 0
    %p35 = por %p33, %p34
    %p36 = scmp.ne.s32.totalorder %s22, %s23
    %p37 = scmp.eq.s32.totalorder %s15, 1
    %p38 = por %p36, %p37
    %p40 = scmp.ne.s32.totalorder %s23, %s39
    %p41 = scmp.eq.s32.totalorder %s15, 0
    %p42 = por %p40, %p41
    %s44 = sadd.s32 %s43, 1
    %p47 = scmp.eq.s32.totalorder %s9, 1
    %p48 = scmp.ne.s32.totalorder %s43, %s45
    %p49 = scmp.eq.s32.totalorder %s9, 0
    %p50 = por %p48, %p49
    %p51 = scmp.ne.s32.totalorder %s43, %s45
    %p52 = scmp.eq.s32.totalorder %s14, 1
    %p53 = por %p51, %p52
    %p54 = scmp.ne.s32.totalorder %s45, %s46
    %p55 = scmp.eq.s32.totalorder %s14, 0
    %p56 = por %p54, %p55
    %p57 = scmp.ne.s32.totalorder %s45, %s46
    %p58 = scmp.eq.s32.totalorder %s15, 1
    %p59 = por %p57, %p58
    %p61 = scmp.ne.s32.totalorder %s46, %s60
    %p62 = scmp.eq.s32.totalorder %s15, 0
    %p63 = por %p61, %p62
    %s65 = sadd.s32 %s64, 1
    %p68 = scmp.eq.s32.totalorder %s9, 1
    %p69 = scmp.ne.s32.totalorder %s64, %s66
    %p70 = scmp.eq.s32.totalorder %s9, 0
    %p71 = por %p69, %p70
    %p72 = scmp.ne.s32.totalorder %s64, %s66
    %p73 = scmp.eq.s32.totalorder %s14, 1
    %p74 = por %p72, %p73
    %p75 = scmp.ne.s32.totalorder %s66, %s67
    %p76 = scmp.eq.s32.totalorder %s14, 0
    %p77 = por %p75, %p76
    %p78 = scmp.ne.s32.totalorder %s66, %s67
    %p79 = scmp.eq.s32.totalorder %s15, 1
    %p80 = por %p78, %p79
    %p82 = scmp.ne.s32.totalorder %s67, %s81
    %p83 = scmp.eq.s32.totalorder %s15, 0
    %p84 = por %p82, %p83
    %s85 = ssub.s32 %s9, %s16
    %p86 = scmp.eq.s32.totalorder %s85, 0
    %s88 = sadd.s32 %s87, 1
    %s89 = scalar_select %p86, %s87, %s88
    %p92 = pneg %p86
    %p93 = scmp.eq.s32.totalorder %s9, 1
    %p94 = por %p92, %p93
    %p95 = scmp.ne.s32.totalorder %s87, %s90
    %p96 = scmp.eq.s32.totalorder %s9, 0
    %p97 = por %p95, %p96
    %p98 = scmp.ne.s32.totalorder %s87, %s90
    %p99 = scmp.eq.s32.totalorder %s14, 1
    %p100 = por %p98, %p99
    %p101 = scmp.ne.s32.totalorder %s90, %s91
    %p102 = scmp.eq.s32.totalorder %s14, 0
    %p103 = por %p101, %p102
    %p104 = scmp.ne.s32.totalorder %s90, %s91
    %p105 = scmp.eq.s32.totalorder %s15, 1
    %p106 = por %p104, %p105
    %p108 = scmp.ne.s32.totalorder %s91, %s107
    %p109 = scmp.eq.s32.totalorder %s15, 0
    %p110 = por %p108, %p109
    %p111 = scmp.le.s32.totalorder 1, %s9
    %p112 = scmp.lt.s32.totalorder %s9, 3
    %p113 = pnand %p111, %p112
    %p114 = pneg %p113
    // Predicated region
    $region9: #{deconv2d_block.3} parent=5 // pred_check
      _
    $region10: #{deconv2d_block.3} parent=5 // pred_check_branch
      %116 = sbr.rel (%p113) target = $region12
    $region11: #{deconv2d_block.3} parent=5 // pred_region
      %s117 = ssub.s32 %s9, 1
      // Predicated region
      $region13: #{deconv2d_block.3} parent=11 // pred_check
        %p118 = pneg %p56
      $region14: #{deconv2d_block.3} parent=11 // pred_check_branch
        %120 = sbr.rel (%p118) target = $region16
      $region15: #{deconv2d_block.3} parent=11 // pred_region
        _
      $region16: #{deconv2d_block.3} parent=11 // pred_fallthru
        _
      // Predicated region
      $region17: #{deconv2d_block.3} parent=11 // pred_check
        %p121 = pneg %p77
      $region18: #{deconv2d_block.3} parent=11 // pred_check_branch
        %123 = sbr.rel (%p121) target = $region20
      $region19: #{deconv2d_block.3} parent=11 // pred_region
        _
      $region20: #{deconv2d_block.3} parent=11 // pred_fallthru
        _
    $region12: #{deconv2d_block.3} parent=5 // pred_fallthru
      _
    %p124 = scmp.lt.s32.totalorder %s9, 2
    // Predicated region
    $region21: #{deconv2d_block.3} parent=5 // pred_check
      %p125 = pneg %p124
    $region22: #{deconv2d_block.3} parent=5 // pred_check_branch
      %127 = sbr.rel (%p125) target = $region24
    $region23: #{deconv2d_block.3} parent=5 // pred_region
      // Predicated region
      $region25: #{deconv2d_block.3} parent=23 // pred_check
        %p128 = pneg %p29
      $region26: #{deconv2d_block.3} parent=23 // pred_check_branch
        %130 = sbr.rel (%p128) target = $region28
      $region27: #{deconv2d_block.3} parent=23 // pred_region
        %s131 = smul.u32 8, %s9
        %p132 = scmp.lt.s32.totalorder %s131, 15
        %s133 = scalar_select %p132, %s131, 15
        %s134 = smul.addr %s133, 8
        %s135 = scalar_lea.vmem %s0, %s134
        %s136 = smul.u32 8, %s9
      $region28: #{deconv2d_block.3} parent=23 // pred_fallthru
        _
    $region24: #{deconv2d_block.3} parent=5 // pred_fallthru
      _
    %p137 = scmp.le.s32.totalorder 1, %s9
    %p138 = scmp.lt.s32.totalorder %s9, 3
    %p139 = pnand %p137, %p138
    %p140 = pneg %p139
    // Predicated region
    $region29: #{deconv2d_block.3} parent=5 // pred_check
      _
    $region30: #{deconv2d_block.3} parent=5 // pred_check_branch
      %142 = sbr.rel (%p139) target = $region32
    $region31: #{deconv2d_block.3} parent=5 // pred_region
      %s143 = ssub.s32 %s9, 1
      %s144 = smul.u32 8, %s14
      %p145 = scmp.lt.s32.totalorder %s144, 15
      %s146 = scalar_select %p145, %s144, 15
      %s147 = smul.addr %s146, 8
      %s148 = scalar_lea.vmem %s0, %s147
      %p149 = pneg %p35
      %p150 = pneg %p32
      %p151 = pneg %p56
      %p152 = pneg %p53
      %p153 = pneg %p77
      %p154 = pneg %p74
      %p155 = pneg %p103
      %p156 = pneg %p100
      %s157 = smul.u32 8, %s14
      %p158 = scmp.lt.s32.totalorder %s157, 15
      %s159 = scalar_select %p158, %s157, 15
      %s160 = smul.addr %s159, 8
      %s161 = scalar_lea.vmem %s3, %s160
      %s162 = smul.u32 8, %s14
      %p163 = scmp.lt.s32.totalorder %s162, 15
      %s164 = scalar_select %p163, %s162, 15
      %s165 = smul.addr %s164, 8
      %s166 = scalar_lea.vmem %s0, %s165
      %s167 = smul.u32 8, %s14
      %s168 = smul.u32 8, %s14
      %p169 = scmp.lt.s32.totalorder %s168, 15
      %s170 = scalar_select %p169, %s168, 15
      %s171 = smul.addr %s170, 8
      %s172 = scalar_lea.vmem %s3, %s171
      %s173 = smul.u32 8, %s14
      %v174 = vld [vmem:[%s166] sm:$0xff]
      %v175 = vld [vmem:[%s166 + $0x8] sm:$0xff]
      %v176 = vld [vmem:[%s166 + $0x10] sm:$0xff]
      %v177 = vld [vmem:[%s166 + $0x18] sm:$0xff]
      %v178 = vld [vmem:[%s166 + $0x20] sm:$0xff]
      %v179 = vld [vmem:[%s166 + $0x28] sm:$0xff]
      %v180 = vld [vmem:[%s166 + $0x30] sm:$0xff]
      %v181 = vld [vmem:[%s166 + $0x38] sm:$0xff]
      %v182 = vld [vmem:[%s1] sm:$0x1]
      %v184 = vlaneseq
      %v185 = vshrl.u32 %v184, 7
      %v186 = vsub.s32 0, %v185
      %v187 = vrot.slane %v182, %v186
      %v189 = vmul.f32 %v174, %v187
      %v190 = vmul.f32 %v175, %v187
      %v191 = vmul.f32 %v176, %v187
      %v192 = vmul.f32 %v177, %v187
      %v193 = vmul.f32 %v178, %v187
      %v194 = vmul.f32 %v179, %v187
      %v195 = vmul.f32 %v180, %v187
      %v196 = vmul.f32 %v181, %v187
      %v197 = vld [vmem:[%s2] sm:$0x1]
      %v199 = vlaneseq
      %v200 = vshrl.u32 %v199, 7
      %v201 = vsub.s32 0, %v200
      %v202 = vrot.slane %v197, %v201
      %v204 = vadd.f32 %v189, %v202
      %v205 = vadd.f32 %v190, %v202
      %v206 = vadd.f32 %v191, %v202
      %v207 = vadd.f32 %v192, %v202
      %v208 = vadd.f32 %v193, %v202
      %v209 = vadd.f32 %v194, %v202
      %v210 = vadd.f32 %v195, %v202
      %v211 = vadd.f32 %v196, %v202
      %v212 = vmax.f32 %v204, 0.0
      %v213 = vmax.f32 %v205, 0.0
      %v214 = vmax.f32 %v206, 0.0
      %v215 = vmax.f32 %v207, 0.0
      %v216 = vmax.f32 %v208, 0.0
      %v217 = vmax.f32 %v209, 0.0
      %v218 = vmax.f32 %v210, 0.0
      %v219 = vmax.f32 %v211, 0.0
      %220 = vst [vmem:[%s172] sm:$0xff] %v212
      %221 = vst [vmem:[%s172 + $0x8] sm:$0xff] %v213
      %222 = vst [vmem:[%s172 + $0x10] sm:$0xff] %v214
      %223 = vst [vmem:[%s172 + $0x18] sm:$0xff] %v215
      %224 = vst [vmem:[%s172 + $0x20] sm:$0xff] %v216
      %225 = vst [vmem:[%s172 + $0x28] sm:$0xff] %v217
      %226 = vst [vmem:[%s172 + $0x30] sm:$0xff] %v218
      %227 = vst [vmem:[%s172 + $0x38] sm:$0xff] %v219
      %s228 = smul.u32 8, %s14
      %p229 = scmp.lt.s32.totalorder %s228, 15
      %s230 = scalar_select %p229, %s228, 15
      %s231 = smul.addr %s230, 8
      %s232 = scalar_lea.vmem %s3, %s231
      // Predicated region
      $region33: #{deconv2d_block.3} parent=31 // pred_check
        %p233 = pneg %p100
      $region34: #{deconv2d_block.3} parent=31 // pred_check_branch
        %235 = sbr.rel (%p233) target = $region36
      $region35: #{deconv2d_block.3} parent=31 // pred_region
        %s236 = smul.u32 8, %s14
      $region36: #{deconv2d_block.3} parent=31 // pred_fallthru
        _
    $region32: #{deconv2d_block.3} parent=5 // pred_fallthru
      _
    %p237 = scmp.le.s32.totalorder 2, %s9
    // Predicated region
    $region37: #{deconv2d_block.3} parent=5 // pred_check
      %p238 = pneg %p237
    $region38: #{deconv2d_block.3} parent=5 // pred_check_branch
      %240 = sbr.rel (%p238) target = $region40
    $region39: #{deconv2d_block.3} parent=5 // pred_region
      %s241 = ssub.s32 %s9, 2
      // Predicated region
      $region41: #{deconv2d_block.3} parent=39 // pred_check
        %p242 = pneg %p106
      $region42: #{deconv2d_block.3} parent=39 // pred_check_branch
        %244 = sbr.rel (%p242) target = $region44
      $region43: #{deconv2d_block.3} parent=39 // pred_region
        %s245 = smul.u32 8, %s15
        %p246 = scmp.lt.s32.totalorder %s245, 15
        %s247 = scalar_select %p246, %s245, 15
        %s248 = smul.addr %s247, 8
        %s249 = scalar_lea.vmem %s3, %s248
      $region44: #{deconv2d_block.3} parent=39 // pred_fallthru
        _
    $region40: #{deconv2d_block.3} parent=5 // pred_fallthru
      _
  $region6: #{deconv2d_block.3} parent=0 // loop_footer
    %s13 = sadd.s32 1, %s9
  $region7: #{deconv2d_block.3} parent=0 // loop_footer_branch
    %8 = sbr.rel target = $region3
  $region8: #{deconv2d_block.3} parent=0 // loop_exit
    _

// kernel: deconv2d_block.2
$region0: #{deconv2d_block.2}
  #allocation0 [shape = 'u32[]', space=smem, size = 0x4, offset = 0x4, fixed_abs, tag = 'smem constant byte address 0x4 - core index']
  #allocation1 [shape = 'u32[144,128]{1,0:T(1,128)}', space=vmem, size = 0x12000, scoped, tag = 'internal scratch']
  #allocation2 [shape = 'f32[18,18,5]{2,1,0:T(8,128)}', space=vmem, size = 0x36000, scoped, tag = 'scratch operand']
  %s0 = inlined_call_operand.vmem [shape: f32[2,16,16,4], index: 0, kind: input, shape index: {}]
  %s1 = inlined_call_operand.vmem [shape: f32[16,5,8], index: 1, kind: input, shape index: {}]
  %s2 = inlined_call_operand.vmem [shape: f32[1,8], index: 2, kind: input, shape index: {}]
  %s3 = inlined_call_operand.vmem [shape: f32[8,16,16,8], index: 3, kind: output, shape index: {0}]
  %s4 = inlined_call_operand.vmem [shape: f32[2,8,8], index: 4, kind: output, shape index: {1}]
  %5 = xla_tuple %s3, %s4
  %s6 = sld [smem:[#allocation0]]
  $region53: #{deconv2d_block.2} parent=0
    _
  %s8 = ssub.s32 1, %s6
  %s9 = scalar_select 0, %s8, %s6
  loop: start=0, step=1, limit=4
  $region2: #{deconv2d_block.2} parent=0 // loop_pre_header
    _
  $region3: #{deconv2d_block.2} parent=0 // loop_header
    %s11 = sphi 0, %s15
    %p12 = scmp.ge.s32.totalorder %s11, 4
    %s21 = sphi 0, %s23
    %s24 = sphi 0, %s21
    %s25 = sphi 0, %s24
    %s41 = sphi 0, %s25
    %s45 = sphi 0, %s45
    %s47 = sphi 0, %s45
    %s48 = sphi 0, %s47
    %s62 = sphi 0, %s48
    %s66 = sphi 0, %s66
    %s68 = sphi 0, %s66
    %s69 = sphi 0, %s68
    %s83 = sphi 0, %s69
    %s89 = sphi 0, %s91
    %s92 = sphi 0, %s89
    %s93 = sphi 0, %s92
    %s109 = sphi 0, %s93
    %s115 = sphi 0, %s117
    %s118 = sphi 0, %s115
    %s119 = sphi 0, %s118
    %s135 = sphi 0, %s119
  $region4: #{deconv2d_block.2} parent=0 // loop_header_branch
    %14 = sbr.rel (%p12) target = $region8
  $region5: #{deconv2d_block.2} parent=0 // loop_body
    %s16 = ssub.s32 %s11, 1
    %s17 = ssub.s32 %s11, 2
    %s18 = sadd.s32 %s11, 1
    %s19 = ssub.s32 %s11, %s18
    %p20 = scmp.eq.s32.totalorder %s19, 0
    %s22 = sadd.s32 %s21, 1
    %s23 = scalar_select %p20, %s21, %s22
    %p26 = pneg %p20
    %p27 = scmp.eq.s32.totalorder %s11, 1
    %p28 = por %p26, %p27
    %p29 = scmp.ne.s32.totalorder %s21, %s24
    %p30 = scmp.eq.s32.totalorder %s11, 0
    %p31 = por %p29, %p30
    %p32 = scmp.ne.s32.totalorder %s21, %s24
    %p33 = scmp.eq.s32.totalorder %s16, 1
    %p34 = por %p32, %p33
    %p35 = scmp.ne.s32.totalorder %s24, %s25
    %p36 = scmp.eq.s32.totalorder %s16, 0
    %p37 = por %p35, %p36
    %p38 = scmp.ne.s32.totalorder %s24, %s25
    %p39 = scmp.eq.s32.totalorder %s17, 1
    %p40 = por %p38, %p39
    %p42 = scmp.ne.s32.totalorder %s25, %s41
    %p43 = scmp.eq.s32.totalorder %s17, 0
    %p44 = por %p42, %p43
    %s46 = sadd.s32 %s45, 1
    %p49 = scmp.eq.s32.totalorder %s11, 1
    %p50 = scmp.ne.s32.totalorder %s45, %s47
    %p51 = scmp.eq.s32.totalorder %s11, 0
    %p52 = por %p50, %p51
    %p53 = scmp.ne.s32.totalorder %s45, %s47
    %p54 = scmp.eq.s32.totalorder %s16, 1
    %p55 = por %p53, %p54
    %p56 = scmp.ne.s32.totalorder %s47, %s48
    %p57 = scmp.eq.s32.totalorder %s16, 0
    %p58 = por %p56, %p57
    %p59 = scmp.ne.s32.totalorder %s47, %s48
    %p60 = scmp.eq.s32.totalorder %s17, 1
    %p61 = por %p59, %p60
    %p63 = scmp.ne.s32.totalorder %s48, %s62
    %p64 = scmp.eq.s32.totalorder %s17, 0
    %p65 = por %p63, %p64
    %s67 = sadd.s32 %s66, 1
    %p70 = scmp.eq.s32.totalorder %s11, 1
    %p71 = scmp.ne.s32.totalorder %s66, %s68
    %p72 = scmp.eq.s32.totalorder %s11, 0
    %p73 = por %p71, %p72
    %p74 = scmp.ne.s32.totalorder %s66, %s68
    %p75 = scmp.eq.s32.totalorder %s16, 1
    %p76 = por %p74, %p75
    %p77 = scmp.ne.s32.totalorder %s68, %s69
    %p78 = scmp.eq.s32.totalorder %s16, 0
    %p79 = por %p77, %p78
    %p80 = scmp.ne.s32.totalorder %s68, %s69
    %p81 = scmp.eq.s32.totalorder %s17, 1
    %p82 = por %p80, %p81
    %p84 = scmp.ne.s32.totalorder %s69, %s83
    %p85 = scmp.eq.s32.totalorder %s17, 0
    %p86 = por %p84, %p85
    %s87 = ssub.s32 %s11, %s18
    %p88 = scmp.eq.s32.totalorder %s87, 0
    %s90 = sadd.s32 %s89, 1
    %s91 = scalar_select %p88, %s89, %s90
    %p94 = pneg %p88
    %p95 = scmp.eq.s32.totalorder %s11, 1
    %p96 = por %p94, %p95
    %p97 = scmp.ne.s32.totalorder %s89, %s92
    %p98 = scmp.eq.s32.totalorder %s11, 0
    %p99 = por %p97, %p98
    %p100 = scmp.ne.s32.totalorder %s89, %s92
    %p101 = scmp.eq.s32.totalorder %s16, 1
    %p102 = por %p100, %p101
    %p103 = scmp.ne.s32.totalorder %s92, %s93
    %p104 = scmp.eq.s32.totalorder %s16, 0
    %p105 = por %p103, %p104
    %p106 = scmp.ne.s32.totalorder %s92, %s93
    %p107 = scmp.eq.s32.totalorder %s17, 1
    %p108 = por %p106, %p107
    %p110 = scmp.ne.s32.totalorder %s93, %s109
    %p111 = scmp.eq.s32.totalorder %s17, 0
    %p112 = por %p110, %p111
    %s113 = ssub.s32 %s11, %s18
    %p114 = scmp.eq.s32.totalorder %s113, 0
    %s116 = sadd.s32 %s115, 1
    %s117 = scalar_select %p114, %s115, %s116
    %p120 = pneg %p114
    %p121 = scmp.eq.s32.totalorder %s11, 1
    %p122 = por %p120, %p121
    %p123 = scmp.ne.s32.totalorder %s115, %s118
    %p124 = scmp.eq.s32.totalorder %s11, 0
    %p125 = por %p123, %p124
    %p126 = scmp.ne.s32.totalorder %s115, %s118
    %p127 = scmp.eq.s32.totalorder %s16, 1
    %p128 = por %p126, %p127
    %p129 = scmp.ne.s32.totalorder %s118, %s119
    %p130 = scmp.eq.s32.totalorder %s16, 0
    %p131 = por %p129, %p130
    %p132 = scmp.ne.s32.totalorder %s118, %s119
    %p133 = scmp.eq.s32.totalorder %s17, 1
    %p134 = por %p132, %p133
    %p136 = scmp.ne.s32.totalorder %s119, %s135
    %p137 = scmp.eq.s32.totalorder %s17, 0
    %p138 = por %p136, %p137
    %p139 = scmp.le.s32.totalorder 1, %s11
    %p140 = scmp.lt.s32.totalorder %s11, 3
    %p141 = pnand %p139, %p140
    %p142 = pneg %p141
    // Predicated region
    $region9: #{deconv2d_block.2} parent=5 // pred_check
      _
    $region10: #{deconv2d_block.2} parent=5 // pred_check_branch
      %144 = sbr.rel (%p141) target = $region12
    $region11: #{deconv2d_block.2} parent=5 // pred_region
      %s145 = ssub.s32 %s11, 1
      // Predicated region
      $region13: #{deconv2d_block.2} parent=11 // pred_check
        %p146 = pneg %p58
      $region14: #{deconv2d_block.2} parent=11 // pred_check_branch
        %148 = sbr.rel (%p146) target = $region16
      $region15: #{deconv2d_block.2} parent=11 // pred_region
        _
      $region16: #{deconv2d_block.2} parent=11 // pred_fallthru
        _
      // Predicated region
      $region17: #{deconv2d_block.2} parent=11 // pred_check
        %p149 = pneg %p79
      $region18: #{deconv2d_block.2} parent=11 // pred_check_branch
        %151 = sbr.rel (%p149) target = $region20
      $region19: #{deconv2d_block.2} parent=11 // pred_region
        _
      $region20: #{deconv2d_block.2} parent=11 // pred_fallthru
        _
    $region12: #{deconv2d_block.2} parent=5 // pred_fallthru
      _
    %p152 = scmp.lt.s32.totalorder %s11, 2
    // Predicated region
    $region21: #{deconv2d_block.2} parent=5 // pred_check
      %p153 = pneg %p152
    $region22: #{deconv2d_block.2} parent=5 // pred_check_branch
      %155 = sbr.rel (%p153) target = $region24
    $region23: #{deconv2d_block.2} parent=5 // pred_region
      // Predicated region
      $region25: #{deconv2d_block.2} parent=23 // pred_check
        %p156 = pneg %p31
      $region26: #{deconv2d_block.2} parent=23 // pred_check_branch
        %158 = sbr.rel (%p156) target = $region28
      $region27: #{deconv2d_block.2} parent=23 // pred_region
        %p159 = scmp.lt.s32.totalorder %s11, 1
        %s160 = scalar_select %p159, %s11, 1
        %s161 = smul.addr %s160, 32
        %s162 = smul.addr %s161, 8
        %s163 = scalar_lea.vmem %s0, %s162
      $region28: #{deconv2d_block.2} parent=23 // pred_fallthru
        _
    $region24: #{deconv2d_block.2} parent=5 // pred_fallthru
      _
    %p164 = scmp.le.s32.totalorder 1, %s11
    %p165 = scmp.lt.s32.totalorder %s11, 3
    %p166 = pnand %p164, %p165
    %p167 = pneg %p166
    // Predicated region
    $region29: #{deconv2d_block.2} parent=5 // pred_check
      _
    $region30: #{deconv2d_block.2} parent=5 // pred_check_branch
      %169 = sbr.rel (%p166) target = $region32
    $region31: #{deconv2d_block.2} parent=5 // pred_region
      %s170 = ssub.s32 %s11, 1
      %p171 = scmp.lt.s32.totalorder %s16, 1
      %s172 = scalar_select %p171, %s16, 1
      %s173 = smul.addr %s172, 32
      %s174 = smul.addr %s173, 8
      %s175 = scalar_lea.vmem %s0, %s174
      %p176 = pneg %p37
      %p177 = pneg %p34
      %p178 = pneg %p58
      %p179 = pneg %p55
      %p180 = pneg %p79
      %p181 = pneg %p76
      %p182 = pneg %p105
      %p183 = pneg %p102
      %s184 = smul.u32 4, %s16
      %p185 = scmp.lt.s32.totalorder %s184, 7
      %s186 = scalar_select %p185, %s184, 7
      %s187 = smul.addr %s186, 32
      %s188 = smul.addr %s187, 8
      %s189 = scalar_lea.vmem %s3, %s188
      %p190 = pneg %p131
      %p191 = pneg %p128
      %p192 = scmp.lt.s32.totalorder %s16, 1
      %s193 = scalar_select %p192, %s16, 1
      %s194 = smul.addr %s193, 8
      %s195 = scalar_lea.vmem %s4, %s194
      %p196 = scmp.lt.s32.totalorder %s16, 1
      %s197 = scalar_select %p196, %s16, 1
      %s198 = smul.addr %s197, 32
      %s199 = smul.addr %s198, 8
      %s200 = scalar_lea.vmem %s0, %s199
      %s201 = smul.u32 4, %s16
      %p202 = scmp.lt.s32.totalorder %s201, 7
      %s203 = scalar_select %p202, %s201, 7
      %s204 = smul.addr %s203, 32
      %s205 = smul.addr %s204, 8
      %s206 = scalar_lea.vmem %s3, %s205
      %s207 = smul.u32 4, %s16
      %p208 = scmp.lt.s32.totalorder %s16, 1
      %s209 = scalar_select %p208, %s16, 1
      %s210 = smul.addr %s209, 8
      %s211 = scalar_lea.vmem %s4, %s210
      %vm212 = vcmask 39936
      %213 = vst.msk [vmem:[#allocation2] sm:$0xff] %vm212, 0.0
      %214 = vst.msk [vmem:[#allocation2 + $0x8] sm:$0xff] %vm212, 0.0
      %vm215 = vcmask 33792
      %216 = vst.msk [vmem:[#allocation2 + $0x10] sm:$0x3] %vm215, 0.0
      %217 = vst.msk [vmem:[#allocation2 + $0x18] sm:$0xff] %vm212, 0.0
      %218 = vst.msk [vmem:[#allocation2 + $0x20] sm:$0xff] %vm212, 0.0
      %219 = vst.msk [vmem:[#allocation2 + $0x28] sm:$0x3] %vm215, 0.0
      %220 = vst.msk [vmem:[#allocation2 + $0x30] sm:$0xff] %vm212, 0.0
      %221 = vst.msk [vmem:[#allocation2 + $0x38] sm:$0xff] %vm212, 0.0
      %222 = vst.msk [vmem:[#allocation2 + $0x40] sm:$0x3] %vm215, 0.0
      %223 = vst.msk [vmem:[#allocation2 + $0x48] sm:$0xff] %vm212, 0.0
      %224 = vst.msk [vmem:[#allocation2 + $0x50] sm:$0xff] %vm212, 0.0
      %225 = vst.msk [vmem:[#allocation2 + $0x58] sm:$0x3] %vm215, 0.0
      %226 = vst.msk [vmem:[#allocation2 + $0x60] sm:$0xff] %vm212, 0.0
      %227 = vst.msk [vmem:[#allocation2 + $0x68] sm:$0xff] %vm212, 0.0
      %228 = vst.msk [vmem:[#allocation2 + $0x70] sm:$0x3] %vm215, 0.0
      %229 = vst.msk [vmem:[#allocation2 + $0x78] sm:$0xff] %vm212, 0.0
      %230 = vst.msk [vmem:[#allocation2 + $0x80] sm:$0xff] %vm212, 0.0
      %231 = vst.msk [vmem:[#allocation2 + $0x88] sm:$0x3] %vm215, 0.0
      %232 = vst.msk [vmem:[#allocation2 + $0x90] sm:$0xff] %vm212, 0.0
      %233 = vst.msk [vmem:[#allocation2 + $0x98] sm:$0xff] %vm212, 0.0
      %234 = vst.msk [vmem:[#allocation2 + $0xa0] sm:$0x3] %vm215, 0.0
      %235 = vst.msk [vmem:[#allocation2 + $0xa8] sm:$0xff] %vm212, 0.0
      %236 = vst.msk [vmem:[#allocation2 + $0xb0] sm:$0xff] %vm212, 0.0
      %237 = vst.msk [vmem:[#allocation2 + $0xb8] sm:$0x3] %vm215, 0.0
      %238 = vst.msk [vmem:[#allocation2 + $0xc0] sm:$0xff] %vm212, 0.0
      %239 = vst.msk [vmem:[#allocation2 + $0xc8] sm:$0xff] %vm212, 0.0
      %240 = vst.msk [vmem:[#allocation2 + $0xd0] sm:$0x3] %vm215, 0.0
      %241 = vst.msk [vmem:[#allocation2 + $0xd8] sm:$0xff] %vm212, 0.0
      %242 = vst.msk [vmem:[#allocation2 + $0xe0] sm:$0xff] %vm212, 0.0
      %243 = vst.msk [vmem:[#allocation2 + $0xe8] sm:$0x3] %vm215, 0.0
      %244 = vst.msk [vmem:[#allocation2 + $0xf0] sm:$0xff] %vm212, 0.0
      %245 = vst.msk [vmem:[#allocation2 + $0xf8] sm:$0xff] %vm212, 0.0
      %246 = vst.msk [vmem:[#allocation2 + $0x100] sm:$0x3] %vm215, 0.0
      %247 = vst.msk [vmem:[#allocation2 + $0x108] sm:$0xff] %vm212, 0.0
      %248 = vst.msk [vmem:[#allocation2 + $0x110] sm:$0xff] %vm212, 0.0
      %249 = vst.msk [vmem:[#allocation2 + $0x118] sm:$0x3] %vm215, 0.0
      %250 = vst.msk [vmem:[#allocation2 + $0x120] sm:$0xff] %vm212, 0.0
      %251 = vst.msk [vmem:[#allocation2 + $0x128] sm:$0xff] %vm212, 0.0
      %252 = vst.msk [vmem:[#allocation2 + $0x130] sm:$0x3] %vm215, 0.0
      %253 = vst.msk [vmem:[#allocation2 + $0x138] sm:$0xff] %vm212, 0.0
      %254 = vst.msk [vmem:[#allocation2 + $0x140] sm:$0xff] %vm212, 0.0
      %255 = vst.msk [vmem:[#allocation2 + $0x148] sm:$0x3] %vm215, 0.0
      %256 = vst.msk [vmem:[#allocation2 + $0x150] sm:$0xff] %vm212, 0.0
      %257 = vst.msk [vmem:[#allocation2 + $0x158] sm:$0xff] %vm212, 0.0
      %258 = vst.msk [vmem:[#allocation2 + $0x160] sm:$0x3] %vm215, 0.0
      %259 = vst.msk [vmem:[#allocation2 + $0x168] sm:$0xff] %vm212, 0.0
      %260 = vst.msk [vmem:[#allocation2 + $0x170] sm:$0xff] %vm212, 0.0
      %261 = vst.msk [vmem:[#allocation2 + $0x178] sm:$0x3] %vm215, 0.0
      %262 = vst.msk [vmem:[#allocation2 + $0x180] sm:$0xff] %vm212, 0.0
      %263 = vst.msk [vmem:[#allocation2 + $0x188] sm:$0xff] %vm212, 0.0
      %264 = vst.msk [vmem:[#allocation2 + $0x190] sm:$0x3] %vm215, 0.0
      %265 = vst.msk [vmem:[#allocation2 + $0x198] sm:$0xff] %vm212, 0.0
      %266 = vst.msk [vmem:[#allocation2 + $0x1a0] sm:$0xff] %vm212, 0.0
      %267 = vst.msk [vmem:[#allocation2 + $0x1a8] sm:$0x3] %vm215, 0.0
      %v268 = vld [vmem:[%s200] sm:$0xff]
      %v269 = vld [vmem:[%s200 + $0x8] sm:$0xff]
      %v270 = vld [vmem:[%s200 + $0x10] sm:$0xff]
      %v271 = vld [vmem:[%s200 + $0x18] sm:$0xff]
      %v272 = vld [vmem:[%s200 + $0x20] sm:$0xff]
      %v273 = vld [vmem:[%s200 + $0x28] sm:$0xff]
      %v274 = vld [vmem:[%s200 + $0x30] sm:$0xff]
      %v275 = vld [vmem:[%s200 + $0x38] sm:$0xff]
      %v276 = vld [vmem:[%s200 + $0x40] sm:$0xff]
      %v277 = vld [vmem:[%s200 + $0x48] sm:$0xff]
      %v278 = vld [vmem:[%s200 + $0x50] sm:$0xff]
      %v279 = vld [vmem:[%s200 + $0x58] sm:$0xff]
      %v280 = vld [vmem:[%s200 + $0x60] sm:$0xff]
      %v281 = vld [vmem:[%s200 + $0x68] sm:$0xff]
      %v282 = vld [vmem:[%s200 + $0x70] sm:$0xff]
      %v283 = vld [vmem:[%s200 + $0x78] sm:$0xff]
      %v284 = vld [vmem:[%s200 + $0x80] sm:$0xff]
      %v285 = vld [vmem:[%s200 + $0x88] sm:$0xff]
      %v286 = vld [vmem:[%s200 + $0x90] sm:$0xff]
      %v287 = vld [vmem:[%s200 + $0x98] sm:$0xff]
      %v288 = vld [vmem:[%s200 + $0xa0] sm:$0xff]
      %v289 = vld [vmem:[%s200 + $0xa8] sm:$0xff]
      %v290 = vld [vmem:[%s200 + $0xb0] sm:$0xff]
      %v291 = vld [vmem:[%s200 + $0xb8] sm:$0xff]
      %v292 = vld [vmem:[%s200 + $0xc0] sm:$0xff]
      %v293 = vld [vmem:[%s200 + $0xc8] sm:$0xff]
      %v294 = vld [vmem:[%s200 + $0xd0] sm:$0xff]
      %v295 = vld [vmem:[%s200 + $0xd8] sm:$0xff]
      %v296 = vld [vmem:[%s200 + $0xe0] sm:$0xff]
      %v297 = vld [vmem:[%s200 + $0xe8] sm:$0xff]
      %v298 = vld [vmem:[%s200 + $0xf0] sm:$0xff]
      %v299 = vld [vmem:[%s200 + $0xf8] sm:$0xff]
      %s300 = scalar_lea.vmem [#allocation2], 24
      %vm301 = vcmask 31744
      %302 = vst.msk [vmem:[%s300 + $0x1] sm:$0xff] %vm301, %v268
      %303 = vst.msk [vmem:[%s300 + $0x9] sm:$0xff] %vm301, %v269
      %304 = vst.msk [vmem:[%s300 + $0x19] sm:$0xff] %vm301, %v270
      %305 = vst.msk [vmem:[%s300 + $0x21] sm:$0xff] %vm301, %v271
      %306 = vst.msk [vmem:[%s300 + $0x31] sm:$0xff] %vm301, %v272
      %307 = vst.msk [vmem:[%s300 + $0x39] sm:$0xff] %vm301, %v273
      %308 = vst.msk [vmem:[%s300 + $0x49] sm:$0xff] %vm301, %v274
      %309 = vst.msk [vmem:[%s300 + $0x51] sm:$0xff] %vm301, %v275
      %310 = vst.msk [vmem:[%s300 + $0x61] sm:$0xff] %vm301, %v276
      %311 = vst.msk [vmem:[%s300 + $0x69] sm:$0xff] %vm301, %v277
      %312 = vst.msk [vmem:[%s300 + $0x79] sm:$0xff] %vm301, %v278
      %313 = vst.msk [vmem:[%s300 + $0x81] sm:$0xff] %vm301, %v279
      %314 = vst.msk [vmem:[%s300 + $0x91] sm:$0xff] %vm301, %v280
      %315 = vst.msk [vmem:[%s300 + $0x99] sm:$0xff] %vm301, %v281
      %316 = vst.msk [vmem:[%s300 + $0xa9] sm:$0xff] %vm301, %v282
      %317 = vst.msk [vmem:[%s300 + $0xb1] sm:$0xff] %vm301, %v283
      %318 = vst.msk [vmem:[%s300 + $0xc1] sm:$0xff] %vm301, %v284
      %319 = vst.msk [vmem:[%s300 + $0xc9] sm:$0xff] %vm301, %v285
      %320 = vst.msk [vmem:[%s300 + $0xd9] sm:$0xff] %vm301, %v286
      %321 = vst.msk [vmem:[%s300 + $0xe1] sm:$0xff] %vm301, %v287
      %322 = vst.msk [vmem:[%s300 + $0xf1] sm:$0xff] %vm301, %v288
      %323 = vst.msk [vmem:[%s300 + $0xf9] sm:$0xff] %vm301, %v289
      %324 = vst.msk [vmem:[%s300 + $0x109] sm:$0xff] %vm301, %v290
      %325 = vst.msk [vmem:[%s300 + $0x111] sm:$0xff] %vm301, %v291
      %326 = vst.msk [vmem:[%s300 + $0x121] sm:$0xff] %vm301, %v292
      %327 = vst.msk [vmem:[%s300 + $0x129] sm:$0xff] %vm301, %v293
      %328 = vst.msk [vmem:[%s300 + $0x139] sm:$0xff] %vm301, %v294
      %329 = vst.msk [vmem:[%s300 + $0x141] sm:$0xff] %vm301, %v295
      %330 = vst.msk [vmem:[%s300 + $0x151] sm:$0xff] %vm301, %v296
      %331 = vst.msk [vmem:[%s300 + $0x159] sm:$0xff] %vm301, %v297
      %332 = vst.msk [vmem:[%s300 + $0x169] sm:$0xff] %vm301, %v298
      %333 = vst.msk [vmem:[%s300 + $0x171] sm:$0xff] %vm301, %v299
      %vm334 = vcmask 39968
      %335 = vst.msk [vmem:[%s300 + $0x1] sm:$0xff] %vm334, 1.0
      %336 = vst.msk [vmem:[%s300 + $0x9] sm:$0xff] %vm334, 1.0
      %337 = vst.msk [vmem:[%s300 + $0x19] sm:$0xff] %vm334, 1.0
      %338 = vst.msk [vmem:[%s300 + $0x21] sm:$0xff] %vm334, 1.0
      %339 = vst.msk [vmem:[%s300 + $0x31] sm:$0xff] %vm334, 1.0
      %340 = vst.msk [vmem:[%s300 + $0x39] sm:$0xff] %vm334, 1.0
      %341 = vst.msk [vmem:[%s300 + $0x49] sm:$0xff] %vm334, 1.0
      %342 = vst.msk [vmem:[%s300 + $0x51] sm:$0xff] %vm334, 1.0
      %343 = vst.msk [vmem:[%s300 + $0x61] sm:$0xff] %vm334, 1.0
      %344 = vst.msk [vmem:[%s300 + $0x69] sm:$0xff] %vm334, 1.0
      %345 = vst.msk [vmem:[%s300 + $0x79] sm:$0xff] %vm334, 1.0
      %346 = vst.msk [vmem:[%s300 + $0x81] sm:$0xff] %vm334, 1.0
      %347 = vst.msk [vmem:[%s300 + $0x91] sm:$0xff] %vm334, 1.0
      %348 = vst.msk [vmem:[%s300 + $0x99] sm:$0xff] %vm334, 1.0
      %349 = vst.msk [vmem:[%s300 + $0xa9] sm:$0xff] %vm334, 1.0
      %350 = vst.msk [vmem:[%s300 + $0xb1] sm:$0xff] %vm334, 1.0
      %351 = vst.msk [vmem:[%s300 + $0xc1] sm:$0xff] %vm334, 1.0
      %352 = vst.msk [vmem:[%s300 + $0xc9] sm:$0xff] %vm334, 1.0
      %353 = vst.msk [vmem:[%s300 + $0xd9] sm:$0xff] %vm334, 1.0
      %354 = vst.msk [vmem:[%s300 + $0xe1] sm:$0xff] %vm334, 1.0
      %355 = vst.msk [vmem:[%s300 + $0xf1] sm:$0xff] %vm334, 1.0
      %356 = vst.msk [vmem:[%s300 + $0xf9] sm:$0xff] %vm334, 1.0
      %357 = vst.msk [vmem:[%s300 + $0x109] sm:$0xff] %vm334, 1.0
      %358 = vst.msk [vmem:[%s300 + $0x111] sm:$0xff] %vm334, 1.0
      %359 = vst.msk [vmem:[%s300 + $0x121] sm:$0xff] %vm334, 1.0
      %360 = vst.msk [vmem:[%s300 + $0x129] sm:$0xff] %vm334, 1.0
      %361 = vst.msk [vmem:[%s300 + $0x139] sm:$0xff] %vm334, 1.0
      %362 = vst.msk [vmem:[%s300 + $0x141] sm:$0xff] %vm334, 1.0
      %363 = vst.msk [vmem:[%s300 + $0x151] sm:$0xff] %vm334, 1.0
      %364 = vst.msk [vmem:[%s300 + $0x159] sm:$0xff] %vm334, 1.0
      %365 = vst.msk [vmem:[%s300 + $0x169] sm:$0xff] %vm334, 1.0
      %366 = vst.msk [vmem:[%s300 + $0x171] sm:$0xff] %vm334, 1.0
      %v367 = vld [vmem:[%s2] sm:$0x1]
      %v368 = vld [vmem:[#allocation2] sm:$0xff]
      %v369 = vld [vmem:[#allocation2 + $0x8] sm:$0xff]
      %v370 = vld [vmem:[#allocation2 + $0x18] sm:$0xff]
      %v371 = vld [vmem:[#allocation2 + $0x20] sm:$0xff]
      %v372 = vld [vmem:[#allocation2 + $0x30] sm:$0xff]
      %v373 = vld [vmem:[#allocation2 + $0x38] sm:$0xff]
      %v374 = vld [vmem:[#allocation2 + $0x48] sm:$0xff]
      %v375 = vld [vmem:[#allocation2 + $0x50] sm:$0xff]
      %v376 = vld [vmem:[#allocation2 + $0x60] sm:$0xff]
      %v377 = vld [vmem:[#allocation2 + $0x68] sm:$0xff]
      %v378 = vld [vmem:[#allocation2 + $0x78] sm:$0xff]
      %v379 = vld [vmem:[#allocation2 + $0x80] sm:$0xff]
      %v380 = vld [vmem:[#allocation2 + $0x90] sm:$0xff]
      %v381 = vld [vmem:[#allocation2 + $0x98] sm:$0xff]
      %v382 = vld [vmem:[#allocation2 + $0xa8] sm:$0xff]
      %v383 = vld [vmem:[#allocation2 + $0xb0] sm:$0xff]
      %v384 = vld [vmem:[#allocation2 + $0xc0] sm:$0xff]
      %v385 = vld [vmem:[#allocation2 + $0xc8] sm:$0xff]
      %v386 = vld [vmem:[#allocation2 + $0xd8] sm:$0xff]
      %v387 = vld [vmem:[#allocation2 + $0xe0] sm:$0xff]
      %v388 = vld [vmem:[#allocation2 + $0xf0] sm:$0xff]
      %v389 = vld [vmem:[#allocation2 + $0xf8] sm:$0xff]
      %v390 = vld [vmem:[#allocation2 + $0x108] sm:$0xff]
      %v391 = vld [vmem:[#allocation2 + $0x110] sm:$0xff]
      %v392 = vld [vmem:[#allocation2 + $0x120] sm:$0xff]
      %v393 = vld [vmem:[#allocation2 + $0x128] sm:$0xff]
      %v394 = vld [vmem:[#allocation2 + $0x138] sm:$0xff]
      %v395 = vld [vmem:[#allocation2 + $0x140] sm:$0xff]
      %v396 = vld [vmem:[#allocation2 + $0x150] sm:$0xff]
      %v397 = vld [vmem:[#allocation2 + $0x158] sm:$0xff]
      %v398 = vld [vmem:[#allocation2 + $0x168] sm:$0xff]
      %v399 = vld [vmem:[#allocation2 + $0x170] sm:$0xff]
      %v400 = vld [vmem:[%s1] sm:$0x1f]
      %v401 = vld [vmem:[#allocation2 + $0x1] sm:$0xff]
      %v402 = vld [vmem:[#allocation2 + $0x9] sm:$0xff]
      %v403 = vld [vmem:[#allocation2 + $0x19] sm:$0xff]
      %v404 = vld [vmem:[#allocation2 + $0x21] sm:$0xff]
      %v405 = vld [vmem:[#allocation2 + $0x31] sm:$0xff]
      %v406 = vld [vmem:[#allocation2 + $0x39] sm:$0xff]
      %v407 = vld [vmem:[#allocation2 + $0x49] sm:$0xff]
      %v408 = vld [vmem:[#allocation2 + $0x51] sm:$0xff]
      %v409 = vld [vmem:[#allocation2 + $0x61] sm:$0xff]
      %v410 = vld [vmem:[#allocation2 + $0x69] sm:$0xff]
      %v411 = vld [vmem:[#allocation2 + $0x79] sm:$0xff]
      %v412 = vld [vmem:[#allocation2 + $0x81] sm:$0xff]
      %v413 = vld [vmem:[#allocation2 + $0x91] sm:$0xff]
      %v414 = vld [vmem:[#allocation2 + $0x99] sm:$0xff]
      %v415 = vld [vmem:[#allocation2 + $0xa9] sm:$0xff]
      %v416 = vld [vmem:[#allocation2 + $0xb1] sm:$0xff]
      %v417 = vld [vmem:[#allocation2 + $0xc1] sm:$0xff]
      %v418 = vld [vmem:[#allocation2 + $0xc9] sm:$0xff]
      %v419 = vld [vmem:[#allocation2 + $0xd9] sm:$0xff]
      %v420 = vld [vmem:[#allocation2 + $0xe1] sm:$0xff]
      %v421 = vld [vmem:[#allocation2 + $0xf1] sm:$0xff]
      %v422 = vld [vmem:[#allocation2 + $0xf9] sm:$0xff]
      %v423 = vld [vmem:[#allocation2 + $0x109] sm:$0xff]
      %v424 = vld [vmem:[#allocation2 + $0x111] sm:$0xff]
      %v425 = vld [vmem:[#allocation2 + $0x121] sm:$0xff]
      %v426 = vld [vmem:[#allocation2 + $0x129] sm:$0xff]
      %v427 = vld [vmem:[#allocation2 + $0x139] sm:$0xff]
      %v428 = vld [vmem:[#allocation2 + $0x141] sm:$0xff]
      %v429 = vld [vmem:[#allocation2 + $0x151] sm:$0xff]
      %v430 = vld [vmem:[#allocation2 + $0x159] sm:$0xff]
      %v431 = vld [vmem:[#allocation2 + $0x169] sm:$0xff]
      %v432 = vld [vmem:[#allocation2 + $0x171] sm:$0xff]
      %s433 = scalar_lea.vmem %s1, 8
      %v434 = vld [vmem:[%s433] sm:$0x1f]
      %v436 = vsel %vm212, %v401, 0
      %v439 = vsel %vm212, %v402, 0
      %v442 = vsel %vm212, %v403, 0
      %v445 = vsel %vm212, %v404, 0
      %v448 = vsel %vm212, %v405, 0
      %v451 = vsel %vm212, %v406, 0
      %v454 = vsel %vm212, %v407, 0
      %v457 = vsel %vm212, %v408, 0
      %v460 = vsel %vm212, %v409, 0
      %v463 = vsel %vm212, %v410, 0
      %v466 = vsel %vm212, %v411, 0
      %v469 = vsel %vm212, %v412, 0
      %v472 = vsel %vm212, %v413, 0
      %v475 = vsel %vm212, %v414, 0
      %v478 = vsel %vm212, %v415, 0
      %v481 = vsel %vm212, %v416, 0
      %v484 = vsel %vm212, %v417, 0
      %v487 = vsel %vm212, %v418, 0
      %v490 = vsel %vm212, %v419, 0
      %v493 = vsel %vm212, %v420, 0
      %v496 = vsel %vm212, %v421, 0
      %v499 = vsel %vm212, %v422, 0
      %v502 = vsel %vm212, %v423, 0
      %v505 = vsel %vm212, %v424, 0
      %v508 = vsel %vm212, %v425, 0
      %v511 = vsel %vm212, %v426, 0
      %v514 = vsel %vm212, %v427, 0
      %v517 = vsel %vm212, %v428, 0
      %v520 = vsel %vm212, %v429, 0
      %v523 = vsel %vm212, %v430, 0
      %v526 = vsel %vm212, %v431, 0
      %v529 = vsel %vm212, %v432, 0
      %vm531 = vcmask 1044480
      %v533 = vsel %vm531, %v434, 0
      %535 = vmatprep.subr.mxu0 0.0
      %536 = vmatpush1.msra.mxu0 0.0
      %537 = vmatprep.subr.mxu0 0.0
      %538 = vmatpush1.msra.mxu0 0.0
      %539 = vmatprep.subr.mxu0 0.0
      %540 = vmatpush1.msra.mxu0 0.0
      %541 = vmatprep.subr.mxu0 0.0
      %542 = vmatpush1.msra.mxu0 0.0
      %543 = vmatprep.subr.mxu0 0.0
      %544 = vmatpush1.msra.mxu0 0.0
      %545 = vmatprep.subr.mxu0 0.0
      %546 = vmatpush1.msra.mxu0 0.0
      %547 = vmatprep.subr.mxu0 0.0
      %548 = vmatpush1.msra.mxu0 0.0
      %549 = vmatprep.subr.mxu0 0.0
      %550 = vmatpush1.msra.mxu0 0.0
      %551 = vmatprep.subr.mxu0 0.0
      %552 = vmatpush1.msra.mxu0 0.0
      %553 = vmatprep.subr.mxu0 0.0
      %554 = vmatpush1.msra.mxu0 0.0
      %555 = vmatprep.subr.mxu0 0.0
      %556 = vmatpush1.msra.mxu0 0.0
      %557 = vmatprep.subr.mxu0 0.0
      %558 = vmatpush1.msra.mxu0 0.0
      %559 = vmatprep.subr.mxu0 0.0
      %560 = vmatpush1.msra.mxu0 0.0
      %561 = vmatprep.subr.mxu0 0.0
      %562 = vmatpush1.msra.mxu0 0.0
      %563 = vmatprep.subr.mxu0 0.0
      %564 = vmatpush1.msra.mxu0 0.0
      %565 = vmatprep.subr.mxu0 0.0
      %566 = vmatpush1.msra.mxu0 %v533
      %567 = vmatprep.subr.mxu0 0.0
      %568 = vmatpush2.msra.mxu0 0.0
      %569 = vmatprep.subr.mxu0 0.0
      %570 = vmatpush2.msra.mxu0 0.0
      %571 = vmatprep.subr.mxu0 0.0
      %572 = vmatpush2.msra.mxu0 0.0
      %573 = vmatprep.subr.mxu0 0.0
      %574 = vmatpush2.msra.mxu0 0.0
      %575 = vmatprep.subr.mxu0 0.0
      %576 = vmatpush2.msra.mxu0 0.0
      %577 = vmatprep.subr.mxu0 0.0
      %578 = vmatpush2.msra.mxu0 0.0
      %579 = vmatprep.subr.mxu0 0.0
      %580 = vmatpush2.msra.mxu0 0.0
      %581 = vmatprep.subr.mxu0 0.0
      %582 = vmatpush2.msra.mxu0 0.0
      %583 = vmatprep.subr.mxu0 0.0
      %584 = vmatpush2.msra.mxu0 0.0
      %585 = vmatprep.subr.mxu0 0.0
      %586 = vmatpush2.msra.mxu0 0.0
      %587 = vmatprep.subr.mxu0 0.0
      %588 = vmatpush2.msra.mxu0 0.0
      %589 = vmatprep.subr.mxu0 0.0
      %590 = vmatpush2.msra.mxu0 0.0
      %591 = vmatprep.subr.mxu0 0.0
      %592 = vmatpush2.msra.mxu0 0.0
      %593 = vmatprep.subr.mxu0 0.0
      %594 = vmatpush2.msra.mxu0 0.0
      %595 = vmatprep.subr.mxu0 0.0
      %596 = vmatpush2.msra.mxu0 0.0
      %597 = vmatprep.subr.mxu0 0.0
      %598 = vmatpush2.msra.mxu0 0.0
      %599 = vmatprep.mubr.f32.mxu0 0.0
      %600 = vmatmul.mubr.f32.gmra.mxu0 %v436
      %v601 = vpop.f32.mrf.mxu0
      %v602 = vadd.f32 0.0, %v601
      %v603 = vpop.f32.mrf.mxu0
      %604 = vmatprep.mubr.f32.mxu0 0.0
      %605 = vmatmul.mubr.f32.gmra.mxu0 %v439
      %v606 = vpop.f32.mrf.mxu0
      %v607 = vadd.f32 0.0, %v606
      %v608 = vpop.f32.mrf.mxu0
      %609 = vmatprep.mubr.f32.mxu0 0.0
      %610 = vmatmul.mubr.f32.gmra.mxu0 %v442
      %v611 = vpop.f32.mrf.mxu0
      %v612 = vadd.f32 0.0, %v611
      %v613 = vpop.f32.mrf.mxu0
      %614 = vmatprep.mubr.f32.mxu0 0.0
      %615 = vmatmul.mubr.f32.gmra.mxu0 %v445
      %v616 = vpop.f32.mrf.mxu0
      %v617 = vadd.f32 0.0, %v616
      %v618 = vpop.f32.mrf.mxu0
      %619 = vmatprep.mubr.f32.mxu0 0.0
      %620 = vmatmul.mubr.f32.gmra.mxu0 %v448
      %v621 = vpop.f32.mrf.mxu0
      %v622 = vadd.f32 0.0, %v621
      %v623 = vpop.f32.mrf.mxu0
      %624 = vmatprep.mubr.f32.mxu0 0.0
      %625 = vmatmul.mubr.f32.gmra.mxu0 %v451
      %v626 = vpop.f32.mrf.mxu0
      %v627 = vadd.f32 0.0, %v626
      %v628 = vpop.f32.mrf.mxu0
      %629 = vmatprep.mubr.f32.mxu0 0.0
      %630 = vmatmul.mubr.f32.gmra.mxu0 %v454
      %v631 = vpop.f32.mrf.mxu0
      %v632 = vadd.f32 0.0, %v631
      %v633 = vpop.f32.mrf.mxu0
      %634 = vmatprep.mubr.f32.mxu0 0.0
      %635 = vmatmul.mubr.f32.gmra.mxu0 %v457
      %v636 = vpop.f32.mrf.mxu0
      %v637 = vadd.f32 0.0, %v636
      %v638 = vpop.f32.mrf.mxu0
      %639 = vmatprep.mubr.f32.mxu0 0.0
      %640 = vmatmul.mubr.f32.gmra.mxu0 %v460
      %v641 = vpop.f32.mrf.mxu0
      %v642 = vadd.f32 0.0, %v641
      %v643 = vpop.f32.mrf.mxu0
      %644 = vmatprep.mubr.f32.mxu0 0.0
      %645 = vmatmul.mubr.f32.gmra.mxu0 %v463
      %v646 = vpop.f32.mrf.mxu0
      %v647 = vadd.f32 0.0, %v646
      %v648 = vpop.f32.mrf.mxu0
      %649 = vmatprep.mubr.f32.mxu0 0.0
      %650 = vmatmul.mubr.f32.gmra.mxu0 %v466
      %v651 = vpop.f32.mrf.mxu0
      %v652 = vadd.f32 0.0, %v651
      %v653 = vpop.f32.mrf.mxu0
      %654 = vmatprep.mubr.f32.mxu0 0.0
      %655 = vmatmul.mubr.f32.gmra.mxu0 %v469
      %v656 = vpop.f32.mrf.mxu0
      %v657 = vadd.f32 0.0, %v656
      %v658 = vpop.f32.mrf.mxu0
      %659 = vmatprep.mubr.f32.mxu0 0.0
      %660 = vmatmul.mubr.f32.gmra.mxu0 %v472
      %v661 = vpop.f32.mrf.mxu0
      %v662 = vadd.f32 0.0, %v661
      %v663 = vpop.f32.mrf.mxu0
      %664 = vmatprep.mubr.f32.mxu0 0.0
      %665 = vmatmul.mubr.f32.gmra.mxu0 %v475
      %v666 = vpop.f32.mrf.mxu0
      %v667 = vadd.f32 0.0, %v666
      %v668 = vpop.f32.mrf.mxu0
      %669 = vmatprep.mubr.f32.mxu0 0.0
      %670 = vmatmul.mubr.f32.gmra.mxu0 %v478
      %v671 = vpop.f32.mrf.mxu0
      %v672 = vadd.f32 0.0, %v671
      %v673 = vpop.f32.mrf.mxu0
      %674 = vmatprep.mubr.f32.mxu0 0.0
      %675 = vmatmul.mubr.f32.gmra.mxu0 %v481
      %v676 = vpop.f32.mrf.mxu0
      %v677 = vadd.f32 0.0, %v676
      %v678 = vpop.f32.mrf.mxu0
      %679 = vmatprep.mubr.f32.mxu0 0.0
      %680 = vmatmul.mubr.f32.gmra.mxu0 %v484
      %v681 = vpop.f32.mrf.mxu0
      %v682 = vadd.f32 0.0, %v681
      %v683 = vpop.f32.mrf.mxu0
      %684 = vmatprep.mubr.f32.mxu0 0.0
      %685 = vmatmul.mubr.f32.gmra.mxu0 %v487
      %v686 = vpop.f32.mrf.mxu0
      %v687 = vadd.f32 0.0, %v686
      %v688 = vpop.f32.mrf.mxu0
      %689 = vmatprep.mubr.f32.mxu0 0.0
      %690 = vmatmul.mubr.f32.gmra.mxu0 %v490
      %v691 = vpop.f32.mrf.mxu0
      %v692 = vadd.f32 0.0, %v691
      %v693 = vpop.f32.mrf.mxu0
      %694 = vmatprep.mubr.f32.mxu0 0.0
      %695 = vmatmul.mubr.f32.gmra.mxu0 %v493
      %v696 = vpop.f32.mrf.mxu0
      %v697 = vadd.f32 0.0, %v696
      %v698 = vpop.f32.mrf.mxu0
      %699 = vmatprep.mubr.f32.mxu0 0.0
      %700 = vmatmul.mubr.f32.gmra.mxu0 %v496
      %v701 = vpop.f32.mrf.mxu0
      %v702 = vadd.f32 0.0, %v701
      %v703 = vpop.f32.mrf.mxu0
      %704 = vmatprep.mubr.f32.mxu0 0.0
      %705 = vmatmul.mubr.f32.gmra.mxu0 %v499
      %v706 = vpop.f32.mrf.mxu0
      %v707 = vadd.f32 0.0, %v706
      %v708 = vpop.f32.mrf.mxu0
      %709 = vmatprep.mubr.f32.mxu0 0.0
      %710 = vmatmul.mubr.f32.gmra.mxu0 %v502
      %v711 = vpop.f32.mrf.mxu0
      %v712 = vadd.f32 0.0, %v711
      %v713 = vpop.f32.mrf.mxu0
      %714 = vmatprep.mubr.f32.mxu0 0.0
      %715 = vmatmul.mubr.f32.gmra.mxu0 %v505
      %v716 = vpop.f32.mrf.mxu0
      %v717 = vadd.f32 0.0, %v716
      %v718 = vpop.f32.mrf.mxu0
      %719 = vmatprep.mubr.f32.mxu0 0.0
      %720 = vmatmul.mubr.f32.gmra.mxu0 %v508
      %v721 = vpop.f32.mrf.mxu0
      %v722 = vadd.f32 0.0, %v721
      %v723 = vpop.f32.mrf.mxu0
      %724 = vmatprep.mubr.f32.mxu0 0.0
      %725 = vmatmul.mubr.f32.gmra.mxu0 %v511
      %v726 = vpop.f32.mrf.mxu0
      %v727 = vadd.f32 0.0, %v726
      %v728 = vpop.f32.mrf.mxu0
      %729 = vmatprep.mubr.f32.mxu0 0.0
      %730 = vmatmul.mubr.f32.gmra.mxu0 %v514
      %v731 = vpop.f32.mrf.mxu0
      %v732 = vadd.f32 0.0, %v731
      %v733 = vpop.f32.mrf.mxu0
      %734 = vmatprep.mubr.f32.mxu0 0.0
      %735 = vmatmul.mubr.f32.gmra.mxu0 %v517
      %v736 = vpop.f32.mrf.mxu0
      %v737 = vadd.f32 0.0, %v736
      %v738 = vpop.f32.mrf.mxu0
      %739 = vmatprep.mubr.f32.mxu0 0.0
      %740 = vmatmul.mubr.f32.gmra.mxu0 %v520
      %v741 = vpop.f32.mrf.mxu0
      %v742 = vadd.f32 0.0, %v741
      %v743 = vpop.f32.mrf.mxu0
      %744 = vmatprep.mubr.f32.mxu0 0.0
      %745 = vmatmul.mubr.f32.gmra.mxu0 %v523
      %v746 = vpop.f32.mrf.mxu0
      %v747 = vadd.f32 0.0, %v746
      %v748 = vpop.f32.mrf.mxu0
      %749 = vmatprep.mubr.f32.mxu0 0.0
      %750 = vmatmul.mubr.f32.gmra.mxu0 %v526
      %v751 = vpop.f32.mrf.mxu0
      %v752 = vadd.f32 0.0, %v751
      %v753 = vpop.f32.mrf.mxu0
      %754 = vmatprep.mubr.f32.mxu0 0.0
      %755 = vmatmul.mubr.f32.gmra.mxu0 %v529
      %v756 = vpop.f32.mrf.mxu0
      %v757 = vadd.f32 0.0, %v756
      %v758 = vpop.f32.mrf.mxu0
      %759 = vdwg.mxu0
      %v761 = vsel %vm212, %v368, 0
      %v764 = vsel %vm212, %v369, 0
      %v767 = vsel %vm212, %v370, 0
      %v770 = vsel %vm212, %v371, 0
      %v773 = vsel %vm212, %v372, 0
      %v776 = vsel %vm212, %v373, 0
      %v779 = vsel %vm212, %v374, 0
      %v782 = vsel %vm212, %v375, 0
      %v785 = vsel %vm212, %v376, 0
      %v788 = vsel %vm212, %v377, 0
      %v791 = vsel %vm212, %v378, 0
      %v794 = vsel %vm212, %v379, 0
      %v797 = vsel %vm212, %v380, 0
      %v800 = vsel %vm212, %v381, 0
      %v803 = vsel %vm212, %v382, 0
      %v806 = vsel %vm212, %v383, 0
      %v809 = vsel %vm212, %v384, 0
      %v812 = vsel %vm212, %v385, 0
      %v815 = vsel %vm212, %v386, 0
      %v818 = vsel %vm212, %v387, 0
      %v821 = vsel %vm212, %v388, 0
      %v824 = vsel %vm212, %v389, 0
      %v827 = vsel %vm212, %v390, 0
      %v830 = vsel %vm212, %v391, 0
      %v833 = vsel %vm212, %v392, 0
      %v836 = vsel %vm212, %v393, 0
      %v839 = vsel %vm212, %v394, 0
      %v842 = vsel %vm212, %v395, 0
      %v845 = vsel %vm212, %v396, 0
      %v848 = vsel %vm212, %v397, 0
      %v851 = vsel %vm212, %v398, 0
      %v854 = vsel %vm212, %v399, 0
      %v857 = vsel %vm531, %v400, 0
      %859 = vmatprep.subr.mxu0 0.0
      %860 = vmatpush1.msra.mxu0 0.0
      %861 = vmatprep.subr.mxu0 0.0
      %862 = vmatpush1.msra.mxu0 0.0
      %863 = vmatprep.subr.mxu0 0.0
      %864 = vmatpush1.msra.mxu0 0.0
      %865 = vmatprep.subr.mxu0 0.0
      %866 = vmatpush1.msra.mxu0 0.0
      %867 = vmatprep.subr.mxu0 0.0
      %868 = vmatpush1.msra.mxu0 0.0
      %869 = vmatprep.subr.mxu0 0.0
      %870 = vmatpush1.msra.mxu0 0.0
      %871 = vmatprep.subr.mxu0 0.0
      %872 = vmatpush1.msra.mxu0 0.0
      %873 = vmatprep.subr.mxu0 0.0
      %874 = vmatpush1.msra.mxu0 0.0
      %875 = vmatprep.subr.mxu0 0.0
      %876 = vmatpush1.msra.mxu0 0.0
      %877 = vmatprep.subr.mxu0 0.0
      %878 = vmatpush1.msra.mxu0 0.0
      %879 = vmatprep.subr.mxu0 0.0
      %880 = vmatpush1.msra.mxu0 0.0
      %881 = vmatprep.subr.mxu0 0.0
      %882 = vmatpush1.msra.mxu0 0.0
      %883 = vmatprep.subr.mxu0 0.0
      %884 = vmatpush1.msra.mxu0 0.0
      %885 = vmatprep.subr.mxu0 0.0
      %886 = vmatpush1.msra.mxu0 0.0
      %887 = vmatprep.subr.mxu0 0.0
      %888 = vmatpush1.msra.mxu0 0.0
      %889 = vmatprep.subr.mxu0 0.0
      %890 = vmatpush1.msra.mxu0 %v857
      %891 = vmatprep.subr.mxu0 0.0
      %892 = vmatpush2.msra.mxu0 0.0
      %893 = vmatprep.subr.mxu0 0.0
      %894 = vmatpush2.msra.mxu0 0.0
      %895 = vmatprep.subr.mxu0 0.0
      %896 = vmatpush2.msra.mxu0 0.0
      %897 = vmatprep.subr.mxu0 0.0
      %898 = vmatpush2.msra.mxu0 0.0
      %899 = vmatprep.subr.mxu0 0.0
      %900 = vmatpush2.msra.mxu0 0.0
      %901 = vmatprep.subr.mxu0 0.0
      %902 = vmatpush2.msra.mxu0 0.0
      %903 = vmatprep.subr.mxu0 0.0
      %904 = vmatpush2.msra.mxu0 0.0
      %905 = vmatprep.subr.mxu0 0.0
      %906 = vmatpush2.msra.mxu0 0.0
      %907 = vmatprep.subr.mxu0 0.0
      %908 = vmatpush2.msra.mxu0 0.0
      %909 = vmatprep.subr.mxu0 0.0
      %910 = vmatpush2.msra.mxu0 0.0
      %911 = vmatprep.subr.mxu0 0.0
      %912 = vmatpush2.msra.mxu0 0.0
      %913 = vmatprep.subr.mxu0 0.0
      %914 = vmatpush2.msra.mxu0 0.0
      %915 = vmatprep.subr.mxu0 0.0
      %916 = vmatpush2.msra.mxu0 0.0
      %917 = vmatprep.subr.mxu0 0.0
      %918 = vmatpush2.msra.mxu0 0.0
      %919 = vmatprep.subr.mxu0 0.0
      %920 = vmatpush2.msra.mxu0 0.0
      %921 = vmatprep.subr.mxu0 0.0
      %922 = vmatpush2.msra.mxu0 0.0
      %923 = vmatprep.mubr.f32.mxu0 0.0
      %924 = vmatmul.mubr.f32.gmra.mxu0 %v761
      %v925 = vpop.f32.mrf.mxu0
      %v926 = vadd.f32 %v602, %v925
      %v927 = vpop.f32.mrf.mxu0
      %928 = vmatprep.mubr.f32.mxu0 0.0
      %929 = vmatmul.mubr.f32.gmra.mxu0 %v764
      %v930 = vpop.f32.mrf.mxu0
      %v931 = vadd.f32 %v607, %v930
      %v932 = vpop.f32.mrf.mxu0
      %933 = vmatprep.mubr.f32.mxu0 0.0
      %934 = vmatmul.mubr.f32.gmra.mxu0 %v767
      %v935 = vpop.f32.mrf.mxu0
      %v936 = vadd.f32 %v612, %v935
      %v937 = vpop.f32.mrf.mxu0
      %938 = vmatprep.mubr.f32.mxu0 0.0
      %939 = vmatmul.mubr.f32.gmra.mxu0 %v770
      %v940 = vpop.f32.mrf.mxu0
      %v941 = vadd.f32 %v617, %v940
      %v942 = vpop.f32.mrf.mxu0
      %943 = vmatprep.mubr.f32.mxu0 0.0
      %944 = vmatmul.mubr.f32.gmra.mxu0 %v773
      %v945 = vpop.f32.mrf.mxu0
      %v946 = vadd.f32 %v622, %v945
      %v947 = vpop.f32.mrf.mxu0
      %948 = vmatprep.mubr.f32.mxu0 0.0
      %949 = vmatmul.mubr.f32.gmra.mxu0 %v776
      %v950 = vpop.f32.mrf.mxu0
      %v951 = vadd.f32 %v627, %v950
      %v952 = vpop.f32.mrf.mxu0
      %953 = vmatprep.mubr.f32.mxu0 0.0
      %954 = vmatmul.mubr.f32.gmra.mxu0 %v779
      %v955 = vpop.f32.mrf.mxu0
      %v956 = vadd.f32 %v632, %v955
      %v957 = vpop.f32.mrf.mxu0
      %958 = vmatprep.mubr.f32.mxu0 0.0
      %959 = vmatmul.mubr.f32.gmra.mxu0 %v782
      %v960 = vpop.f32.mrf.mxu0
      %v961 = vadd.f32 %v637, %v960
      %v962 = vpop.f32.mrf.mxu0
      %963 = vmatprep.mubr.f32.mxu0 0.0
      %964 = vmatmul.mubr.f32.gmra.mxu0 %v785
      %v965 = vpop.f32.mrf.mxu0
      %v966 = vadd.f32 %v642, %v965
      %v967 = vpop.f32.mrf.mxu0
      %968 = vmatprep.mubr.f32.mxu0 0.0
      %969 = vmatmul.mubr.f32.gmra.mxu0 %v788
      %v970 = vpop.f32.mrf.mxu0
      %v971 = vadd.f32 %v647, %v970
      %v972 = vpop.f32.mrf.mxu0
      %973 = vmatprep.mubr.f32.mxu0 0.0
      %974 = vmatmul.mubr.f32.gmra.mxu0 %v791
      %v975 = vpop.f32.mrf.mxu0
      %v976 = vadd.f32 %v652, %v975
      %v977 = vpop.f32.mrf.mxu0
      %978 = vmatprep.mubr.f32.mxu0 0.0
      %979 = vmatmul.mubr.f32.gmra.mxu0 %v794
      %v980 = vpop.f32.mrf.mxu0
      %v981 = vadd.f32 %v657, %v980
      %v982 = vpop.f32.mrf.mxu0
      %983 = vmatprep.mubr.f32.mxu0 0.0
      %984 = vmatmul.mubr.f32.gmra.mxu0 %v797
      %v985 = vpop.f32.mrf.mxu0
      %v986 = vadd.f32 %v662, %v985
      %v987 = vpop.f32.mrf.mxu0
      %988 = vmatprep.mubr.f32.mxu0 0.0
      %989 = vmatmul.mubr.f32.gmra.mxu0 %v800
      %v990 = vpop.f32.mrf.mxu0
      %v991 = vadd.f32 %v667, %v990
      %v992 = vpop.f32.mrf.mxu0
      %993 = vmatprep.mubr.f32.mxu0 0.0
      %994 = vmatmul.mubr.f32.gmra.mxu0 %v803
      %v995 = vpop.f32.mrf.mxu0
      %v996 = vadd.f32 %v672, %v995
      %v997 = vpop.f32.mrf.mxu0
      %998 = vmatprep.mubr.f32.mxu0 0.0
      %999 = vmatmul.mubr.f32.gmra.mxu0 %v806
      %v1000 = vpop.f32.mrf.mxu0
      %v1001 = vadd.f32 %v677, %v1000
      %v1002 = vpop.f32.mrf.mxu0
      %1003 = vmatprep.mubr.f32.mxu0 0.0
      %1004 = vmatmul.mubr.f32.gmra.mxu0 %v809
      %v1005 = vpop.f32.mrf.mxu0
      %v1006 = vadd.f32 %v682, %v1005
      %v1007 = vpop.f32.mrf.mxu0
      %1008 = vmatprep.mubr.f32.mxu0 0.0
      %1009 = vmatmul.mubr.f32.gmra.mxu0 %v812
      %v1010 = vpop.f32.mrf.mxu0
      %v1011 = vadd.f32 %v687, %v1010
      %v1012 = vpop.f32.mrf.mxu0
      %1013 = vmatprep.mubr.f32.mxu0 0.0
      %1014 = vmatmul.mubr.f32.gmra.mxu0 %v815
      %v1015 = vpop.f32.mrf.mxu0
      %v1016 = vadd.f32 %v692, %v1015
      %v1017 = vpop.f32.mrf.mxu0
      %1018 = vmatprep.mubr.f32.mxu0 0.0
      %1019 = vmatmul.mubr.f32.gmra.mxu0 %v818
      %v1020 = vpop.f32.mrf.mxu0
      %v1021 = vadd.f32 %v697, %v1020
      %v1022 = vpop.f32.mrf.mxu0
      %1023 = vmatprep.mubr.f32.mxu0 0.0
      %1024 = vmatmul.mubr.f32.gmra.mxu0 %v821
      %v1025 = vpop.f32.mrf.mxu0
      %v1026 = vadd.f32 %v702, %v1025
      %v1027 = vpop.f32.mrf.mxu0
      %1028 = vmatprep.mubr.f32.mxu0 0.0
      %1029 = vmatmul.mubr.f32.gmra.mxu0 %v824
      %v1030 = vpop.f32.mrf.mxu0
      %v1031 = vadd.f32 %v707, %v1030
      %v1032 = vpop.f32.mrf.mxu0
      %1033 = vmatprep.mubr.f32.mxu0 0.0
      %1034 = vmatmul.mubr.f32.gmra.mxu0 %v827
      %v1035 = vpop.f32.mrf.mxu0
      %v1036 = vadd.f32 %v712, %v1035
      %v1037 = vpop.f32.mrf.mxu0
      %1038 = vmatprep.mubr.f32.mxu0 0.0
      %1039 = vmatmul.mubr.f32.gmra.mxu0 %v830
      %v1040 = vpop.f32.mrf.mxu0
      %v1041 = vadd.f32 %v717, %v1040
      %v1042 = vpop.f32.mrf.mxu0
      %1043 = vmatprep.mubr.f32.mxu0 0.0
      %1044 = vmatmul.mubr.f32.gmra.mxu0 %v833
      %v1045 = vpop.f32.mrf.mxu0
      %v1046 = vadd.f32 %v722, %v1045
      %v1047 = vpop.f32.mrf.mxu0
      %1048 = vmatprep.mubr.f32.mxu0 0.0
      %1049 = vmatmul.mubr.f32.gmra.mxu0 %v836
      %v1050 = vpop.f32.mrf.mxu0
      %v1051 = vadd.f32 %v727, %v1050
      %v1052 = vpop.f32.mrf.mxu0
      %1053 = vmatprep.mubr.f32.mxu0 0.0
      %1054 = vmatmul.mubr.f32.gmra.mxu0 %v839
      %v1055 = vpop.f32.mrf.mxu0
      %v1056 = vadd.f32 %v732, %v1055
      %v1057 = vpop.f32.mrf.mxu0
      %1058 = vmatprep.mubr.f32.mxu0 0.0
      %1059 = vmatmul.mubr.f32.gmra.mxu0 %v842
      %v1060 = vpop.f32.mrf.mxu0
      %v1061 = vadd.f32 %v737, %v1060
      %v1062 = vpop.f32.mrf.mxu0
      %1063 = vmatprep.mubr.f32.mxu0 0.0
      %1064 = vmatmul.mubr.f32.gmra.mxu0 %v845
      %v1065 = vpop.f32.mrf.mxu0
      %v1066 = vadd.f32 %v742, %v1065
      %v1067 = vpop.f32.mrf.mxu0
      %1068 = vmatprep.mubr.f32.mxu0 0.0
      %1069 = vmatmul.mubr.f32.gmra.mxu0 %v848
      %v1070 = vpop.f32.mrf.mxu0
      %v1071 = vadd.f32 %v747, %v1070
      %v1072 = vpop.f32.mrf.mxu0
      %1073 = vmatprep.mubr.f32.mxu0 0.0
      %1074 = vmatmul.mubr.f32.gmra.mxu0 %v851
      %v1075 = vpop.f32.mrf.mxu0
      %v1076 = vadd.f32 %v752, %v1075
      %v1077 = vpop.f32.mrf.mxu0
      %1078 = vmatprep.mubr.f32.mxu0 0.0
      %1079 = vmatmul.mubr.f32.gmra.mxu0 %v854
      %v1080 = vpop.f32.mrf.mxu0
      %v1081 = vadd.f32 %v757, %v1080
      %v1082 = vpop.f32.mrf.mxu0
      %1083 = vdwg.mxu0
      %v1084 = vld [vmem:[%s300] sm:$0xff]
      %v1085 = vld [vmem:[%s300 + $0x8] sm:$0xff]
      %v1086 = vld [vmem:[%s300 + $0x18] sm:$0xff]
      %v1087 = vld [vmem:[%s300 + $0x20] sm:$0xff]
      %v1088 = vld [vmem:[%s300 + $0x30] sm:$0xff]
      %v1089 = vld [vmem:[%s300 + $0x38] sm:$0xff]
      %v1090 = vld [vmem:[%s300 + $0x48] sm:$0xff]
      %v1091 = vld [vmem:[%s300 + $0x50] sm:$0xff]
      %v1092 = vld [vmem:[%s300 + $0x60] sm:$0xff]
      %v1093 = vld [vmem:[%s300 + $0x68] sm:$0xff]
      %v1094 = vld [vmem:[%s300 + $0x78] sm:$0xff]
      %v1095 = vld [vmem:[%s300 + $0x80] sm:$0xff]
      %v1096 = vld [vmem:[%s300 + $0x90] sm:$0xff]
      %v1097 = vld [vmem:[%s300 + $0x98] sm:$0xff]
      %v1098 = vld [vmem:[%s300 + $0xa8] sm:$0xff]
      %v1099 = vld [vmem:[%s300 + $0xb0] sm:$0xff]
      %v1100 = vld [vmem:[%s300 + $0xc0] sm:$0xff]
      %v1101 = vld [vmem:[%s300 + $0xc8] sm:$0xff]
      %v1102 = vld [vmem:[%s300 + $0xd8] sm:$0xff]
      %v1103 = vld [vmem:[%s300 + $0xe0] sm:$0xff]
      %v1104 = vld [vmem:[%s300 + $0xf0] sm:$0xff]
      %v1105 = vld [vmem:[%s300 + $0xf8] sm:$0xff]
      %v1106 = vld [vmem:[%s300 + $0x108] sm:$0xff]
      %v1107 = vld [vmem:[%s300 + $0x110] sm:$0xff]
      %v1108 = vld [vmem:[%s300 + $0x120] sm:$0xff]
      %v1109 = vld [vmem:[%s300 + $0x128] sm:$0xff]
      %v1110 = vld [vmem:[%s300 + $0x138] sm:$0xff]
      %v1111 = vld [vmem:[%s300 + $0x140] sm:$0xff]
      %v1112 = vld [vmem:[%s300 + $0x150] sm:$0xff]
      %v1113 = vld [vmem:[%s300 + $0x158] sm:$0xff]
      %v1114 = vld [vmem:[%s300 + $0x168] sm:$0xff]
      %v1115 = vld [vmem:[%s300 + $0x170] sm:$0xff]
      %s1116 = scalar_lea.vmem %s1, 16
      %v1117 = vld [vmem:[%s1116] sm:$0x1f]
      %v1119 = vsel %vm212, %v1084, 0
      %v1122 = vsel %vm212, %v1085, 0
      %v1125 = vsel %vm212, %v1086, 0
      %v1128 = vsel %vm212, %v1087, 0
      %v1131 = vsel %vm212, %v1088, 0
      %v1134 = vsel %vm212, %v1089, 0
      %v1137 = vsel %vm212, %v1090, 0
      %v1140 = vsel %vm212, %v1091, 0
      %v1143 = vsel %vm212, %v1092, 0
      %v1146 = vsel %vm212, %v1093, 0
      %v1149 = vsel %vm212, %v1094, 0
      %v1152 = vsel %vm212, %v1095, 0
      %v1155 = vsel %vm212, %v1096, 0
      %v1158 = vsel %vm212, %v1097, 0
      %v1161 = vsel %vm212, %v1098, 0
      %v1164 = vsel %vm212, %v1099, 0
      %v1167 = vsel %vm212, %v1100, 0
      %v1170 = vsel %vm212, %v1101, 0
      %v1173 = vsel %vm212, %v1102, 0
      %v1176 = vsel %vm212, %v1103, 0
      %v1179 = vsel %vm212, %v1104, 0
      %v1182 = vsel %vm212, %v1105, 0
      %v1185 = vsel %vm212, %v1106, 0
      %v1188 = vsel %vm212, %v1107, 0
      %v1191 = vsel %vm212, %v1108, 0
      %v1194 = vsel %vm212, %v1109, 0
      %v1197 = vsel %vm212, %v1110, 0
      %v1200 = vsel %vm212, %v1111, 0
      %v1203 = vsel %vm212, %v1112, 0
      %v1206 = vsel %vm212, %v1113, 0
      %v1209 = vsel %vm212, %v1114, 0
      %v1212 = vsel %vm212, %v1115, 0
      %v1215 = vsel %vm531, %v1117, 0
      %1217 = vmatprep.subr.mxu0 0.0
      %1218 = vmatpush1.msra.mxu0 0.0
      %1219 = vmatprep.subr.mxu0 0.0
      %1220 = vmatpush1.msra.mxu0 0.0
      %1221 = vmatprep.subr.mxu0 0.0
      %1222 = vmatpush1.msra.mxu0 0.0
      %1223 = vmatprep.subr.mxu0 0.0
      %1224 = vmatpush1.msra.mxu0 0.0
      %1225 = vmatprep.subr.mxu0 0.0
      %1226 = vmatpush1.msra.mxu0 0.0
      %1227 = vmatprep.subr.mxu0 0.0
      %1228 = vmatpush1.msra.mxu0 0.0
      %1229 = vmatprep.subr.mxu0 0.0
      %1230 = vmatpush1.msra.mxu0 0.0
      %1231 = vmatprep.subr.mxu0 0.0
      %1232 = vmatpush1.msra.mxu0 0.0
      %1233 = vmatprep.subr.mxu0 0.0
      %1234 = vmatpush1.msra.mxu0 0.0
      %1235 = vmatprep.subr.mxu0 0.0
      %1236 = vmatpush1.msra.mxu0 0.0
      %1237 = vmatprep.subr.mxu0 0.0
      %1238 = vmatpush1.msra.mxu0 0.0
      %1239 = vmatprep.subr.mxu0 0.0
      %1240 = vmatpush1.msra.mxu0 0.0
      %1241 = vmatprep.subr.mxu0 0.0
      %1242 = vmatpush1.msra.mxu0 0.0
      %1243 = vmatprep.subr.mxu0 0.0
      %1244 = vmatpush1.msra.mxu0 0.0
      %1245 = vmatprep.subr.mxu0 0.0
      %1246 = vmatpush1.msra.mxu0 0.0
      %1247 = vmatprep.subr.mxu0 0.0
      %1248 = vmatpush1.msra.mxu0 %v1215
      %1249 = vmatprep.subr.mxu0 0.0
      %1250 = vmatpush2.msra.mxu0 0.0
      %1251 = vmatprep.subr.mxu0 0.0
      %1252 = vmatpush2.msra.mxu0 0.0
      %1253 = vmatprep.subr.mxu0 0.0
      %1254 = vmatpush2.msra.mxu0 0.0
      %1255 = vmatprep.subr.mxu0 0.0
      %1256 = vmatpush2.msra.mxu0 0.0
      %1257 = vmatprep.subr.mxu0 0.0
      %1258 = vmatpush2.msra.mxu0 0.0
      %1259 = vmatprep.subr.mxu0 0.0
      %1260 = vmatpush2.msra.mxu0 0.0
      %1261 = vmatprep.subr.mxu0 0.0
      %1262 = vmatpush2.msra.mxu0 0.0
      %1263 = vmatprep.subr.mxu0 0.0
      %1264 = vmatpush2.msra.mxu0 0.0
      %1265 = vmatprep.subr.mxu0 0.0
      %1266 = vmatpush2.msra.mxu0 0.0
      %1267 = vmatprep.subr.mxu0 0.0
      %1268 = vmatpush2.msra.mxu0 0.0
      %1269 = vmatprep.subr.mxu0 0.0
      %1270 = vmatpush2.msra.mxu0 0.0
      %1271 = vmatprep.subr.mxu0 0.0
      %1272 = vmatpush2.msra.mxu0 0.0
      %1273 = vmatprep.subr.mxu0 0.0
      %1274 = vmatpush2.msra.mxu0 0.0
      %1275 = vmatprep.subr.mxu0 0.0
      %1276 = vmatpush2.msra.mxu0 0.0
      %1277 = vmatprep.subr.mxu0 0.0
      %1278 = vmatpush2.msra.mxu0 0.0
      %1279 = vmatprep.subr.mxu0 0.0
      %1280 = vmatpush2.msra.mxu0 0.0
      %1281 = vmatprep.mubr.f32.mxu0 0.0
      %1282 = vmatmul.mubr.f32.gmra.mxu0 %v1119
      %v1283 = vpop.f32.mrf.mxu0
      %v1284 = vadd.f32 0.0, %v1283
      %v1285 = vpop.f32.mrf.mxu0
      %1286 = vmatprep.mubr.f32.mxu0 0.0
      %1287 = vmatmul.mubr.f32.gmra.mxu0 %v1122
      %v1288 = vpop.f32.mrf.mxu0
      %v1289 = vadd.f32 0.0, %v1288
      %v1290 = vpop.f32.mrf.mxu0
      %1291 = vmatprep.mubr.f32.mxu0 0.0
      %1292 = vmatmul.mubr.f32.gmra.mxu0 %v1125
      %v1293 = vpop.f32.mrf.mxu0
      %v1294 = vadd.f32 0.0, %v1293
      %v1295 = vpop.f32.mrf.mxu0
      %1296 = vmatprep.mubr.f32.mxu0 0.0
      %1297 = vmatmul.mubr.f32.gmra.mxu0 %v1128
      %v1298 = vpop.f32.mrf.mxu0
      %v1299 = vadd.f32 0.0, %v1298
      %v1300 = vpop.f32.mrf.mxu0
      %1301 = vmatprep.mubr.f32.mxu0 0.0
      %1302 = vmatmul.mubr.f32.gmra.mxu0 %v1131
      %v1303 = vpop.f32.mrf.mxu0
      %v1304 = vadd.f32 0.0, %v1303
      %v1305 = vpop.f32.mrf.mxu0
      %1306 = vmatprep.mubr.f32.mxu0 0.0
      %1307 = vmatmul.mubr.f32.gmra.mxu0 %v1134
      %v1308 = vpop.f32.mrf.mxu0
      %v1309 = vadd.f32 0.0, %v1308
      %v1310 = vpop.f32.mrf.mxu0
      %1311 = vmatprep.mubr.f32.mxu0 0.0
      %1312 = vmatmul.mubr.f32.gmra.mxu0 %v1137
      %v1313 = vpop.f32.mrf.mxu0
      %v1314 = vadd.f32 0.0, %v1313
      %v1315 = vpop.f32.mrf.mxu0
      %1316 = vmatprep.mubr.f32.mxu0 0.0
      %1317 = vmatmul.mubr.f32.gmra.mxu0 %v1140
      %v1318 = vpop.f32.mrf.mxu0
      %v1319 = vadd.f32 0.0, %v1318
      %v1320 = vpop.f32.mrf.mxu0
      %1321 = vmatprep.mubr.f32.mxu0 0.0
      %1322 = vmatmul.mubr.f32.gmra.mxu0 %v1143
      %v1323 = vpop.f32.mrf.mxu0
      %v1324 = vadd.f32 0.0, %v1323
      %v1325 = vpop.f32.mrf.mxu0
      %1326 = vmatprep.mubr.f32.mxu0 0.0
      %1327 = vmatmul.mubr.f32.gmra.mxu0 %v1146
      %v1328 = vpop.f32.mrf.mxu0
      %v1329 = vadd.f32 0.0, %v1328
      %v1330 = vpop.f32.mrf.mxu0
      %1331 = vmatprep.mubr.f32.mxu0 0.0
      %1332 = vmatmul.mubr.f32.gmra.mxu0 %v1149
      %v1333 = vpop.f32.mrf.mxu0
      %v1334 = vadd.f32 0.0, %v1333
      %v1335 = vpop.f32.mrf.mxu0
      %1336 = vmatprep.mubr.f32.mxu0 0.0
      %1337 = vmatmul.mubr.f32.gmra.mxu0 %v1152
      %v1338 = vpop.f32.mrf.mxu0
      %v1339 = vadd.f32 0.0, %v1338
      %v1340 = vpop.f32.mrf.mxu0
      %1341 = vmatprep.mubr.f32.mxu0 0.0
      %1342 = vmatmul.mubr.f32.gmra.mxu0 %v1155
      %v1343 = vpop.f32.mrf.mxu0
      %v1344 = vadd.f32 0.0, %v1343
      %v1345 = vpop.f32.mrf.mxu0
      %1346 = vmatprep.mubr.f32.mxu0 0.0
      %1347 = vmatmul.mubr.f32.gmra.mxu0 %v1158
      %v1348 = vpop.f32.mrf.mxu0
      %v1349 = vadd.f32 0.0, %v1348
      %v1350 = vpop.f32.mrf.mxu0
      %1351 = vmatprep.mubr.f32.mxu0 0.0
      %1352 = vmatmul.mubr.f32.gmra.mxu0 %v1161
      %v1353 = vpop.f32.mrf.mxu0
      %v1354 = vadd.f32 0.0, %v1353
      %v1355 = vpop.f32.mrf.mxu0
      %1356 = vmatprep.mubr.f32.mxu0 0.0
      %1357 = vmatmul.mubr.f32.gmra.mxu0 %v1164
      %v1358 = vpop.f32.mrf.mxu0
      %v1359 = vadd.f32 0.0, %v1358
      %v1360 = vpop.f32.mrf.mxu0
      %1361 = vmatprep.mubr.f32.mxu0 0.0
      %1362 = vmatmul.mubr.f32.gmra.mxu0 %v1167
      %v1363 = vpop.f32.mrf.mxu0
      %v1364 = vadd.f32 0.0, %v1363
      %v1365 = vpop.f32.mrf.mxu0
      %1366 = vmatprep.mubr.f32.mxu0 0.0
      %1367 = vmatmul.mubr.f32.gmra.mxu0 %v1170
      %v1368 = vpop.f32.mrf.mxu0
      %v1369 = vadd.f32 0.0, %v1368
      %v1370 = vpop.f32.mrf.mxu0
      %1371 = vmatprep.mubr.f32.mxu0 0.0
      %1372 = vmatmul.mubr.f32.gmra.mxu0 %v1173
      %v1373 = vpop.f32.mrf.mxu0
      %v1374 = vadd.f32 0.0, %v1373
      %v1375 = vpop.f32.mrf.mxu0
      %1376 = vmatprep.mubr.f32.mxu0 0.0
      %1377 = vmatmul.mubr.f32.gmra.mxu0 %v1176
      %v1378 = vpop.f32.mrf.mxu0
      %v1379 = vadd.f32 0.0, %v1378
      %v1380 = vpop.f32.mrf.mxu0
      %1381 = vmatprep.mubr.f32.mxu0 0.0
      %1382 = vmatmul.mubr.f32.gmra.mxu0 %v1179
      %v1383 = vpop.f32.mrf.mxu0
      %v1384 = vadd.f32 0.0, %v1383
      %v1385 = vpop.f32.mrf.mxu0
      %1386 = vmatprep.mubr.f32.mxu0 0.0
      %1387 = vmatmul.mubr.f32.gmra.mxu0 %v1182
      %v1388 = vpop.f32.mrf.mxu0
      %v1389 = vadd.f32 0.0, %v1388
      %v1390 = vpop.f32.mrf.mxu0
      %1391 = vmatprep.mubr.f32.mxu0 0.0
      %1392 = vmatmul.mubr.f32.gmra.mxu0 %v1185
      %v1393 = vpop.f32.mrf.mxu0
      %v1394 = vadd.f32 0.0, %v1393
      %v1395 = vpop.f32.mrf.mxu0
      %1396 = vmatprep.mubr.f32.mxu0 0.0
      %1397 = vmatmul.mubr.f32.gmra.mxu0 %v1188
      %v1398 = vpop.f32.mrf.mxu0
      %v1399 = vadd.f32 0.0, %v1398
      %v1400 = vpop.f32.mrf.mxu0
      %1401 = vmatprep.mubr.f32.mxu0 0.0
      %1402 = vmatmul.mubr.f32.gmra.mxu0 %v1191
      %v1403 = vpop.f32.mrf.mxu0
      %v1404 = vadd.f32 0.0, %v1403
      %v1405 = vpop.f32.mrf.mxu0
      %1406 = vmatprep.mubr.f32.mxu0 0.0
      %1407 = vmatmul.mubr.f32.gmra.mxu0 %v1194
      %v1408 = vpop.f32.mrf.mxu0
      %v1409 = vadd.f32 0.0, %v1408
      %v1410 = vpop.f32.mrf.mxu0
      %1411 = vmatprep.mubr.f32.mxu0 0.0
      %1412 = vmatmul.mubr.f32.gmra.mxu0 %v1197
      %v1413 = vpop.f32.mrf.mxu0
      %v1414 = vadd.f32 0.0, %v1413
      %v1415 = vpop.f32.mrf.mxu0
      %1416 = vmatprep.mubr.f32.mxu0 0.0
      %1417 = vmatmul.mubr.f32.gmra.mxu0 %v1200
      %v1418 = vpop.f32.mrf.mxu0
      %v1419 = vadd.f32 0.0, %v1418
      %v1420 = vpop.f32.mrf.mxu0
      %1421 = vmatprep.mubr.f32.mxu0 0.0
      %1422 = vmatmul.mubr.f32.gmra.mxu0 %v1203
      %v1423 = vpop.f32.mrf.mxu0
      %v1424 = vadd.f32 0.0, %v1423
      %v1425 = vpop.f32.mrf.mxu0
      %1426 = vmatprep.mubr.f32.mxu0 0.0
      %1427 = vmatmul.mubr.f32.gmra.mxu0 %v1206
      %v1428 = vpop.f32.mrf.mxu0
      %v1429 = vadd.f32 0.0, %v1428
      %v1430 = vpop.f32.mrf.mxu0
      %1431 = vmatprep.mubr.f32.mxu0 0.0
      %1432 = vmatmul.mubr.f32.gmra.mxu0 %v1209
      %v1433 = vpop.f32.mrf.mxu0
      %v1434 = vadd.f32 0.0, %v1433
      %v1435 = vpop.f32.mrf.mxu0
      %1436 = vmatprep.mubr.f32.mxu0 0.0
      %1437 = vmatmul.mubr.f32.gmra.mxu0 %v1212
      %v1438 = vpop.f32.mrf.mxu0
      %v1439 = vadd.f32 0.0, %v1438
      %v1440 = vpop.f32.mrf.mxu0
      %1441 = vdwg.mxu0
      %v1442 = vadd.f32 %v926, %v1284
      %v1443 = vadd.f32 %v931, %v1289
      %v1444 = vadd.f32 %v936, %v1294
      %v1445 = vadd.f32 %v941, %v1299
      %v1446 = vadd.f32 %v946, %v1304
      %v1447 = vadd.f32 %v951, %v1309
      %v1448 = vadd.f32 %v956, %v1314
      %v1449 = vadd.f32 %v961, %v1319
      %v1450 = vadd.f32 %v966, %v1324
      %v1451 = vadd.f32 %v971, %v1329
      %v1452 = vadd.f32 %v976, %v1334
      %v1453 = vadd.f32 %v981, %v1339
      %v1454 = vadd.f32 %v986, %v1344
      %v1455 = vadd.f32 %v991, %v1349
      %v1456 = vadd.f32 %v996, %v1354
      %v1457 = vadd.f32 %v1001, %v1359
      %v1458 = vadd.f32 %v1006, %v1364
      %v1459 = vadd.f32 %v1011, %v1369
      %v1460 = vadd.f32 %v1016, %v1374
      %v1461 = vadd.f32 %v1021, %v1379
      %v1462 = vadd.f32 %v1026, %v1384
      %v1463 = vadd.f32 %v1031, %v1389
      %v1464 = vadd.f32 %v1036, %v1394
      %v1465 = vadd.f32 %v1041, %v1399
      %v1466 = vadd.f32 %v1046, %v1404
      %v1467 = vadd.f32 %v1051, %v1409
      %v1468 = vadd.f32 %v1056, %v1414
      %v1469 = vadd.f32 %v1061, %v1419
      %v1470 = vadd.f32 %v1066, %v1424
      %v1471 = vadd.f32 %v1071, %v1429
      %v1472 = vadd.f32 %v1076, %v1434
      %v1473 = vadd.f32 %v1081, %v1439
      %v1474 = vld [vmem:[%s300 + $0x1] sm:$0xff]
      %v1475 = vld [vmem:[%s300 + $0x9] sm:$0xff]
      %v1476 = vld [vmem:[%s300 + $0x19] sm:$0xff]
      %v1477 = vld [vmem:[%s300 + $0x21] sm:$0xff]
      %v1478 = vld [vmem:[%s300 + $0x31] sm:$0xff]
      %v1479 = vld [vmem:[%s300 + $0x39] sm:$0xff]
      %v1480 = vld [vmem:[%s300 + $0x49] sm:$0xff]
      %v1481 = vld [vmem:[%s300 + $0x51] sm:$0xff]
      %v1482 = vld [vmem:[%s300 + $0x61] sm:$0xff]
      %v1483 = vld [vmem:[%s300 + $0x69] sm:$0xff]
      %v1484 = vld [vmem:[%s300 + $0x79] sm:$0xff]
      %v1485 = vld [vmem:[%s300 + $0x81] sm:$0xff]
      %v1486 = vld [vmem:[%s300 + $0x91] sm:$0xff]
      %v1487 = vld [vmem:[%s300 + $0x99] sm:$0xff]
      %v1488 = vld [vmem:[%s300 + $0xa9] sm:$0xff]
      %v1489 = vld [vmem:[%s300 + $0xb1] sm:$0xff]
      %v1490 = vld [vmem:[%s300 + $0xc1] sm:$0xff]
      %v1491 = vld [vmem:[%s300 + $0xc9] sm:$0xff]
      %v1492 = vld [vmem:[%s300 + $0xd9] sm:$0xff]
      %v1493 = vld [vmem:[%s300 + $0xe1] sm:$0xff]
      %v1494 = vld [vmem:[%s300 + $0xf1] sm:$0xff]
      %v1495 = vld [vmem:[%s300 + $0xf9] sm:$0xff]
      %v1496 = vld [vmem:[%s300 + $0x109] sm:$0xff]
      %v1497 = vld [vmem:[%s300 + $0x111] sm:$0xff]
      %v1498 = vld [vmem:[%s300 + $0x121] sm:$0xff]
      %v1499 = vld [vmem:[%s300 + $0x129] sm:$0xff]
      %v1500 = vld [vmem:[%s300 + $0x139] sm:$0xff]
      %v1501 = vld [vmem:[%s300 + $0x141] sm:$0xff]
      %v1502 = vld [vmem:[%s300 + $0x151] sm:$0xff]
      %v1503 = vld [vmem:[%s300 + $0x159] sm:$0xff]
      %v1504 = vld [vmem:[%s300 + $0x169] sm:$0xff]
      %v1505 = vld [vmem:[%s300 + $0x171] sm:$0xff]
      %s1506 = scalar_lea.vmem %s1, 24
      %v1507 = vld [vmem:[%s1506] sm:$0x1f]
      %v1509 = vsel %vm212, %v1474, 0
      %v1512 = vsel %vm212, %v1475, 0
      %v1515 = vsel %vm212, %v1476, 0
      %v1518 = vsel %vm212, %v1477, 0
      %v1521 = vsel %vm212, %v1478, 0
      %v1524 = vsel %vm212, %v1479, 0
      %v1527 = vsel %vm212, %v1480, 0
      %v1530 = vsel %vm212, %v1481, 0
      %v1533 = vsel %vm212, %v1482, 0
      %v1536 = vsel %vm212, %v1483, 0
      %v1539 = vsel %vm212, %v1484, 0
      %v1542 = vsel %vm212, %v1485, 0
      %v1545 = vsel %vm212, %v1486, 0
      %v1548 = vsel %vm212, %v1487, 0
      %v1551 = vsel %vm212, %v1488, 0
      %v1554 = vsel %vm212, %v1489, 0
      %v1557 = vsel %vm212, %v1490, 0
      %v1560 = vsel %vm212, %v1491, 0
      %v1563 = vsel %vm212, %v1492, 0
      %v1566 = vsel %vm212, %v1493, 0
      %v1569 = vsel %vm212, %v1494, 0
      %v1572 = vsel %vm212, %v1495, 0
      %v1575 = vsel %vm212, %v1496, 0
      %v1578 = vsel %vm212, %v1497, 0
      %v1581 = vsel %vm212, %v1498, 0
      %v1584 = vsel %vm212, %v1499, 0
      %v1587 = vsel %vm212, %v1500, 0
      %v1590 = vsel %vm212, %v1501, 0
      %v1593 = vsel %vm212, %v1502, 0
      %v1596 = vsel %vm212, %v1503, 0
      %v1599 = vsel %vm212, %v1504, 0
      %v1602 = vsel %vm212, %v1505, 0
      %v1605 = vsel %vm531, %v1507, 0
      %1607 = vmatprep.subr.mxu0 0.0
      %1608 = vmatpush1.msra.mxu0 0.0
      %1609 = vmatprep.subr.mxu0 0.0
      %1610 = vmatpush1.msra.mxu0 0.0
      %1611 = vmatprep.subr.mxu0 0.0
      %1612 = vmatpush1.msra.mxu0 0.0
      %1613 = vmatprep.subr.mxu0 0.0
      %1614 = vmatpush1.msra.mxu0 0.0
      %1615 = vmatprep.subr.mxu0 0.0
      %1616 = vmatpush1.msra.mxu0 0.0
      %1617 = vmatprep.subr.mxu0 0.0
      %1618 = vmatpush1.msra.mxu0 0.0
      %1619 = vmatprep.subr.mxu0 0.0
      %1620 = vmatpush1.msra.mxu0 0.0
      %1621 = vmatprep.subr.mxu0 0.0
      %1622 = vmatpush1.msra.mxu0 0.0
      %1623 = vmatprep.subr.mxu0 0.0
      %1624 = vmatpush1.msra.mxu0 0.0
      %1625 = vmatprep.subr.mxu0 0.0
      %1626 = vmatpush1.msra.mxu0 0.0
      %1627 = vmatprep.subr.mxu0 0.0
      %1628 = vmatpush1.msra.mxu0 0.0
      %1629 = vmatprep.subr.mxu0 0.0
      %1630 = vmatpush1.msra.mxu0 0.0
      %1631 = vmatprep.subr.mxu0 0.0
      %1632 = vmatpush1.msra.mxu0 0.0
      %1633 = vmatprep.subr.mxu0 0.0
      %1634 = vmatpush1.msra.mxu0 0.0
      %1635 = vmatprep.subr.mxu0 0.0
      %1636 = vmatpush1.msra.mxu0 0.0
      %1637 = vmatprep.subr.mxu0 0.0
      %1638 = vmatpush1.msra.mxu0 %v1605
      %1639 = vmatprep.subr.mxu0 0.0
      %1640 = vmatpush2.msra.mxu0 0.0
      %1641 = vmatprep.subr.mxu0 0.0
      %1642 = vmatpush2.msra.mxu0 0.0
      %1643 = vmatprep.subr.mxu0 0.0
      %1644 = vmatpush2.msra.mxu0 0.0
      %1645 = vmatprep.subr.mxu0 0.0
      %1646 = vmatpush2.msra.mxu0 0.0
      %1647 = vmatprep.subr.mxu0 0.0
      %1648 = vmatpush2.msra.mxu0 0.0
      %1649 = vmatprep.subr.mxu0 0.0
      %1650 = vmatpush2.msra.mxu0 0.0
      %1651 = vmatprep.subr.mxu0 0.0
      %1652 = vmatpush2.msra.mxu0 0.0
      %1653 = vmatprep.subr.mxu0 0.0
      %1654 = vmatpush2.msra.mxu0 0.0
      %1655 = vmatprep.subr.mxu0 0.0
      %1656 = vmatpush2.msra.mxu0 0.0
      %1657 = vmatprep.subr.mxu0 0.0
      %1658 = vmatpush2.msra.mxu0 0.0
      %1659 = vmatprep.subr.mxu0 0.0
      %1660 = vmatpush2.msra.mxu0 0.0
      %1661 = vmatprep.subr.mxu0 0.0
      %1662 = vmatpush2.msra.mxu0 0.0
      %1663 = vmatprep.subr.mxu0 0.0
      %1664 = vmatpush2.msra.mxu0 0.0
      %1665 = vmatprep.subr.mxu0 0.0
      %1666 = vmatpush2.msra.mxu0 0.0
      %1667 = vmatprep.subr.mxu0 0.0
      %1668 = vmatpush2.msra.mxu0 0.0
      %1669 = vmatprep.subr.mxu0 0.0
      %1670 = vmatpush2.msra.mxu0 0.0
      %1671 = vmatprep.mubr.f32.mxu0 0.0
      %1672 = vmatmul.mubr.f32.gmra.mxu0 %v1509
      %v1673 = vpop.f32.mrf.mxu0
      %v1674 = vadd.f32 0.0, %v1673
      %v1675 = vpop.f32.mrf.mxu0
      %1676 = vmatprep.mubr.f32.mxu0 0.0
      %1677 = vmatmul.mubr.f32.gmra.mxu0 %v1512
      %v1678 = vpop.f32.mrf.mxu0
      %v1679 = vadd.f32 0.0, %v1678
      %v1680 = vpop.f32.mrf.mxu0
      %1681 = vmatprep.mubr.f32.mxu0 0.0
      %1682 = vmatmul.mubr.f32.gmra.mxu0 %v1515
      %v1683 = vpop.f32.mrf.mxu0
      %v1684 = vadd.f32 0.0, %v1683
      %v1685 = vpop.f32.mrf.mxu0
      %1686 = vmatprep.mubr.f32.mxu0 0.0
      %1687 = vmatmul.mubr.f32.gmra.mxu0 %v1518
      %v1688 = vpop.f32.mrf.mxu0
      %v1689 = vadd.f32 0.0, %v1688
      %v1690 = vpop.f32.mrf.mxu0
      %1691 = vmatprep.mubr.f32.mxu0 0.0
      %1692 = vmatmul.mubr.f32.gmra.mxu0 %v1521
      %v1693 = vpop.f32.mrf.mxu0
      %v1694 = vadd.f32 0.0, %v1693
      %v1695 = vpop.f32.mrf.mxu0
      %1696 = vmatprep.mubr.f32.mxu0 0.0
      %1697 = vmatmul.mubr.f32.gmra.mxu0 %v1524
      %v1698 = vpop.f32.mrf.mxu0
      %v1699 = vadd.f32 0.0, %v1698
      %v1700 = vpop.f32.mrf.mxu0
      %1701 = vmatprep.mubr.f32.mxu0 0.0
      %1702 = vmatmul.mubr.f32.gmra.mxu0 %v1527
      %v1703 = vpop.f32.mrf.mxu0
      %v1704 = vadd.f32 0.0, %v1703
      %v1705 = vpop.f32.mrf.mxu0
      %1706 = vmatprep.mubr.f32.mxu0 0.0
      %1707 = vmatmul.mubr.f32.gmra.mxu0 %v1530
      %v1708 = vpop.f32.mrf.mxu0
      %v1709 = vadd.f32 0.0, %v1708
      %v1710 = vpop.f32.mrf.mxu0
      %1711 = vmatprep.mubr.f32.mxu0 0.0
      %1712 = vmatmul.mubr.f32.gmra.mxu0 %v1533
      %v1713 = vpop.f32.mrf.mxu0
      %v1714 = vadd.f32 0.0, %v1713
      %v1715 = vpop.f32.mrf.mxu0
      %1716 = vmatprep.mubr.f32.mxu0 0.0
      %1717 = vmatmul.mubr.f32.gmra.mxu0 %v1536
      %v1718 = vpop.f32.mrf.mxu0
      %v1719 = vadd.f32 0.0, %v1718
      %v1720 = vpop.f32.mrf.mxu0
      %1721 = vmatprep.mubr.f32.mxu0 0.0
      %1722 = vmatmul.mubr.f32.gmra.mxu0 %v1539
      %v1723 = vpop.f32.mrf.mxu0
      %v1724 = vadd.f32 0.0, %v1723
      %v1725 = vpop.f32.mrf.mxu0
      %1726 = vmatprep.mubr.f32.mxu0 0.0
      %1727 = vmatmul.mubr.f32.gmra.mxu0 %v1542
      %v1728 = vpop.f32.mrf.mxu0
      %v1729 = vadd.f32 0.0, %v1728
      %v1730 = vpop.f32.mrf.mxu0
      %1731 = vmatprep.mubr.f32.mxu0 0.0
      %1732 = vmatmul.mubr.f32.gmra.mxu0 %v1545
      %v1733 = vpop.f32.mrf.mxu0
      %v1734 = vadd.f32 0.0, %v1733
      %v1735 = vpop.f32.mrf.mxu0
      %1736 = vmatprep.mubr.f32.mxu0 0.0
      %1737 = vmatmul.mubr.f32.gmra.mxu0 %v1548
      %v1738 = vpop.f32.mrf.mxu0
      %v1739 = vadd.f32 0.0, %v1738
      %v1740 = vpop.f32.mrf.mxu0
      %1741 = vmatprep.mubr.f32.mxu0 0.0
      %1742 = vmatmul.mubr.f32.gmra.mxu0 %v1551
      %v1743 = vpop.f32.mrf.mxu0
      %v1744 = vadd.f32 0.0, %v1743
      %v1745 = vpop.f32.mrf.mxu0
      %1746 = vmatprep.mubr.f32.mxu0 0.0
      %1747 = vmatmul.mubr.f32.gmra.mxu0 %v1554
      %v1748 = vpop.f32.mrf.mxu0
      %v1749 = vadd.f32 0.0, %v1748
      %v1750 = vpop.f32.mrf.mxu0
      %1751 = vmatprep.mubr.f32.mxu0 0.0
      %1752 = vmatmul.mubr.f32.gmra.mxu0 %v1557
      %v1753 = vpop.f32.mrf.mxu0
      %v1754 = vadd.f32 0.0, %v1753
      %v1755 = vpop.f32.mrf.mxu0
      %1756 = vmatprep.mubr.f32.mxu0 0.0
      %1757 = vmatmul.mubr.f32.gmra.mxu0 %v1560
      %v1758 = vpop.f32.mrf.mxu0
      %v1759 = vadd.f32 0.0, %v1758
      %v1760 = vpop.f32.mrf.mxu0
      %1761 = vmatprep.mubr.f32.mxu0 0.0
      %1762 = vmatmul.mubr.f32.gmra.mxu0 %v1563
      %v1763 = vpop.f32.mrf.mxu0
      %v1764 = vadd.f32 0.0, %v1763
      %v1765 = vpop.f32.mrf.mxu0
      %1766 = vmatprep.mubr.f32.mxu0 0.0
      %1767 = vmatmul.mubr.f32.gmra.mxu0 %v1566
      %v1768 = vpop.f32.mrf.mxu0
      %v1769 = vadd.f32 0.0, %v1768
      %v1770 = vpop.f32.mrf.mxu0
      %1771 = vmatprep.mubr.f32.mxu0 0.0
      %1772 = vmatmul.mubr.f32.gmra.mxu0 %v1569
      %v1773 = vpop.f32.mrf.mxu0
      %v1774 = vadd.f32 0.0, %v1773
      %v1775 = vpop.f32.mrf.mxu0
      %1776 = vmatprep.mubr.f32.mxu0 0.0
      %1777 = vmatmul.mubr.f32.gmra.mxu0 %v1572
      %v1778 = vpop.f32.mrf.mxu0
      %v1779 = vadd.f32 0.0, %v1778
      %v1780 = vpop.f32.mrf.mxu0
      %1781 = vmatprep.mubr.f32.mxu0 0.0
      %1782 = vmatmul.mubr.f32.gmra.mxu0 %v1575
      %v1783 = vpop.f32.mrf.mxu0
      %v1784 = vadd.f32 0.0, %v1783
      %v1785 = vpop.f32.mrf.mxu0
      %1786 = vmatprep.mubr.f32.mxu0 0.0
      %1787 = vmatmul.mubr.f32.gmra.mxu0 %v1578
      %v1788 = vpop.f32.mrf.mxu0
      %v1789 = vadd.f32 0.0, %v1788
      %v1790 = vpop.f32.mrf.mxu0
      %1791 = vmatprep.mubr.f32.mxu0 0.0
      %1792 = vmatmul.mubr.f32.gmra.mxu0 %v1581
      %v1793 = vpop.f32.mrf.mxu0
      %v1794 = vadd.f32 0.0, %v1793
      %v1795 = vpop.f32.mrf.mxu0
      %1796 = vmatprep.mubr.f32.mxu0 0.0
      %1797 = vmatmul.mubr.f32.gmra.mxu0 %v1584
      %v1798 = vpop.f32.mrf.mxu0
      %v1799 = vadd.f32 0.0, %v1798
      %v1800 = vpop.f32.mrf.mxu0
      %1801 = vmatprep.mubr.f32.mxu0 0.0
      %1802 = vmatmul.mubr.f32.gmra.mxu0 %v1587
      %v1803 = vpop.f32.mrf.mxu0
      %v1804 = vadd.f32 0.0, %v1803
      %v1805 = vpop.f32.mrf.mxu0
      %1806 = vmatprep.mubr.f32.mxu0 0.0
      %1807 = vmatmul.mubr.f32.gmra.mxu0 %v1590
      %v1808 = vpop.f32.mrf.mxu0
      %v1809 = vadd.f32 0.0, %v1808
      %v1810 = vpop.f32.mrf.mxu0
      %1811 = vmatprep.mubr.f32.mxu0 0.0
      %1812 = vmatmul.mubr.f32.gmra.mxu0 %v1593
      %v1813 = vpop.f32.mrf.mxu0
      %v1814 = vadd.f32 0.0, %v1813
      %v1815 = vpop.f32.mrf.mxu0
      %1816 = vmatprep.mubr.f32.mxu0 0.0
      %1817 = vmatmul.mubr.f32.gmra.mxu0 %v1596
      %v1818 = vpop.f32.mrf.mxu0
      %v1819 = vadd.f32 0.0, %v1818
      %v1820 = vpop.f32.mrf.mxu0
      %1821 = vmatprep.mubr.f32.mxu0 0.0
      %1822 = vmatmul.mubr.f32.gmra.mxu0 %v1599
      %v1823 = vpop.f32.mrf.mxu0
      %v1824 = vadd.f32 0.0, %v1823
      %v1825 = vpop.f32.mrf.mxu0
      %1826 = vmatprep.mubr.f32.mxu0 0.0
      %1827 = vmatmul.mubr.f32.gmra.mxu0 %v1602
      %v1828 = vpop.f32.mrf.mxu0
      %v1829 = vadd.f32 0.0, %v1828
      %v1830 = vpop.f32.mrf.mxu0
      %1831 = vdwg.mxu0
      %v1832 = vadd.f32 %v1442, %v1674
      %v1833 = vadd.f32 %v1443, %v1679
      %v1834 = vadd.f32 %v1444, %v1684
      %v1835 = vadd.f32 %v1445, %v1689
      %v1836 = vadd.f32 %v1446, %v1694
      %v1837 = vadd.f32 %v1447, %v1699
      %v1838 = vadd.f32 %v1448, %v1704
      %v1839 = vadd.f32 %v1449, %v1709
      %v1840 = vadd.f32 %v1450, %v1714
      %v1841 = vadd.f32 %v1451, %v1719
      %v1842 = vadd.f32 %v1452, %v1724
      %v1843 = vadd.f32 %v1453, %v1729
      %v1844 = vadd.f32 %v1454, %v1734
      %v1845 = vadd.f32 %v1455, %v1739
      %v1846 = vadd.f32 %v1456, %v1744
      %v1847 = vadd.f32 %v1457, %v1749
      %v1848 = vadd.f32 %v1458, %v1754
      %v1849 = vadd.f32 %v1459, %v1759
      %v1850 = vadd.f32 %v1460, %v1764
      %v1851 = vadd.f32 %v1461, %v1769
      %v1852 = vadd.f32 %v1462, %v1774
      %v1853 = vadd.f32 %v1463, %v1779
      %v1854 = vadd.f32 %v1464, %v1784
      %v1855 = vadd.f32 %v1465, %v1789
      %v1856 = vadd.f32 %v1466, %v1794
      %v1857 = vadd.f32 %v1467, %v1799
      %v1858 = vadd.f32 %v1468, %v1804
      %v1859 = vadd.f32 %v1469, %v1809
      %v1860 = vadd.f32 %v1470, %v1814
      %v1861 = vadd.f32 %v1471, %v1819
      %v1862 = vadd.f32 %v1472, %v1824
      %v1863 = vadd.f32 %v1473, %v1829
      %v1865 = vlaneseq
      %v1866 = vshrl.u32 %v1865, 7
      %v1867 = vsub.s32 0, %v1866
      %v1868 = vrot.slane %v367, %v1867
      %v1870 = vadd.f32 %v1832, %v1868
      %v1871 = vadd.f32 %v1833, %v1868
      %v1872 = vadd.f32 %v1834, %v1868
      %v1873 = vadd.f32 %v1835, %v1868
      %v1874 = vadd.f32 %v1836, %v1868
      %v1875 = vadd.f32 %v1837, %v1868
      %v1876 = vadd.f32 %v1838, %v1868
      %v1877 = vadd.f32 %v1839, %v1868
      %v1878 = vadd.f32 %v1840, %v1868
      %v1879 = vadd.f32 %v1841, %v1868
      %v1880 = vadd.f32 %v1842, %v1868
      %v1881 = vadd.f32 %v1843, %v1868
      %v1882 = vadd.f32 %v1844, %v1868
      %v1883 = vadd.f32 %v1845, %v1868
      %v1884 = vadd.f32 %v1846, %v1868
      %v1885 = vadd.f32 %v1847, %v1868
      %v1886 = vadd.f32 %v1848, %v1868
      %v1887 = vadd.f32 %v1849, %v1868
      %v1888 = vadd.f32 %v1850, %v1868
      %v1889 = vadd.f32 %v1851, %v1868
      %v1890 = vadd.f32 %v1852, %v1868
      %v1891 = vadd.f32 %v1853, %v1868
      %v1892 = vadd.f32 %v1854, %v1868
      %v1893 = vadd.f32 %v1855, %v1868
      %v1894 = vadd.f32 %v1856, %v1868
      %v1895 = vadd.f32 %v1857, %v1868
      %v1896 = vadd.f32 %v1858, %v1868
      %v1897 = vadd.f32 %v1859, %v1868
      %v1898 = vadd.f32 %v1860, %v1868
      %v1899 = vadd.f32 %v1861, %v1868
      %v1900 = vadd.f32 %v1862, %v1868
      %v1901 = vadd.f32 %v1863, %v1868
      %vm1902 = vcmask 64512
      %1903 = vst.msk [vmem:[%s206] sm:$0xff] %vm1902, %v1870
      %1904 = vst.msk [vmem:[%s206 + $0x8] sm:$0xff] %vm1902, %v1871
      %1905 = vst.msk [vmem:[%s206 + $0x10] sm:$0xff] %vm1902, %v1872
      %1906 = vst.msk [vmem:[%s206 + $0x18] sm:$0xff] %vm1902, %v1873
      %1907 = vst.msk [vmem:[%s206 + $0x20] sm:$0xff] %vm1902, %v1874
      %1908 = vst.msk [vmem:[%s206 + $0x28] sm:$0xff] %vm1902, %v1875
      %1909 = vst.msk [vmem:[%s206 + $0x30] sm:$0xff] %vm1902, %v1876
      %1910 = vst.msk [vmem:[%s206 + $0x38] sm:$0xff] %vm1902, %v1877
      %1911 = vst.msk [vmem:[%s206 + $0x40] sm:$0xff] %vm1902, %v1878
      %1912 = vst.msk [vmem:[%s206 + $0x48] sm:$0xff] %vm1902, %v1879
      %1913 = vst.msk [vmem:[%s206 + $0x50] sm:$0xff] %vm1902, %v1880
      %1914 = vst.msk [vmem:[%s206 + $0x58] sm:$0xff] %vm1902, %v1881
      %1915 = vst.msk [vmem:[%s206 + $0x60] sm:$0xff] %vm1902, %v1882
      %1916 = vst.msk [vmem:[%s206 + $0x68] sm:$0xff] %vm1902, %v1883
      %1917 = vst.msk [vmem:[%s206 + $0x70] sm:$0xff] %vm1902, %v1884
      %1918 = vst.msk [vmem:[%s206 + $0x78] sm:$0xff] %vm1902, %v1885
      %1919 = vst.msk [vmem:[%s206 + $0x80] sm:$0xff] %vm1902, %v1886
      %1920 = vst.msk [vmem:[%s206 + $0x88] sm:$0xff] %vm1902, %v1887
      %1921 = vst.msk [vmem:[%s206 + $0x90] sm:$0xff] %vm1902, %v1888
      %1922 = vst.msk [vmem:[%s206 + $0x98] sm:$0xff] %vm1902, %v1889
      %1923 = vst.msk [vmem:[%s206 + $0xa0] sm:$0xff] %vm1902, %v1890
      %1924 = vst.msk [vmem:[%s206 + $0xa8] sm:$0xff] %vm1902, %v1891
      %1925 = vst.msk [vmem:[%s206 + $0xb0] sm:$0xff] %vm1902, %v1892
      %1926 = vst.msk [vmem:[%s206 + $0xb8] sm:$0xff] %vm1902, %v1893
      %1927 = vst.msk [vmem:[%s206 + $0xc0] sm:$0xff] %vm1902, %v1894
      %1928 = vst.msk [vmem:[%s206 + $0xc8] sm:$0xff] %vm1902, %v1895
      %1929 = vst.msk [vmem:[%s206 + $0xd0] sm:$0xff] %vm1902, %v1896
      %1930 = vst.msk [vmem:[%s206 + $0xd8] sm:$0xff] %vm1902, %v1897
      %1931 = vst.msk [vmem:[%s206 + $0xe0] sm:$0xff] %vm1902, %v1898
      %1932 = vst.msk [vmem:[%s206 + $0xe8] sm:$0xff] %vm1902, %v1899
      %1933 = vst.msk [vmem:[%s206 + $0xf0] sm:$0xff] %vm1902, %v1900
      %1934 = vst.msk [vmem:[%s206 + $0xf8] sm:$0xff] %vm1902, %v1901
      %v1935 = vsel %vm1902, %v1870, 0.0
      %v1936 = vsel %vm1902, %v1871, 0.0
      %v1937 = vadd.f32 %v1935, %v1936
      %v1938 = vsel %vm1902, %v1872, 0.0
      %v1939 = vadd.f32 %v1937, %v1938
      %v1940 = vsel %vm1902, %v1873, 0.0
      %v1941 = vadd.f32 %v1939, %v1940
      %v1942 = vsel %vm1902, %v1874, 0.0
      %v1943 = vadd.f32 %v1941, %v1942
      %v1944 = vsel %vm1902, %v1875, 0.0
      %v1945 = vadd.f32 %v1943, %v1944
      %v1946 = vsel %vm1902, %v1876, 0.0
      %v1947 = vadd.f32 %v1945, %v1946
      %v1948 = vsel %vm1902, %v1877, 0.0
      %v1949 = vadd.f32 %v1947, %v1948
      %v1950 = vsel %vm1902, %v1878, 0.0
      %v1951 = vadd.f32 %v1949, %v1950
      %v1952 = vsel %vm1902, %v1879, 0.0
      %v1953 = vadd.f32 %v1951, %v1952
      %v1954 = vsel %vm1902, %v1880, 0.0
      %v1955 = vadd.f32 %v1953, %v1954
      %v1956 = vsel %vm1902, %v1881, 0.0
      %v1957 = vadd.f32 %v1955, %v1956
      %v1958 = vsel %vm1902, %v1882, 0.0
      %v1959 = vadd.f32 %v1957, %v1958
      %v1960 = vsel %vm1902, %v1883, 0.0
      %v1961 = vadd.f32 %v1959, %v1960
      %v1962 = vsel %vm1902, %v1884, 0.0
      %v1963 = vadd.f32 %v1961, %v1962
      %v1964 = vsel %vm1902, %v1885, 0.0
      %v1965 = vadd.f32 %v1963, %v1964
      %v1966 = vsel %vm1902, %v1886, 0.0
      %v1967 = vadd.f32 %v1965, %v1966
      %v1968 = vsel %vm1902, %v1887, 0.0
      %v1969 = vadd.f32 %v1967, %v1968
      %v1970 = vsel %vm1902, %v1888, 0.0
      %v1971 = vadd.f32 %v1969, %v1970
      %v1972 = vsel %vm1902, %v1889, 0.0
      %v1973 = vadd.f32 %v1971, %v1972
      %v1974 = vsel %vm1902, %v1890, 0.0
      %v1975 = vadd.f32 %v1973, %v1974
      %v1976 = vsel %vm1902, %v1891, 0.0
      %v1977 = vadd.f32 %v1975, %v1976
      %v1978 = vsel %vm1902, %v1892, 0.0
      %v1979 = vadd.f32 %v1977, %v1978
      %v1980 = vsel %vm1902, %v1893, 0.0
      %v1981 = vadd.f32 %v1979, %v1980
      %v1982 = vsel %vm1902, %v1894, 0.0
      %v1983 = vadd.f32 %v1981, %v1982
      %v1984 = vsel %vm1902, %v1895, 0.0
      %v1985 = vadd.f32 %v1983, %v1984
      %v1986 = vsel %vm1902, %v1896, 0.0
      %v1987 = vadd.f32 %v1985, %v1986
      %v1988 = vsel %vm1902, %v1897, 0.0
      %v1989 = vadd.f32 %v1987, %v1988
      %v1990 = vsel %vm1902, %v1898, 0.0
      %v1991 = vadd.f32 %v1989, %v1990
      %v1992 = vsel %vm1902, %v1899, 0.0
      %v1993 = vadd.f32 %v1991, %v1992
      %v1994 = vsel %vm1902, %v1900, 0.0
      %v1995 = vadd.f32 %v1993, %v1994
      %v1996 = vsel %vm1902, %v1901, 0.0
      %v1997 = vadd.f32 %v1995, %v1996
      %v1998 = vrot.slane %v1997, 4
      %v1999 = vadd.f32 %v1997, %v1998
      %v2000 = vrot.slane %v1999, 2
      %v2001 = vadd.f32 %v1999, %v2000
      %v2002 = vrot.slane %v2001, 1
      %v2003 = vadd.f32 %v2001, %v2002
      %v2004 = vadd.f32 %v2003, 0.0
      %v2005 = vmul.f32 %v1870, %v1870
      %v2006 = vmul.f32 %v1871, %v1871
      %v2007 = vmul.f32 %v1872, %v1872
      %v2008 = vmul.f32 %v1873, %v1873
      %v2009 = vmul.f32 %v1874, %v1874
      %v2010 = vmul.f32 %v1875, %v1875
      %v2011 = vmul.f32 %v1876, %v1876
      %v2012 = vmul.f32 %v1877, %v1877
      %v2013 = vmul.f32 %v1878, %v1878
      %v2014 = vmul.f32 %v1879, %v1879
      %v2015 = vmul.f32 %v1880, %v1880
      %v2016 = vmul.f32 %v1881, %v1881
      %v2017 = vmul.f32 %v1882, %v1882
      %v2018 = vmul.f32 %v1883, %v1883
      %v2019 = vmul.f32 %v1884, %v1884
      %v2020 = vmul.f32 %v1885, %v1885
      %v2021 = vmul.f32 %v1886, %v1886
      %v2022 = vmul.f32 %v1887, %v1887
      %v2023 = vmul.f32 %v1888, %v1888
      %v2024 = vmul.f32 %v1889, %v1889
      %v2025 = vmul.f32 %v1890, %v1890
      %v2026 = vmul.f32 %v1891, %v1891
      %v2027 = vmul.f32 %v1892, %v1892
      %v2028 = vmul.f32 %v1893, %v1893
      %v2029 = vmul.f32 %v1894, %v1894
      %v2030 = vmul.f32 %v1895, %v1895
      %v2031 = vmul.f32 %v1896, %v1896
      %v2032 = vmul.f32 %v1897, %v1897
      %v2033 = vmul.f32 %v1898, %v1898
      %v2034 = vmul.f32 %v1899, %v1899
      %v2035 = vmul.f32 %v1900, %v1900
      %v2036 = vmul.f32 %v1901, %v1901
      %v2037 = vsel %vm1902, %v2005, 0.0
      %v2038 = vsel %vm1902, %v2006, 0.0
      %v2039 = vadd.f32 %v2037, %v2038
      %v2040 = vsel %vm1902, %v2007, 0.0
      %v2041 = vadd.f32 %v2039, %v2040
      %v2042 = vsel %vm1902, %v2008, 0.0
      %v2043 = vadd.f32 %v2041, %v2042
      %v2044 = vsel %vm1902, %v2009, 0.0
      %v2045 = vadd.f32 %v2043, %v2044
      %v2046 = vsel %vm1902, %v2010, 0.0
      %v2047 = vadd.f32 %v2045, %v2046
      %v2048 = vsel %vm1902, %v2011, 0.0
      %v2049 = vadd.f32 %v2047, %v2048
      %v2050 = vsel %vm1902, %v2012, 0.0
      %v2051 = vadd.f32 %v2049, %v2050
      %v2052 = vsel %vm1902, %v2013, 0.0
      %v2053 = vadd.f32 %v2051, %v2052
      %v2054 = vsel %vm1902, %v2014, 0.0
      %v2055 = vadd.f32 %v2053, %v2054
      %v2056 = vsel %vm1902, %v2015, 0.0
      %v2057 = vadd.f32 %v2055, %v2056
      %v2058 = vsel %vm1902, %v2016, 0.0
      %v2059 = vadd.f32 %v2057, %v2058
      %v2060 = vsel %vm1902, %v2017, 0.0
      %v2061 = vadd.f32 %v2059, %v2060
      %v2062 = vsel %vm1902, %v2018, 0.0
      %v2063 = vadd.f32 %v2061, %v2062
      %v2064 = vsel %vm1902, %v2019, 0.0
      %v2065 = vadd.f32 %v2063, %v2064
      %v2066 = vsel %vm1902, %v2020, 0.0
      %v2067 = vadd.f32 %v2065, %v2066
      %v2068 = vsel %vm1902, %v2021, 0.0
      %v2069 = vadd.f32 %v2067, %v2068
      %v2070 = vsel %vm1902, %v2022, 0.0
      %v2071 = vadd.f32 %v2069, %v2070
      %v2072 = vsel %vm1902, %v2023, 0.0
      %v2073 = vadd.f32 %v2071, %v2072
      %v2074 = vsel %vm1902, %v2024, 0.0
      %v2075 = vadd.f32 %v2073, %v2074
      %v2076 = vsel %vm1902, %v2025, 0.0
      %v2077 = vadd.f32 %v2075, %v2076
      %v2078 = vsel %vm1902, %v2026, 0.0
      %v2079 = vadd.f32 %v2077, %v2078
      %v2080 = vsel %vm1902, %v2027, 0.0
      %v2081 = vadd.f32 %v2079, %v2080
      %v2082 = vsel %vm1902, %v2028, 0.0
      %v2083 = vadd.f32 %v2081, %v2082
      %v2084 = vsel %vm1902, %v2029, 0.0
      %v2085 = vadd.f32 %v2083, %v2084
      %v2086 = vsel %vm1902, %v2030, 0.0
      %v2087 = vadd.f32 %v2085, %v2086
      %v2088 = vsel %vm1902, %v2031, 0.0
      %v2089 = vadd.f32 %v2087, %v2088
      %v2090 = vsel %vm1902, %v2032, 0.0
      %v2091 = vadd.f32 %v2089, %v2090
      %v2092 = vsel %vm1902, %v2033, 0.0
      %v2093 = vadd.f32 %v2091, %v2092
      %v2094 = vsel %vm1902, %v2034, 0.0
      %v2095 = vadd.f32 %v2093, %v2094
      %v2096 = vsel %vm1902, %v2035, 0.0
      %v2097 = vadd.f32 %v2095, %v2096
      %v2098 = vsel %vm1902, %v2036, 0.0
      %v2099 = vadd.f32 %v2097, %v2098
      %v2100 = vrot.slane %v2099, 4
      %v2101 = vadd.f32 %v2099, %v2100
      %v2102 = vrot.slane %v2101, 2
      %v2103 = vadd.f32 %v2101, %v2102
      %v2104 = vrot.slane %v2103, 1
      %v2105 = vadd.f32 %v2103, %v2104
      %v2106 = vadd.f32 %v2105, 0.0
      %v2107 = vld [vmem:[#allocation2 + $0x1] sm:$0xff]
      %v2108 = vld [vmem:[#allocation2 + $0x9] sm:$0xff]
      %v2109 = vld [vmem:[#allocation2 + $0x19] sm:$0xff]
      %v2110 = vld [vmem:[#allocation2 + $0x21] sm:$0xff]
      %v2111 = vld [vmem:[#allocation2 + $0x31] sm:$0xff]
      %v2112 = vld [vmem:[#allocation2 + $0x39] sm:$0xff]
      %v2113 = vld [vmem:[#allocation2 + $0x49] sm:$0xff]
      %v2114 = vld [vmem:[#allocation2 + $0x51] sm:$0xff]
      %v2115 = vld [vmem:[#allocation2 + $0x61] sm:$0xff]
      %v2116 = vld [vmem:[#allocation2 + $0x69] sm:$0xff]
      %v2117 = vld [vmem:[#allocation2 + $0x79] sm:$0xff]
      %v2118 = vld [vmem:[#allocation2 + $0x81] sm:$0xff]
      %v2119 = vld [vmem:[#allocation2 + $0x91] sm:$0xff]
      %v2120 = vld [vmem:[#allocation2 + $0x99] sm:$0xff]
      %v2121 = vld [vmem:[#allocation2 + $0xa9] sm:$0xff]
      %v2122 = vld [vmem:[#allocation2 + $0xb1] sm:$0xff]
      %v2123 = vld [vmem:[#allocation2 + $0xc1] sm:$0xff]
      %v2124 = vld [vmem:[#allocation2 + $0xc9] sm:$0xff]
      %v2125 = vld [vmem:[#allocation2 + $0xd9] sm:$0xff]
      %v2126 = vld [vmem:[#allocation2 + $0xe1] sm:$0xff]
      %v2127 = vld [vmem:[#allocation2 + $0xf1] sm:$0xff]
      %v2128 = vld [vmem:[#allocation2 + $0xf9] sm:$0xff]
      %v2129 = vld [vmem:[#allocation2 + $0x109] sm:$0xff]
      %v2130 = vld [vmem:[#allocation2 + $0x111] sm:$0xff]
      %v2131 = vld [vmem:[#allocation2 + $0x121] sm:$0xff]
      %v2132 = vld [vmem:[#allocation2 + $0x129] sm:$0xff]
      %v2133 = vld [vmem:[#allocation2 + $0x139] sm:$0xff]
      %v2134 = vld [vmem:[#allocation2 + $0x141] sm:$0xff]
      %v2135 = vld [vmem:[#allocation2 + $0x151] sm:$0xff]
      %v2136 = vld [vmem:[#allocation2 + $0x159] sm:$0xff]
      %v2137 = vld [vmem:[#allocation2 + $0x169] sm:$0xff]
      %v2138 = vld [vmem:[#allocation2 + $0x171] sm:$0xff]
      %s2139 = scalar_lea.vmem %s1, 32
      %v2140 = vld [vmem:[%s2139] sm:$0x1f]
      %v2141 = vld [vmem:[#allocation2 + $0x2] sm:$0xff]
      %v2142 = vld [vmem:[#allocation2 + $0xa] sm:$0xff]
      %v2143 = vld [vmem:[#allocation2 + $0x1a] sm:$0xff]
      %v2144 = vld [vmem:[#allocation2 + $0x22] sm:$0xff]
      %v2145 = vld [vmem:[#allocation2 + $0x32] sm:$0xff]
      %v2146 = vld [vmem:[#allocation2 + $0x3a] sm:$0xff]
      %v2147 = vld [vmem:[#allocation2 + $0x4a] sm:$0xff]
      %v2148 = vld [vmem:[#allocation2 + $0x52] sm:$0xff]
      %v2149 = vld [vmem:[#allocation2 + $0x62] sm:$0xff]
      %v2150 = vld [vmem:[#allocation2 + $0x6a] sm:$0xff]
      %v2151 = vld [vmem:[#allocation2 + $0x7a] sm:$0xff]
      %v2152 = vld [vmem:[#allocation2 + $0x82] sm:$0xff]
      %v2153 = vld [vmem:[#allocation2 + $0x92] sm:$0xff]
      %v2154 = vld [vmem:[#allocation2 + $0x9a] sm:$0xff]
      %v2155 = vld [vmem:[#allocation2 + $0xaa] sm:$0xff]
      %v2156 = vld [vmem:[#allocation2 + $0xb2] sm:$0xff]
      %v2157 = vld [vmem:[#allocation2 + $0xc2] sm:$0xff]
      %v2158 = vld [vmem:[#allocation2 + $0xca] sm:$0xff]
      %v2159 = vld [vmem:[#allocation2 + $0xda] sm:$0xff]
      %v2160 = vld [vmem:[#allocation2 + $0xe2] sm:$0xff]
      %v2161 = vld [vmem:[#allocation2 + $0xf2] sm:$0xff]
      %v2162 = vld [vmem:[#allocation2 + $0xfa] sm:$0xff]
      %v2163 = vld [vmem:[#allocation2 + $0x10a] sm:$0xff]
      %v2164 = vld [vmem:[#allocation2 + $0x112] sm:$0xff]
      %v2165 = vld [vmem:[#allocation2 + $0x122] sm:$0xff]
      %v2166 = vld [vmem:[#allocation2 + $0x12a] sm:$0xff]
      %v2167 = vld [vmem:[#allocation2 + $0x13a] sm:$0xff]
      %v2168 = vld [vmem:[#allocation2 + $0x142] sm:$0xff]
      %v2169 = vld [vmem:[#allocation2 + $0x152] sm:$0xff]
      %v2170 = vld [vmem:[#allocation2 + $0x15a] sm:$0xff]
      %v2171 = vld [vmem:[#allocation2 + $0x16a] sm:$0xff]
      %v2172 = vld [vmem:[#allocation2 + $0x172] sm:$0xff]
      %s2173 = scalar_lea.vmem %s1, 40
      %v2174 = vld [vmem:[%s2173] sm:$0x1f]
      %v2176 = vsel %vm212, %v2141, 0
      %v2179 = vsel %vm212, %v2142, 0
      %v2182 = vsel %vm212, %v2143, 0
      %v2185 = vsel %vm212, %v2144, 0
      %v2188 = vsel %vm212, %v2145, 0
      %v2191 = vsel %vm212, %v2146, 0
      %v2194 = vsel %vm212, %v2147, 0
      %v2197 = vsel %vm212, %v2148, 0
      %v2200 = vsel %vm212, %v2149, 0
      %v2203 = vsel %vm212, %v2150, 0
      %v2206 = vsel %vm212, %v2151, 0
      %v2209 = vsel %vm212, %v2152, 0
      %v2212 = vsel %vm212, %v2153, 0
      %v2215 = vsel %vm212, %v2154, 0
      %v2218 = vsel %vm212, %v2155, 0
      %v2221 = vsel %vm212, %v2156, 0
      %v2224 = vsel %vm212, %v2157, 0
      %v2227 = vsel %vm212, %v2158, 0
      %v2230 = vsel %vm212, %v2159, 0
      %v2233 = vsel %vm212, %v2160, 0
      %v2236 = vsel %vm212, %v2161, 0
      %v2239 = vsel %vm212, %v2162, 0
      %v2242 = vsel %vm212, %v2163, 0
      %v2245 = vsel %vm212, %v2164, 0
      %v2248 = vsel %vm212, %v2165, 0
      %v2251 = vsel %vm212, %v2166, 0
      %v2254 = vsel %vm212, %v2167, 0
      %v2257 = vsel %vm212, %v2168, 0
      %v2260 = vsel %vm212, %v2169, 0
      %v2263 = vsel %vm212, %v2170, 0
      %v2266 = vsel %vm212, %v2171, 0
      %v2269 = vsel %vm212, %v2172, 0
      %v2272 = vsel %vm531, %v2174, 0
      %2274 = vmatprep.subr.mxu0 0.0
      %2275 = vmatpush1.msra.mxu0 0.0
      %2276 = vmatprep.subr.mxu0 0.0
      %2277 = vmatpush1.msra.mxu0 0.0
      %2278 = vmatprep.subr.mxu0 0.0
      %2279 = vmatpush1.msra.mxu0 0.0
      %2280 = vmatprep.subr.mxu0 0.0
      %2281 = vmatpush1.msra.mxu0 0.0
      %2282 = vmatprep.subr.mxu0 0.0
      %2283 = vmatpush1.msra.mxu0 0.0
      %2284 = vmatprep.subr.mxu0 0.0
      %2285 = vmatpush1.msra.mxu0 0.0
      %2286 = vmatprep.subr.mxu0 0.0
      %2287 = vmatpush1.msra.mxu0 0.0
      %2288 = vmatprep.subr.mxu0 0.0
      %2289 = vmatpush1.msra.mxu0 0.0
      %2290 = vmatprep.subr.mxu0 0.0
      %2291 = vmatpush1.msra.mxu0 0.0
      %2292 = vmatprep.subr.mxu0 0.0
      %2293 = vmatpush1.msra.mxu0 0.0
      %2294 = vmatprep.subr.mxu0 0.0
      %2295 = vmatpush1.msra.mxu0 0.0
      %2296 = vmatprep.subr.mxu0 0.0
      %2297 = vmatpush1.msra.mxu0 0.0
      %2298 = vmatprep.subr.mxu0 0.0
      %2299 = vmatpush1.msra.mxu0 0.0
      %2300 = vmatprep.subr.mxu0 0.0
      %2301 = vmatpush1.msra.mxu0 0.0
      %2302 = vmatprep.subr.mxu0 0.0
      %2303 = vmatpush1.msra.mxu0 0.0
      %2304 = vmatprep.subr.mxu0 0.0
      %2305 = vmatpush1.msra.mxu0 %v2272
      %2306 = vmatprep.subr.mxu0 0.0
      %2307 = vmatpush2.msra.mxu0 0.0
      %2308 = vmatprep.subr.mxu0 0.0
      %2309 = vmatpush2.msra.mxu0 0.0
      %2310 = vmatprep.subr.mxu0 0.0
      %2311 = vmatpush2.msra.mxu0 0.0
      %2312 = vmatprep.subr.mxu0 0.0
      %2313 = vmatpush2.msra.mxu0 0.0
      %2314 = vmatprep.subr.mxu0 0.0
      %2315 = vmatpush2.msra.mxu0 0.0
      %2316 = vmatprep.subr.mxu0 0.0
      %2317 = vmatpush2.msra.mxu0 0.0
      %2318 = vmatprep.subr.mxu0 0.0
      %2319 = vmatpush2.msra.mxu0 0.0
      %2320 = vmatprep.subr.mxu0 0.0
      %2321 = vmatpush2.msra.mxu0 0.0
      %2322 = vmatprep.subr.mxu0 0.0
      %2323 = vmatpush2.msra.mxu0 0.0
      %2324 = vmatprep.subr.mxu0 0.0
      %2325 = vmatpush2.msra.mxu0 0.0
      %2326 = vmatprep.subr.mxu0 0.0
      %2327 = vmatpush2.msra.mxu0 0.0
      %2328 = vmatprep.subr.mxu0 0.0
      %2329 = vmatpush2.msra.mxu0 0.0
      %2330 = vmatprep.subr.mxu0 0.0
      %2331 = vmatpush2.msra.mxu0 0.0
      %2332 = vmatprep.subr.mxu0 0.0
      %2333 = vmatpush2.msra.mxu0 0.0
      %2334 = vmatprep.subr.mxu0 0.0
      %2335 = vmatpush2.msra.mxu0 0.0
      %2336 = vmatprep.subr.mxu0 0.0
      %2337 = vmatpush2.msra.mxu0 0.0
      %2338 = vmatprep.mubr.f32.mxu0 0.0
      %2339 = vmatmul.mubr.f32.gmra.mxu0 %v2176
      %v2340 = vpop.f32.mrf.mxu0
      %v2341 = vadd.f32 0.0, %v2340
      %v2342 = vpop.f32.mrf.mxu0
      %2343 = vmatprep.mubr.f32.mxu0 0.0
      %2344 = vmatmul.mubr.f32.gmra.mxu0 %v2179
      %v2345 = vpop.f32.mrf.mxu0
      %v2346 = vadd.f32 0.0, %v2345
      %v2347 = vpop.f32.mrf.mxu0
      %2348 = vmatprep.mubr.f32.mxu0 0.0
      %2349 = vmatmul.mubr.f32.gmra.mxu0 %v2182
      %v2350 = vpop.f32.mrf.mxu0
      %v2351 = vadd.f32 0.0, %v2350
      %v2352 = vpop.f32.mrf.mxu0
      %2353 = vmatprep.mubr.f32.mxu0 0.0
      %2354 = vmatmul.mubr.f32.gmra.mxu0 %v2185
      %v2355 = vpop.f32.mrf.mxu0
      %v2356 = vadd.f32 0.0, %v2355
      %v2357 = vpop.f32.mrf.mxu0
      %2358 = vmatprep.mubr.f32.mxu0 0.0
      %2359 = vmatmul.mubr.f32.gmra.mxu0 %v2188
      %v2360 = vpop.f32.mrf.mxu0
      %v2361 = vadd.f32 0.0, %v2360
      %v2362 = vpop.f32.mrf.mxu0
      %2363 = vmatprep.mubr.f32.mxu0 0.0
      %2364 = vmatmul.mubr.f32.gmra.mxu0 %v2191
      %v2365 = vpop.f32.mrf.mxu0
      %v2366 = vadd.f32 0.0, %v2365
      %v2367 = vpop.f32.mrf.mxu0
      %2368 = vmatprep.mubr.f32.mxu0 0.0
      %2369 = vmatmul.mubr.f32.gmra.mxu0 %v2194
      %v2370 = vpop.f32.mrf.mxu0
      %v2371 = vadd.f32 0.0, %v2370
      %v2372 = vpop.f32.mrf.mxu0
      %2373 = vmatprep.mubr.f32.mxu0 0.0
      %2374 = vmatmul.mubr.f32.gmra.mxu0 %v2197
      %v2375 = vpop.f32.mrf.mxu0
      %v2376 = vadd.f32 0.0, %v2375
      %v2377 = vpop.f32.mrf.mxu0
      %2378 = vmatprep.mubr.f32.mxu0 0.0
      %2379 = vmatmul.mubr.f32.gmra.mxu0 %v2200
      %v2380 = vpop.f32.mrf.mxu0
      %v2381 = vadd.f32 0.0, %v2380
      %v2382 = vpop.f32.mrf.mxu0
      %2383 = vmatprep.mubr.f32.mxu0 0.0
      %2384 = vmatmul.mubr.f32.gmra.mxu0 %v2203
      %v2385 = vpop.f32.mrf.mxu0
      %v2386 = vadd.f32 0.0, %v2385
      %v2387 = vpop.f32.mrf.mxu0
      %2388 = vmatprep.mubr.f32.mxu0 0.0
      %2389 = vmatmul.mubr.f32.gmra.mxu0 %v2206
      %v2390 = vpop.f32.mrf.mxu0
      %v2391 = vadd.f32 0.0, %v2390
      %v2392 = vpop.f32.mrf.mxu0
      %2393 = vmatprep.mubr.f32.mxu0 0.0
      %2394 = vmatmul.mubr.f32.gmra.mxu0 %v2209
      %v2395 = vpop.f32.mrf.mxu0
      %v2396 = vadd.f32 0.0, %v2395
      %v2397 = vpop.f32.mrf.mxu0
      %2398 = vmatprep.mubr.f32.mxu0 0.0
      %2399 = vmatmul.mubr.f32.gmra.mxu0 %v2212
      %v2400 = vpop.f32.mrf.mxu0
      %v2401 = vadd.f32 0.0, %v2400
      %v2402 = vpop.f32.mrf.mxu0
      %2403 = vmatprep.mubr.f32.mxu0 0.0
      %2404 = vmatmul.mubr.f32.gmra.mxu0 %v2215
      %v2405 = vpop.f32.mrf.mxu0
      %v2406 = vadd.f32 0.0, %v2405
      %v2407 = vpop.f32.mrf.mxu0
      %2408 = vmatprep.mubr.f32.mxu0 0.0
      %2409 = vmatmul.mubr.f32.gmra.mxu0 %v2218
      %v2410 = vpop.f32.mrf.mxu0
      %v2411 = vadd.f32 0.0, %v2410
      %v2412 = vpop.f32.mrf.mxu0
      %2413 = vmatprep.mubr.f32.mxu0 0.0
      %2414 = vmatmul.mubr.f32.gmra.mxu0 %v2221
      %v2415 = vpop.f32.mrf.mxu0
      %v2416 = vadd.f32 0.0, %v2415
      %v2417 = vpop.f32.mrf.mxu0
      %2418 = vmatprep.mubr.f32.mxu0 0.0
      %2419 = vmatmul.mubr.f32.gmra.mxu0 %v2224
      %v2420 = vpop.f32.mrf.mxu0
      %v2421 = vadd.f32 0.0, %v2420
      %v2422 = vpop.f32.mrf.mxu0
      %2423 = vmatprep.mubr.f32.mxu0 0.0
      %2424 = vmatmul.mubr.f32.gmra.mxu0 %v2227
      %v2425 = vpop.f32.mrf.mxu0
      %v2426 = vadd.f32 0.0, %v2425
      %v2427 = vpop.f32.mrf.mxu0
      %2428 = vmatprep.mubr.f32.mxu0 0.0
      %2429 = vmatmul.mubr.f32.gmra.mxu0 %v2230
      %v2430 = vpop.f32.mrf.mxu0
      %v2431 = vadd.f32 0.0, %v2430
      %v2432 = vpop.f32.mrf.mxu0
      %2433 = vmatprep.mubr.f32.mxu0 0.0
      %2434 = vmatmul.mubr.f32.gmra.mxu0 %v2233
      %v2435 = vpop.f32.mrf.mxu0
      %v2436 = vadd.f32 0.0, %v2435
      %v2437 = vpop.f32.mrf.mxu0
      %2438 = vmatprep.mubr.f32.mxu0 0.0
      %2439 = vmatmul.mubr.f32.gmra.mxu0 %v2236
      %v2440 = vpop.f32.mrf.mxu0
      %v2441 = vadd.f32 0.0, %v2440
      %v2442 = vpop.f32.mrf.mxu0
      %2443 = vmatprep.mubr.f32.mxu0 0.0
      %2444 = vmatmul.mubr.f32.gmra.mxu0 %v2239
      %v2445 = vpop.f32.mrf.mxu0
      %v2446 = vadd.f32 0.0, %v2445
      %v2447 = vpop.f32.mrf.mxu0
      %2448 = vmatprep.mubr.f32.mxu0 0.0
      %2449 = vmatmul.mubr.f32.gmra.mxu0 %v2242
      %v2450 = vpop.f32.mrf.mxu0
      %v2451 = vadd.f32 0.0, %v2450
      %v2452 = vpop.f32.mrf.mxu0
      %2453 = vmatprep.mubr.f32.mxu0 0.0
      %2454 = vmatmul.mubr.f32.gmra.mxu0 %v2245
      %v2455 = vpop.f32.mrf.mxu0
      %v2456 = vadd.f32 0.0, %v2455
      %v2457 = vpop.f32.mrf.mxu0
      %2458 = vmatprep.mubr.f32.mxu0 0.0
      %2459 = vmatmul.mubr.f32.gmra.mxu0 %v2248
      %v2460 = vpop.f32.mrf.mxu0
      %v2461 = vadd.f32 0.0, %v2460
      %v2462 = vpop.f32.mrf.mxu0
      %2463 = vmatprep.mubr.f32.mxu0 0.0
      %2464 = vmatmul.mubr.f32.gmra.mxu0 %v2251
      %v2465 = vpop.f32.mrf.mxu0
      %v2466 = vadd.f32 0.0, %v2465
      %v2467 = vpop.f32.mrf.mxu0
      %2468 = vmatprep.mubr.f32.mxu0 0.0
      %2469 = vmatmul.mubr.f32.gmra.mxu0 %v2254
      %v2470 = vpop.f32.mrf.mxu0
      %v2471 = vadd.f32 0.0, %v2470
      %v2472 = vpop.f32.mrf.mxu0
      %2473 = vmatprep.mubr.f32.mxu0 0.0
      %2474 = vmatmul.mubr.f32.gmra.mxu0 %v2257
      %v2475 = vpop.f32.mrf.mxu0
      %v2476 = vadd.f32 0.0, %v2475
      %v2477 = vpop.f32.mrf.mxu0
      %2478 = vmatprep.mubr.f32.mxu0 0.0
      %2479 = vmatmul.mubr.f32.gmra.mxu0 %v2260
      %v2480 = vpop.f32.mrf.mxu0
      %v2481 = vadd.f32 0.0, %v2480
      %v2482 = vpop.f32.mrf.mxu0
      %2483 = vmatprep.mubr.f32.mxu0 0.0
      %2484 = vmatmul.mubr.f32.gmra.mxu0 %v2263
      %v2485 = vpop.f32.mrf.mxu0
      %v2486 = vadd.f32 0.0, %v2485
      %v2487 = vpop.f32.mrf.mxu0
      %2488 = vmatprep.mubr.f32.mxu0 0.0
      %2489 = vmatmul.mubr.f32.gmra.mxu0 %v2266
      %v2490 = vpop.f32.mrf.mxu0
      %v2491 = vadd.f32 0.0, %v2490
      %v2492 = vpop.f32.mrf.mxu0
      %2493 = vmatprep.mubr.f32.mxu0 0.0
      %2494 = vmatmul.mubr.f32.gmra.mxu0 %v2269
      %v2495 = vpop.f32.mrf.mxu0
      %v2496 = vadd.f32 0.0, %v2495
      %v2497 = vpop.f32.mrf.mxu0
      %2498 = vdwg.mxu0
      %v2500 = vsel %vm212, %v2107, 0
      %v2503 = vsel %vm212, %v2108, 0
      %v2506 = vsel %vm212, %v2109, 0
      %v2509 = vsel %vm212, %v2110, 0
      %v2512 = vsel %vm212, %v2111, 0
      %v2515 = vsel %vm212, %v2112, 0
      %v2518 = vsel %vm212, %v2113, 0
      %v2521 = vsel %vm212, %v2114, 0
      %v2524 = vsel %vm212, %v2115, 0
      %v2527 = vsel %vm212, %v2116, 0
      %v2530 = vsel %vm212, %v2117, 0
      %v2533 = vsel %vm212, %v2118, 0
      %v2536 = vsel %vm212, %v2119, 0
      %v2539 = vsel %vm212, %v2120, 0
      %v2542 = vsel %vm212, %v2121, 0
      %v2545 = vsel %vm212, %v2122, 0
      %v2548 = vsel %vm212, %v2123, 0
      %v2551 = vsel %vm212, %v2124, 0
      %v2554 = vsel %vm212, %v2125, 0
      %v2557 = vsel %vm212, %v2126, 0
      %v2560 = vsel %vm212, %v2127, 0
      %v2563 = vsel %vm212, %v2128, 0
      %v2566 = vsel %vm212, %v2129, 0
      %v2569 = vsel %vm212, %v2130, 0
      %v2572 = vsel %vm212, %v2131, 0
      %v2575 = vsel %vm212, %v2132, 0
      %v2578 = vsel %vm212, %v2133, 0
      %v2581 = vsel %vm212, %v2134, 0
      %v2584 = vsel %vm212, %v2135, 0
      %v2587 = vsel %vm212, %v2136, 0
      %v2590 = vsel %vm212, %v2137, 0
      %v2593 = vsel %vm212, %v2138, 0
      %v2596 = vsel %vm531, %v2140, 0
      %2598 = vmatprep.subr.mxu0 0.0
      %2599 = vmatpush1.msra.mxu0 0.0
      %2600 = vmatprep.subr.mxu0 0.0
      %2601 = vmatpush1.msra.mxu0 0.0
      %2602 = vmatprep.subr.mxu0 0.0
      %2603 = vmatpush1.msra.mxu0 0.0
      %2604 = vmatprep.subr.mxu0 0.0
      %2605 = vmatpush1.msra.mxu0 0.0
      %2606 = vmatprep.subr.mxu0 0.0
      %2607 = vmatpush1.msra.mxu0 0.0
      %2608 = vmatprep.subr.mxu0 0.0
      %2609 = vmatpush1.msra.mxu0 0.0
      %2610 = vmatprep.subr.mxu0 0.0
      %2611 = vmatpush1.msra.mxu0 0.0
      %2612 = vmatprep.subr.mxu0 0.0
      %2613 = vmatpush1.msra.mxu0 0.0
      %2614 = vmatprep.subr.mxu0 0.0
      %2615 = vmatpush1.msra.mxu0 0.0
      %2616 = vmatprep.subr.mxu0 0.0
      %2617 = vmatpush1.msra.mxu0 0.0
      %2618 = vmatprep.subr.mxu0 0.0
      %2619 = vmatpush1.msra.mxu0 0.0
      %2620 = vmatprep.subr.mxu0 0.0
      %2621 = vmatpush1.msra.mxu0 0.0
      %2622 = vmatprep.subr.mxu0 0.0
      %2623 = vmatpush1.msra.mxu0 0.0
      %2624 = vmatprep.subr.mxu0 0.0
      %2625 = vmatpush1.msra.mxu0 0.0
      %2626 = vmatprep.subr.mxu0 0.0
      %2627 = vmatpush1.msra.mxu0 0.0
      %2628 = vmatprep.subr.mxu0 0.0
      %2629 = vmatpush1.msra.mxu0 %v2596
      %2630 = vmatprep.subr.mxu0 0.0
      %2631 = vmatpush2.msra.mxu0 0.0
      %2632 = vmatprep.subr.mxu0 0.0
      %2633 = vmatpush2.msra.mxu0 0.0
      %2634 = vmatprep.subr.mxu0 0.0
      %2635 = vmatpush2.msra.mxu0 0.0
      %2636 = vmatprep.subr.mxu0 0.0
      %2637 = vmatpush2.msra.mxu0 0.0
      %2638 = vmatprep.subr.mxu0 0.0
      %2639 = vmatpush2.msra.mxu0 0.0
      %2640 = vmatprep.subr.mxu0 0.0
      %2641 = vmatpush2.msra.mxu0 0.0
      %2642 = vmatprep.subr.mxu0 0.0
      %2643 = vmatpush2.msra.mxu0 0.0
      %2644 = vmatprep.subr.mxu0 0.0
      %2645 = vmatpush2.msra.mxu0 0.0
      %2646 = vmatprep.subr.mxu0 0.0
      %2647 = vmatpush2.msra.mxu0 0.0
      %2648 = vmatprep.subr.mxu0 0.0
      %2649 = vmatpush2.msra.mxu0 0.0
      %2650 = vmatprep.subr.mxu0 0.0
      %2651 = vmatpush2.msra.mxu0 0.0
      %2652 = vmatprep.subr.mxu0 0.0
      %2653 = vmatpush2.msra.mxu0 0.0
      %2654 = vmatprep.subr.mxu0 0.0
      %2655 = vmatpush2.msra.mxu0 0.0
      %2656 = vmatprep.subr.mxu0 0.0
      %2657 = vmatpush2.msra.mxu0 0.0
      %2658 = vmatprep.subr.mxu0 0.0
      %2659 = vmatpush2.msra.mxu0 0.0
      %2660 = vmatprep.subr.mxu0 0.0
      %2661 = vmatpush2.msra.mxu0 0.0
      %2662 = vmatprep.mubr.f32.mxu0 0.0
      %2663 = vmatmul.mubr.f32.gmra.mxu0 %v2500
      %v2664 = vpop.f32.mrf.mxu0
      %v2665 = vadd.f32 %v2341, %v2664
      %v2666 = vpop.f32.mrf.mxu0
      %2667 = vmatprep.mubr.f32.mxu0 0.0
      %2668 = vmatmul.mubr.f32.gmra.mxu0 %v2503
      %v2669 = vpop.f32.mrf.mxu0
      %v2670 = vadd.f32 %v2346, %v2669
      %v2671 = vpop.f32.mrf.mxu0
      %2672 = vmatprep.mubr.f32.mxu0 0.0
      %2673 = vmatmul.mubr.f32.gmra.mxu0 %v2506
      %v2674 = vpop.f32.mrf.mxu0
      %v2675 = vadd.f32 %v2351, %v2674
      %v2676 = vpop.f32.mrf.mxu0
      %2677 = vmatprep.mubr.f32.mxu0 0.0
      %2678 = vmatmul.mubr.f32.gmra.mxu0 %v2509
      %v2679 = vpop.f32.mrf.mxu0
      %v2680 = vadd.f32 %v2356, %v2679
      %v2681 = vpop.f32.mrf.mxu0
      %2682 = vmatprep.mubr.f32.mxu0 0.0
      %2683 = vmatmul.mubr.f32.gmra.mxu0 %v2512
      %v2684 = vpop.f32.mrf.mxu0
      %v2685 = vadd.f32 %v2361, %v2684
      %v2686 = vpop.f32.mrf.mxu0
      %2687 = vmatprep.mubr.f32.mxu0 0.0
      %2688 = vmatmul.mubr.f32.gmra.mxu0 %v2515
      %v2689 = vpop.f32.mrf.mxu0
      %v2690 = vadd.f32 %v2366, %v2689
      %v2691 = vpop.f32.mrf.mxu0
      %2692 = vmatprep.mubr.f32.mxu0 0.0
      %2693 = vmatmul.mubr.f32.gmra.mxu0 %v2518
      %v2694 = vpop.f32.mrf.mxu0
      %v2695 = vadd.f32 %v2371, %v2694
      %v2696 = vpop.f32.mrf.mxu0
      %2697 = vmatprep.mubr.f32.mxu0 0.0
      %2698 = vmatmul.mubr.f32.gmra.mxu0 %v2521
      %v2699 = vpop.f32.mrf.mxu0
      %v2700 = vadd.f32 %v2376, %v2699
      %v2701 = vpop.f32.mrf.mxu0
      %2702 = vmatprep.mubr.f32.mxu0 0.0
      %2703 = vmatmul.mubr.f32.gmra.mxu0 %v2524
      %v2704 = vpop.f32.mrf.mxu0
      %v2705 = vadd.f32 %v2381, %v2704
      %v2706 = vpop.f32.mrf.mxu0
      %2707 = vmatprep.mubr.f32.mxu0 0.0
      %2708 = vmatmul.mubr.f32.gmra.mxu0 %v2527
      %v2709 = vpop.f32.mrf.mxu0
      %v2710 = vadd.f32 %v2386, %v2709
      %v2711 = vpop.f32.mrf.mxu0
      %2712 = vmatprep.mubr.f32.mxu0 0.0
      %2713 = vmatmul.mubr.f32.gmra.mxu0 %v2530
      %v2714 = vpop.f32.mrf.mxu0
      %v2715 = vadd.f32 %v2391, %v2714
      %v2716 = vpop.f32.mrf.mxu0
      %2717 = vmatprep.mubr.f32.mxu0 0.0
      %2718 = vmatmul.mubr.f32.gmra.mxu0 %v2533
      %v2719 = vpop.f32.mrf.mxu0
      %v2720 = vadd.f32 %v2396, %v2719
      %v2721 = vpop.f32.mrf.mxu0
      %2722 = vmatprep.mubr.f32.mxu0 0.0
      %2723 = vmatmul.mubr.f32.gmra.mxu0 %v2536
      %v2724 = vpop.f32.mrf.mxu0
      %v2725 = vadd.f32 %v2401, %v2724
      %v2726 = vpop.f32.mrf.mxu0
      %2727 = vmatprep.mubr.f32.mxu0 0.0
      %2728 = vmatmul.mubr.f32.gmra.mxu0 %v2539
      %v2729 = vpop.f32.mrf.mxu0
      %v2730 = vadd.f32 %v2406, %v2729
      %v2731 = vpop.f32.mrf.mxu0
      %2732 = vmatprep.mubr.f32.mxu0 0.0
      %2733 = vmatmul.mubr.f32.gmra.mxu0 %v2542
      %v2734 = vpop.f32.mrf.mxu0
      %v2735 = vadd.f32 %v2411, %v2734
      %v2736 = vpop.f32.mrf.mxu0
      %2737 = vmatprep.mubr.f32.mxu0 0.0
      %2738 = vmatmul.mubr.f32.gmra.mxu0 %v2545
      %v2739 = vpop.f32.mrf.mxu0
      %v2740 = vadd.f32 %v2416, %v2739
      %v2741 = vpop.f32.mrf.mxu0
      %2742 = vmatprep.mubr.f32.mxu0 0.0
      %2743 = vmatmul.mubr.f32.gmra.mxu0 %v2548
      %v2744 = vpop.f32.mrf.mxu0
      %v2745 = vadd.f32 %v2421, %v2744
      %v2746 = vpop.f32.mrf.mxu0
      %2747 = vmatprep.mubr.f32.mxu0 0.0
      %2748 = vmatmul.mubr.f32.gmra.mxu0 %v2551
      %v2749 = vpop.f32.mrf.mxu0
      %v2750 = vadd.f32 %v2426, %v2749
      %v2751 = vpop.f32.mrf.mxu0
      %2752 = vmatprep.mubr.f32.mxu0 0.0
      %2753 = vmatmul.mubr.f32.gmra.mxu0 %v2554
      %v2754 = vpop.f32.mrf.mxu0
      %v2755 = vadd.f32 %v2431, %v2754
      %v2756 = vpop.f32.mrf.mxu0
      %2757 = vmatprep.mubr.f32.mxu0 0.0
      %2758 = vmatmul.mubr.f32.gmra.mxu0 %v2557
      %v2759 = vpop.f32.mrf.mxu0
      %v2760 = vadd.f32 %v2436, %v2759
      %v2761 = vpop.f32.mrf.mxu0
      %2762 = vmatprep.mubr.f32.mxu0 0.0
      %2763 = vmatmul.mubr.f32.gmra.mxu0 %v2560
      %v2764 = vpop.f32.mrf.mxu0
      %v2765 = vadd.f32 %v2441, %v2764
      %v2766 = vpop.f32.mrf.mxu0
      %2767 = vmatprep.mubr.f32.mxu0 0.0
      %2768 = vmatmul.mubr.f32.gmra.mxu0 %v2563
      %v2769 = vpop.f32.mrf.mxu0
      %v2770 = vadd.f32 %v2446, %v2769
      %v2771 = vpop.f32.mrf.mxu0
      %2772 = vmatprep.mubr.f32.mxu0 0.0
      %2773 = vmatmul.mubr.f32.gmra.mxu0 %v2566
      %v2774 = vpop.f32.mrf.mxu0
      %v2775 = vadd.f32 %v2451, %v2774
      %v2776 = vpop.f32.mrf.mxu0
      %2777 = vmatprep.mubr.f32.mxu0 0.0
      %2778 = vmatmul.mubr.f32.gmra.mxu0 %v2569
      %v2779 = vpop.f32.mrf.mxu0
      %v2780 = vadd.f32 %v2456, %v2779
      %v2781 = vpop.f32.mrf.mxu0
      %2782 = vmatprep.mubr.f32.mxu0 0.0
      %2783 = vmatmul.mubr.f32.gmra.mxu0 %v2572
      %v2784 = vpop.f32.mrf.mxu0
      %v2785 = vadd.f32 %v2461, %v2784
      %v2786 = vpop.f32.mrf.mxu0
      %2787 = vmatprep.mubr.f32.mxu0 0.0
      %2788 = vmatmul.mubr.f32.gmra.mxu0 %v2575
      %v2789 = vpop.f32.mrf.mxu0
      %v2790 = vadd.f32 %v2466, %v2789
      %v2791 = vpop.f32.mrf.mxu0
      %2792 = vmatprep.mubr.f32.mxu0 0.0
      %2793 = vmatmul.mubr.f32.gmra.mxu0 %v2578
      %v2794 = vpop.f32.mrf.mxu0
      %v2795 = vadd.f32 %v2471, %v2794
      %v2796 = vpop.f32.mrf.mxu0
      %2797 = vmatprep.mubr.f32.mxu0 0.0
      %2798 = vmatmul.mubr.f32.gmra.mxu0 %v2581
      %v2799 = vpop.f32.mrf.mxu0
      %v2800 = vadd.f32 %v2476, %v2799
      %v2801 = vpop.f32.mrf.mxu0
      %2802 = vmatprep.mubr.f32.mxu0 0.0
      %2803 = vmatmul.mubr.f32.gmra.mxu0 %v2584
      %v2804 = vpop.f32.mrf.mxu0
      %v2805 = vadd.f32 %v2481, %v2804
      %v2806 = vpop.f32.mrf.mxu0
      %2807 = vmatprep.mubr.f32.mxu0 0.0
      %2808 = vmatmul.mubr.f32.gmra.mxu0 %v2587
      %v2809 = vpop.f32.mrf.mxu0
      %v2810 = vadd.f32 %v2486, %v2809
      %v2811 = vpop.f32.mrf.mxu0
      %2812 = vmatprep.mubr.f32.mxu0 0.0
      %2813 = vmatmul.mubr.f32.gmra.mxu0 %v2590
      %v2814 = vpop.f32.mrf.mxu0
      %v2815 = vadd.f32 %v2491, %v2814
      %v2816 = vpop.f32.mrf.mxu0
      %2817 = vmatprep.mubr.f32.mxu0 0.0
      %2818 = vmatmul.mubr.f32.gmra.mxu0 %v2593
      %v2819 = vpop.f32.mrf.mxu0
      %v2820 = vadd.f32 %v2496, %v2819
      %v2821 = vpop.f32.mrf.mxu0
      %2822 = vdwg.mxu0
      %v2823 = vld [vmem:[%s300 + $0x1] sm:$0xff]
      %v2824 = vld [vmem:[%s300 + $0x9] sm:$0xff]
      %v2825 = vld [vmem:[%s300 + $0x19] sm:$0xff]
      %v2826 = vld [vmem:[%s300 + $0x21] sm:$0xff]
      %v2827 = vld [vmem:[%s300 + $0x31] sm:$0xff]
      %v2828 = vld [vmem:[%s300 + $0x39] sm:$0xff]
      %v2829 = vld [vmem:[%s300 + $0x49] sm:$0xff]
      %v2830 = vld [vmem:[%s300 + $0x51] sm:$0xff]
      %v2831 = vld [vmem:[%s300 + $0x61] sm:$0xff]
      %v2832 = vld [vmem:[%s300 + $0x69] sm:$0xff]
      %v2833 = vld [vmem:[%s300 + $0x79] sm:$0xff]
      %v2834 = vld [vmem:[%s300 + $0x81] sm:$0xff]
      %v2835 = vld [vmem:[%s300 + $0x91] sm:$0xff]
      %v2836 = vld [vmem:[%s300 + $0x99] sm:$0xff]
      %v2837 = vld [vmem:[%s300 + $0xa9] sm:$0xff]
      %v2838 = vld [vmem:[%s300 + $0xb1] sm:$0xff]
      %v2839 = vld [vmem:[%s300 + $0xc1] sm:$0xff]
      %v2840 = vld [vmem:[%s300 + $0xc9] sm:$0xff]
      %v2841 = vld [vmem:[%s300 + $0xd9] sm:$0xff]
      %v2842 = vld [vmem:[%s300 + $0xe1] sm:$0xff]
      %v2843 = vld [vmem:[%s300 + $0xf1] sm:$0xff]
      %v2844 = vld [vmem:[%s300 + $0xf9] sm:$0xff]
      %v2845 = vld [vmem:[%s300 + $0x109] sm:$0xff]
      %v2846 = vld [vmem:[%s300 + $0x111] sm:$0xff]
      %v2847 = vld [vmem:[%s300 + $0x121] sm:$0xff]
      %v2848 = vld [vmem:[%s300 + $0x129] sm:$0xff]
      %v2849 = vld [vmem:[%s300 + $0x139] sm:$0xff]
      %v2850 = vld [vmem:[%s300 + $0x141] sm:$0xff]
      %v2851 = vld [vmem:[%s300 + $0x151] sm:$0xff]
      %v2852 = vld [vmem:[%s300 + $0x159] sm:$0xff]
      %v2853 = vld [vmem:[%s300 + $0x169] sm:$0xff]
      %v2854 = vld [vmem:[%s300 + $0x171] sm:$0xff]
      %s2855 = scalar_lea.vmem %s1, 48
      %v2856 = vld [vmem:[%s2855] sm:$0x1f]
      %v2858 = vsel %vm212, %v2823, 0
      %v2861 = vsel %vm212, %v2824, 0
      %v2864 = vsel %vm212, %v2825, 0
      %v2867 = vsel %vm212, %v2826, 0
      %v2870 = vsel %vm212, %v2827, 0
      %v2873 = vsel %vm212, %v2828, 0
      %v2876 = vsel %vm212, %v2829, 0
      %v2879 = vsel %vm212, %v2830, 0
      %v2882 = vsel %vm212, %v2831, 0
      %v2885 = vsel %vm212, %v2832, 0
      %v2888 = vsel %vm212, %v2833, 0
      %v2891 = vsel %vm212, %v2834, 0
      %v2894 = vsel %vm212, %v2835, 0
      %v2897 = vsel %vm212, %v2836, 0
      %v2900 = vsel %vm212, %v2837, 0
      %v2903 = vsel %vm212, %v2838, 0
      %v2906 = vsel %vm212, %v2839, 0
      %v2909 = vsel %vm212, %v2840, 0
      %v2912 = vsel %vm212, %v2841, 0
      %v2915 = vsel %vm212, %v2842, 0
      %v2918 = vsel %vm212, %v2843, 0
      %v2921 = vsel %vm212, %v2844, 0
      %v2924 = vsel %vm212, %v2845, 0
      %v2927 = vsel %vm212, %v2846, 0
      %v2930 = vsel %vm212, %v2847, 0
      %v2933 = vsel %vm212, %v2848, 0
      %v2936 = vsel %vm212, %v2849, 0
      %v2939 = vsel %vm212, %v2850, 0
      %v2942 = vsel %vm212, %v2851, 0
      %v2945 = vsel %vm212, %v2852, 0
      %v2948 = vsel %vm212, %v2853, 0
      %v2951 = vsel %vm212, %v2854, 0
      %v2954 = vsel %vm531, %v2856, 0
      %2956 = vmatprep.subr.mxu0 0.0
      %2957 = vmatpush1.msra.mxu0 0.0
      %2958 = vmatprep.subr.mxu0 0.0
      %2959 = vmatpush1.msra.mxu0 0.0
      %2960 = vmatprep.subr.mxu0 0.0
      %2961 = vmatpush1.msra.mxu0 0.0
      %2962 = vmatprep.subr.mxu0 0.0
      %2963 = vmatpush1.msra.mxu0 0.0
      %2964 = vmatprep.subr.mxu0 0.0
      %2965 = vmatpush1.msra.mxu0 0.0
      %2966 = vmatprep.subr.mxu0 0.0
      %2967 = vmatpush1.msra.mxu0 0.0
      %2968 = vmatprep.subr.mxu0 0.0
      %2969 = vmatpush1.msra.mxu0 0.0
      %2970 = vmatprep.subr.mxu0 0.0
      %2971 = vmatpush1.msra.mxu0 0.0
      %2972 = vmatprep.subr.mxu0 0.0
      %2973 = vmatpush1.msra.mxu0 0.0
      %2974 = vmatprep.subr.mxu0 0.0
      %2975 = vmatpush1.msra.mxu0 0.0
      %2976 = vmatprep.subr.mxu0 0.0
      %2977 = vmatpush1.msra.mxu0 0.0
      %2978 = vmatprep.subr.mxu0 0.0
      %2979 = vmatpush1.msra.mxu0 0.0
      %2980 = vmatprep.subr.mxu0 0.0
      %2981 = vmatpush1.msra.mxu0 0.0
      %2982 = vmatprep.subr.mxu0 0.0
      %2983 = vmatpush1.msra.mxu0 0.0
      %2984 = vmatprep.subr.mxu0 0.0
      %2985 = vmatpush1.msra.mxu0 0.0
      %2986 = vmatprep.subr.mxu0 0.0
      %2987 = vmatpush1.msra.mxu0 %v2954
      %2988 = vmatprep.subr.mxu0 0.0
      %2989 = vmatpush2.msra.mxu0 0.0
      %2990 = vmatprep.subr.mxu0 0.0
      %2991 = vmatpush2.msra.mxu0 0.0
      %2992 = vmatprep.subr.mxu0 0.0
      %2993 = vmatpush2.msra.mxu0 0.0
      %2994 = vmatprep.subr.mxu0 0.0
      %2995 = vmatpush2.msra.mxu0 0.0
      %2996 = vmatprep.subr.mxu0 0.0
      %2997 = vmatpush2.msra.mxu0 0.0
      %2998 = vmatprep.subr.mxu0 0.0
      %2999 = vmatpush2.msra.mxu0 0.0
      %3000 = vmatprep.subr.mxu0 0.0
      %3001 = vmatpush2.msra.mxu0 0.0
      %3002 = vmatprep.subr.mxu0 0.0
      %3003 = vmatpush2.msra.mxu0 0.0
      %3004 = vmatprep.subr.mxu0 0.0
      %3005 = vmatpush2.msra.mxu0 0.0
      %3006 = vmatprep.subr.mxu0 0.0
      %3007 = vmatpush2.msra.mxu0 0.0
      %3008 = vmatprep.subr.mxu0 0.0
      %3009 = vmatpush2.msra.mxu0 0.0
      %3010 = vmatprep.subr.mxu0 0.0
      %3011 = vmatpush2.msra.mxu0 0.0
      %3012 = vmatprep.subr.mxu0 0.0
      %3013 = vmatpush2.msra.mxu0 0.0
      %3014 = vmatprep.subr.mxu0 0.0
      %3015 = vmatpush2.msra.mxu0 0.0
      %3016 = vmatprep.subr.mxu0 0.0
      %3017 = vmatpush2.msra.mxu0 0.0
      %3018 = vmatprep.subr.mxu0 0.0
      %3019 = vmatpush2.msra.mxu0 0.0
      %3020 = vmatprep.mubr.f32.mxu0 0.0
      %3021 = vmatmul.mubr.f32.gmra.mxu0 %v2858
      %v3022 = vpop.f32.mrf.mxu0
      %v3023 = vadd.f32 0.0, %v3022
      %v3024 = vpop.f32.mrf.mxu0
      %3025 = vmatprep.mubr.f32.mxu0 0.0
      %3026 = vmatmul.mubr.f32.gmra.mxu0 %v2861
      %v3027 = vpop.f32.mrf.mxu0
      %v3028 = vadd.f32 0.0, %v3027
      %v3029 = vpop.f32.mrf.mxu0
      %3030 = vmatprep.mubr.f32.mxu0 0.0
      %3031 = vmatmul.mubr.f32.gmra.mxu0 %v2864
      %v3032 = vpop.f32.mrf.mxu0
      %v3033 = vadd.f32 0.0, %v3032
      %v3034 = vpop.f32.mrf.mxu0
      %3035 = vmatprep.mubr.f32.mxu0 0.0
      %3036 = vmatmul.mubr.f32.gmra.mxu0 %v2867
      %v3037 = vpop.f32.mrf.mxu0
      %v3038 = vadd.f32 0.0, %v3037
      %v3039 = vpop.f32.mrf.mxu0
      %3040 = vmatprep.mubr.f32.mxu0 0.0
      %3041 = vmatmul.mubr.f32.gmra.mxu0 %v2870
      %v3042 = vpop.f32.mrf.mxu0
      %v3043 = vadd.f32 0.0, %v3042
      %v3044 = vpop.f32.mrf.mxu0
      %3045 = vmatprep.mubr.f32.mxu0 0.0
      %3046 = vmatmul.mubr.f32.gmra.mxu0 %v2873
      %v3047 = vpop.f32.mrf.mxu0
      %v3048 = vadd.f32 0.0, %v3047
      %v3049 = vpop.f32.mrf.mxu0
      %3050 = vmatprep.mubr.f32.mxu0 0.0
      %3051 = vmatmul.mubr.f32.gmra.mxu0 %v2876
      %v3052 = vpop.f32.mrf.mxu0
      %v3053 = vadd.f32 0.0, %v3052
      %v3054 = vpop.f32.mrf.mxu0
      %3055 = vmatprep.mubr.f32.mxu0 0.0
      %3056 = vmatmul.mubr.f32.gmra.mxu0 %v2879
      %v3057 = vpop.f32.mrf.mxu0
      %v3058 = vadd.f32 0.0, %v3057
      %v3059 = vpop.f32.mrf.mxu0
      %3060 = vmatprep.mubr.f32.mxu0 0.0
      %3061 = vmatmul.mubr.f32.gmra.mxu0 %v2882
      %v3062 = vpop.f32.mrf.mxu0
      %v3063 = vadd.f32 0.0, %v3062
      %v3064 = vpop.f32.mrf.mxu0
      %3065 = vmatprep.mubr.f32.mxu0 0.0
      %3066 = vmatmul.mubr.f32.gmra.mxu0 %v2885
      %v3067 = vpop.f32.mrf.mxu0
      %v3068 = vadd.f32 0.0, %v3067
      %v3069 = vpop.f32.mrf.mxu0
      %3070 = vmatprep.mubr.f32.mxu0 0.0
      %3071 = vmatmul.mubr.f32.gmra.mxu0 %v2888
      %v3072 = vpop.f32.mrf.mxu0
      %v3073 = vadd.f32 0.0, %v3072
      %v3074 = vpop.f32.mrf.mxu0
      %3075 = vmatprep.mubr.f32.mxu0 0.0
      %3076 = vmatmul.mubr.f32.gmra.mxu0 %v2891
      %v3077 = vpop.f32.mrf.mxu0
      %v3078 = vadd.f32 0.0, %v3077
      %v3079 = vpop.f32.mrf.mxu0
      %3080 = vmatprep.mubr.f32.mxu0 0.0
      %3081 = vmatmul.mubr.f32.gmra.mxu0 %v2894
      %v3082 = vpop.f32.mrf.mxu0
      %v3083 = vadd.f32 0.0, %v3082
      %v3084 = vpop.f32.mrf.mxu0
      %3085 = vmatprep.mubr.f32.mxu0 0.0
      %3086 = vmatmul.mubr.f32.gmra.mxu0 %v2897
      %v3087 = vpop.f32.mrf.mxu0
      %v3088 = vadd.f32 0.0, %v3087
      %v3089 = vpop.f32.mrf.mxu0
      %3090 = vmatprep.mubr.f32.mxu0 0.0
      %3091 = vmatmul.mubr.f32.gmra.mxu0 %v2900
      %v3092 = vpop.f32.mrf.mxu0
      %v3093 = vadd.f32 0.0, %v3092
      %v3094 = vpop.f32.mrf.mxu0
      %3095 = vmatprep.mubr.f32.mxu0 0.0
      %3096 = vmatmul.mubr.f32.gmra.mxu0 %v2903
      %v3097 = vpop.f32.mrf.mxu0
      %v3098 = vadd.f32 0.0, %v3097
      %v3099 = vpop.f32.mrf.mxu0
      %3100 = vmatprep.mubr.f32.mxu0 0.0
      %3101 = vmatmul.mubr.f32.gmra.mxu0 %v2906
      %v3102 = vpop.f32.mrf.mxu0
      %v3103 = vadd.f32 0.0, %v3102
      %v3104 = vpop.f32.mrf.mxu0
      %3105 = vmatprep.mubr.f32.mxu0 0.0
      %3106 = vmatmul.mubr.f32.gmra.mxu0 %v2909
      %v3107 = vpop.f32.mrf.mxu0
      %v3108 = vadd.f32 0.0, %v3107
      %v3109 = vpop.f32.mrf.mxu0
      %3110 = vmatprep.mubr.f32.mxu0 0.0
      %3111 = vmatmul.mubr.f32.gmra.mxu0 %v2912
      %v3112 = vpop.f32.mrf.mxu0
      %v3113 = vadd.f32 0.0, %v3112
      %v3114 = vpop.f32.mrf.mxu0
      %3115 = vmatprep.mubr.f32.mxu0 0.0
      %3116 = vmatmul.mubr.f32.gmra.mxu0 %v2915
      %v3117 = vpop.f32.mrf.mxu0
      %v3118 = vadd.f32 0.0, %v3117
      %v3119 = vpop.f32.mrf.mxu0
      %3120 = vmatprep.mubr.f32.mxu0 0.0
      %3121 = vmatmul.mubr.f32.gmra.mxu0 %v2918
      %v3122 = vpop.f32.mrf.mxu0
      %v3123 = vadd.f32 0.0, %v3122
      %v3124 = vpop.f32.mrf.mxu0
      %3125 = vmatprep.mubr.f32.mxu0 0.0
      %3126 = vmatmul.mubr.f32.gmra.mxu0 %v2921
      %v3127 = vpop.f32.mrf.mxu0
      %v3128 = vadd.f32 0.0, %v3127
      %v3129 = vpop.f32.mrf.mxu0
      %3130 = vmatprep.mubr.f32.mxu0 0.0
      %3131 = vmatmul.mubr.f32.gmra.mxu0 %v2924
      %v3132 = vpop.f32.mrf.mxu0
      %v3133 = vadd.f32 0.0, %v3132
      %v3134 = vpop.f32.mrf.mxu0
      %3135 = vmatprep.mubr.f32.mxu0 0.0
      %3136 = vmatmul.mubr.f32.gmra.mxu0 %v2927
      %v3137 = vpop.f32.mrf.mxu0
      %v3138 = vadd.f32 0.0, %v3137
      %v3139 = vpop.f32.mrf.mxu0
      %3140 = vmatprep.mubr.f32.mxu0 0.0
      %3141 = vmatmul.mubr.f32.gmra.mxu0 %v2930
      %v3142 = vpop.f32.mrf.mxu0
      %v3143 = vadd.f32 0.0, %v3142
      %v3144 = vpop.f32.mrf.mxu0
      %3145 = vmatprep.mubr.f32.mxu0 0.0
      %3146 = vmatmul.mubr.f32.gmra.mxu0 %v2933
      %v3147 = vpop.f32.mrf.mxu0
      %v3148 = vadd.f32 0.0, %v3147
      %v3149 = vpop.f32.mrf.mxu0
      %3150 = vmatprep.mubr.f32.mxu0 0.0
      %3151 = vmatmul.mubr.f32.gmra.mxu0 %v2936
      %v3152 = vpop.f32.mrf.mxu0
      %v3153 = vadd.f32 0.0, %v3152
      %v3154 = vpop.f32.mrf.mxu0
      %3155 = vmatprep.mubr.f32.mxu0 0.0
      %3156 = vmatmul.mubr.f32.gmra.mxu0 %v2939
      %v3157 = vpop.f32.mrf.mxu0
      %v3158 = vadd.f32 0.0, %v3157
      %v3159 = vpop.f32.mrf.mxu0
      %3160 = vmatprep.mubr.f32.mxu0 0.0
      %3161 = vmatmul.mubr.f32.gmra.mxu0 %v2942
      %v3162 = vpop.f32.mrf.mxu0
      %v3163 = vadd.f32 0.0, %v3162
      %v3164 = vpop.f32.mrf.mxu0
      %3165 = vmatprep.mubr.f32.mxu0 0.0
      %3166 = vmatmul.mubr.f32.gmra.mxu0 %v2945
      %v3167 = vpop.f32.mrf.mxu0
      %v3168 = vadd.f32 0.0, %v3167
      %v3169 = vpop.f32.mrf.mxu0
      %3170 = vmatprep.mubr.f32.mxu0 0.0
      %3171 = vmatmul.mubr.f32.gmra.mxu0 %v2948
      %v3172 = vpop.f32.mrf.mxu0
      %v3173 = vadd.f32 0.0, %v3172
      %v3174 = vpop.f32.mrf.mxu0
      %3175 = vmatprep.mubr.f32.mxu0 0.0
      %3176 = vmatmul.mubr.f32.gmra.mxu0 %v2951
      %v3177 = vpop.f32.mrf.mxu0
      %v3178 = vadd.f32 0.0, %v3177
      %v3179 = vpop.f32.mrf.mxu0
      %3180 = vdwg.mxu0
      %v3181 = vadd.f32 %v2665, %v3023
      %v3182 = vadd.f32 %v2670, %v3028
      %v3183 = vadd.f32 %v2675, %v3033
      %v3184 = vadd.f32 %v2680, %v3038
      %v3185 = vadd.f32 %v2685, %v3043
      %v3186 = vadd.f32 %v2690, %v3048
      %v3187 = vadd.f32 %v2695, %v3053
      %v3188 = vadd.f32 %v2700, %v3058
      %v3189 = vadd.f32 %v2705, %v3063
      %v3190 = vadd.f32 %v2710, %v3068
      %v3191 = vadd.f32 %v2715, %v3073
      %v3192 = vadd.f32 %v2720, %v3078
      %v3193 = vadd.f32 %v2725, %v3083
      %v3194 = vadd.f32 %v2730, %v3088
      %v3195 = vadd.f32 %v2735, %v3093
      %v3196 = vadd.f32 %v2740, %v3098
      %v3197 = vadd.f32 %v2745, %v3103
      %v3198 = vadd.f32 %v2750, %v3108
      %v3199 = vadd.f32 %v2755, %v3113
      %v3200 = vadd.f32 %v2760, %v3118
      %v3201 = vadd.f32 %v2765, %v3123
      %v3202 = vadd.f32 %v2770, %v3128
      %v3203 = vadd.f32 %v2775, %v3133
      %v3204 = vadd.f32 %v2780, %v3138
      %v3205 = vadd.f32 %v2785, %v3143
      %v3206 = vadd.f32 %v2790, %v3148
      %v3207 = vadd.f32 %v2795, %v3153
      %v3208 = vadd.f32 %v2800, %v3158
      %v3209 = vadd.f32 %v2805, %v3163
      %v3210 = vadd.f32 %v2810, %v3168
      %v3211 = vadd.f32 %v2815, %v3173
      %v3212 = vadd.f32 %v2820, %v3178
      %v3213 = vld [vmem:[%s300 + $0x2] sm:$0xff]
      %v3214 = vld [vmem:[%s300 + $0xa] sm:$0xff]
      %v3215 = vld [vmem:[%s300 + $0x1a] sm:$0xff]
      %v3216 = vld [vmem:[%s300 + $0x22] sm:$0xff]
      %v3217 = vld [vmem:[%s300 + $0x32] sm:$0xff]
      %v3218 = vld [vmem:[%s300 + $0x3a] sm:$0xff]
      %v3219 = vld [vmem:[%s300 + $0x4a] sm:$0xff]
      %v3220 = vld [vmem:[%s300 + $0x52] sm:$0xff]
      %v3221 = vld [vmem:[%s300 + $0x62] sm:$0xff]
      %v3222 = vld [vmem:[%s300 + $0x6a] sm:$0xff]
      %v3223 = vld [vmem:[%s300 + $0x7a] sm:$0xff]
      %v3224 = vld [vmem:[%s300 + $0x82] sm:$0xff]
      %v3225 = vld [vmem:[%s300 + $0x92] sm:$0xff]
      %v3226 = vld [vmem:[%s300 + $0x9a] sm:$0xff]
      %v3227 = vld [vmem:[%s300 + $0xaa] sm:$0xff]
      %v3228 = vld [vmem:[%s300 + $0xb2] sm:$0xff]
      %v3229 = vld [vmem:[%s300 + $0xc2] sm:$0xff]
      %v3230 = vld [vmem:[%s300 + $0xca] sm:$0xff]
      %v3231 = vld [vmem:[%s300 + $0xda] sm:$0xff]
      %v3232 = vld [vmem:[%s300 + $0xe2] sm:$0xff]
      %v3233 = vld [vmem:[%s300 + $0xf2] sm:$0xff]
      %v3234 = vld [vmem:[%s300 + $0xfa] sm:$0xff]
      %v3235 = vld [vmem:[%s300 + $0x10a] sm:$0xff]
      %v3236 = vld [vmem:[%s300 + $0x112] sm:$0xff]
      %v3237 = vld [vmem:[%s300 + $0x122] sm:$0xff]
      %v3238 = vld [vmem:[%s300 + $0x12a] sm:$0xff]
      %v3239 = vld [vmem:[%s300 + $0x13a] sm:$0xff]
      %v3240 = vld [vmem:[%s300 + $0x142] sm:$0xff]
      %v3241 = vld [vmem:[%s300 + $0x152] sm:$0xff]
      %v3242 = vld [vmem:[%s300 + $0x15a] sm:$0xff]
      %v3243 = vld [vmem:[%s300 + $0x16a] sm:$0xff]
      %v3244 = vld [vmem:[%s300 + $0x172] sm:$0xff]
      %s3245 = scalar_lea.vmem %s1, 56
      %v3246 = vld [vmem:[%s3245] sm:$0x1f]
      %v3248 = vsel %vm212, %v3213, 0
      %v3251 = vsel %vm212, %v3214, 0
      %v3254 = vsel %vm212, %v3215, 0
      %v3257 = vsel %vm212, %v3216, 0
      %v3260 = vsel %vm212, %v3217, 0
      %v3263 = vsel %vm212, %v3218, 0
      %v3266 = vsel %vm212, %v3219, 0
      %v3269 = vsel %vm212, %v3220, 0
      %v3272 = vsel %vm212, %v3221, 0
      %v3275 = vsel %vm212, %v3222, 0
      %v3278 = vsel %vm212, %v3223, 0
      %v3281 = vsel %vm212, %v3224, 0
      %v3284 = vsel %vm212, %v3225, 0
      %v3287 = vsel %vm212, %v3226, 0
      %v3290 = vsel %vm212, %v3227, 0
      %v3293 = vsel %vm212, %v3228, 0
      %v3296 = vsel %vm212, %v3229, 0
      %v3299 = vsel %vm212, %v3230, 0
      %v3302 = vsel %vm212, %v3231, 0
      %v3305 = vsel %vm212, %v3232, 0
      %v3308 = vsel %vm212, %v3233, 0
      %v3311 = vsel %vm212, %v3234, 0
      %v3314 = vsel %vm212, %v3235, 0
      %v3317 = vsel %vm212, %v3236, 0
      %v3320 = vsel %vm212, %v3237, 0
      %v3323 = vsel %vm212, %v3238, 0
      %v3326 = vsel %vm212, %v3239, 0
      %v3329 = vsel %vm212, %v3240, 0
      %v3332 = vsel %vm212, %v3241, 0
      %v3335 = vsel %vm212, %v3242, 0
      %v3338 = vsel %vm212, %v3243, 0
      %v3341 = vsel %vm212, %v3244, 0
      %v3344 = vsel %vm531, %v3246, 0
      %3346 = vmatprep.subr.mxu0 0.0
      %3347 = vmatpush1.msra.mxu0 0.0
      %3348 = vmatprep.subr.mxu0 0.0
      %3349 = vmatpush1.msra.mxu0 0.0
      %3350 = vmatprep.subr.mxu0 0.0
      %3351 = vmatpush1.msra.mxu0 0.0
      %3352 = vmatprep.subr.mxu0 0.0
      %3353 = vmatpush1.msra.mxu0 0.0
      %3354 = vmatprep.subr.mxu0 0.0
      %3355 = vmatpush1.msra.mxu0 0.0
      %3356 = vmatprep.subr.mxu0 0.0
      %3357 = vmatpush1.msra.mxu0 0.0
      %3358 = vmatprep.subr.mxu0 0.0
      %3359 = vmatpush1.msra.mxu0 0.0
      %3360 = vmatprep.subr.mxu0 0.0
      %3361 = vmatpush1.msra.mxu0 0.0
      %3362 = vmatprep.subr.mxu0 0.0
      %3363 = vmatpush1.msra.mxu0 0.0
      %3364 = vmatprep.subr.mxu0 0.0
      %3365 = vmatpush1.msra.mxu0 0.0
      %3366 = vmatprep.subr.mxu0 0.0
      %3367 = vmatpush1.msra.mxu0 0.0
      %3368 = vmatprep.subr.mxu0 0.0
      %3369 = vmatpush1.msra.mxu0 0.0
      %3370 = vmatprep.subr.mxu0 0.0
      %3371 = vmatpush1.msra.mxu0 0.0
      %3372 = vmatprep.subr.mxu0 0.0
      %3373 = vmatpush1.msra.mxu0 0.0
      %3374 = vmatprep.subr.mxu0 0.0
      %3375 = vmatpush1.msra.mxu0 0.0
      %3376 = vmatprep.subr.mxu0 0.0
      %3377 = vmatpush1.msra.mxu0 %v3344
      %3378 = vmatprep.subr.mxu0 0.0
      %3379 = vmatpush2.msra.mxu0 0.0
      %3380 = vmatprep.subr.mxu0 0.0
      %3381 = vmatpush2.msra.mxu0 0.0
      %3382 = vmatprep.subr.mxu0 0.0
      %3383 = vmatpush2.msra.mxu0 0.0
      %3384 = vmatprep.subr.mxu0 0.0
      %3385 = vmatpush2.msra.mxu0 0.0
      %3386 = vmatprep.subr.mxu0 0.0
      %3387 = vmatpush2.msra.mxu0 0.0
      %3388 = vmatprep.subr.mxu0 0.0
      %3389 = vmatpush2.msra.mxu0 0.0
      %3390 = vmatprep.subr.mxu0 0.0
      %3391 = vmatpush2.msra.mxu0 0.0
      %3392 = vmatprep.subr.mxu0 0.0
      %3393 = vmatpush2.msra.mxu0 0.0
      %3394 = vmatprep.subr.mxu0 0.0
      %3395 = vmatpush2.msra.mxu0 0.0
      %3396 = vmatprep.subr.mxu0 0.0
      %3397 = vmatpush2.msra.mxu0 0.0
      %3398 = vmatprep.subr.mxu0 0.0
      %3399 = vmatpush2.msra.mxu0 0.0
      %3400 = vmatprep.subr.mxu0 0.0
      %3401 = vmatpush2.msra.mxu0 0.0
      %3402 = vmatprep.subr.mxu0 0.0
      %3403 = vmatpush2.msra.mxu0 0.0
      %3404 = vmatprep.subr.mxu0 0.0
      %3405 = vmatpush2.msra.mxu0 0.0
      %3406 = vmatprep.subr.mxu0 0.0
      %3407 = vmatpush2.msra.mxu0 0.0
      %3408 = vmatprep.subr.mxu0 0.0
      %3409 = vmatpush2.msra.mxu0 0.0
      %3410 = vmatprep.mubr.f32.mxu0 0.0
      %3411 = vmatmul.mubr.f32.gmra.mxu0 %v3248
      %v3412 = vpop.f32.mrf.mxu0
      %v3413 = vadd.f32 0.0, %v3412
      %v3414 = vpop.f32.mrf.mxu0
      %3415 = vmatprep.mubr.f32.mxu0 0.0
      %3416 = vmatmul.mubr.f32.gmra.mxu0 %v3251
      %v3417 = vpop.f32.mrf.mxu0
      %v3418 = vadd.f32 0.0, %v3417
      %v3419 = vpop.f32.mrf.mxu0
      %3420 = vmatprep.mubr.f32.mxu0 0.0
      %3421 = vmatmul.mubr.f32.gmra.mxu0 %v3254
      %v3422 = vpop.f32.mrf.mxu0
      %v3423 = vadd.f32 0.0, %v3422
      %v3424 = vpop.f32.mrf.mxu0
      %3425 = vmatprep.mubr.f32.mxu0 0.0
      %3426 = vmatmul.mubr.f32.gmra.mxu0 %v3257
      %v3427 = vpop.f32.mrf.mxu0
      %v3428 = vadd.f32 0.0, %v3427
      %v3429 = vpop.f32.mrf.mxu0
      %3430 = vmatprep.mubr.f32.mxu0 0.0
      %3431 = vmatmul.mubr.f32.gmra.mxu0 %v3260
      %v3432 = vpop.f32.mrf.mxu0
      %v3433 = vadd.f32 0.0, %v3432
      %v3434 = vpop.f32.mrf.mxu0
      %3435 = vmatprep.mubr.f32.mxu0 0.0
      %3436 = vmatmul.mubr.f32.gmra.mxu0 %v3263
      %v3437 = vpop.f32.mrf.mxu0
      %v3438 = vadd.f32 0.0, %v3437
      %v3439 = vpop.f32.mrf.mxu0
      %3440 = vmatprep.mubr.f32.mxu0 0.0
      %3441 = vmatmul.mubr.f32.gmra.mxu0 %v3266
      %v3442 = vpop.f32.mrf.mxu0
      %v3443 = vadd.f32 0.0, %v3442
      %v3444 = vpop.f32.mrf.mxu0
      %3445 = vmatprep.mubr.f32.mxu0 0.0
      %3446 = vmatmul.mubr.f32.gmra.mxu0 %v3269
      %v3447 = vpop.f32.mrf.mxu0
      %v3448 = vadd.f32 0.0, %v3447
      %v3449 = vpop.f32.mrf.mxu0
      %3450 = vmatprep.mubr.f32.mxu0 0.0
      %3451 = vmatmul.mubr.f32.gmra.mxu0 %v3272
      %v3452 = vpop.f32.mrf.mxu0
      %v3453 = vadd.f32 0.0, %v3452
      %v3454 = vpop.f32.mrf.mxu0
      %3455 = vmatprep.mubr.f32.mxu0 0.0
      %3456 = vmatmul.mubr.f32.gmra.mxu0 %v3275
      %v3457 = vpop.f32.mrf.mxu0
      %v3458 = vadd.f32 0.0, %v3457
      %v3459 = vpop.f32.mrf.mxu0
      %3460 = vmatprep.mubr.f32.mxu0 0.0
      %3461 = vmatmul.mubr.f32.gmra.mxu0 %v3278
      %v3462 = vpop.f32.mrf.mxu0
      %v3463 = vadd.f32 0.0, %v3462
      %v3464 = vpop.f32.mrf.mxu0
      %3465 = vmatprep.mubr.f32.mxu0 0.0
      %3466 = vmatmul.mubr.f32.gmra.mxu0 %v3281
      %v3467 = vpop.f32.mrf.mxu0
      %v3468 = vadd.f32 0.0, %v3467
      %v3469 = vpop.f32.mrf.mxu0
      %3470 = vmatprep.mubr.f32.mxu0 0.0
      %3471 = vmatmul.mubr.f32.gmra.mxu0 %v3284
      %v3472 = vpop.f32.mrf.mxu0
      %v3473 = vadd.f32 0.0, %v3472
      %v3474 = vpop.f32.mrf.mxu0
      %3475 = vmatprep.mubr.f32.mxu0 0.0
      %3476 = vmatmul.mubr.f32.gmra.mxu0 %v3287
      %v3477 = vpop.f32.mrf.mxu0
      %v3478 = vadd.f32 0.0, %v3477
      %v3479 = vpop.f32.mrf.mxu0
      %3480 = vmatprep.mubr.f32.mxu0 0.0
      %3481 = vmatmul.mubr.f32.gmra.mxu0 %v3290
      %v3482 = vpop.f32.mrf.mxu0
      %v3483 = vadd.f32 0.0, %v3482
      %v3484 = vpop.f32.mrf.mxu0
      %3485 = vmatprep.mubr.f32.mxu0 0.0
      %3486 = vmatmul.mubr.f32.gmra.mxu0 %v3293
      %v3487 = vpop.f32.mrf.mxu0
      %v3488 = vadd.f32 0.0, %v3487
      %v3489 = vpop.f32.mrf.mxu0
      %3490 = vmatprep.mubr.f32.mxu0 0.0
      %3491 = vmatmul.mubr.f32.gmra.mxu0 %v3296
      %v3492 = vpop.f32.mrf.mxu0
      %v3493 = vadd.f32 0.0, %v3492
      %v3494 = vpop.f32.mrf.mxu0
      %3495 = vmatprep.mubr.f32.mxu0 0.0
      %3496 = vmatmul.mubr.f32.gmra.mxu0 %v3299
      %v3497 = vpop.f32.mrf.mxu0
      %v3498 = vadd.f32 0.0, %v3497
      %v3499 = vpop.f32.mrf.mxu0
      %3500 = vmatprep.mubr.f32.mxu0 0.0
      %3501 = vmatmul.mubr.f32.gmra.mxu0 %v3302
      %v3502 = vpop.f32.mrf.mxu0
      %v3503 = vadd.f32 0.0, %v3502
      %v3504 = vpop.f32.mrf.mxu0
      %3505 = vmatprep.mubr.f32.mxu0 0.0
      %3506 = vmatmul.mubr.f32.gmra.mxu0 %v3305
      %v3507 = vpop.f32.mrf.mxu0
      %v3508 = vadd.f32 0.0, %v3507
      %v3509 = vpop.f32.mrf.mxu0
      %3510 = vmatprep.mubr.f32.mxu0 0.0
      %3511 = vmatmul.mubr.f32.gmra.mxu0 %v3308
      %v3512 = vpop.f32.mrf.mxu0
      %v3513 = vadd.f32 0.0, %v3512
      %v3514 = vpop.f32.mrf.mxu0
      %3515 = vmatprep.mubr.f32.mxu0 0.0
      %3516 = vmatmul.mubr.f32.gmra.mxu0 %v3311
      %v3517 = vpop.f32.mrf.mxu0
      %v3518 = vadd.f32 0.0, %v3517
      %v3519 = vpop.f32.mrf.mxu0
      %3520 = vmatprep.mubr.f32.mxu0 0.0
      %3521 = vmatmul.mubr.f32.gmra.mxu0 %v3314
      %v3522 = vpop.f32.mrf.mxu0
      %v3523 = vadd.f32 0.0, %v3522
      %v3524 = vpop.f32.mrf.mxu0
      %3525 = vmatprep.mubr.f32.mxu0 0.0
      %3526 = vmatmul.mubr.f32.gmra.mxu0 %v3317
      %v3527 = vpop.f32.mrf.mxu0
      %v3528 = vadd.f32 0.0, %v3527
      %v3529 = vpop.f32.mrf.mxu0
      %3530 = vmatprep.mubr.f32.mxu0 0.0
      %3531 = vmatmul.mubr.f32.gmra.mxu0 %v3320
      %v3532 = vpop.f32.mrf.mxu0
      %v3533 = vadd.f32 0.0, %v3532
      %v3534 = vpop.f32.mrf.mxu0
      %3535 = vmatprep.mubr.f32.mxu0 0.0
      %3536 = vmatmul.mubr.f32.gmra.mxu0 %v3323
      %v3537 = vpop.f32.mrf.mxu0
      %v3538 = vadd.f32 0.0, %v3537
      %v3539 = vpop.f32.mrf.mxu0
      %3540 = vmatprep.mubr.f32.mxu0 0.0
      %3541 = vmatmul.mubr.f32.gmra.mxu0 %v3326
      %v3542 = vpop.f32.mrf.mxu0
      %v3543 = vadd.f32 0.0, %v3542
      %v3544 = vpop.f32.mrf.mxu0
      %3545 = vmatprep.mubr.f32.mxu0 0.0
      %3546 = vmatmul.mubr.f32.gmra.mxu0 %v3329
      %v3547 = vpop.f32.mrf.mxu0
      %v3548 = vadd.f32 0.0, %v3547
      %v3549 = vpop.f32.mrf.mxu0
      %3550 = vmatprep.mubr.f32.mxu0 0.0
      %3551 = vmatmul.mubr.f32.gmra.mxu0 %v3332
      %v3552 = vpop.f32.mrf.mxu0
      %v3553 = vadd.f32 0.0, %v3552
      %v3554 = vpop.f32.mrf.mxu0
      %3555 = vmatprep.mubr.f32.mxu0 0.0
      %3556 = vmatmul.mubr.f32.gmra.mxu0 %v3335
      %v3557 = vpop.f32.mrf.mxu0
      %v3558 = vadd.f32 0.0, %v3557
      %v3559 = vpop.f32.mrf.mxu0
      %3560 = vmatprep.mubr.f32.mxu0 0.0
      %3561 = vmatmul.mubr.f32.gmra.mxu0 %v3338
      %v3562 = vpop.f32.mrf.mxu0
      %v3563 = vadd.f32 0.0, %v3562
      %v3564 = vpop.f32.mrf.mxu0
      %3565 = vmatprep.mubr.f32.mxu0 0.0
      %3566 = vmatmul.mubr.f32.gmra.mxu0 %v3341
      %v3567 = vpop.f32.mrf.mxu0
      %v3568 = vadd.f32 0.0, %v3567
      %v3569 = vpop.f32.mrf.mxu0
      %3570 = vdwg.mxu0
      %v3571 = vadd.f32 %v3181, %v3413
      %v3572 = vadd.f32 %v3182, %v3418
      %v3573 = vadd.f32 %v3183, %v3423
      %v3574 = vadd.f32 %v3184, %v3428
      %v3575 = vadd.f32 %v3185, %v3433
      %v3576 = vadd.f32 %v3186, %v3438
      %v3577 = vadd.f32 %v3187, %v3443
      %v3578 = vadd.f32 %v3188, %v3448
      %v3579 = vadd.f32 %v3189, %v3453
      %v3580 = vadd.f32 %v3190, %v3458
      %v3581 = vadd.f32 %v3191, %v3463
      %v3582 = vadd.f32 %v3192, %v3468
      %v3583 = vadd.f32 %v3193, %v3473
      %v3584 = vadd.f32 %v3194, %v3478
      %v3585 = vadd.f32 %v3195, %v3483
      %v3586 = vadd.f32 %v3196, %v3488
      %v3587 = vadd.f32 %v3197, %v3493
      %v3588 = vadd.f32 %v3198, %v3498
      %v3589 = vadd.f32 %v3199, %v3503
      %v3590 = vadd.f32 %v3200, %v3508
      %v3591 = vadd.f32 %v3201, %v3513
      %v3592 = vadd.f32 %v3202, %v3518
      %v3593 = vadd.f32 %v3203, %v3523
      %v3594 = vadd.f32 %v3204, %v3528
      %v3595 = vadd.f32 %v3205, %v3533
      %v3596 = vadd.f32 %v3206, %v3538
      %v3597 = vadd.f32 %v3207, %v3543
      %v3598 = vadd.f32 %v3208, %v3548
      %v3599 = vadd.f32 %v3209, %v3553
      %v3600 = vadd.f32 %v3210, %v3558
      %v3601 = vadd.f32 %v3211, %v3563
      %v3602 = vadd.f32 %v3212, %v3568
      %v3603 = vadd.f32 %v3571, %v1868
      %v3604 = vadd.f32 %v3572, %v1868
      %v3605 = vadd.f32 %v3573, %v1868
      %v3606 = vadd.f32 %v3574, %v1868
      %v3607 = vadd.f32 %v3575, %v1868
      %v3608 = vadd.f32 %v3576, %v1868
      %v3609 = vadd.f32 %v3577, %v1868
      %v3610 = vadd.f32 %v3578, %v1868
      %v3611 = vadd.f32 %v3579, %v1868
      %v3612 = vadd.f32 %v3580, %v1868
      %v3613 = vadd.f32 %v3581, %v1868
      %v3614 = vadd.f32 %v3582, %v1868
      %v3615 = vadd.f32 %v3583, %v1868
      %v3616 = vadd.f32 %v3584, %v1868
      %v3617 = vadd.f32 %v3585, %v1868
      %v3618 = vadd.f32 %v3586, %v1868
      %v3619 = vadd.f32 %v3587, %v1868
      %v3620 = vadd.f32 %v3588, %v1868
      %v3621 = vadd.f32 %v3589, %v1868
      %v3622 = vadd.f32 %v3590, %v1868
      %v3623 = vadd.f32 %v3591, %v1868
      %v3624 = vadd.f32 %v3592, %v1868
      %v3625 = vadd.f32 %v3593, %v1868
      %v3626 = vadd.f32 %v3594, %v1868
      %v3627 = vadd.f32 %v3595, %v1868
      %v3628 = vadd.f32 %v3596, %v1868
      %v3629 = vadd.f32 %v3597, %v1868
      %v3630 = vadd.f32 %v3598, %v1868
      %v3631 = vadd.f32 %v3599, %v1868
      %v3632 = vadd.f32 %v3600, %v1868
      %v3633 = vadd.f32 %v3601, %v1868
      %v3634 = vadd.f32 %v3602, %v1868
      %s3635 = scalar_lea.vmem %s206, 256
      %3636 = vst.msk [vmem:[%s3635] sm:$0xff] %vm1902, %v3603
      %3637 = vst.msk [vmem:[%s3635 + $0x8] sm:$0xff] %vm1902, %v3604
      %3638 = vst.msk [vmem:[%s3635 + $0x10] sm:$0xff] %vm1902, %v3605
      %3639 = vst.msk [vmem:[%s3635 + $0x18] sm:$0xff] %vm1902, %v3606
      %3640 = vst.msk [vmem:[%s3635 + $0x20] sm:$0xff] %vm1902, %v3607
      %3641 = vst.msk [vmem:[%s3635 + $0x28] sm:$0xff] %vm1902, %v3608
      %3642 = vst.msk [vmem:[%s3635 + $0x30] sm:$0xff] %vm1902, %v3609
      %3643 = vst.msk [vmem:[%s3635 + $0x38] sm:$0xff] %vm1902, %v3610
      %3644 = vst.msk [vmem:[%s3635 + $0x40] sm:$0xff] %vm1902, %v3611
      %3645 = vst.msk [vmem:[%s3635 + $0x48] sm:$0xff] %vm1902, %v3612
      %3646 = vst.msk [vmem:[%s3635 + $0x50] sm:$0xff] %vm1902, %v3613
      %3647 = vst.msk [vmem:[%s3635 + $0x58] sm:$0xff] %vm1902, %v3614
      %3648 = vst.msk [vmem:[%s3635 + $0x60] sm:$0xff] %vm1902, %v3615
      %3649 = vst.msk [vmem:[%s3635 + $0x68] sm:$0xff] %vm1902, %v3616
      %3650 = vst.msk [vmem:[%s3635 + $0x70] sm:$0xff] %vm1902, %v3617
      %3651 = vst.msk [vmem:[%s3635 + $0x78] sm:$0xff] %vm1902, %v3618
      %3652 = vst.msk [vmem:[%s3635 + $0x80] sm:$0xff] %vm1902, %v3619
      %3653 = vst.msk [vmem:[%s3635 + $0x88] sm:$0xff] %vm1902, %v3620
      %3654 = vst.msk [vmem:[%s3635 + $0x90] sm:$0xff] %vm1902, %v3621
      %3655 = vst.msk [vmem:[%s3635 + $0x98] sm:$0xff] %vm1902, %v3622
      %3656 = vst.msk [vmem:[%s3635 + $0xa0] sm:$0xff] %vm1902, %v3623
      %3657 = vst.msk [vmem:[%s3635 + $0xa8] sm:$0xff] %vm1902, %v3624
      %3658 = vst.msk [vmem:[%s3635 + $0xb0] sm:$0xff] %vm1902, %v3625
      %3659 = vst.msk [vmem:[%s3635 + $0xb8] sm:$0xff] %vm1902, %v3626
      %3660 = vst.msk [vmem:[%s3635 + $0xc0] sm:$0xff] %vm1902, %v3627
      %3661 = vst.msk [vmem:[%s3635 + $0xc8] sm:$0xff] %vm1902, %v3628
      %3662 = vst.msk [vmem:[%s3635 + $0xd0] sm:$0xff] %vm1902, %v3629
      %3663 = vst.msk [vmem:[%s3635 + $0xd8] sm:$0xff] %vm1902, %v3630
      %3664 = vst.msk [vmem:[%s3635 + $0xe0] sm:$0xff] %vm1902, %v3631
      %3665 = vst.msk [vmem:[%s3635 + $0xe8] sm:$0xff] %vm1902, %v3632
      %3666 = vst.msk [vmem:[%s3635 + $0xf0] sm:$0xff] %vm1902, %v3633
      %3667 = vst.msk [vmem:[%s3635 + $0xf8] sm:$0xff] %vm1902, %v3634
      %v3668 = vsel %vm1902, %v3603, 0.0
      %v3669 = vsel %vm1902, %v3604, 0.0
      %v3670 = vadd.f32 %v3668, %v3669
      %v3671 = vsel %vm1902, %v3605, 0.0
      %v3672 = vadd.f32 %v3670, %v3671
      %v3673 = vsel %vm1902, %v3606, 0.0
      %v3674 = vadd.f32 %v3672, %v3673
      %v3675 = vsel %vm1902, %v3607, 0.0
      %v3676 = vadd.f32 %v3674, %v3675
      %v3677 = vsel %vm1902, %v3608, 0.0
      %v3678 = vadd.f32 %v3676, %v3677
      %v3679 = vsel %vm1902, %v3609, 0.0
      %v3680 = vadd.f32 %v3678, %v3679
      %v3681 = vsel %vm1902, %v3610, 0.0
      %v3682 = vadd.f32 %v3680, %v3681
      %v3683 = vsel %vm1902, %v3611, 0.0
      %v3684 = vadd.f32 %v3682, %v3683
      %v3685 = vsel %vm1902, %v3612, 0.0
      %v3686 = vadd.f32 %v3684, %v3685
      %v3687 = vsel %vm1902, %v3613, 0.0
      %v3688 = vadd.f32 %v3686, %v3687
      %v3689 = vsel %vm1902, %v3614, 0.0
      %v3690 = vadd.f32 %v3688, %v3689
      %v3691 = vsel %vm1902, %v3615, 0.0
      %v3692 = vadd.f32 %v3690, %v3691
      %v3693 = vsel %vm1902, %v3616, 0.0
      %v3694 = vadd.f32 %v3692, %v3693
      %v3695 = vsel %vm1902, %v3617, 0.0
      %v3696 = vadd.f32 %v3694, %v3695
      %v3697 = vsel %vm1902, %v3618, 0.0
      %v3698 = vadd.f32 %v3696, %v3697
      %v3699 = vsel %vm1902, %v3619, 0.0
      %v3700 = vadd.f32 %v3698, %v3699
      %v3701 = vsel %vm1902, %v3620, 0.0
      %v3702 = vadd.f32 %v3700, %v3701
      %v3703 = vsel %vm1902, %v3621, 0.0
      %v3704 = vadd.f32 %v3702, %v3703
      %v3705 = vsel %vm1902, %v3622, 0.0
      %v3706 = vadd.f32 %v3704, %v3705
      %v3707 = vsel %vm1902, %v3623, 0.0
      %v3708 = vadd.f32 %v3706, %v3707
      %v3709 = vsel %vm1902, %v3624, 0.0
      %v3710 = vadd.f32 %v3708, %v3709
      %v3711 = vsel %vm1902, %v3625, 0.0
      %v3712 = vadd.f32 %v3710, %v3711
      %v3713 = vsel %vm1902, %v3626, 0.0
      %v3714 = vadd.f32 %v3712, %v3713
      %v3715 = vsel %vm1902, %v3627, 0.0
      %v3716 = vadd.f32 %v3714, %v3715
      %v3717 = vsel %vm1902, %v3628, 0.0
      %v3718 = vadd.f32 %v3716, %v3717
      %v3719 = vsel %vm1902, %v3629, 0.0
      %v3720 = vadd.f32 %v3718, %v3719
      %v3721 = vsel %vm1902, %v3630, 0.0
      %v3722 = vadd.f32 %v3720, %v3721
      %v3723 = vsel %vm1902, %v3631, 0.0
      %v3724 = vadd.f32 %v3722, %v3723
      %v3725 = vsel %vm1902, %v3632, 0.0
      %v3726 = vadd.f32 %v3724, %v3725
      %v3727 = vsel %vm1902, %v3633, 0.0
      %v3728 = vadd.f32 %v3726, %v3727
      %v3729 = vsel %vm1902, %v3634, 0.0
      %v3730 = vadd.f32 %v3728, %v3729
      %v3731 = vrot.slane %v3730, 4
      %v3732 = vadd.f32 %v3730, %v3731
      %v3733 = vrot.slane %v3732, 2
      %v3734 = vadd.f32 %v3732, %v3733
      %v3735 = vrot.slane %v3734, 1
      %v3736 = vadd.f32 %v3734, %v3735
      %v3737 = vadd.f32 %v2004, %v3736
      %v3738 = vmul.f32 %v3603, %v3603
      %v3739 = vmul.f32 %v3604, %v3604
      %v3740 = vmul.f32 %v3605, %v3605
      %v3741 = vmul.f32 %v3606, %v3606
      %v3742 = vmul.f32 %v3607, %v3607
      %v3743 = vmul.f32 %v3608, %v3608
      %v3744 = vmul.f32 %v3609, %v3609
      %v3745 = vmul.f32 %v3610, %v3610
      %v3746 = vmul.f32 %v3611, %v3611
      %v3747 = vmul.f32 %v3612, %v3612
      %v3748 = vmul.f32 %v3613, %v3613
      %v3749 = vmul.f32 %v3614, %v3614
      %v3750 = vmul.f32 %v3615, %v3615
      %v3751 = vmul.f32 %v3616, %v3616
      %v3752 = vmul.f32 %v3617, %v3617
      %v3753 = vmul.f32 %v3618, %v3618
      %v3754 = vmul.f32 %v3619, %v3619
      %v3755 = vmul.f32 %v3620, %v3620
      %v3756 = vmul.f32 %v3621, %v3621
      %v3757 = vmul.f32 %v3622, %v3622
      %v3758 = vmul.f32 %v3623, %v3623
      %v3759 = vmul.f32 %v3624, %v3624
      %v3760 = vmul.f32 %v3625, %v3625
      %v3761 = vmul.f32 %v3626, %v3626
      %v3762 = vmul.f32 %v3627, %v3627
      %v3763 = vmul.f32 %v3628, %v3628
      %v3764 = vmul.f32 %v3629, %v3629
      %v3765 = vmul.f32 %v3630, %v3630
      %v3766 = vmul.f32 %v3631, %v3631
      %v3767 = vmul.f32 %v3632, %v3632
      %v3768 = vmul.f32 %v3633, %v3633
      %v3769 = vmul.f32 %v3634, %v3634
      %v3770 = vsel %vm1902, %v3738, 0.0
      %v3771 = vsel %vm1902, %v3739, 0.0
      %v3772 = vadd.f32 %v3770, %v3771
      %v3773 = vsel %vm1902, %v3740, 0.0
      %v3774 = vadd.f32 %v3772, %v3773
      %v3775 = vsel %vm1902, %v3741, 0.0
      %v3776 = vadd.f32 %v3774, %v3775
      %v3777 = vsel %vm1902, %v3742, 0.0
      %v3778 = vadd.f32 %v3776, %v3777
      %v3779 = vsel %vm1902, %v3743, 0.0
      %v3780 = vadd.f32 %v3778, %v3779
      %v3781 = vsel %vm1902, %v3744, 0.0
      %v3782 = vadd.f32 %v3780, %v3781
      %v3783 = vsel %vm1902, %v3745, 0.0
      %v3784 = vadd.f32 %v3782, %v3783
      %v3785 = vsel %vm1902, %v3746, 0.0
      %v3786 = vadd.f32 %v3784, %v3785
      %v3787 = vsel %vm1902, %v3747, 0.0
      %v3788 = vadd.f32 %v3786, %v3787
      %v3789 = vsel %vm1902, %v3748, 0.0
      %v3790 = vadd.f32 %v3788, %v3789
      %v3791 = vsel %vm1902, %v3749, 0.0
      %v3792 = vadd.f32 %v3790, %v3791
      %v3793 = vsel %vm1902, %v3750, 0.0
      %v3794 = vadd.f32 %v3792, %v3793
      %v3795 = vsel %vm1902, %v3751, 0.0
      %v3796 = vadd.f32 %v3794, %v3795
      %v3797 = vsel %vm1902, %v3752, 0.0
      %v3798 = vadd.f32 %v3796, %v3797
      %v3799 = vsel %vm1902, %v3753, 0.0
      %v3800 = vadd.f32 %v3798, %v3799
      %v3801 = vsel %vm1902, %v3754, 0.0
      %v3802 = vadd.f32 %v3800, %v3801
      %v3803 = vsel %vm1902, %v3755, 0.0
      %v3804 = vadd.f32 %v3802, %v3803
      %v3805 = vsel %vm1902, %v3756, 0.0
      %v3806 = vadd.f32 %v3804, %v3805
      %v3807 = vsel %vm1902, %v3757, 0.0
      %v3808 = vadd.f32 %v3806, %v3807
      %v3809 = vsel %vm1902, %v3758, 0.0
      %v3810 = vadd.f32 %v3808, %v3809
      %v3811 = vsel %vm1902, %v3759, 0.0
      %v3812 = vadd.f32 %v3810, %v3811
      %v3813 = vsel %vm1902, %v3760, 0.0
      %v3814 = vadd.f32 %v3812, %v3813
      %v3815 = vsel %vm1902, %v3761, 0.0
      %v3816 = vadd.f32 %v3814, %v3815
      %v3817 = vsel %vm1902, %v3762, 0.0
      %v3818 = vadd.f32 %v3816, %v3817
      %v3819 = vsel %vm1902, %v3763, 0.0
      %v3820 = vadd.f32 %v3818, %v3819
      %v3821 = vsel %vm1902, %v3764, 0.0
      %v3822 = vadd.f32 %v3820, %v3821
      %v3823 = vsel %vm1902, %v3765, 0.0
      %v3824 = vadd.f32 %v3822, %v3823
      %v3825 = vsel %vm1902, %v3766, 0.0
      %v3826 = vadd.f32 %v3824, %v3825
      %v3827 = vsel %vm1902, %v3767, 0.0
      %v3828 = vadd.f32 %v3826, %v3827
      %v3829 = vsel %vm1902, %v3768, 0.0
      %v3830 = vadd.f32 %v3828, %v3829
      %v3831 = vsel %vm1902, %v3769, 0.0
      %v3832 = vadd.f32 %v3830, %v3831
      %v3833 = vrot.slane %v3832, 4
      %v3834 = vadd.f32 %v3832, %v3833
      %v3835 = vrot.slane %v3834, 2
      %v3836 = vadd.f32 %v3834, %v3835
      %v3837 = vrot.slane %v3836, 1
      %v3838 = vadd.f32 %v3836, %v3837
      %v3839 = vadd.f32 %v2106, %v3838
      %v3840 = vld [vmem:[%s300] sm:$0xff]
      %v3841 = vld [vmem:[%s300 + $0x8] sm:$0xff]
      %v3842 = vld [vmem:[%s300 + $0x18] sm:$0xff]
      %v3843 = vld [vmem:[%s300 + $0x20] sm:$0xff]
      %v3844 = vld [vmem:[%s300 + $0x30] sm:$0xff]
      %v3845 = vld [vmem:[%s300 + $0x38] sm:$0xff]
      %v3846 = vld [vmem:[%s300 + $0x48] sm:$0xff]
      %v3847 = vld [vmem:[%s300 + $0x50] sm:$0xff]
      %v3848 = vld [vmem:[%s300 + $0x60] sm:$0xff]
      %v3849 = vld [vmem:[%s300 + $0x68] sm:$0xff]
      %v3850 = vld [vmem:[%s300 + $0x78] sm:$0xff]
      %v3851 = vld [vmem:[%s300 + $0x80] sm:$0xff]
      %v3852 = vld [vmem:[%s300 + $0x90] sm:$0xff]
      %v3853 = vld [vmem:[%s300 + $0x98] sm:$0xff]
      %v3854 = vld [vmem:[%s300 + $0xa8] sm:$0xff]
      %v3855 = vld [vmem:[%s300 + $0xb0] sm:$0xff]
      %v3856 = vld [vmem:[%s300 + $0xc0] sm:$0xff]
      %v3857 = vld [vmem:[%s300 + $0xc8] sm:$0xff]
      %v3858 = vld [vmem:[%s300 + $0xd8] sm:$0xff]
      %v3859 = vld [vmem:[%s300 + $0xe0] sm:$0xff]
      %v3860 = vld [vmem:[%s300 + $0xf0] sm:$0xff]
      %v3861 = vld [vmem:[%s300 + $0xf8] sm:$0xff]
      %v3862 = vld [vmem:[%s300 + $0x108] sm:$0xff]
      %v3863 = vld [vmem:[%s300 + $0x110] sm:$0xff]
      %v3864 = vld [vmem:[%s300 + $0x120] sm:$0xff]
      %v3865 = vld [vmem:[%s300 + $0x128] sm:$0xff]
      %v3866 = vld [vmem:[%s300 + $0x138] sm:$0xff]
      %v3867 = vld [vmem:[%s300 + $0x140] sm:$0xff]
      %v3868 = vld [vmem:[%s300 + $0x150] sm:$0xff]
      %v3869 = vld [vmem:[%s300 + $0x158] sm:$0xff]
      %v3870 = vld [vmem:[%s300 + $0x168] sm:$0xff]
      %v3871 = vld [vmem:[%s300 + $0x170] sm:$0xff]
      %s3872 = scalar_lea.vmem %s1, 64
      %v3873 = vld [vmem:[%s3872] sm:$0x1f]
      %v3874 = vld [vmem:[%s300 + $0x1] sm:$0xff]
      %v3875 = vld [vmem:[%s300 + $0x9] sm:$0xff]
      %v3876 = vld [vmem:[%s300 + $0x19] sm:$0xff]
      %v3877 = vld [vmem:[%s300 + $0x21] sm:$0xff]
      %v3878 = vld [vmem:[%s300 + $0x31] sm:$0xff]
      %v3879 = vld [vmem:[%s300 + $0x39] sm:$0xff]
      %v3880 = vld [vmem:[%s300 + $0x49] sm:$0xff]
      %v3881 = vld [vmem:[%s300 + $0x51] sm:$0xff]
      %v3882 = vld [vmem:[%s300 + $0x61] sm:$0xff]
      %v3883 = vld [vmem:[%s300 + $0x69] sm:$0xff]
      %v3884 = vld [vmem:[%s300 + $0x79] sm:$0xff]
      %v3885 = vld [vmem:[%s300 + $0x81] sm:$0xff]
      %v3886 = vld [vmem:[%s300 + $0x91] sm:$0xff]
      %v3887 = vld [vmem:[%s300 + $0x99] sm:$0xff]
      %v3888 = vld [vmem:[%s300 + $0xa9] sm:$0xff]
      %v3889 = vld [vmem:[%s300 + $0xb1] sm:$0xff]
      %v3890 = vld [vmem:[%s300 + $0xc1] sm:$0xff]
      %v3891 = vld [vmem:[%s300 + $0xc9] sm:$0xff]
      %v3892 = vld [vmem:[%s300 + $0xd9] sm:$0xff]
      %v3893 = vld [vmem:[%s300 + $0xe1] sm:$0xff]
      %v3894 = vld [vmem:[%s300 + $0xf1] sm:$0xff]
      %v3895 = vld [vmem:[%s300 + $0xf9] sm:$0xff]
      %v3896 = vld [vmem:[%s300 + $0x109] sm:$0xff]
      %v3897 = vld [vmem:[%s300 + $0x111] sm:$0xff]
      %v3898 = vld [vmem:[%s300 + $0x121] sm:$0xff]
      %v3899 = vld [vmem:[%s300 + $0x129] sm:$0xff]
      %v3900 = vld [vmem:[%s300 + $0x139] sm:$0xff]
      %v3901 = vld [vmem:[%s300 + $0x141] sm:$0xff]
      %v3902 = vld [vmem:[%s300 + $0x151] sm:$0xff]
      %v3903 = vld [vmem:[%s300 + $0x159] sm:$0xff]
      %v3904 = vld [vmem:[%s300 + $0x169] sm:$0xff]
      %v3905 = vld [vmem:[%s300 + $0x171] sm:$0xff]
      %s3906 = scalar_lea.vmem %s1, 72
      %v3907 = vld [vmem:[%s3906] sm:$0x1f]
      %v3909 = vsel %vm212, %v3874, 0
      %v3912 = vsel %vm212, %v3875, 0
      %v3915 = vsel %vm212, %v3876, 0
      %v3918 = vsel %vm212, %v3877, 0
      %v3921 = vsel %vm212, %v3878, 0
      %v3924 = vsel %vm212, %v3879, 0
      %v3927 = vsel %vm212, %v3880, 0
      %v3930 = vsel %vm212, %v3881, 0
      %v3933 = vsel %vm212, %v3882, 0
      %v3936 = vsel %vm212, %v3883, 0
      %v3939 = vsel %vm212, %v3884, 0
      %v3942 = vsel %vm212, %v3885, 0
      %v3945 = vsel %vm212, %v3886, 0
      %v3948 = vsel %vm212, %v3887, 0
      %v3951 = vsel %vm212, %v3888, 0
      %v3954 = vsel %vm212, %v3889, 0
      %v3957 = vsel %vm212, %v3890, 0
      %v3960 = vsel %vm212, %v3891, 0
      %v3963 = vsel %vm212, %v3892, 0
      %v3966 = vsel %vm212, %v3893, 0
      %v3969 = vsel %vm212, %v3894, 0
      %v3972 = vsel %vm212, %v3895, 0
      %v3975 = vsel %vm212, %v3896, 0
      %v3978 = vsel %vm212, %v3897, 0
      %v3981 = vsel %vm212, %v3898, 0
      %v3984 = vsel %vm212, %v3899, 0
      %v3987 = vsel %vm212, %v3900, 0
      %v3990 = vsel %vm212, %v3901, 0
      %v3993 = vsel %vm212, %v3902, 0
      %v3996 = vsel %vm212, %v3903, 0
      %v3999 = vsel %vm212, %v3904, 0
      %v4002 = vsel %vm212, %v3905, 0
      %v4005 = vsel %vm531, %v3907, 0
      %4007 = vmatprep.subr.mxu0 0.0
      %4008 = vmatpush1.msra.mxu0 0.0
      %4009 = vmatprep.subr.mxu0 0.0
      %4010 = vmatpush1.msra.mxu0 0.0
      %4011 = vmatprep.subr.mxu0 0.0
      %4012 = vmatpush1.msra.mxu0 0.0
      %4013 = vmatprep.subr.mxu0 0.0
      %4014 = vmatpush1.msra.mxu0 0.0
      %4015 = vmatprep.subr.mxu0 0.0
      %4016 = vmatpush1.msra.mxu0 0.0
      %4017 = vmatprep.subr.mxu0 0.0
      %4018 = vmatpush1.msra.mxu0 0.0
      %4019 = vmatprep.subr.mxu0 0.0
      %4020 = vmatpush1.msra.mxu0 0.0
      %4021 = vmatprep.subr.mxu0 0.0
      %4022 = vmatpush1.msra.mxu0 0.0
      %4023 = vmatprep.subr.mxu0 0.0
      %4024 = vmatpush1.msra.mxu0 0.0
      %4025 = vmatprep.subr.mxu0 0.0
      %4026 = vmatpush1.msra.mxu0 0.0
      %4027 = vmatprep.subr.mxu0 0.0
      %4028 = vmatpush1.msra.mxu0 0.0
      %4029 = vmatprep.subr.mxu0 0.0
      %4030 = vmatpush1.msra.mxu0 0.0
      %4031 = vmatprep.subr.mxu0 0.0
      %4032 = vmatpush1.msra.mxu0 0.0
      %4033 = vmatprep.subr.mxu0 0.0
      %4034 = vmatpush1.msra.mxu0 0.0
      %4035 = vmatprep.subr.mxu0 0.0
      %4036 = vmatpush1.msra.mxu0 0.0
      %4037 = vmatprep.subr.mxu0 0.0
      %4038 = vmatpush1.msra.mxu0 %v4005
      %4039 = vmatprep.subr.mxu0 0.0
      %4040 = vmatpush2.msra.mxu0 0.0
      %4041 = vmatprep.subr.mxu0 0.0
      %4042 = vmatpush2.msra.mxu0 0.0
      %4043 = vmatprep.subr.mxu0 0.0
      %4044 = vmatpush2.msra.mxu0 0.0
      %4045 = vmatprep.subr.mxu0 0.0
      %4046 = vmatpush2.msra.mxu0 0.0
      %4047 = vmatprep.subr.mxu0 0.0
      %4048 = vmatpush2.msra.mxu0 0.0
      %4049 = vmatprep.subr.mxu0 0.0
      %4050 = vmatpush2.msra.mxu0 0.0
      %4051 = vmatprep.subr.mxu0 0.0
      %4052 = vmatpush2.msra.mxu0 0.0
      %4053 = vmatprep.subr.mxu0 0.0
      %4054 = vmatpush2.msra.mxu0 0.0
      %4055 = vmatprep.subr.mxu0 0.0
      %4056 = vmatpush2.msra.mxu0 0.0
      %4057 = vmatprep.subr.mxu0 0.0
      %4058 = vmatpush2.msra.mxu0 0.0
      %4059 = vmatprep.subr.mxu0 0.0
      %4060 = vmatpush2.msra.mxu0 0.0
      %4061 = vmatprep.subr.mxu0 0.0
      %4062 = vmatpush2.msra.mxu0 0.0
      %4063 = vmatprep.subr.mxu0 0.0
      %4064 = vmatpush2.msra.mxu0 0.0
      %4065 = vmatprep.subr.mxu0 0.0
      %4066 = vmatpush2.msra.mxu0 0.0
      %4067 = vmatprep.subr.mxu0 0.0
      %4068 = vmatpush2.msra.mxu0 0.0
      %4069 = vmatprep.subr.mxu0 0.0
      %4070 = vmatpush2.msra.mxu0 0.0
      %4071 = vmatprep.mubr.f32.mxu0 0.0
      %4072 = vmatmul.mubr.f32.gmra.mxu0 %v3909
      %v4073 = vpop.f32.mrf.mxu0
      %v4074 = vadd.f32 0.0, %v4073
      %v4075 = vpop.f32.mrf.mxu0
      %4076 = vmatprep.mubr.f32.mxu0 0.0
      %4077 = vmatmul.mubr.f32.gmra.mxu0 %v3912
      %v4078 = vpop.f32.mrf.mxu0
      %v4079 = vadd.f32 0.0, %v4078
      %v4080 = vpop.f32.mrf.mxu0
      %4081 = vmatprep.mubr.f32.mxu0 0.0
      %4082 = vmatmul.mubr.f32.gmra.mxu0 %v3915
      %v4083 = vpop.f32.mrf.mxu0
      %v4084 = vadd.f32 0.0, %v4083
      %v4085 = vpop.f32.mrf.mxu0
      %4086 = vmatprep.mubr.f32.mxu0 0.0
      %4087 = vmatmul.mubr.f32.gmra.mxu0 %v3918
      %v4088 = vpop.f32.mrf.mxu0
      %v4089 = vadd.f32 0.0, %v4088
      %v4090 = vpop.f32.mrf.mxu0
      %4091 = vmatprep.mubr.f32.mxu0 0.0
      %4092 = vmatmul.mubr.f32.gmra.mxu0 %v3921
      %v4093 = vpop.f32.mrf.mxu0
      %v4094 = vadd.f32 0.0, %v4093
      %v4095 = vpop.f32.mrf.mxu0
      %4096 = vmatprep.mubr.f32.mxu0 0.0
      %4097 = vmatmul.mubr.f32.gmra.mxu0 %v3924
      %v4098 = vpop.f32.mrf.mxu0
      %v4099 = vadd.f32 0.0, %v4098
      %v4100 = vpop.f32.mrf.mxu0
      %4101 = vmatprep.mubr.f32.mxu0 0.0
      %4102 = vmatmul.mubr.f32.gmra.mxu0 %v3927
      %v4103 = vpop.f32.mrf.mxu0
      %v4104 = vadd.f32 0.0, %v4103
      %v4105 = vpop.f32.mrf.mxu0
      %4106 = vmatprep.mubr.f32.mxu0 0.0
      %4107 = vmatmul.mubr.f32.gmra.mxu0 %v3930
      %v4108 = vpop.f32.mrf.mxu0
      %v4109 = vadd.f32 0.0, %v4108
      %v4110 = vpop.f32.mrf.mxu0
      %4111 = vmatprep.mubr.f32.mxu0 0.0
      %4112 = vmatmul.mubr.f32.gmra.mxu0 %v3933
      %v4113 = vpop.f32.mrf.mxu0
      %v4114 = vadd.f32 0.0, %v4113
      %v4115 = vpop.f32.mrf.mxu0
      %4116 = vmatprep.mubr.f32.mxu0 0.0
      %4117 = vmatmul.mubr.f32.gmra.mxu0 %v3936
      %v4118 = vpop.f32.mrf.mxu0
      %v4119 = vadd.f32 0.0, %v4118
      %v4120 = vpop.f32.mrf.mxu0
      %4121 = vmatprep.mubr.f32.mxu0 0.0
      %4122 = vmatmul.mubr.f32.gmra.mxu0 %v3939
      %v4123 = vpop.f32.mrf.mxu0
      %v4124 = vadd.f32 0.0, %v4123
      %v4125 = vpop.f32.mrf.mxu0
      %4126 = vmatprep.mubr.f32.mxu0 0.0
      %4127 = vmatmul.mubr.f32.gmra.mxu0 %v3942
      %v4128 = vpop.f32.mrf.mxu0
      %v4129 = vadd.f32 0.0, %v4128
      %v4130 = vpop.f32.mrf.mxu0
      %4131 = vmatprep.mubr.f32.mxu0 0.0
      %4132 = vmatmul.mubr.f32.gmra.mxu0 %v3945
      %v4133 = vpop.f32.mrf.mxu0
      %v4134 = vadd.f32 0.0, %v4133
      %v4135 = vpop.f32.mrf.mxu0
      %4136 = vmatprep.mubr.f32.mxu0 0.0
      %4137 = vmatmul.mubr.f32.gmra.mxu0 %v3948
      %v4138 = vpop.f32.mrf.mxu0
      %v4139 = vadd.f32 0.0, %v4138
      %v4140 = vpop.f32.mrf.mxu0
      %4141 = vmatprep.mubr.f32.mxu0 0.0
      %4142 = vmatmul.mubr.f32.gmra.mxu0 %v3951
      %v4143 = vpop.f32.mrf.mxu0
      %v4144 = vadd.f32 0.0, %v4143
      %v4145 = vpop.f32.mrf.mxu0
      %4146 = vmatprep.mubr.f32.mxu0 0.0
      %4147 = vmatmul.mubr.f32.gmra.mxu0 %v3954
      %v4148 = vpop.f32.mrf.mxu0
      %v4149 = vadd.f32 0.0, %v4148
      %v4150 = vpop.f32.mrf.mxu0
      %4151 = vmatprep.mubr.f32.mxu0 0.0
      %4152 = vmatmul.mubr.f32.gmra.mxu0 %v3957
      %v4153 = vpop.f32.mrf.mxu0
      %v4154 = vadd.f32 0.0, %v4153
      %v4155 = vpop.f32.mrf.mxu0
      %4156 = vmatprep.mubr.f32.mxu0 0.0
      %4157 = vmatmul.mubr.f32.gmra.mxu0 %v3960
      %v4158 = vpop.f32.mrf.mxu0
      %v4159 = vadd.f32 0.0, %v4158
      %v4160 = vpop.f32.mrf.mxu0
      %4161 = vmatprep.mubr.f32.mxu0 0.0
      %4162 = vmatmul.mubr.f32.gmra.mxu0 %v3963
      %v4163 = vpop.f32.mrf.mxu0
      %v4164 = vadd.f32 0.0, %v4163
      %v4165 = vpop.f32.mrf.mxu0
      %4166 = vmatprep.mubr.f32.mxu0 0.0
      %4167 = vmatmul.mubr.f32.gmra.mxu0 %v3966
      %v4168 = vpop.f32.mrf.mxu0
      %v4169 = vadd.f32 0.0, %v4168
      %v4170 = vpop.f32.mrf.mxu0
      %4171 = vmatprep.mubr.f32.mxu0 0.0
      %4172 = vmatmul.mubr.f32.gmra.mxu0 %v3969
      %v4173 = vpop.f32.mrf.mxu0
      %v4174 = vadd.f32 0.0, %v4173
      %v4175 = vpop.f32.mrf.mxu0
      %4176 = vmatprep.mubr.f32.mxu0 0.0
      %4177 = vmatmul.mubr.f32.gmra.mxu0 %v3972
      %v4178 = vpop.f32.mrf.mxu0
      %v4179 = vadd.f32 0.0, %v4178
      %v4180 = vpop.f32.mrf.mxu0
      %4181 = vmatprep.mubr.f32.mxu0 0.0
      %4182 = vmatmul.mubr.f32.gmra.mxu0 %v3975
      %v4183 = vpop.f32.mrf.mxu0
      %v4184 = vadd.f32 0.0, %v4183
      %v4185 = vpop.f32.mrf.mxu0
      %4186 = vmatprep.mubr.f32.mxu0 0.0
      %4187 = vmatmul.mubr.f32.gmra.mxu0 %v3978
      %v4188 = vpop.f32.mrf.mxu0
      %v4189 = vadd.f32 0.0, %v4188
      %v4190 = vpop.f32.mrf.mxu0
      %4191 = vmatprep.mubr.f32.mxu0 0.0
      %4192 = vmatmul.mubr.f32.gmra.mxu0 %v3981
      %v4193 = vpop.f32.mrf.mxu0
      %v4194 = vadd.f32 0.0, %v4193
      %v4195 = vpop.f32.mrf.mxu0
      %4196 = vmatprep.mubr.f32.mxu0 0.0
      %4197 = vmatmul.mubr.f32.gmra.mxu0 %v3984
      %v4198 = vpop.f32.mrf.mxu0
      %v4199 = vadd.f32 0.0, %v4198
      %v4200 = vpop.f32.mrf.mxu0
      %4201 = vmatprep.mubr.f32.mxu0 0.0
      %4202 = vmatmul.mubr.f32.gmra.mxu0 %v3987
      %v4203 = vpop.f32.mrf.mxu0
      %v4204 = vadd.f32 0.0, %v4203
      %v4205 = vpop.f32.mrf.mxu0
      %4206 = vmatprep.mubr.f32.mxu0 0.0
      %4207 = vmatmul.mubr.f32.gmra.mxu0 %v3990
      %v4208 = vpop.f32.mrf.mxu0
      %v4209 = vadd.f32 0.0, %v4208
      %v4210 = vpop.f32.mrf.mxu0
      %4211 = vmatprep.mubr.f32.mxu0 0.0
      %4212 = vmatmul.mubr.f32.gmra.mxu0 %v3993
      %v4213 = vpop.f32.mrf.mxu0
      %v4214 = vadd.f32 0.0, %v4213
      %v4215 = vpop.f32.mrf.mxu0
      %4216 = vmatprep.mubr.f32.mxu0 0.0
      %4217 = vmatmul.mubr.f32.gmra.mxu0 %v3996
      %v4218 = vpop.f32.mrf.mxu0
      %v4219 = vadd.f32 0.0, %v4218
      %v4220 = vpop.f32.mrf.mxu0
      %4221 = vmatprep.mubr.f32.mxu0 0.0
      %4222 = vmatmul.mubr.f32.gmra.mxu0 %v3999
      %v4223 = vpop.f32.mrf.mxu0
      %v4224 = vadd.f32 0.0, %v4223
      %v4225 = vpop.f32.mrf.mxu0
      %4226 = vmatprep.mubr.f32.mxu0 0.0
      %4227 = vmatmul.mubr.f32.gmra.mxu0 %v4002
      %v4228 = vpop.f32.mrf.mxu0
      %v4229 = vadd.f32 0.0, %v4228
      %v4230 = vpop.f32.mrf.mxu0
      %4231 = vdwg.mxu0
      %v4233 = vsel %vm212, %v3840, 0
      %v4236 = vsel %vm212, %v3841, 0
      %v4239 = vsel %vm212, %v3842, 0
      %v4242 = vsel %vm212, %v3843, 0
      %v4245 = vsel %vm212, %v3844, 0
      %v4248 = vsel %vm212, %v3845, 0
      %v4251 = vsel %vm212, %v3846, 0
      %v4254 = vsel %vm212, %v3847, 0
      %v4257 = vsel %vm212, %v3848, 0
      %v4260 = vsel %vm212, %v3849, 0
      %v4263 = vsel %vm212, %v3850, 0
      %v4266 = vsel %vm212, %v3851, 0
      %v4269 = vsel %vm212, %v3852, 0
      %v4272 = vsel %vm212, %v3853, 0
      %v4275 = vsel %vm212, %v3854, 0
      %v4278 = vsel %vm212, %v3855, 0
      %v4281 = vsel %vm212, %v3856, 0
      %v4284 = vsel %vm212, %v3857, 0
      %v4287 = vsel %vm212, %v3858, 0
      %v4290 = vsel %vm212, %v3859, 0
      %v4293 = vsel %vm212, %v3860, 0
      %v4296 = vsel %vm212, %v3861, 0
      %v4299 = vsel %vm212, %v3862, 0
      %v4302 = vsel %vm212, %v3863, 0
      %v4305 = vsel %vm212, %v3864, 0
      %v4308 = vsel %vm212, %v3865, 0
      %v4311 = vsel %vm212, %v3866, 0
      %v4314 = vsel %vm212, %v3867, 0
      %v4317 = vsel %vm212, %v3868, 0
      %v4320 = vsel %vm212, %v3869, 0
      %v4323 = vsel %vm212, %v3870, 0
      %v4326 = vsel %vm212, %v3871, 0
      %v4329 = vsel %vm531, %v3873, 0
      %4331 = vmatprep.subr.mxu0 0.0
      %4332 = vmatpush1.msra.mxu0 0.0
      %4333 = vmatprep.subr.mxu0 0.0
      %4334 = vmatpush1.msra.mxu0 0.0
      %4335 = vmatprep.subr.mxu0 0.0
      %4336 = vmatpush1.msra.mxu0 0.0
      %4337 = vmatprep.subr.mxu0 0.0
      %4338 = vmatpush1.msra.mxu0 0.0
      %4339 = vmatprep.subr.mxu0 0.0
      %4340 = vmatpush1.msra.mxu0 0.0
      %4341 = vmatprep.subr.mxu0 0.0
      %4342 = vmatpush1.msra.mxu0 0.0
      %4343 = vmatprep.subr.mxu0 0.0
      %4344 = vmatpush1.msra.mxu0 0.0
      %4345 = vmatprep.subr.mxu0 0.0
      %4346 = vmatpush1.msra.mxu0 0.0
      %4347 = vmatprep.subr.mxu0 0.0
      %4348 = vmatpush1.msra.mxu0 0.0
      %4349 = vmatprep.subr.mxu0 0.0
      %4350 = vmatpush1.msra.mxu0 0.0
      %4351 = vmatprep.subr.mxu0 0.0
      %4352 = vmatpush1.msra.mxu0 0.0
      %4353 = vmatprep.subr.mxu0 0.0
      %4354 = vmatpush1.msra.mxu0 0.0
      %4355 = vmatprep.subr.mxu0 0.0
      %4356 = vmatpush1.msra.mxu0 0.0
      %4357 = vmatprep.subr.mxu0 0.0
      %4358 = vmatpush1.msra.mxu0 0.0
      %4359 = vmatprep.subr.mxu0 0.0
      %4360 = vmatpush1.msra.mxu0 0.0
      %4361 = vmatprep.subr.mxu0 0.0
      %4362 = vmatpush1.msra.mxu0 %v4329
      %4363 = vmatprep.subr.mxu0 0.0
      %4364 = vmatpush2.msra.mxu0 0.0
      %4365 = vmatprep.subr.mxu0 0.0
      %4366 = vmatpush2.msra.mxu0 0.0
      %4367 = vmatprep.subr.mxu0 0.0
      %4368 = vmatpush2.msra.mxu0 0.0
      %4369 = vmatprep.subr.mxu0 0.0
      %4370 = vmatpush2.msra.mxu0 0.0
      %4371 = vmatprep.subr.mxu0 0.0
      %4372 = vmatpush2.msra.mxu0 0.0
      %4373 = vmatprep.subr.mxu0 0.0
      %4374 = vmatpush2.msra.mxu0 0.0
      %4375 = vmatprep.subr.mxu0 0.0
      %4376 = vmatpush2.msra.mxu0 0.0
      %4377 = vmatprep.subr.mxu0 0.0
      %4378 = vmatpush2.msra.mxu0 0.0
      %4379 = vmatprep.subr.mxu0 0.0
      %4380 = vmatpush2.msra.mxu0 0.0
      %4381 = vmatprep.subr.mxu0 0.0
      %4382 = vmatpush2.msra.mxu0 0.0
      %4383 = vmatprep.subr.mxu0 0.0
      %4384 = vmatpush2.msra.mxu0 0.0
      %4385 = vmatprep.subr.mxu0 0.0
      %4386 = vmatpush2.msra.mxu0 0.0
      %4387 = vmatprep.subr.mxu0 0.0
      %4388 = vmatpush2.msra.mxu0 0.0
      %4389 = vmatprep.subr.mxu0 0.0
      %4390 = vmatpush2.msra.mxu0 0.0
      %4391 = vmatprep.subr.mxu0 0.0
      %4392 = vmatpush2.msra.mxu0 0.0
      %4393 = vmatprep.subr.mxu0 0.0
      %4394 = vmatpush2.msra.mxu0 0.0
      %4395 = vmatprep.mubr.f32.mxu0 0.0
      %4396 = vmatmul.mubr.f32.gmra.mxu0 %v4233
      %v4397 = vpop.f32.mrf.mxu0
      %v4398 = vadd.f32 %v4074, %v4397
      %v4399 = vpop.f32.mrf.mxu0
      %4400 = vmatprep.mubr.f32.mxu0 0.0
      %4401 = vmatmul.mubr.f32.gmra.mxu0 %v4236
      %v4402 = vpop.f32.mrf.mxu0
      %v4403 = vadd.f32 %v4079, %v4402
      %v4404 = vpop.f32.mrf.mxu0
      %4405 = vmatprep.mubr.f32.mxu0 0.0
      %4406 = vmatmul.mubr.f32.gmra.mxu0 %v4239
      %v4407 = vpop.f32.mrf.mxu0
      %v4408 = vadd.f32 %v4084, %v4407
      %v4409 = vpop.f32.mrf.mxu0
      %4410 = vmatprep.mubr.f32.mxu0 0.0
      %4411 = vmatmul.mubr.f32.gmra.mxu0 %v4242
      %v4412 = vpop.f32.mrf.mxu0
      %v4413 = vadd.f32 %v4089, %v4412
      %v4414 = vpop.f32.mrf.mxu0
      %4415 = vmatprep.mubr.f32.mxu0 0.0
      %4416 = vmatmul.mubr.f32.gmra.mxu0 %v4245
      %v4417 = vpop.f32.mrf.mxu0
      %v4418 = vadd.f32 %v4094, %v4417
      %v4419 = vpop.f32.mrf.mxu0
      %4420 = vmatprep.mubr.f32.mxu0 0.0
      %4421 = vmatmul.mubr.f32.gmra.mxu0 %v4248
      %v4422 = vpop.f32.mrf.mxu0
      %v4423 = vadd.f32 %v4099, %v4422
      %v4424 = vpop.f32.mrf.mxu0
      %4425 = vmatprep.mubr.f32.mxu0 0.0
      %4426 = vmatmul.mubr.f32.gmra.mxu0 %v4251
      %v4427 = vpop.f32.mrf.mxu0
      %v4428 = vadd.f32 %v4104, %v4427
      %v4429 = vpop.f32.mrf.mxu0
      %4430 = vmatprep.mubr.f32.mxu0 0.0
      %4431 = vmatmul.mubr.f32.gmra.mxu0 %v4254
      %v4432 = vpop.f32.mrf.mxu0
      %v4433 = vadd.f32 %v4109, %v4432
      %v4434 = vpop.f32.mrf.mxu0
      %4435 = vmatprep.mubr.f32.mxu0 0.0
      %4436 = vmatmul.mubr.f32.gmra.mxu0 %v4257
      %v4437 = vpop.f32.mrf.mxu0
      %v4438 = vadd.f32 %v4114, %v4437
      %v4439 = vpop.f32.mrf.mxu0
      %4440 = vmatprep.mubr.f32.mxu0 0.0
      %4441 = vmatmul.mubr.f32.gmra.mxu0 %v4260
      %v4442 = vpop.f32.mrf.mxu0
      %v4443 = vadd.f32 %v4119, %v4442
      %v4444 = vpop.f32.mrf.mxu0
      %4445 = vmatprep.mubr.f32.mxu0 0.0
      %4446 = vmatmul.mubr.f32.gmra.mxu0 %v4263
      %v4447 = vpop.f32.mrf.mxu0
      %v4448 = vadd.f32 %v4124, %v4447
      %v4449 = vpop.f32.mrf.mxu0
      %4450 = vmatprep.mubr.f32.mxu0 0.0
      %4451 = vmatmul.mubr.f32.gmra.mxu0 %v4266
      %v4452 = vpop.f32.mrf.mxu0
      %v4453 = vadd.f32 %v4129, %v4452
      %v4454 = vpop.f32.mrf.mxu0
      %4455 = vmatprep.mubr.f32.mxu0 0.0
      %4456 = vmatmul.mubr.f32.gmra.mxu0 %v4269
      %v4457 = vpop.f32.mrf.mxu0
      %v4458 = vadd.f32 %v4134, %v4457
      %v4459 = vpop.f32.mrf.mxu0
      %4460 = vmatprep.mubr.f32.mxu0 0.0
      %4461 = vmatmul.mubr.f32.gmra.mxu0 %v4272
      %v4462 = vpop.f32.mrf.mxu0
      %v4463 = vadd.f32 %v4139, %v4462
      %v4464 = vpop.f32.mrf.mxu0
      %4465 = vmatprep.mubr.f32.mxu0 0.0
      %4466 = vmatmul.mubr.f32.gmra.mxu0 %v4275
      %v4467 = vpop.f32.mrf.mxu0
      %v4468 = vadd.f32 %v4144, %v4467
      %v4469 = vpop.f32.mrf.mxu0
      %4470 = vmatprep.mubr.f32.mxu0 0.0
      %4471 = vmatmul.mubr.f32.gmra.mxu0 %v4278
      %v4472 = vpop.f32.mrf.mxu0
      %v4473 = vadd.f32 %v4149, %v4472
      %v4474 = vpop.f32.mrf.mxu0
      %4475 = vmatprep.mubr.f32.mxu0 0.0
      %4476 = vmatmul.mubr.f32.gmra.mxu0 %v4281
      %v4477 = vpop.f32.mrf.mxu0
      %v4478 = vadd.f32 %v4154, %v4477
      %v4479 = vpop.f32.mrf.mxu0
      %4480 = vmatprep.mubr.f32.mxu0 0.0
      %4481 = vmatmul.mubr.f32.gmra.mxu0 %v4284
      %v4482 = vpop.f32.mrf.mxu0
      %v4483 = vadd.f32 %v4159, %v4482
      %v4484 = vpop.f32.mrf.mxu0
      %4485 = vmatprep.mubr.f32.mxu0 0.0
      %4486 = vmatmul.mubr.f32.gmra.mxu0 %v4287
      %v4487 = vpop.f32.mrf.mxu0
      %v4488 = vadd.f32 %v4164, %v4487
      %v4489 = vpop.f32.mrf.mxu0
      %4490 = vmatprep.mubr.f32.mxu0 0.0
      %4491 = vmatmul.mubr.f32.gmra.mxu0 %v4290
      %v4492 = vpop.f32.mrf.mxu0
      %v4493 = vadd.f32 %v4169, %v4492
      %v4494 = vpop.f32.mrf.mxu0
      %4495 = vmatprep.mubr.f32.mxu0 0.0
      %4496 = vmatmul.mubr.f32.gmra.mxu0 %v4293
      %v4497 = vpop.f32.mrf.mxu0
      %v4498 = vadd.f32 %v4174, %v4497
      %v4499 = vpop.f32.mrf.mxu0
      %4500 = vmatprep.mubr.f32.mxu0 0.0
      %4501 = vmatmul.mubr.f32.gmra.mxu0 %v4296
      %v4502 = vpop.f32.mrf.mxu0
      %v4503 = vadd.f32 %v4179, %v4502
      %v4504 = vpop.f32.mrf.mxu0
      %4505 = vmatprep.mubr.f32.mxu0 0.0
      %4506 = vmatmul.mubr.f32.gmra.mxu0 %v4299
      %v4507 = vpop.f32.mrf.mxu0
      %v4508 = vadd.f32 %v4184, %v4507
      %v4509 = vpop.f32.mrf.mxu0
      %4510 = vmatprep.mubr.f32.mxu0 0.0
      %4511 = vmatmul.mubr.f32.gmra.mxu0 %v4302
      %v4512 = vpop.f32.mrf.mxu0
      %v4513 = vadd.f32 %v4189, %v4512
      %v4514 = vpop.f32.mrf.mxu0
      %4515 = vmatprep.mubr.f32.mxu0 0.0
      %4516 = vmatmul.mubr.f32.gmra.mxu0 %v4305
      %v4517 = vpop.f32.mrf.mxu0
      %v4518 = vadd.f32 %v4194, %v4517
      %v4519 = vpop.f32.mrf.mxu0
      %4520 = vmatprep.mubr.f32.mxu0 0.0
      %4521 = vmatmul.mubr.f32.gmra.mxu0 %v4308
      %v4522 = vpop.f32.mrf.mxu0
      %v4523 = vadd.f32 %v4199, %v4522
      %v4524 = vpop.f32.mrf.mxu0
      %4525 = vmatprep.mubr.f32.mxu0 0.0
      %4526 = vmatmul.mubr.f32.gmra.mxu0 %v4311
      %v4527 = vpop.f32.mrf.mxu0
      %v4528 = vadd.f32 %v4204, %v4527
      %v4529 = vpop.f32.mrf.mxu0
      %4530 = vmatprep.mubr.f32.mxu0 0.0
      %4531 = vmatmul.mubr.f32.gmra.mxu0 %v4314
      %v4532 = vpop.f32.mrf.mxu0
      %v4533 = vadd.f32 %v4209, %v4532
      %v4534 = vpop.f32.mrf.mxu0
      %4535 = vmatprep.mubr.f32.mxu0 0.0
      %4536 = vmatmul.mubr.f32.gmra.mxu0 %v4317
      %v4537 = vpop.f32.mrf.mxu0
      %v4538 = vadd.f32 %v4214, %v4537
      %v4539 = vpop.f32.mrf.mxu0
      %4540 = vmatprep.mubr.f32.mxu0 0.0
      %4541 = vmatmul.mubr.f32.gmra.mxu0 %v4320
      %v4542 = vpop.f32.mrf.mxu0
      %v4543 = vadd.f32 %v4219, %v4542
      %v4544 = vpop.f32.mrf.mxu0
      %4545 = vmatprep.mubr.f32.mxu0 0.0
      %4546 = vmatmul.mubr.f32.gmra.mxu0 %v4323
      %v4547 = vpop.f32.mrf.mxu0
      %v4548 = vadd.f32 %v4224, %v4547
      %v4549 = vpop.f32.mrf.mxu0
      %4550 = vmatprep.mubr.f32.mxu0 0.0
      %4551 = vmatmul.mubr.f32.gmra.mxu0 %v4326
      %v4552 = vpop.f32.mrf.mxu0
      %v4553 = vadd.f32 %v4229, %v4552
      %v4554 = vpop.f32.mrf.mxu0
      %4555 = vdwg.mxu0
      %s4556 = scalar_lea.vmem [#allocation2], 48
      %v4557 = vld [vmem:[%s4556] sm:$0xff]
      %v4558 = vld [vmem:[%s4556 + $0x8] sm:$0xff]
      %v4559 = vld [vmem:[%s4556 + $0x18] sm:$0xff]
      %v4560 = vld [vmem:[%s4556 + $0x20] sm:$0xff]
      %v4561 = vld [vmem:[%s4556 + $0x30] sm:$0xff]
      %v4562 = vld [vmem:[%s4556 + $0x38] sm:$0xff]
      %v4563 = vld [vmem:[%s4556 + $0x48] sm:$0xff]
      %v4564 = vld [vmem:[%s4556 + $0x50] sm:$0xff]
      %v4565 = vld [vmem:[%s4556 + $0x60] sm:$0xff]
      %v4566 = vld [vmem:[%s4556 + $0x68] sm:$0xff]
      %v4567 = vld [vmem:[%s4556 + $0x78] sm:$0xff]
      %v4568 = vld [vmem:[%s4556 + $0x80] sm:$0xff]
      %v4569 = vld [vmem:[%s4556 + $0x90] sm:$0xff]
      %v4570 = vld [vmem:[%s4556 + $0x98] sm:$0xff]
      %v4571 = vld [vmem:[%s4556 + $0xa8] sm:$0xff]
      %v4572 = vld [vmem:[%s4556 + $0xb0] sm:$0xff]
      %v4573 = vld [vmem:[%s4556 + $0xc0] sm:$0xff]
      %v4574 = vld [vmem:[%s4556 + $0xc8] sm:$0xff]
      %v4575 = vld [vmem:[%s4556 + $0xd8] sm:$0xff]
      %v4576 = vld [vmem:[%s4556 + $0xe0] sm:$0xff]
      %v4577 = vld [vmem:[%s4556 + $0xf0] sm:$0xff]
      %v4578 = vld [vmem:[%s4556 + $0xf8] sm:$0xff]
      %v4579 = vld [vmem:[%s4556 + $0x108] sm:$0xff]
      %v4580 = vld [vmem:[%s4556 + $0x110] sm:$0xff]
      %v4581 = vld [vmem:[%s4556 + $0x120] sm:$0xff]
      %v4582 = vld [vmem:[%s4556 + $0x128] sm:$0xff]
      %v4583 = vld [vmem:[%s4556 + $0x138] sm:$0xff]
      %v4584 = vld [vmem:[%s4556 + $0x140] sm:$0xff]
      %v4585 = vld [vmem:[%s4556 + $0x150] sm:$0xff]
      %v4586 = vld [vmem:[%s4556 + $0x158] sm:$0xff]
      %v4587 = vld [vmem:[%s4556 + $0x168] sm:$0xff]
      %v4588 = vld [vmem:[%s4556 + $0x170] sm:$0xff]
      %s4589 = scalar_lea.vmem %s1, 80
      %v4590 = vld [vmem:[%s4589] sm:$0x1f]
      %v4592 = vsel %vm212, %v4557, 0
      %v4595 = vsel %vm212, %v4558, 0
      %v4598 = vsel %vm212, %v4559, 0
      %v4601 = vsel %vm212, %v4560, 0
      %v4604 = vsel %vm212, %v4561, 0
      %v4607 = vsel %vm212, %v4562, 0
      %v4610 = vsel %vm212, %v4563, 0
      %v4613 = vsel %vm212, %v4564, 0
      %v4616 = vsel %vm212, %v4565, 0
      %v4619 = vsel %vm212, %v4566, 0
      %v4622 = vsel %vm212, %v4567, 0
      %v4625 = vsel %vm212, %v4568, 0
      %v4628 = vsel %vm212, %v4569, 0
      %v4631 = vsel %vm212, %v4570, 0
      %v4634 = vsel %vm212, %v4571, 0
      %v4637 = vsel %vm212, %v4572, 0
      %v4640 = vsel %vm212, %v4573, 0
      %v4643 = vsel %vm212, %v4574, 0
      %v4646 = vsel %vm212, %v4575, 0
      %v4649 = vsel %vm212, %v4576, 0
      %v4652 = vsel %vm212, %v4577, 0
      %v4655 = vsel %vm212, %v4578, 0
      %v4658 = vsel %vm212, %v4579, 0
      %v4661 = vsel %vm212, %v4580, 0
      %v4664 = vsel %vm212, %v4581, 0
      %v4667 = vsel %vm212, %v4582, 0
      %v4670 = vsel %vm212, %v4583, 0
      %v4673 = vsel %vm212, %v4584, 0
      %v4676 = vsel %vm212, %v4585, 0
      %v4679 = vsel %vm212, %v4586, 0
      %v4682 = vsel %vm212, %v4587, 0
      %v4685 = vsel %vm212, %v4588, 0
      %v4688 = vsel %vm531, %v4590, 0
      %4690 = vmatprep.subr.mxu0 0.0
      %4691 = vmatpush1.msra.mxu0 0.0
      %4692 = vmatprep.subr.mxu0 0.0
      %4693 = vmatpush1.msra.mxu0 0.0
      %4694 = vmatprep.subr.mxu0 0.0
      %4695 = vmatpush1.msra.mxu0 0.0
      %4696 = vmatprep.subr.mxu0 0.0
      %4697 = vmatpush1.msra.mxu0 0.0
      %4698 = vmatprep.subr.mxu0 0.0
      %4699 = vmatpush1.msra.mxu0 0.0
      %4700 = vmatprep.subr.mxu0 0.0
      %4701 = vmatpush1.msra.mxu0 0.0
      %4702 = vmatprep.subr.mxu0 0.0
      %4703 = vmatpush1.msra.mxu0 0.0
      %4704 = vmatprep.subr.mxu0 0.0
      %4705 = vmatpush1.msra.mxu0 0.0
      %4706 = vmatprep.subr.mxu0 0.0
      %4707 = vmatpush1.msra.mxu0 0.0
      %4708 = vmatprep.subr.mxu0 0.0
      %4709 = vmatpush1.msra.mxu0 0.0
      %4710 = vmatprep.subr.mxu0 0.0
      %4711 = vmatpush1.msra.mxu0 0.0
      %4712 = vmatprep.subr.mxu0 0.0
      %4713 = vmatpush1.msra.mxu0 0.0
      %4714 = vmatprep.subr.mxu0 0.0
      %4715 = vmatpush1.msra.mxu0 0.0
      %4716 = vmatprep.subr.mxu0 0.0
      %4717 = vmatpush1.msra.mxu0 0.0
      %4718 = vmatprep.subr.mxu0 0.0
      %4719 = vmatpush1.msra.mxu0 0.0
      %4720 = vmatprep.subr.mxu0 0.0
      %4721 = vmatpush1.msra.mxu0 %v4688
      %4722 = vmatprep.subr.mxu0 0.0
      %4723 = vmatpush2.msra.mxu0 0.0
      %4724 = vmatprep.subr.mxu0 0.0
      %4725 = vmatpush2.msra.mxu0 0.0
      %4726 = vmatprep.subr.mxu0 0.0
      %4727 = vmatpush2.msra.mxu0 0.0
      %4728 = vmatprep.subr.mxu0 0.0
      %4729 = vmatpush2.msra.mxu0 0.0
      %4730 = vmatprep.subr.mxu0 0.0
      %4731 = vmatpush2.msra.mxu0 0.0
      %4732 = vmatprep.subr.mxu0 0.0
      %4733 = vmatpush2.msra.mxu0 0.0
      %4734 = vmatprep.subr.mxu0 0.0
      %4735 = vmatpush2.msra.mxu0 0.0
      %4736 = vmatprep.subr.mxu0 0.0
      %4737 = vmatpush2.msra.mxu0 0.0
      %4738 = vmatprep.subr.mxu0 0.0
      %4739 = vmatpush2.msra.mxu0 0.0
      %4740 = vmatprep.subr.mxu0 0.0
      %4741 = vmatpush2.msra.mxu0 0.0
      %4742 = vmatprep.subr.mxu0 0.0
      %4743 = vmatpush2.msra.mxu0 0.0
      %4744 = vmatprep.subr.mxu0 0.0
      %4745 = vmatpush2.msra.mxu0 0.0
      %4746 = vmatprep.subr.mxu0 0.0
      %4747 = vmatpush2.msra.mxu0 0.0
      %4748 = vmatprep.subr.mxu0 0.0
      %4749 = vmatpush2.msra.mxu0 0.0
      %4750 = vmatprep.subr.mxu0 0.0
      %4751 = vmatpush2.msra.mxu0 0.0
      %4752 = vmatprep.subr.mxu0 0.0
      %4753 = vmatpush2.msra.mxu0 0.0
      %4754 = vmatprep.mubr.f32.mxu0 0.0
      %4755 = vmatmul.mubr.f32.gmra.mxu0 %v4592
      %v4756 = vpop.f32.mrf.mxu0
      %v4757 = vadd.f32 0.0, %v4756
      %v4758 = vpop.f32.mrf.mxu0
      %4759 = vmatprep.mubr.f32.mxu0 0.0
      %4760 = vmatmul.mubr.f32.gmra.mxu0 %v4595
      %v4761 = vpop.f32.mrf.mxu0
      %v4762 = vadd.f32 0.0, %v4761
      %v4763 = vpop.f32.mrf.mxu0
      %4764 = vmatprep.mubr.f32.mxu0 0.0
      %4765 = vmatmul.mubr.f32.gmra.mxu0 %v4598
      %v4766 = vpop.f32.mrf.mxu0
      %v4767 = vadd.f32 0.0, %v4766
      %v4768 = vpop.f32.mrf.mxu0
      %4769 = vmatprep.mubr.f32.mxu0 0.0
      %4770 = vmatmul.mubr.f32.gmra.mxu0 %v4601
      %v4771 = vpop.f32.mrf.mxu0
      %v4772 = vadd.f32 0.0, %v4771
      %v4773 = vpop.f32.mrf.mxu0
      %4774 = vmatprep.mubr.f32.mxu0 0.0
      %4775 = vmatmul.mubr.f32.gmra.mxu0 %v4604
      %v4776 = vpop.f32.mrf.mxu0
      %v4777 = vadd.f32 0.0, %v4776
      %v4778 = vpop.f32.mrf.mxu0
      %4779 = vmatprep.mubr.f32.mxu0 0.0
      %4780 = vmatmul.mubr.f32.gmra.mxu0 %v4607
      %v4781 = vpop.f32.mrf.mxu0
      %v4782 = vadd.f32 0.0, %v4781
      %v4783 = vpop.f32.mrf.mxu0
      %4784 = vmatprep.mubr.f32.mxu0 0.0
      %4785 = vmatmul.mubr.f32.gmra.mxu0 %v4610
      %v4786 = vpop.f32.mrf.mxu0
      %v4787 = vadd.f32 0.0, %v4786
      %v4788 = vpop.f32.mrf.mxu0
      %4789 = vmatprep.mubr.f32.mxu0 0.0
      %4790 = vmatmul.mubr.f32.gmra.mxu0 %v4613
      %v4791 = vpop.f32.mrf.mxu0
      %v4792 = vadd.f32 0.0, %v4791
      %v4793 = vpop.f32.mrf.mxu0
      %4794 = vmatprep.mubr.f32.mxu0 0.0
      %4795 = vmatmul.mubr.f32.gmra.mxu0 %v4616
      %v4796 = vpop.f32.mrf.mxu0
      %v4797 = vadd.f32 0.0, %v4796
      %v4798 = vpop.f32.mrf.mxu0
      %4799 = vmatprep.mubr.f32.mxu0 0.0
      %4800 = vmatmul.mubr.f32.gmra.mxu0 %v4619
      %v4801 = vpop.f32.mrf.mxu0
      %v4802 = vadd.f32 0.0, %v4801
      %v4803 = vpop.f32.mrf.mxu0
      %4804 = vmatprep.mubr.f32.mxu0 0.0
      %4805 = vmatmul.mubr.f32.gmra.mxu0 %v4622
      %v4806 = vpop.f32.mrf.mxu0
      %v4807 = vadd.f32 0.0, %v4806
      %v4808 = vpop.f32.mrf.mxu0
      %4809 = vmatprep.mubr.f32.mxu0 0.0
      %4810 = vmatmul.mubr.f32.gmra.mxu0 %v4625
      %v4811 = vpop.f32.mrf.mxu0
      %v4812 = vadd.f32 0.0, %v4811
      %v4813 = vpop.f32.mrf.mxu0
      %4814 = vmatprep.mubr.f32.mxu0 0.0
      %4815 = vmatmul.mubr.f32.gmra.mxu0 %v4628
      %v4816 = vpop.f32.mrf.mxu0
      %v4817 = vadd.f32 0.0, %v4816
      %v4818 = vpop.f32.mrf.mxu0
      %4819 = vmatprep.mubr.f32.mxu0 0.0
      %4820 = vmatmul.mubr.f32.gmra.mxu0 %v4631
      %v4821 = vpop.f32.mrf.mxu0
      %v4822 = vadd.f32 0.0, %v4821
      %v4823 = vpop.f32.mrf.mxu0
      %4824 = vmatprep.mubr.f32.mxu0 0.0
      %4825 = vmatmul.mubr.f32.gmra.mxu0 %v4634
      %v4826 = vpop.f32.mrf.mxu0
      %v4827 = vadd.f32 0.0, %v4826
      %v4828 = vpop.f32.mrf.mxu0
      %4829 = vmatprep.mubr.f32.mxu0 0.0
      %4830 = vmatmul.mubr.f32.gmra.mxu0 %v4637
      %v4831 = vpop.f32.mrf.mxu0
      %v4832 = vadd.f32 0.0, %v4831
      %v4833 = vpop.f32.mrf.mxu0
      %4834 = vmatprep.mubr.f32.mxu0 0.0
      %4835 = vmatmul.mubr.f32.gmra.mxu0 %v4640
      %v4836 = vpop.f32.mrf.mxu0
      %v4837 = vadd.f32 0.0, %v4836
      %v4838 = vpop.f32.mrf.mxu0
      %4839 = vmatprep.mubr.f32.mxu0 0.0
      %4840 = vmatmul.mubr.f32.gmra.mxu0 %v4643
      %v4841 = vpop.f32.mrf.mxu0
      %v4842 = vadd.f32 0.0, %v4841
      %v4843 = vpop.f32.mrf.mxu0
      %4844 = vmatprep.mubr.f32.mxu0 0.0
      %4845 = vmatmul.mubr.f32.gmra.mxu0 %v4646
      %v4846 = vpop.f32.mrf.mxu0
      %v4847 = vadd.f32 0.0, %v4846
      %v4848 = vpop.f32.mrf.mxu0
      %4849 = vmatprep.mubr.f32.mxu0 0.0
      %4850 = vmatmul.mubr.f32.gmra.mxu0 %v4649
      %v4851 = vpop.f32.mrf.mxu0
      %v4852 = vadd.f32 0.0, %v4851
      %v4853 = vpop.f32.mrf.mxu0
      %4854 = vmatprep.mubr.f32.mxu0 0.0
      %4855 = vmatmul.mubr.f32.gmra.mxu0 %v4652
      %v4856 = vpop.f32.mrf.mxu0
      %v4857 = vadd.f32 0.0, %v4856
      %v4858 = vpop.f32.mrf.mxu0
      %4859 = vmatprep.mubr.f32.mxu0 0.0
      %4860 = vmatmul.mubr.f32.gmra.mxu0 %v4655
      %v4861 = vpop.f32.mrf.mxu0
      %v4862 = vadd.f32 0.0, %v4861
      %v4863 = vpop.f32.mrf.mxu0
      %4864 = vmatprep.mubr.f32.mxu0 0.0
      %4865 = vmatmul.mubr.f32.gmra.mxu0 %v4658
      %v4866 = vpop.f32.mrf.mxu0
      %v4867 = vadd.f32 0.0, %v4866
      %v4868 = vpop.f32.mrf.mxu0
      %4869 = vmatprep.mubr.f32.mxu0 0.0
      %4870 = vmatmul.mubr.f32.gmra.mxu0 %v4661
      %v4871 = vpop.f32.mrf.mxu0
      %v4872 = vadd.f32 0.0, %v4871
      %v4873 = vpop.f32.mrf.mxu0
      %4874 = vmatprep.mubr.f32.mxu0 0.0
      %4875 = vmatmul.mubr.f32.gmra.mxu0 %v4664
      %v4876 = vpop.f32.mrf.mxu0
      %v4877 = vadd.f32 0.0, %v4876
      %v4878 = vpop.f32.mrf.mxu0
      %4879 = vmatprep.mubr.f32.mxu0 0.0
      %4880 = vmatmul.mubr.f32.gmra.mxu0 %v4667
      %v4881 = vpop.f32.mrf.mxu0
      %v4882 = vadd.f32 0.0, %v4881
      %v4883 = vpop.f32.mrf.mxu0
      %4884 = vmatprep.mubr.f32.mxu0 0.0
      %4885 = vmatmul.mubr.f32.gmra.mxu0 %v4670
      %v4886 = vpop.f32.mrf.mxu0
      %v4887 = vadd.f32 0.0, %v4886
      %v4888 = vpop.f32.mrf.mxu0
      %4889 = vmatprep.mubr.f32.mxu0 0.0
      %4890 = vmatmul.mubr.f32.gmra.mxu0 %v4673
      %v4891 = vpop.f32.mrf.mxu0
      %v4892 = vadd.f32 0.0, %v4891
      %v4893 = vpop.f32.mrf.mxu0
      %4894 = vmatprep.mubr.f32.mxu0 0.0
      %4895 = vmatmul.mubr.f32.gmra.mxu0 %v4676
      %v4896 = vpop.f32.mrf.mxu0
      %v4897 = vadd.f32 0.0, %v4896
      %v4898 = vpop.f32.mrf.mxu0
      %4899 = vmatprep.mubr.f32.mxu0 0.0
      %4900 = vmatmul.mubr.f32.gmra.mxu0 %v4679
      %v4901 = vpop.f32.mrf.mxu0
      %v4902 = vadd.f32 0.0, %v4901
      %v4903 = vpop.f32.mrf.mxu0
      %4904 = vmatprep.mubr.f32.mxu0 0.0
      %4905 = vmatmul.mubr.f32.gmra.mxu0 %v4682
      %v4906 = vpop.f32.mrf.mxu0
      %v4907 = vadd.f32 0.0, %v4906
      %v4908 = vpop.f32.mrf.mxu0
      %4909 = vmatprep.mubr.f32.mxu0 0.0
      %4910 = vmatmul.mubr.f32.gmra.mxu0 %v4685
      %v4911 = vpop.f32.mrf.mxu0
      %v4912 = vadd.f32 0.0, %v4911
      %v4913 = vpop.f32.mrf.mxu0
      %4914 = vdwg.mxu0
      %v4915 = vadd.f32 %v4398, %v4757
      %v4916 = vadd.f32 %v4403, %v4762
      %v4917 = vadd.f32 %v4408, %v4767
      %v4918 = vadd.f32 %v4413, %v4772
      %v4919 = vadd.f32 %v4418, %v4777
      %v4920 = vadd.f32 %v4423, %v4782
      %v4921 = vadd.f32 %v4428, %v4787
      %v4922 = vadd.f32 %v4433, %v4792
      %v4923 = vadd.f32 %v4438, %v4797
      %v4924 = vadd.f32 %v4443, %v4802
      %v4925 = vadd.f32 %v4448, %v4807
      %v4926 = vadd.f32 %v4453, %v4812
      %v4927 = vadd.f32 %v4458, %v4817
      %v4928 = vadd.f32 %v4463, %v4822
      %v4929 = vadd.f32 %v4468, %v4827
      %v4930 = vadd.f32 %v4473, %v4832
      %v4931 = vadd.f32 %v4478, %v4837
      %v4932 = vadd.f32 %v4483, %v4842
      %v4933 = vadd.f32 %v4488, %v4847
      %v4934 = vadd.f32 %v4493, %v4852
      %v4935 = vadd.f32 %v4498, %v4857
      %v4936 = vadd.f32 %v4503, %v4862
      %v4937 = vadd.f32 %v4508, %v4867
      %v4938 = vadd.f32 %v4513, %v4872
      %v4939 = vadd.f32 %v4518, %v4877
      %v4940 = vadd.f32 %v4523, %v4882
      %v4941 = vadd.f32 %v4528, %v4887
      %v4942 = vadd.f32 %v4533, %v4892
      %v4943 = vadd.f32 %v4538, %v4897
      %v4944 = vadd.f32 %v4543, %v4902
      %v4945 = vadd.f32 %v4548, %v4907
      %v4946 = vadd.f32 %v4553, %v4912
      %v4947 = vld [vmem:[%s4556 + $0x1] sm:$0xff]
      %v4948 = vld [vmem:[%s4556 + $0x9] sm:$0xff]
      %v4949 = vld [vmem:[%s4556 + $0x19] sm:$0xff]
      %v4950 = vld [vmem:[%s4556 + $0x21] sm:$0xff]
      %v4951 = vld [vmem:[%s4556 + $0x31] sm:$0xff]
      %v4952 = vld [vmem:[%s4556 + $0x39] sm:$0xff]
      %v4953 = vld [vmem:[%s4556 + $0x49] sm:$0xff]
      %v4954 = vld [vmem:[%s4556 + $0x51] sm:$0xff]
      %v4955 = vld [vmem:[%s4556 + $0x61] sm:$0xff]
      %v4956 = vld [vmem:[%s4556 + $0x69] sm:$0xff]
      %v4957 = vld [vmem:[%s4556 + $0x79] sm:$0xff]
      %v4958 = vld [vmem:[%s4556 + $0x81] sm:$0xff]
      %v4959 = vld [vmem:[%s4556 + $0x91] sm:$0xff]
      %v4960 = vld [vmem:[%s4556 + $0x99] sm:$0xff]
      %v4961 = vld [vmem:[%s4556 + $0xa9] sm:$0xff]
      %v4962 = vld [vmem:[%s4556 + $0xb1] sm:$0xff]
      %v4963 = vld [vmem:[%s4556 + $0xc1] sm:$0xff]
      %v4964 = vld [vmem:[%s4556 + $0xc9] sm:$0xff]
      %v4965 = vld [vmem:[%s4556 + $0xd9] sm:$0xff]
      %v4966 = vld [vmem:[%s4556 + $0xe1] sm:$0xff]
      %v4967 = vld [vmem:[%s4556 + $0xf1] sm:$0xff]
      %v4968 = vld [vmem:[%s4556 + $0xf9] sm:$0xff]
      %v4969 = vld [vmem:[%s4556 + $0x109] sm:$0xff]
      %v4970 = vld [vmem:[%s4556 + $0x111] sm:$0xff]
      %v4971 = vld [vmem:[%s4556 + $0x121] sm:$0xff]
      %v4972 = vld [vmem:[%s4556 + $0x129] sm:$0xff]
      %v4973 = vld [vmem:[%s4556 + $0x139] sm:$0xff]
      %v4974 = vld [vmem:[%s4556 + $0x141] sm:$0xff]
      %v4975 = vld [vmem:[%s4556 + $0x151] sm:$0xff]
      %v4976 = vld [vmem:[%s4556 + $0x159] sm:$0xff]
      %v4977 = vld [vmem:[%s4556 + $0x169] sm:$0xff]
      %v4978 = vld [vmem:[%s4556 + $0x171] sm:$0xff]
      %s4979 = scalar_lea.vmem %s1, 88
      %v4980 = vld [vmem:[%s4979] sm:$0x1f]
      %v4982 = vsel %vm212, %v4947, 0
      %v4985 = vsel %vm212, %v4948, 0
      %v4988 = vsel %vm212, %v4949, 0
      %v4991 = vsel %vm212, %v4950, 0
      %v4994 = vsel %vm212, %v4951, 0
      %v4997 = vsel %vm212, %v4952, 0
      %v5000 = vsel %vm212, %v4953, 0
      %v5003 = vsel %vm212, %v4954, 0
      %v5006 = vsel %vm212, %v4955, 0
      %v5009 = vsel %vm212, %v4956, 0
      %v5012 = vsel %vm212, %v4957, 0
      %v5015 = vsel %vm212, %v4958, 0
      %v5018 = vsel %vm212, %v4959, 0
      %v5021 = vsel %vm212, %v4960, 0
      %v5024 = vsel %vm212, %v4961, 0
      %v5027 = vsel %vm212, %v4962, 0
      %v5030 = vsel %vm212, %v4963, 0
      %v5033 = vsel %vm212, %v4964, 0
      %v5036 = vsel %vm212, %v4965, 0
      %v5039 = vsel %vm212, %v4966, 0
      %v5042 = vsel %vm212, %v4967, 0
      %v5045 = vsel %vm212, %v4968, 0
      %v5048 = vsel %vm212, %v4969, 0
      %v5051 = vsel %vm212, %v4970, 0
      %v5054 = vsel %vm212, %v4971, 0
      %v5057 = vsel %vm212, %v4972, 0
      %v5060 = vsel %vm212, %v4973, 0
      %v5063 = vsel %vm212, %v4974, 0
      %v5066 = vsel %vm212, %v4975, 0
      %v5069 = vsel %vm212, %v4976, 0
      %v5072 = vsel %vm212, %v4977, 0
      %v5075 = vsel %vm212, %v4978, 0
      %v5078 = vsel %vm531, %v4980, 0
      %5080 = vmatprep.subr.mxu0 0.0
      %5081 = vmatpush1.msra.mxu0 0.0
      %5082 = vmatprep.subr.mxu0 0.0
      %5083 = vmatpush1.msra.mxu0 0.0
      %5084 = vmatprep.subr.mxu0 0.0
      %5085 = vmatpush1.msra.mxu0 0.0
      %5086 = vmatprep.subr.mxu0 0.0
      %5087 = vmatpush1.msra.mxu0 0.0
      %5088 = vmatprep.subr.mxu0 0.0
      %5089 = vmatpush1.msra.mxu0 0.0
      %5090 = vmatprep.subr.mxu0 0.0
      %5091 = vmatpush1.msra.mxu0 0.0
      %5092 = vmatprep.subr.mxu0 0.0
      %5093 = vmatpush1.msra.mxu0 0.0
      %5094 = vmatprep.subr.mxu0 0.0
      %5095 = vmatpush1.msra.mxu0 0.0
      %5096 = vmatprep.subr.mxu0 0.0
      %5097 = vmatpush1.msra.mxu0 0.0
      %5098 = vmatprep.subr.mxu0 0.0
      %5099 = vmatpush1.msra.mxu0 0.0
      %5100 = vmatprep.subr.mxu0 0.0
      %5101 = vmatpush1.msra.mxu0 0.0
      %5102 = vmatprep.subr.mxu0 0.0
      %5103 = vmatpush1.msra.mxu0 0.0
      %5104 = vmatprep.subr.mxu0 0.0
      %5105 = vmatpush1.msra.mxu0 0.0
      %5106 = vmatprep.subr.mxu0 0.0
      %5107 = vmatpush1.msra.mxu0 0.0
      %5108 = vmatprep.subr.mxu0 0.0
      %5109 = vmatpush1.msra.mxu0 0.0
      %5110 = vmatprep.subr.mxu0 0.0
      %5111 = vmatpush1.msra.mxu0 %v5078
      %5112 = vmatprep.subr.mxu0 0.0
      %5113 = vmatpush2.msra.mxu0 0.0
      %5114 = vmatprep.subr.mxu0 0.0
      %5115 = vmatpush2.msra.mxu0 0.0
      %5116 = vmatprep.subr.mxu0 0.0
      %5117 = vmatpush2.msra.mxu0 0.0
      %5118 = vmatprep.subr.mxu0 0.0
      %5119 = vmatpush2.msra.mxu0 0.0
      %5120 = vmatprep.subr.mxu0 0.0
      %5121 = vmatpush2.msra.mxu0 0.0
      %5122 = vmatprep.subr.mxu0 0.0
      %5123 = vmatpush2.msra.mxu0 0.0
      %5124 = vmatprep.subr.mxu0 0.0
      %5125 = vmatpush2.msra.mxu0 0.0
      %5126 = vmatprep.subr.mxu0 0.0
      %5127 = vmatpush2.msra.mxu0 0.0
      %5128 = vmatprep.subr.mxu0 0.0
      %5129 = vmatpush2.msra.mxu0 0.0
      %5130 = vmatprep.subr.mxu0 0.0
      %5131 = vmatpush2.msra.mxu0 0.0
      %5132 = vmatprep.subr.mxu0 0.0
      %5133 = vmatpush2.msra.mxu0 0.0
      %5134 = vmatprep.subr.mxu0 0.0
      %5135 = vmatpush2.msra.mxu0 0.0
      %5136 = vmatprep.subr.mxu0 0.0
      %5137 = vmatpush2.msra.mxu0 0.0
      %5138 = vmatprep.subr.mxu0 0.0
      %5139 = vmatpush2.msra.mxu0 0.0
      %5140 = vmatprep.subr.mxu0 0.0
      %5141 = vmatpush2.msra.mxu0 0.0
      %5142 = vmatprep.subr.mxu0 0.0
      %5143 = vmatpush2.msra.mxu0 0.0
      %5144 = vmatprep.mubr.f32.mxu0 0.0
      %5145 = vmatmul.mubr.f32.gmra.mxu0 %v4982
      %v5146 = vpop.f32.mrf.mxu0
      %v5147 = vadd.f32 0.0, %v5146
      %v5148 = vpop.f32.mrf.mxu0
      %5149 = vmatprep.mubr.f32.mxu0 0.0
      %5150 = vmatmul.mubr.f32.gmra.mxu0 %v4985
      %v5151 = vpop.f32.mrf.mxu0
      %v5152 = vadd.f32 0.0, %v5151
      %v5153 = vpop.f32.mrf.mxu0
      %5154 = vmatprep.mubr.f32.mxu0 0.0
      %5155 = vmatmul.mubr.f32.gmra.mxu0 %v4988
      %v5156 = vpop.f32.mrf.mxu0
      %v5157 = vadd.f32 0.0, %v5156
      %v5158 = vpop.f32.mrf.mxu0
      %5159 = vmatprep.mubr.f32.mxu0 0.0
      %5160 = vmatmul.mubr.f32.gmra.mxu0 %v4991
      %v5161 = vpop.f32.mrf.mxu0
      %v5162 = vadd.f32 0.0, %v5161
      %v5163 = vpop.f32.mrf.mxu0
      %5164 = vmatprep.mubr.f32.mxu0 0.0
      %5165 = vmatmul.mubr.f32.gmra.mxu0 %v4994
      %v5166 = vpop.f32.mrf.mxu0
      %v5167 = vadd.f32 0.0, %v5166
      %v5168 = vpop.f32.mrf.mxu0
      %5169 = vmatprep.mubr.f32.mxu0 0.0
      %5170 = vmatmul.mubr.f32.gmra.mxu0 %v4997
      %v5171 = vpop.f32.mrf.mxu0
      %v5172 = vadd.f32 0.0, %v5171
      %v5173 = vpop.f32.mrf.mxu0
      %5174 = vmatprep.mubr.f32.mxu0 0.0
      %5175 = vmatmul.mubr.f32.gmra.mxu0 %v5000
      %v5176 = vpop.f32.mrf.mxu0
      %v5177 = vadd.f32 0.0, %v5176
      %v5178 = vpop.f32.mrf.mxu0
      %5179 = vmatprep.mubr.f32.mxu0 0.0
      %5180 = vmatmul.mubr.f32.gmra.mxu0 %v5003
      %v5181 = vpop.f32.mrf.mxu0
      %v5182 = vadd.f32 0.0, %v5181
      %v5183 = vpop.f32.mrf.mxu0
      %5184 = vmatprep.mubr.f32.mxu0 0.0
      %5185 = vmatmul.mubr.f32.gmra.mxu0 %v5006
      %v5186 = vpop.f32.mrf.mxu0
      %v5187 = vadd.f32 0.0, %v5186
      %v5188 = vpop.f32.mrf.mxu0
      %5189 = vmatprep.mubr.f32.mxu0 0.0
      %5190 = vmatmul.mubr.f32.gmra.mxu0 %v5009
      %v5191 = vpop.f32.mrf.mxu0
      %v5192 = vadd.f32 0.0, %v5191
      %v5193 = vpop.f32.mrf.mxu0
      %5194 = vmatprep.mubr.f32.mxu0 0.0
      %5195 = vmatmul.mubr.f32.gmra.mxu0 %v5012
      %v5196 = vpop.f32.mrf.mxu0
      %v5197 = vadd.f32 0.0, %v5196
      %v5198 = vpop.f32.mrf.mxu0
      %5199 = vmatprep.mubr.f32.mxu0 0.0
      %5200 = vmatmul.mubr.f32.gmra.mxu0 %v5015
      %v5201 = vpop.f32.mrf.mxu0
      %v5202 = vadd.f32 0.0, %v5201
      %v5203 = vpop.f32.mrf.mxu0
      %5204 = vmatprep.mubr.f32.mxu0 0.0
      %5205 = vmatmul.mubr.f32.gmra.mxu0 %v5018
      %v5206 = vpop.f32.mrf.mxu0
      %v5207 = vadd.f32 0.0, %v5206
      %v5208 = vpop.f32.mrf.mxu0
      %5209 = vmatprep.mubr.f32.mxu0 0.0
      %5210 = vmatmul.mubr.f32.gmra.mxu0 %v5021
      %v5211 = vpop.f32.mrf.mxu0
      %v5212 = vadd.f32 0.0, %v5211
      %v5213 = vpop.f32.mrf.mxu0
      %5214 = vmatprep.mubr.f32.mxu0 0.0
      %5215 = vmatmul.mubr.f32.gmra.mxu0 %v5024
      %v5216 = vpop.f32.mrf.mxu0
      %v5217 = vadd.f32 0.0, %v5216
      %v5218 = vpop.f32.mrf.mxu0
      %5219 = vmatprep.mubr.f32.mxu0 0.0
      %5220 = vmatmul.mubr.f32.gmra.mxu0 %v5027
      %v5221 = vpop.f32.mrf.mxu0
      %v5222 = vadd.f32 0.0, %v5221
      %v5223 = vpop.f32.mrf.mxu0
      %5224 = vmatprep.mubr.f32.mxu0 0.0
      %5225 = vmatmul.mubr.f32.gmra.mxu0 %v5030
      %v5226 = vpop.f32.mrf.mxu0
      %v5227 = vadd.f32 0.0, %v5226
      %v5228 = vpop.f32.mrf.mxu0
      %5229 = vmatprep.mubr.f32.mxu0 0.0
      %5230 = vmatmul.mubr.f32.gmra.mxu0 %v5033
      %v5231 = vpop.f32.mrf.mxu0
      %v5232 = vadd.f32 0.0, %v5231
      %v5233 = vpop.f32.mrf.mxu0
      %5234 = vmatprep.mubr.f32.mxu0 0.0
      %5235 = vmatmul.mubr.f32.gmra.mxu0 %v5036
      %v5236 = vpop.f32.mrf.mxu0
      %v5237 = vadd.f32 0.0, %v5236
      %v5238 = vpop.f32.mrf.mxu0
      %5239 = vmatprep.mubr.f32.mxu0 0.0
      %5240 = vmatmul.mubr.f32.gmra.mxu0 %v5039
      %v5241 = vpop.f32.mrf.mxu0
      %v5242 = vadd.f32 0.0, %v5241
      %v5243 = vpop.f32.mrf.mxu0
      %5244 = vmatprep.mubr.f32.mxu0 0.0
      %5245 = vmatmul.mubr.f32.gmra.mxu0 %v5042
      %v5246 = vpop.f32.mrf.mxu0
      %v5247 = vadd.f32 0.0, %v5246
      %v5248 = vpop.f32.mrf.mxu0
      %5249 = vmatprep.mubr.f32.mxu0 0.0
      %5250 = vmatmul.mubr.f32.gmra.mxu0 %v5045
      %v5251 = vpop.f32.mrf.mxu0
      %v5252 = vadd.f32 0.0, %v5251
      %v5253 = vpop.f32.mrf.mxu0
      %5254 = vmatprep.mubr.f32.mxu0 0.0
      %5255 = vmatmul.mubr.f32.gmra.mxu0 %v5048
      %v5256 = vpop.f32.mrf.mxu0
      %v5257 = vadd.f32 0.0, %v5256
      %v5258 = vpop.f32.mrf.mxu0
      %5259 = vmatprep.mubr.f32.mxu0 0.0
      %5260 = vmatmul.mubr.f32.gmra.mxu0 %v5051
      %v5261 = vpop.f32.mrf.mxu0
      %v5262 = vadd.f32 0.0, %v5261
      %v5263 = vpop.f32.mrf.mxu0
      %5264 = vmatprep.mubr.f32.mxu0 0.0
      %5265 = vmatmul.mubr.f32.gmra.mxu0 %v5054
      %v5266 = vpop.f32.mrf.mxu0
      %v5267 = vadd.f32 0.0, %v5266
      %v5268 = vpop.f32.mrf.mxu0
      %5269 = vmatprep.mubr.f32.mxu0 0.0
      %5270 = vmatmul.mubr.f32.gmra.mxu0 %v5057
      %v5271 = vpop.f32.mrf.mxu0
      %v5272 = vadd.f32 0.0, %v5271
      %v5273 = vpop.f32.mrf.mxu0
      %5274 = vmatprep.mubr.f32.mxu0 0.0
      %5275 = vmatmul.mubr.f32.gmra.mxu0 %v5060
      %v5276 = vpop.f32.mrf.mxu0
      %v5277 = vadd.f32 0.0, %v5276
      %v5278 = vpop.f32.mrf.mxu0
      %5279 = vmatprep.mubr.f32.mxu0 0.0
      %5280 = vmatmul.mubr.f32.gmra.mxu0 %v5063
      %v5281 = vpop.f32.mrf.mxu0
      %v5282 = vadd.f32 0.0, %v5281
      %v5283 = vpop.f32.mrf.mxu0
      %5284 = vmatprep.mubr.f32.mxu0 0.0
      %5285 = vmatmul.mubr.f32.gmra.mxu0 %v5066
      %v5286 = vpop.f32.mrf.mxu0
      %v5287 = vadd.f32 0.0, %v5286
      %v5288 = vpop.f32.mrf.mxu0
      %5289 = vmatprep.mubr.f32.mxu0 0.0
      %5290 = vmatmul.mubr.f32.gmra.mxu0 %v5069
      %v5291 = vpop.f32.mrf.mxu0
      %v5292 = vadd.f32 0.0, %v5291
      %v5293 = vpop.f32.mrf.mxu0
      %5294 = vmatprep.mubr.f32.mxu0 0.0
      %5295 = vmatmul.mubr.f32.gmra.mxu0 %v5072
      %v5296 = vpop.f32.mrf.mxu0
      %v5297 = vadd.f32 0.0, %v5296
      %v5298 = vpop.f32.mrf.mxu0
      %5299 = vmatprep.mubr.f32.mxu0 0.0
      %5300 = vmatmul.mubr.f32.gmra.mxu0 %v5075
      %v5301 = vpop.f32.mrf.mxu0
      %v5302 = vadd.f32 0.0, %v5301
      %v5303 = vpop.f32.mrf.mxu0
      %5304 = vdwg.mxu0
      %v5305 = vadd.f32 %v4915, %v5147
      %v5306 = vadd.f32 %v4916, %v5152
      %v5307 = vadd.f32 %v4917, %v5157
      %v5308 = vadd.f32 %v4918, %v5162
      %v5309 = vadd.f32 %v4919, %v5167
      %v5310 = vadd.f32 %v4920, %v5172
      %v5311 = vadd.f32 %v4921, %v5177
      %v5312 = vadd.f32 %v4922, %v5182
      %v5313 = vadd.f32 %v4923, %v5187
      %v5314 = vadd.f32 %v4924, %v5192
      %v5315 = vadd.f32 %v4925, %v5197
      %v5316 = vadd.f32 %v4926, %v5202
      %v5317 = vadd.f32 %v4927, %v5207
      %v5318 = vadd.f32 %v4928, %v5212
      %v5319 = vadd.f32 %v4929, %v5217
      %v5320 = vadd.f32 %v4930, %v5222
      %v5321 = vadd.f32 %v4931, %v5227
      %v5322 = vadd.f32 %v4932, %v5232
      %v5323 = vadd.f32 %v4933, %v5237
      %v5324 = vadd.f32 %v4934, %v5242
      %v5325 = vadd.f32 %v4935, %v5247
      %v5326 = vadd.f32 %v4936, %v5252
      %v5327 = vadd.f32 %v4937, %v5257
      %v5328 = vadd.f32 %v4938, %v5262
      %v5329 = vadd.f32 %v4939, %v5267
      %v5330 = vadd.f32 %v4940, %v5272
      %v5331 = vadd.f32 %v4941, %v5277
      %v5332 = vadd.f32 %v4942, %v5282
      %v5333 = vadd.f32 %v4943, %v5287
      %v5334 = vadd.f32 %v4944, %v5292
      %v5335 = vadd.f32 %v4945, %v5297
      %v5336 = vadd.f32 %v4946, %v5302
      %v5337 = vadd.f32 %v5305, %v1868
      %v5338 = vadd.f32 %v5306, %v1868
      %v5339 = vadd.f32 %v5307, %v1868
      %v5340 = vadd.f32 %v5308, %v1868
      %v5341 = vadd.f32 %v5309, %v1868
      %v5342 = vadd.f32 %v5310, %v1868
      %v5343 = vadd.f32 %v5311, %v1868
      %v5344 = vadd.f32 %v5312, %v1868
      %v5345 = vadd.f32 %v5313, %v1868
      %v5346 = vadd.f32 %v5314, %v1868
      %v5347 = vadd.f32 %v5315, %v1868
      %v5348 = vadd.f32 %v5316, %v1868
      %v5349 = vadd.f32 %v5317, %v1868
      %v5350 = vadd.f32 %v5318, %v1868
      %v5351 = vadd.f32 %v5319, %v1868
      %v5352 = vadd.f32 %v5320, %v1868
      %v5353 = vadd.f32 %v5321, %v1868
      %v5354 = vadd.f32 %v5322, %v1868
      %v5355 = vadd.f32 %v5323, %v1868
      %v5356 = vadd.f32 %v5324, %v1868
      %v5357 = vadd.f32 %v5325, %v1868
      %v5358 = vadd.f32 %v5326, %v1868
      %v5359 = vadd.f32 %v5327, %v1868
      %v5360 = vadd.f32 %v5328, %v1868
      %v5361 = vadd.f32 %v5329, %v1868
      %v5362 = vadd.f32 %v5330, %v1868
      %v5363 = vadd.f32 %v5331, %v1868
      %v5364 = vadd.f32 %v5332, %v1868
      %v5365 = vadd.f32 %v5333, %v1868
      %v5366 = vadd.f32 %v5334, %v1868
      %v5367 = vadd.f32 %v5335, %v1868
      %v5368 = vadd.f32 %v5336, %v1868
      %s5369 = scalar_lea.vmem %s206, 512
      %5370 = vst.msk [vmem:[%s5369] sm:$0xff] %vm1902, %v5337
      %5371 = vst.msk [vmem:[%s5369 + $0x8] sm:$0xff] %vm1902, %v5338
      %5372 = vst.msk [vmem:[%s5369 + $0x10] sm:$0xff] %vm1902, %v5339
      %5373 = vst.msk [vmem:[%s5369 + $0x18] sm:$0xff] %vm1902, %v5340
      %5374 = vst.msk [vmem:[%s5369 + $0x20] sm:$0xff] %vm1902, %v5341
      %5375 = vst.msk [vmem:[%s5369 + $0x28] sm:$0xff] %vm1902, %v5342
      %5376 = vst.msk [vmem:[%s5369 + $0x30] sm:$0xff] %vm1902, %v5343
      %5377 = vst.msk [vmem:[%s5369 + $0x38] sm:$0xff] %vm1902, %v5344
      %5378 = vst.msk [vmem:[%s5369 + $0x40] sm:$0xff] %vm1902, %v5345
      %5379 = vst.msk [vmem:[%s5369 + $0x48] sm:$0xff] %vm1902, %v5346
      %5380 = vst.msk [vmem:[%s5369 + $0x50] sm:$0xff] %vm1902, %v5347
      %5381 = vst.msk [vmem:[%s5369 + $0x58] sm:$0xff] %vm1902, %v5348
      %5382 = vst.msk [vmem:[%s5369 + $0x60] sm:$0xff] %vm1902, %v5349
      %5383 = vst.msk [vmem:[%s5369 + $0x68] sm:$0xff] %vm1902, %v5350
      %5384 = vst.msk [vmem:[%s5369 + $0x70] sm:$0xff] %vm1902, %v5351
      %5385 = vst.msk [vmem:[%s5369 + $0x78] sm:$0xff] %vm1902, %v5352
      %5386 = vst.msk [vmem:[%s5369 + $0x80] sm:$0xff] %vm1902, %v5353
      %5387 = vst.msk [vmem:[%s5369 + $0x88] sm:$0xff] %vm1902, %v5354
      %5388 = vst.msk [vmem:[%s5369 + $0x90] sm:$0xff] %vm1902, %v5355
      %5389 = vst.msk [vmem:[%s5369 + $0x98] sm:$0xff] %vm1902, %v5356
      %5390 = vst.msk [vmem:[%s5369 + $0xa0] sm:$0xff] %vm1902, %v5357
      %5391 = vst.msk [vmem:[%s5369 + $0xa8] sm:$0xff] %vm1902, %v5358
      %5392 = vst.msk [vmem:[%s5369 + $0xb0] sm:$0xff] %vm1902, %v5359
      %5393 = vst.msk [vmem:[%s5369 + $0xb8] sm:$0xff] %vm1902, %v5360
      %5394 = vst.msk [vmem:[%s5369 + $0xc0] sm:$0xff] %vm1902, %v5361
      %5395 = vst.msk [vmem:[%s5369 + $0xc8] sm:$0xff] %vm1902, %v5362
      %5396 = vst.msk [vmem:[%s5369 + $0xd0] sm:$0xff] %vm1902, %v5363
      %5397 = vst.msk [vmem:[%s5369 + $0xd8] sm:$0xff] %vm1902, %v5364
      %5398 = vst.msk [vmem:[%s5369 + $0xe0] sm:$0xff] %vm1902, %v5365
      %5399 = vst.msk [vmem:[%s5369 + $0xe8] sm:$0xff] %vm1902, %v5366
      %5400 = vst.msk [vmem:[%s5369 + $0xf0] sm:$0xff] %vm1902, %v5367
      %5401 = vst.msk [vmem:[%s5369 + $0xf8] sm:$0xff] %vm1902, %v5368
      %v5402 = vsel %vm1902, %v5337, 0.0
      %v5403 = vsel %vm1902, %v5338, 0.0
      %v5404 = vadd.f32 %v5402, %v5403
      %v5405 = vsel %vm1902, %v5339, 0.0
      %v5406 = vadd.f32 %v5404, %v5405
      %v5407 = vsel %vm1902, %v5340, 0.0
      %v5408 = vadd.f32 %v5406, %v5407
      %v5409 = vsel %vm1902, %v5341, 0.0
      %v5410 = vadd.f32 %v5408, %v5409
      %v5411 = vsel %vm1902, %v5342, 0.0
      %v5412 = vadd.f32 %v5410, %v5411
      %v5413 = vsel %vm1902, %v5343, 0.0
      %v5414 = vadd.f32 %v5412, %v5413
      %v5415 = vsel %vm1902, %v5344, 0.0
      %v5416 = vadd.f32 %v5414, %v5415
      %v5417 = vsel %vm1902, %v5345, 0.0
      %v5418 = vadd.f32 %v5416, %v5417
      %v5419 = vsel %vm1902, %v5346, 0.0
      %v5420 = vadd.f32 %v5418, %v5419
      %v5421 = vsel %vm1902, %v5347, 0.0
      %v5422 = vadd.f32 %v5420, %v5421
      %v5423 = vsel %vm1902, %v5348, 0.0
      %v5424 = vadd.f32 %v5422, %v5423
      %v5425 = vsel %vm1902, %v5349, 0.0
      %v5426 = vadd.f32 %v5424, %v5425
      %v5427 = vsel %vm1902, %v5350, 0.0
      %v5428 = vadd.f32 %v5426, %v5427
      %v5429 = vsel %vm1902, %v5351, 0.0
      %v5430 = vadd.f32 %v5428, %v5429
      %v5431 = vsel %vm1902, %v5352, 0.0
      %v5432 = vadd.f32 %v5430, %v5431
      %v5433 = vsel %vm1902, %v5353, 0.0
      %v5434 = vadd.f32 %v5432, %v5433
      %v5435 = vsel %vm1902, %v5354, 0.0
      %v5436 = vadd.f32 %v5434, %v5435
      %v5437 = vsel %vm1902, %v5355, 0.0
      %v5438 = vadd.f32 %v5436, %v5437
      %v5439 = vsel %vm1902, %v5356, 0.0
      %v5440 = vadd.f32 %v5438, %v5439
      %v5441 = vsel %vm1902, %v5357, 0.0
      %v5442 = vadd.f32 %v5440, %v5441
      %v5443 = vsel %vm1902, %v5358, 0.0
      %v5444 = vadd.f32 %v5442, %v5443
      %v5445 = vsel %vm1902, %v5359, 0.0
      %v5446 = vadd.f32 %v5444, %v5445
      %v5447 = vsel %vm1902, %v5360, 0.0
      %v5448 = vadd.f32 %v5446, %v5447
      %v5449 = vsel %vm1902, %v5361, 0.0
      %v5450 = vadd.f32 %v5448, %v5449
      %v5451 = vsel %vm1902, %v5362, 0.0
      %v5452 = vadd.f32 %v5450, %v5451
      %v5453 = vsel %vm1902, %v5363, 0.0
      %v5454 = vadd.f32 %v5452, %v5453
      %v5455 = vsel %vm1902, %v5364, 0.0
      %v5456 = vadd.f32 %v5454, %v5455
      %v5457 = vsel %vm1902, %v5365, 0.0
      %v5458 = vadd.f32 %v5456, %v5457
      %v5459 = vsel %vm1902, %v5366, 0.0
      %v5460 = vadd.f32 %v5458, %v5459
      %v5461 = vsel %vm1902, %v5367, 0.0
      %v5462 = vadd.f32 %v5460, %v5461
      %v5463 = vsel %vm1902, %v5368, 0.0
      %v5464 = vadd.f32 %v5462, %v5463
      %v5465 = vrot.slane %v5464, 4
      %v5466 = vadd.f32 %v5464, %v5465
      %v5467 = vrot.slane %v5466, 2
      %v5468 = vadd.f32 %v5466, %v5467
      %v5469 = vrot.slane %v5468, 1
      %v5470 = vadd.f32 %v5468, %v5469
      %v5471 = vadd.f32 %v3737, %v5470
      %v5472 = vmul.f32 %v5337, %v5337
      %v5473 = vmul.f32 %v5338, %v5338
      %v5474 = vmul.f32 %v5339, %v5339
      %v5475 = vmul.f32 %v5340, %v5340
      %v5476 = vmul.f32 %v5341, %v5341
      %v5477 = vmul.f32 %v5342, %v5342
      %v5478 = vmul.f32 %v5343, %v5343
      %v5479 = vmul.f32 %v5344, %v5344
      %v5480 = vmul.f32 %v5345, %v5345
      %v5481 = vmul.f32 %v5346, %v5346
      %v5482 = vmul.f32 %v5347, %v5347
      %v5483 = vmul.f32 %v5348, %v5348
      %v5484 = vmul.f32 %v5349, %v5349
      %v5485 = vmul.f32 %v5350, %v5350
      %v5486 = vmul.f32 %v5351, %v5351
      %v5487 = vmul.f32 %v5352, %v5352
      %v5488 = vmul.f32 %v5353, %v5353
      %v5489 = vmul.f32 %v5354, %v5354
      %v5490 = vmul.f32 %v5355, %v5355
      %v5491 = vmul.f32 %v5356, %v5356
      %v5492 = vmul.f32 %v5357, %v5357
      %v5493 = vmul.f32 %v5358, %v5358
      %v5494 = vmul.f32 %v5359, %v5359
      %v5495 = vmul.f32 %v5360, %v5360
      %v5496 = vmul.f32 %v5361, %v5361
      %v5497 = vmul.f32 %v5362, %v5362
      %v5498 = vmul.f32 %v5363, %v5363
      %v5499 = vmul.f32 %v5364, %v5364
      %v5500 = vmul.f32 %v5365, %v5365
      %v5501 = vmul.f32 %v5366, %v5366
      %v5502 = vmul.f32 %v5367, %v5367
      %v5503 = vmul.f32 %v5368, %v5368
      %v5504 = vsel %vm1902, %v5472, 0.0
      %v5505 = vsel %vm1902, %v5473, 0.0
      %v5506 = vadd.f32 %v5504, %v5505
      %v5507 = vsel %vm1902, %v5474, 0.0
      %v5508 = vadd.f32 %v5506, %v5507
      %v5509 = vsel %vm1902, %v5475, 0.0
      %v5510 = vadd.f32 %v5508, %v5509
      %v5511 = vsel %vm1902, %v5476, 0.0
      %v5512 = vadd.f32 %v5510, %v5511
      %v5513 = vsel %vm1902, %v5477, 0.0
      %v5514 = vadd.f32 %v5512, %v5513
      %v5515 = vsel %vm1902, %v5478, 0.0
      %v5516 = vadd.f32 %v5514, %v5515
      %v5517 = vsel %vm1902, %v5479, 0.0
      %v5518 = vadd.f32 %v5516, %v5517
      %v5519 = vsel %vm1902, %v5480, 0.0
      %v5520 = vadd.f32 %v5518, %v5519
      %v5521 = vsel %vm1902, %v5481, 0.0
      %v5522 = vadd.f32 %v5520, %v5521
      %v5523 = vsel %vm1902, %v5482, 0.0
      %v5524 = vadd.f32 %v5522, %v5523
      %v5525 = vsel %vm1902, %v5483, 0.0
      %v5526 = vadd.f32 %v5524, %v5525
      %v5527 = vsel %vm1902, %v5484, 0.0
      %v5528 = vadd.f32 %v5526, %v5527
      %v5529 = vsel %vm1902, %v5485, 0.0
      %v5530 = vadd.f32 %v5528, %v5529
      %v5531 = vsel %vm1902, %v5486, 0.0
      %v5532 = vadd.f32 %v5530, %v5531
      %v5533 = vsel %vm1902, %v5487, 0.0
      %v5534 = vadd.f32 %v5532, %v5533
      %v5535 = vsel %vm1902, %v5488, 0.0
      %v5536 = vadd.f32 %v5534, %v5535
      %v5537 = vsel %vm1902, %v5489, 0.0
      %v5538 = vadd.f32 %v5536, %v5537
      %v5539 = vsel %vm1902, %v5490, 0.0
      %v5540 = vadd.f32 %v5538, %v5539
      %v5541 = vsel %vm1902, %v5491, 0.0
      %v5542 = vadd.f32 %v5540, %v5541
      %v5543 = vsel %vm1902, %v5492, 0.0
      %v5544 = vadd.f32 %v5542, %v5543
      %v5545 = vsel %vm1902, %v5493, 0.0
      %v5546 = vadd.f32 %v5544, %v5545
      %v5547 = vsel %vm1902, %v5494, 0.0
      %v5548 = vadd.f32 %v5546, %v5547
      %v5549 = vsel %vm1902, %v5495, 0.0
      %v5550 = vadd.f32 %v5548, %v5549
      %v5551 = vsel %vm1902, %v5496, 0.0
      %v5552 = vadd.f32 %v5550, %v5551
      %v5553 = vsel %vm1902, %v5497, 0.0
      %v5554 = vadd.f32 %v5552, %v5553
      %v5555 = vsel %vm1902, %v5498, 0.0
      %v5556 = vadd.f32 %v5554, %v5555
      %v5557 = vsel %vm1902, %v5499, 0.0
      %v5558 = vadd.f32 %v5556, %v5557
      %v5559 = vsel %vm1902, %v5500, 0.0
      %v5560 = vadd.f32 %v5558, %v5559
      %v5561 = vsel %vm1902, %v5501, 0.0
      %v5562 = vadd.f32 %v5560, %v5561
      %v5563 = vsel %vm1902, %v5502, 0.0
      %v5564 = vadd.f32 %v5562, %v5563
      %v5565 = vsel %vm1902, %v5503, 0.0
      %v5566 = vadd.f32 %v5564, %v5565
      %v5567 = vrot.slane %v5566, 4
      %v5568 = vadd.f32 %v5566, %v5567
      %v5569 = vrot.slane %v5568, 2
      %v5570 = vadd.f32 %v5568, %v5569
      %v5571 = vrot.slane %v5570, 1
      %v5572 = vadd.f32 %v5570, %v5571
      %v5573 = vadd.f32 %v3839, %v5572
      %v5574 = vld [vmem:[%s300 + $0x1] sm:$0xff]
      %v5575 = vld [vmem:[%s300 + $0x9] sm:$0xff]
      %v5576 = vld [vmem:[%s300 + $0x19] sm:$0xff]
      %v5577 = vld [vmem:[%s300 + $0x21] sm:$0xff]
      %v5578 = vld [vmem:[%s300 + $0x31] sm:$0xff]
      %v5579 = vld [vmem:[%s300 + $0x39] sm:$0xff]
      %v5580 = vld [vmem:[%s300 + $0x49] sm:$0xff]
      %v5581 = vld [vmem:[%s300 + $0x51] sm:$0xff]
      %v5582 = vld [vmem:[%s300 + $0x61] sm:$0xff]
      %v5583 = vld [vmem:[%s300 + $0x69] sm:$0xff]
      %v5584 = vld [vmem:[%s300 + $0x79] sm:$0xff]
      %v5585 = vld [vmem:[%s300 + $0x81] sm:$0xff]
      %v5586 = vld [vmem:[%s300 + $0x91] sm:$0xff]
      %v5587 = vld [vmem:[%s300 + $0x99] sm:$0xff]
      %v5588 = vld [vmem:[%s300 + $0xa9] sm:$0xff]
      %v5589 = vld [vmem:[%s300 + $0xb1] sm:$0xff]
      %v5590 = vld [vmem:[%s300 + $0xc1] sm:$0xff]
      %v5591 = vld [vmem:[%s300 + $0xc9] sm:$0xff]
      %v5592 = vld [vmem:[%s300 + $0xd9] sm:$0xff]
      %v5593 = vld [vmem:[%s300 + $0xe1] sm:$0xff]
      %v5594 = vld [vmem:[%s300 + $0xf1] sm:$0xff]
      %v5595 = vld [vmem:[%s300 + $0xf9] sm:$0xff]
      %v5596 = vld [vmem:[%s300 + $0x109] sm:$0xff]
      %v5597 = vld [vmem:[%s300 + $0x111] sm:$0xff]
      %v5598 = vld [vmem:[%s300 + $0x121] sm:$0xff]
      %v5599 = vld [vmem:[%s300 + $0x129] sm:$0xff]
      %v5600 = vld [vmem:[%s300 + $0x139] sm:$0xff]
      %v5601 = vld [vmem:[%s300 + $0x141] sm:$0xff]
      %v5602 = vld [vmem:[%s300 + $0x151] sm:$0xff]
      %v5603 = vld [vmem:[%s300 + $0x159] sm:$0xff]
      %v5604 = vld [vmem:[%s300 + $0x169] sm:$0xff]
      %v5605 = vld [vmem:[%s300 + $0x171] sm:$0xff]
      %s5606 = scalar_lea.vmem %s1, 96
      %v5607 = vld [vmem:[%s5606] sm:$0x1f]
      %v5608 = vld [vmem:[%s300 + $0x2] sm:$0xff]
      %v5609 = vld [vmem:[%s300 + $0xa] sm:$0xff]
      %v5610 = vld [vmem:[%s300 + $0x1a] sm:$0xff]
      %v5611 = vld [vmem:[%s300 + $0x22] sm:$0xff]
      %v5612 = vld [vmem:[%s300 + $0x32] sm:$0xff]
      %v5613 = vld [vmem:[%s300 + $0x3a] sm:$0xff]
      %v5614 = vld [vmem:[%s300 + $0x4a] sm:$0xff]
      %v5615 = vld [vmem:[%s300 + $0x52] sm:$0xff]
      %v5616 = vld [vmem:[%s300 + $0x62] sm:$0xff]
      %v5617 = vld [vmem:[%s300 + $0x6a] sm:$0xff]
      %v5618 = vld [vmem:[%s300 + $0x7a] sm:$0xff]
      %v5619 = vld [vmem:[%s300 + $0x82] sm:$0xff]
      %v5620 = vld [vmem:[%s300 + $0x92] sm:$0xff]
      %v5621 = vld [vmem:[%s300 + $0x9a] sm:$0xff]
      %v5622 = vld [vmem:[%s300 + $0xaa] sm:$0xff]
      %v5623 = vld [vmem:[%s300 + $0xb2] sm:$0xff]
      %v5624 = vld [vmem:[%s300 + $0xc2] sm:$0xff]
      %v5625 = vld [vmem:[%s300 + $0xca] sm:$0xff]
      %v5626 = vld [vmem:[%s300 + $0xda] sm:$0xff]
      %v5627 = vld [vmem:[%s300 + $0xe2] sm:$0xff]
      %v5628 = vld [vmem:[%s300 + $0xf2] sm:$0xff]
      %v5629 = vld [vmem:[%s300 + $0xfa] sm:$0xff]
      %v5630 = vld [vmem:[%s300 + $0x10a] sm:$0xff]
      %v5631 = vld [vmem:[%s300 + $0x112] sm:$0xff]
      %v5632 = vld [vmem:[%s300 + $0x122] sm:$0xff]
      %v5633 = vld [vmem:[%s300 + $0x12a] sm:$0xff]
      %v5634 = vld [vmem:[%s300 + $0x13a] sm:$0xff]
      %v5635 = vld [vmem:[%s300 + $0x142] sm:$0xff]
      %v5636 = vld [vmem:[%s300 + $0x152] sm:$0xff]
      %v5637 = vld [vmem:[%s300 + $0x15a] sm:$0xff]
      %v5638 = vld [vmem:[%s300 + $0x16a] sm:$0xff]
      %v5639 = vld [vmem:[%s300 + $0x172] sm:$0xff]
      %s5640 = scalar_lea.vmem %s1, 104
      %v5641 = vld [vmem:[%s5640] sm:$0x1f]
      %v5643 = vsel %vm212, %v5608, 0
      %v5646 = vsel %vm212, %v5609, 0
      %v5649 = vsel %vm212, %v5610, 0
      %v5652 = vsel %vm212, %v5611, 0
      %v5655 = vsel %vm212, %v5612, 0
      %v5658 = vsel %vm212, %v5613, 0
      %v5661 = vsel %vm212, %v5614, 0
      %v5664 = vsel %vm212, %v5615, 0
      %v5667 = vsel %vm212, %v5616, 0
      %v5670 = vsel %vm212, %v5617, 0
      %v5673 = vsel %vm212, %v5618, 0
      %v5676 = vsel %vm212, %v5619, 0
      %v5679 = vsel %vm212, %v5620, 0
      %v5682 = vsel %vm212, %v5621, 0
      %v5685 = vsel %vm212, %v5622, 0
      %v5688 = vsel %vm212, %v5623, 0
      %v5691 = vsel %vm212, %v5624, 0
      %v5694 = vsel %vm212, %v5625, 0
      %v5697 = vsel %vm212, %v5626, 0
      %v5700 = vsel %vm212, %v5627, 0
      %v5703 = vsel %vm212, %v5628, 0
      %v5706 = vsel %vm212, %v5629, 0
      %v5709 = vsel %vm212, %v5630, 0
      %v5712 = vsel %vm212, %v5631, 0
      %v5715 = vsel %vm212, %v5632, 0
      %v5718 = vsel %vm212, %v5633, 0
      %v5721 = vsel %vm212, %v5634, 0
      %v5724 = vsel %vm212, %v5635, 0
      %v5727 = vsel %vm212, %v5636, 0
      %v5730 = vsel %vm212, %v5637, 0
      %v5733 = vsel %vm212, %v5638, 0
      %v5736 = vsel %vm212, %v5639, 0
      %v5739 = vsel %vm531, %v5641, 0
      %5741 = vmatprep.subr.mxu0 0.0
      %5742 = vmatpush1.msra.mxu0 0.0
      %5743 = vmatprep.subr.mxu0 0.0
      %5744 = vmatpush1.msra.mxu0 0.0
      %5745 = vmatprep.subr.mxu0 0.0
      %5746 = vmatpush1.msra.mxu0 0.0
      %5747 = vmatprep.subr.mxu0 0.0
      %5748 = vmatpush1.msra.mxu0 0.0
      %5749 = vmatprep.subr.mxu0 0.0
      %5750 = vmatpush1.msra.mxu0 0.0
      %5751 = vmatprep.subr.mxu0 0.0
      %5752 = vmatpush1.msra.mxu0 0.0
      %5753 = vmatprep.subr.mxu0 0.0
      %5754 = vmatpush1.msra.mxu0 0.0
      %5755 = vmatprep.subr.mxu0 0.0
      %5756 = vmatpush1.msra.mxu0 0.0
      %5757 = vmatprep.subr.mxu0 0.0
      %5758 = vmatpush1.msra.mxu0 0.0
      %5759 = vmatprep.subr.mxu0 0.0
      %5760 = vmatpush1.msra.mxu0 0.0
      %5761 = vmatprep.subr.mxu0 0.0
      %5762 = vmatpush1.msra.mxu0 0.0
      %5763 = vmatprep.subr.mxu0 0.0
      %5764 = vmatpush1.msra.mxu0 0.0
      %5765 = vmatprep.subr.mxu0 0.0
      %5766 = vmatpush1.msra.mxu0 0.0
      %5767 = vmatprep.subr.mxu0 0.0
      %5768 = vmatpush1.msra.mxu0 0.0
      %5769 = vmatprep.subr.mxu0 0.0
      %5770 = vmatpush1.msra.mxu0 0.0
      %5771 = vmatprep.subr.mxu0 0.0
      %5772 = vmatpush1.msra.mxu0 %v5739
      %5773 = vmatprep.subr.mxu0 0.0
      %5774 = vmatpush2.msra.mxu0 0.0
      %5775 = vmatprep.subr.mxu0 0.0
      %5776 = vmatpush2.msra.mxu0 0.0
      %5777 = vmatprep.subr.mxu0 0.0
      %5778 = vmatpush2.msra.mxu0 0.0
      %5779 = vmatprep.subr.mxu0 0.0
      %5780 = vmatpush2.msra.mxu0 0.0
      %5781 = vmatprep.subr.mxu0 0.0
      %5782 = vmatpush2.msra.mxu0 0.0
      %5783 = vmatprep.subr.mxu0 0.0
      %5784 = vmatpush2.msra.mxu0 0.0
      %5785 = vmatprep.subr.mxu0 0.0
      %5786 = vmatpush2.msra.mxu0 0.0
      %5787 = vmatprep.subr.mxu0 0.0
      %5788 = vmatpush2.msra.mxu0 0.0
      %5789 = vmatprep.subr.mxu0 0.0
      %5790 = vmatpush2.msra.mxu0 0.0
      %5791 = vmatprep.subr.mxu0 0.0
      %5792 = vmatpush2.msra.mxu0 0.0
      %5793 = vmatprep.subr.mxu0 0.0
      %5794 = vmatpush2.msra.mxu0 0.0
      %5795 = vmatprep.subr.mxu0 0.0
      %5796 = vmatpush2.msra.mxu0 0.0
      %5797 = vmatprep.subr.mxu0 0.0
      %5798 = vmatpush2.msra.mxu0 0.0
      %5799 = vmatprep.subr.mxu0 0.0
      %5800 = vmatpush2.msra.mxu0 0.0
      %5801 = vmatprep.subr.mxu0 0.0
      %5802 = vmatpush2.msra.mxu0 0.0
      %5803 = vmatprep.subr.mxu0 0.0
      %5804 = vmatpush2.msra.mxu0 0.0
      %5805 = vmatprep.mubr.f32.mxu0 0.0
      %5806 = vmatmul.mubr.f32.gmra.mxu0 %v5643
      %v5807 = vpop.f32.mrf.mxu0
      %v5808 = vadd.f32 0.0, %v5807
      %v5809 = vpop.f32.mrf.mxu0
      %5810 = vmatprep.mubr.f32.mxu0 0.0
      %5811 = vmatmul.mubr.f32.gmra.mxu0 %v5646
      %v5812 = vpop.f32.mrf.mxu0
      %v5813 = vadd.f32 0.0, %v5812
      %v5814 = vpop.f32.mrf.mxu0
      %5815 = vmatprep.mubr.f32.mxu0 0.0
      %5816 = vmatmul.mubr.f32.gmra.mxu0 %v5649
      %v5817 = vpop.f32.mrf.mxu0
      %v5818 = vadd.f32 0.0, %v5817
      %v5819 = vpop.f32.mrf.mxu0
      %5820 = vmatprep.mubr.f32.mxu0 0.0
      %5821 = vmatmul.mubr.f32.gmra.mxu0 %v5652
      %v5822 = vpop.f32.mrf.mxu0
      %v5823 = vadd.f32 0.0, %v5822
      %v5824 = vpop.f32.mrf.mxu0
      %5825 = vmatprep.mubr.f32.mxu0 0.0
      %5826 = vmatmul.mubr.f32.gmra.mxu0 %v5655
      %v5827 = vpop.f32.mrf.mxu0
      %v5828 = vadd.f32 0.0, %v5827
      %v5829 = vpop.f32.mrf.mxu0
      %5830 = vmatprep.mubr.f32.mxu0 0.0
      %5831 = vmatmul.mubr.f32.gmra.mxu0 %v5658
      %v5832 = vpop.f32.mrf.mxu0
      %v5833 = vadd.f32 0.0, %v5832
      %v5834 = vpop.f32.mrf.mxu0
      %5835 = vmatprep.mubr.f32.mxu0 0.0
      %5836 = vmatmul.mubr.f32.gmra.mxu0 %v5661
      %v5837 = vpop.f32.mrf.mxu0
      %v5838 = vadd.f32 0.0, %v5837
      %v5839 = vpop.f32.mrf.mxu0
      %5840 = vmatprep.mubr.f32.mxu0 0.0
      %5841 = vmatmul.mubr.f32.gmra.mxu0 %v5664
      %v5842 = vpop.f32.mrf.mxu0
      %v5843 = vadd.f32 0.0, %v5842
      %v5844 = vpop.f32.mrf.mxu0
      %5845 = vmatprep.mubr.f32.mxu0 0.0
      %5846 = vmatmul.mubr.f32.gmra.mxu0 %v5667
      %v5847 = vpop.f32.mrf.mxu0
      %v5848 = vadd.f32 0.0, %v5847
      %v5849 = vpop.f32.mrf.mxu0
      %5850 = vmatprep.mubr.f32.mxu0 0.0
      %5851 = vmatmul.mubr.f32.gmra.mxu0 %v5670
      %v5852 = vpop.f32.mrf.mxu0
      %v5853 = vadd.f32 0.0, %v5852
      %v5854 = vpop.f32.mrf.mxu0
      %5855 = vmatprep.mubr.f32.mxu0 0.0
      %5856 = vmatmul.mubr.f32.gmra.mxu0 %v5673
      %v5857 = vpop.f32.mrf.mxu0
      %v5858 = vadd.f32 0.0, %v5857
      %v5859 = vpop.f32.mrf.mxu0
      %5860 = vmatprep.mubr.f32.mxu0 0.0
      %5861 = vmatmul.mubr.f32.gmra.mxu0 %v5676
      %v5862 = vpop.f32.mrf.mxu0
      %v5863 = vadd.f32 0.0, %v5862
      %v5864 = vpop.f32.mrf.mxu0
      %5865 = vmatprep.mubr.f32.mxu0 0.0
      %5866 = vmatmul.mubr.f32.gmra.mxu0 %v5679
      %v5867 = vpop.f32.mrf.mxu0
      %v5868 = vadd.f32 0.0, %v5867
      %v5869 = vpop.f32.mrf.mxu0
      %5870 = vmatprep.mubr.f32.mxu0 0.0
      %5871 = vmatmul.mubr.f32.gmra.mxu0 %v5682
      %v5872 = vpop.f32.mrf.mxu0
      %v5873 = vadd.f32 0.0, %v5872
      %v5874 = vpop.f32.mrf.mxu0
      %5875 = vmatprep.mubr.f32.mxu0 0.0
      %5876 = vmatmul.mubr.f32.gmra.mxu0 %v5685
      %v5877 = vpop.f32.mrf.mxu0
      %v5878 = vadd.f32 0.0, %v5877
      %v5879 = vpop.f32.mrf.mxu0
      %5880 = vmatprep.mubr.f32.mxu0 0.0
      %5881 = vmatmul.mubr.f32.gmra.mxu0 %v5688
      %v5882 = vpop.f32.mrf.mxu0
      %v5883 = vadd.f32 0.0, %v5882
      %v5884 = vpop.f32.mrf.mxu0
      %5885 = vmatprep.mubr.f32.mxu0 0.0
      %5886 = vmatmul.mubr.f32.gmra.mxu0 %v5691
      %v5887 = vpop.f32.mrf.mxu0
      %v5888 = vadd.f32 0.0, %v5887
      %v5889 = vpop.f32.mrf.mxu0
      %5890 = vmatprep.mubr.f32.mxu0 0.0
      %5891 = vmatmul.mubr.f32.gmra.mxu0 %v5694
      %v5892 = vpop.f32.mrf.mxu0
      %v5893 = vadd.f32 0.0, %v5892
      %v5894 = vpop.f32.mrf.mxu0
      %5895 = vmatprep.mubr.f32.mxu0 0.0
      %5896 = vmatmul.mubr.f32.gmra.mxu0 %v5697
      %v5897 = vpop.f32.mrf.mxu0
      %v5898 = vadd.f32 0.0, %v5897
      %v5899 = vpop.f32.mrf.mxu0
      %5900 = vmatprep.mubr.f32.mxu0 0.0
      %5901 = vmatmul.mubr.f32.gmra.mxu0 %v5700
      %v5902 = vpop.f32.mrf.mxu0
      %v5903 = vadd.f32 0.0, %v5902
      %v5904 = vpop.f32.mrf.mxu0
      %5905 = vmatprep.mubr.f32.mxu0 0.0
      %5906 = vmatmul.mubr.f32.gmra.mxu0 %v5703
      %v5907 = vpop.f32.mrf.mxu0
      %v5908 = vadd.f32 0.0, %v5907
      %v5909 = vpop.f32.mrf.mxu0
      %5910 = vmatprep.mubr.f32.mxu0 0.0
      %5911 = vmatmul.mubr.f32.gmra.mxu0 %v5706
      %v5912 = vpop.f32.mrf.mxu0
      %v5913 = vadd.f32 0.0, %v5912
      %v5914 = vpop.f32.mrf.mxu0
      %5915 = vmatprep.mubr.f32.mxu0 0.0
      %5916 = vmatmul.mubr.f32.gmra.mxu0 %v5709
      %v5917 = vpop.f32.mrf.mxu0
      %v5918 = vadd.f32 0.0, %v5917
      %v5919 = vpop.f32.mrf.mxu0
      %5920 = vmatprep.mubr.f32.mxu0 0.0
      %5921 = vmatmul.mubr.f32.gmra.mxu0 %v5712
      %v5922 = vpop.f32.mrf.mxu0
      %v5923 = vadd.f32 0.0, %v5922
      %v5924 = vpop.f32.mrf.mxu0
      %5925 = vmatprep.mubr.f32.mxu0 0.0
      %5926 = vmatmul.mubr.f32.gmra.mxu0 %v5715
      %v5927 = vpop.f32.mrf.mxu0
      %v5928 = vadd.f32 0.0, %v5927
      %v5929 = vpop.f32.mrf.mxu0
      %5930 = vmatprep.mubr.f32.mxu0 0.0
      %5931 = vmatmul.mubr.f32.gmra.mxu0 %v5718
      %v5932 = vpop.f32.mrf.mxu0
      %v5933 = vadd.f32 0.0, %v5932
      %v5934 = vpop.f32.mrf.mxu0
      %5935 = vmatprep.mubr.f32.mxu0 0.0
      %5936 = vmatmul.mubr.f32.gmra.mxu0 %v5721
      %v5937 = vpop.f32.mrf.mxu0
      %v5938 = vadd.f32 0.0, %v5937
      %v5939 = vpop.f32.mrf.mxu0
      %5940 = vmatprep.mubr.f32.mxu0 0.0
      %5941 = vmatmul.mubr.f32.gmra.mxu0 %v5724
      %v5942 = vpop.f32.mrf.mxu0
      %v5943 = vadd.f32 0.0, %v5942
      %v5944 = vpop.f32.mrf.mxu0
      %5945 = vmatprep.mubr.f32.mxu0 0.0
      %5946 = vmatmul.mubr.f32.gmra.mxu0 %v5727
      %v5947 = vpop.f32.mrf.mxu0
      %v5948 = vadd.f32 0.0, %v5947
      %v5949 = vpop.f32.mrf.mxu0
      %5950 = vmatprep.mubr.f32.mxu0 0.0
      %5951 = vmatmul.mubr.f32.gmra.mxu0 %v5730
      %v5952 = vpop.f32.mrf.mxu0
      %v5953 = vadd.f32 0.0, %v5952
      %v5954 = vpop.f32.mrf.mxu0
      %5955 = vmatprep.mubr.f32.mxu0 0.0
      %5956 = vmatmul.mubr.f32.gmra.mxu0 %v5733
      %v5957 = vpop.f32.mrf.mxu0
      %v5958 = vadd.f32 0.0, %v5957
      %v5959 = vpop.f32.mrf.mxu0
      %5960 = vmatprep.mubr.f32.mxu0 0.0
      %5961 = vmatmul.mubr.f32.gmra.mxu0 %v5736
      %v5962 = vpop.f32.mrf.mxu0
      %v5963 = vadd.f32 0.0, %v5962
      %v5964 = vpop.f32.mrf.mxu0
      %5965 = vdwg.mxu0
      %v5967 = vsel %vm212, %v5574, 0
      %v5970 = vsel %vm212, %v5575, 0
      %v5973 = vsel %vm212, %v5576, 0
      %v5976 = vsel %vm212, %v5577, 0
      %v5979 = vsel %vm212, %v5578, 0
      %v5982 = vsel %vm212, %v5579, 0
      %v5985 = vsel %vm212, %v5580, 0
      %v5988 = vsel %vm212, %v5581, 0
      %v5991 = vsel %vm212, %v5582, 0
      %v5994 = vsel %vm212, %v5583, 0
      %v5997 = vsel %vm212, %v5584, 0
      %v6000 = vsel %vm212, %v5585, 0
      %v6003 = vsel %vm212, %v5586, 0
      %v6006 = vsel %vm212, %v5587, 0
      %v6009 = vsel %vm212, %v5588, 0
      %v6012 = vsel %vm212, %v5589, 0
      %v6015 = vsel %vm212, %v5590, 0
      %v6018 = vsel %vm212, %v5591, 0
      %v6021 = vsel %vm212, %v5592, 0
      %v6024 = vsel %vm212, %v5593, 0
      %v6027 = vsel %vm212, %v5594, 0
      %v6030 = vsel %vm212, %v5595, 0
      %v6033 = vsel %vm212, %v5596, 0
      %v6036 = vsel %vm212, %v5597, 0
      %v6039 = vsel %vm212, %v5598, 0
      %v6042 = vsel %vm212, %v5599, 0
      %v6045 = vsel %vm212, %v5600, 0
      %v6048 = vsel %vm212, %v5601, 0
      %v6051 = vsel %vm212, %v5602, 0
      %v6054 = vsel %vm212, %v5603, 0
      %v6057 = vsel %vm212, %v5604, 0
      %v6060 = vsel %vm212, %v5605, 0
      %v6063 = vsel %vm531, %v5607, 0
      %6065 = vmatprep.subr.mxu0 0.0
      %6066 = vmatpush1.msra.mxu0 0.0
      %6067 = vmatprep.subr.mxu0 0.0
      %6068 = vmatpush1.msra.mxu0 0.0
      %6069 = vmatprep.subr.mxu0 0.0
      %6070 = vmatpush1.msra.mxu0 0.0
      %6071 = vmatprep.subr.mxu0 0.0
      %6072 = vmatpush1.msra.mxu0 0.0
      %6073 = vmatprep.subr.mxu0 0.0
      %6074 = vmatpush1.msra.mxu0 0.0
      %6075 = vmatprep.subr.mxu0 0.0
      %6076 = vmatpush1.msra.mxu0 0.0
      %6077 = vmatprep.subr.mxu0 0.0
      %6078 = vmatpush1.msra.mxu0 0.0
      %6079 = vmatprep.subr.mxu0 0.0
      %6080 = vmatpush1.msra.mxu0 0.0
      %6081 = vmatprep.subr.mxu0 0.0
      %6082 = vmatpush1.msra.mxu0 0.0
      %6083 = vmatprep.subr.mxu0 0.0
      %6084 = vmatpush1.msra.mxu0 0.0
      %6085 = vmatprep.subr.mxu0 0.0
      %6086 = vmatpush1.msra.mxu0 0.0
      %6087 = vmatprep.subr.mxu0 0.0
      %6088 = vmatpush1.msra.mxu0 0.0
      %6089 = vmatprep.subr.mxu0 0.0
      %6090 = vmatpush1.msra.mxu0 0.0
      %6091 = vmatprep.subr.mxu0 0.0
      %6092 = vmatpush1.msra.mxu0 0.0
      %6093 = vmatprep.subr.mxu0 0.0
      %6094 = vmatpush1.msra.mxu0 0.0
      %6095 = vmatprep.subr.mxu0 0.0
      %6096 = vmatpush1.msra.mxu0 %v6063
      %6097 = vmatprep.subr.mxu0 0.0
      %6098 = vmatpush2.msra.mxu0 0.0
      %6099 = vmatprep.subr.mxu0 0.0
      %6100 = vmatpush2.msra.mxu0 0.0
      %6101 = vmatprep.subr.mxu0 0.0
      %6102 = vmatpush2.msra.mxu0 0.0
      %6103 = vmatprep.subr.mxu0 0.0
      %6104 = vmatpush2.msra.mxu0 0.0
      %6105 = vmatprep.subr.mxu0 0.0
      %6106 = vmatpush2.msra.mxu0 0.0
      %6107 = vmatprep.subr.mxu0 0.0
      %6108 = vmatpush2.msra.mxu0 0.0
      %6109 = vmatprep.subr.mxu0 0.0
      %6110 = vmatpush2.msra.mxu0 0.0
      %6111 = vmatprep.subr.mxu0 0.0
      %6112 = vmatpush2.msra.mxu0 0.0
      %6113 = vmatprep.subr.mxu0 0.0
      %6114 = vmatpush2.msra.mxu0 0.0
      %6115 = vmatprep.subr.mxu0 0.0
      %6116 = vmatpush2.msra.mxu0 0.0
      %6117 = vmatprep.subr.mxu0 0.0
      %6118 = vmatpush2.msra.mxu0 0.0
      %6119 = vmatprep.subr.mxu0 0.0
      %6120 = vmatpush2.msra.mxu0 0.0
      %6121 = vmatprep.subr.mxu0 0.0
      %6122 = vmatpush2.msra.mxu0 0.0
      %6123 = vmatprep.subr.mxu0 0.0
      %6124 = vmatpush2.msra.mxu0 0.0
      %6125 = vmatprep.subr.mxu0 0.0
      %6126 = vmatpush2.msra.mxu0 0.0
      %6127 = vmatprep.subr.mxu0 0.0
      %6128 = vmatpush2.msra.mxu0 0.0
      %6129 = vmatprep.mubr.f32.mxu0 0.0
      %6130 = vmatmul.mubr.f32.gmra.mxu0 %v5967
      %v6131 = vpop.f32.mrf.mxu0
      %v6132 = vadd.f32 %v5808, %v6131
      %v6133 = vpop.f32.mrf.mxu0
      %6134 = vmatprep.mubr.f32.mxu0 0.0
      %6135 = vmatmul.mubr.f32.gmra.mxu0 %v5970
      %v6136 = vpop.f32.mrf.mxu0
      %v6137 = vadd.f32 %v5813, %v6136
      %v6138 = vpop.f32.mrf.mxu0
      %6139 = vmatprep.mubr.f32.mxu0 0.0
      %6140 = vmatmul.mubr.f32.gmra.mxu0 %v5973
      %v6141 = vpop.f32.mrf.mxu0
      %v6142 = vadd.f32 %v5818, %v6141
      %v6143 = vpop.f32.mrf.mxu0
      %6144 = vmatprep.mubr.f32.mxu0 0.0
      %6145 = vmatmul.mubr.f32.gmra.mxu0 %v5976
      %v6146 = vpop.f32.mrf.mxu0
      %v6147 = vadd.f32 %v5823, %v6146
      %v6148 = vpop.f32.mrf.mxu0
      %6149 = vmatprep.mubr.f32.mxu0 0.0
      %6150 = vmatmul.mubr.f32.gmra.mxu0 %v5979
      %v6151 = vpop.f32.mrf.mxu0
      %v6152 = vadd.f32 %v5828, %v6151
      %v6153 = vpop.f32.mrf.mxu0
      %6154 = vmatprep.mubr.f32.mxu0 0.0
      %6155 = vmatmul.mubr.f32.gmra.mxu0 %v5982
      %v6156 = vpop.f32.mrf.mxu0
      %v6157 = vadd.f32 %v5833, %v6156
      %v6158 = vpop.f32.mrf.mxu0
      %6159 = vmatprep.mubr.f32.mxu0 0.0
      %6160 = vmatmul.mubr.f32.gmra.mxu0 %v5985
      %v6161 = vpop.f32.mrf.mxu0
      %v6162 = vadd.f32 %v5838, %v6161
      %v6163 = vpop.f32.mrf.mxu0
      %6164 = vmatprep.mubr.f32.mxu0 0.0
      %6165 = vmatmul.mubr.f32.gmra.mxu0 %v5988
      %v6166 = vpop.f32.mrf.mxu0
      %v6167 = vadd.f32 %v5843, %v6166
      %v6168 = vpop.f32.mrf.mxu0
      %6169 = vmatprep.mubr.f32.mxu0 0.0
      %6170 = vmatmul.mubr.f32.gmra.mxu0 %v5991
      %v6171 = vpop.f32.mrf.mxu0
      %v6172 = vadd.f32 %v5848, %v6171
      %v6173 = vpop.f32.mrf.mxu0
      %6174 = vmatprep.mubr.f32.mxu0 0.0
      %6175 = vmatmul.mubr.f32.gmra.mxu0 %v5994
      %v6176 = vpop.f32.mrf.mxu0
      %v6177 = vadd.f32 %v5853, %v6176
      %v6178 = vpop.f32.mrf.mxu0
      %6179 = vmatprep.mubr.f32.mxu0 0.0
      %6180 = vmatmul.mubr.f32.gmra.mxu0 %v5997
      %v6181 = vpop.f32.mrf.mxu0
      %v6182 = vadd.f32 %v5858, %v6181
      %v6183 = vpop.f32.mrf.mxu0
      %6184 = vmatprep.mubr.f32.mxu0 0.0
      %6185 = vmatmul.mubr.f32.gmra.mxu0 %v6000
      %v6186 = vpop.f32.mrf.mxu0
      %v6187 = vadd.f32 %v5863, %v6186
      %v6188 = vpop.f32.mrf.mxu0
      %6189 = vmatprep.mubr.f32.mxu0 0.0
      %6190 = vmatmul.mubr.f32.gmra.mxu0 %v6003
      %v6191 = vpop.f32.mrf.mxu0
      %v6192 = vadd.f32 %v5868, %v6191
      %v6193 = vpop.f32.mrf.mxu0
      %6194 = vmatprep.mubr.f32.mxu0 0.0
      %6195 = vmatmul.mubr.f32.gmra.mxu0 %v6006
      %v6196 = vpop.f32.mrf.mxu0
      %v6197 = vadd.f32 %v5873, %v6196
      %v6198 = vpop.f32.mrf.mxu0
      %6199 = vmatprep.mubr.f32.mxu0 0.0
      %6200 = vmatmul.mubr.f32.gmra.mxu0 %v6009
      %v6201 = vpop.f32.mrf.mxu0
      %v6202 = vadd.f32 %v5878, %v6201
      %v6203 = vpop.f32.mrf.mxu0
      %6204 = vmatprep.mubr.f32.mxu0 0.0
      %6205 = vmatmul.mubr.f32.gmra.mxu0 %v6012
      %v6206 = vpop.f32.mrf.mxu0
      %v6207 = vadd.f32 %v5883, %v6206
      %v6208 = vpop.f32.mrf.mxu0
      %6209 = vmatprep.mubr.f32.mxu0 0.0
      %6210 = vmatmul.mubr.f32.gmra.mxu0 %v6015
      %v6211 = vpop.f32.mrf.mxu0
      %v6212 = vadd.f32 %v5888, %v6211
      %v6213 = vpop.f32.mrf.mxu0
      %6214 = vmatprep.mubr.f32.mxu0 0.0
      %6215 = vmatmul.mubr.f32.gmra.mxu0 %v6018
      %v6216 = vpop.f32.mrf.mxu0
      %v6217 = vadd.f32 %v5893, %v6216
      %v6218 = vpop.f32.mrf.mxu0
      %6219 = vmatprep.mubr.f32.mxu0 0.0
      %6220 = vmatmul.mubr.f32.gmra.mxu0 %v6021
      %v6221 = vpop.f32.mrf.mxu0
      %v6222 = vadd.f32 %v5898, %v6221
      %v6223 = vpop.f32.mrf.mxu0
      %6224 = vmatprep.mubr.f32.mxu0 0.0
      %6225 = vmatmul.mubr.f32.gmra.mxu0 %v6024
      %v6226 = vpop.f32.mrf.mxu0
      %v6227 = vadd.f32 %v5903, %v6226
      %v6228 = vpop.f32.mrf.mxu0
      %6229 = vmatprep.mubr.f32.mxu0 0.0
      %6230 = vmatmul.mubr.f32.gmra.mxu0 %v6027
      %v6231 = vpop.f32.mrf.mxu0
      %v6232 = vadd.f32 %v5908, %v6231
      %v6233 = vpop.f32.mrf.mxu0
      %6234 = vmatprep.mubr.f32.mxu0 0.0
      %6235 = vmatmul.mubr.f32.gmra.mxu0 %v6030
      %v6236 = vpop.f32.mrf.mxu0
      %v6237 = vadd.f32 %v5913, %v6236
      %v6238 = vpop.f32.mrf.mxu0
      %6239 = vmatprep.mubr.f32.mxu0 0.0
      %6240 = vmatmul.mubr.f32.gmra.mxu0 %v6033
      %v6241 = vpop.f32.mrf.mxu0
      %v6242 = vadd.f32 %v5918, %v6241
      %v6243 = vpop.f32.mrf.mxu0
      %6244 = vmatprep.mubr.f32.mxu0 0.0
      %6245 = vmatmul.mubr.f32.gmra.mxu0 %v6036
      %v6246 = vpop.f32.mrf.mxu0
      %v6247 = vadd.f32 %v5923, %v6246
      %v6248 = vpop.f32.mrf.mxu0
      %6249 = vmatprep.mubr.f32.mxu0 0.0
      %6250 = vmatmul.mubr.f32.gmra.mxu0 %v6039
      %v6251 = vpop.f32.mrf.mxu0
      %v6252 = vadd.f32 %v5928, %v6251
      %v6253 = vpop.f32.mrf.mxu0
      %6254 = vmatprep.mubr.f32.mxu0 0.0
      %6255 = vmatmul.mubr.f32.gmra.mxu0 %v6042
      %v6256 = vpop.f32.mrf.mxu0
      %v6257 = vadd.f32 %v5933, %v6256
      %v6258 = vpop.f32.mrf.mxu0
      %6259 = vmatprep.mubr.f32.mxu0 0.0
      %6260 = vmatmul.mubr.f32.gmra.mxu0 %v6045
      %v6261 = vpop.f32.mrf.mxu0
      %v6262 = vadd.f32 %v5938, %v6261
      %v6263 = vpop.f32.mrf.mxu0
      %6264 = vmatprep.mubr.f32.mxu0 0.0
      %6265 = vmatmul.mubr.f32.gmra.mxu0 %v6048
      %v6266 = vpop.f32.mrf.mxu0
      %v6267 = vadd.f32 %v5943, %v6266
      %v6268 = vpop.f32.mrf.mxu0
      %6269 = vmatprep.mubr.f32.mxu0 0.0
      %6270 = vmatmul.mubr.f32.gmra.mxu0 %v6051
      %v6271 = vpop.f32.mrf.mxu0
      %v6272 = vadd.f32 %v5948, %v6271
      %v6273 = vpop.f32.mrf.mxu0
      %6274 = vmatprep.mubr.f32.mxu0 0.0
      %6275 = vmatmul.mubr.f32.gmra.mxu0 %v6054
      %v6276 = vpop.f32.mrf.mxu0
      %v6277 = vadd.f32 %v5953, %v6276
      %v6278 = vpop.f32.mrf.mxu0
      %6279 = vmatprep.mubr.f32.mxu0 0.0
      %6280 = vmatmul.mubr.f32.gmra.mxu0 %v6057
      %v6281 = vpop.f32.mrf.mxu0
      %v6282 = vadd.f32 %v5958, %v6281
      %v6283 = vpop.f32.mrf.mxu0
      %6284 = vmatprep.mubr.f32.mxu0 0.0
      %6285 = vmatmul.mubr.f32.gmra.mxu0 %v6060
      %v6286 = vpop.f32.mrf.mxu0
      %v6287 = vadd.f32 %v5963, %v6286
      %v6288 = vpop.f32.mrf.mxu0
      %6289 = vdwg.mxu0
      %v6290 = vld [vmem:[%s4556 + $0x1] sm:$0xff]
      %v6291 = vld [vmem:[%s4556 + $0x9] sm:$0xff]
      %v6292 = vld [vmem:[%s4556 + $0x19] sm:$0xff]
      %v6293 = vld [vmem:[%s4556 + $0x21] sm:$0xff]
      %v6294 = vld [vmem:[%s4556 + $0x31] sm:$0xff]
      %v6295 = vld [vmem:[%s4556 + $0x39] sm:$0xff]
      %v6296 = vld [vmem:[%s4556 + $0x49] sm:$0xff]
      %v6297 = vld [vmem:[%s4556 + $0x51] sm:$0xff]
      %v6298 = vld [vmem:[%s4556 + $0x61] sm:$0xff]
      %v6299 = vld [vmem:[%s4556 + $0x69] sm:$0xff]
      %v6300 = vld [vmem:[%s4556 + $0x79] sm:$0xff]
      %v6301 = vld [vmem:[%s4556 + $0x81] sm:$0xff]
      %v6302 = vld [vmem:[%s4556 + $0x91] sm:$0xff]
      %v6303 = vld [vmem:[%s4556 + $0x99] sm:$0xff]
      %v6304 = vld [vmem:[%s4556 + $0xa9] sm:$0xff]
      %v6305 = vld [vmem:[%s4556 + $0xb1] sm:$0xff]
      %v6306 = vld [vmem:[%s4556 + $0xc1] sm:$0xff]
      %v6307 = vld [vmem:[%s4556 + $0xc9] sm:$0xff]
      %v6308 = vld [vmem:[%s4556 + $0xd9] sm:$0xff]
      %v6309 = vld [vmem:[%s4556 + $0xe1] sm:$0xff]
      %v6310 = vld [vmem:[%s4556 + $0xf1] sm:$0xff]
      %v6311 = vld [vmem:[%s4556 + $0xf9] sm:$0xff]
      %v6312 = vld [vmem:[%s4556 + $0x109] sm:$0xff]
      %v6313 = vld [vmem:[%s4556 + $0x111] sm:$0xff]
      %v6314 = vld [vmem:[%s4556 + $0x121] sm:$0xff]
      %v6315 = vld [vmem:[%s4556 + $0x129] sm:$0xff]
      %v6316 = vld [vmem:[%s4556 + $0x139] sm:$0xff]
      %v6317 = vld [vmem:[%s4556 + $0x141] sm:$0xff]
      %v6318 = vld [vmem:[%s4556 + $0x151] sm:$0xff]
      %v6319 = vld [vmem:[%s4556 + $0x159] sm:$0xff]
      %v6320 = vld [vmem:[%s4556 + $0x169] sm:$0xff]
      %v6321 = vld [vmem:[%s4556 + $0x171] sm:$0xff]
      %s6322 = scalar_lea.vmem %s1, 112
      %v6323 = vld [vmem:[%s6322] sm:$0x1f]
      %v6325 = vsel %vm212, %v6290, 0
      %v6328 = vsel %vm212, %v6291, 0
      %v6331 = vsel %vm212, %v6292, 0
      %v6334 = vsel %vm212, %v6293, 0
      %v6337 = vsel %vm212, %v6294, 0
      %v6340 = vsel %vm212, %v6295, 0
      %v6343 = vsel %vm212, %v6296, 0
      %v6346 = vsel %vm212, %v6297, 0
      %v6349 = vsel %vm212, %v6298, 0
      %v6352 = vsel %vm212, %v6299, 0
      %v6355 = vsel %vm212, %v6300, 0
      %v6358 = vsel %vm212, %v6301, 0
      %v6361 = vsel %vm212, %v6302, 0
      %v6364 = vsel %vm212, %v6303, 0
      %v6367 = vsel %vm212, %v6304, 0
      %v6370 = vsel %vm212, %v6305, 0
      %v6373 = vsel %vm212, %v6306, 0
      %v6376 = vsel %vm212, %v6307, 0
      %v6379 = vsel %vm212, %v6308, 0
      %v6382 = vsel %vm212, %v6309, 0
      %v6385 = vsel %vm212, %v6310, 0
      %v6388 = vsel %vm212, %v6311, 0
      %v6391 = vsel %vm212, %v6312, 0
      %v6394 = vsel %vm212, %v6313, 0
      %v6397 = vsel %vm212, %v6314, 0
      %v6400 = vsel %vm212, %v6315, 0
      %v6403 = vsel %vm212, %v6316, 0
      %v6406 = vsel %vm212, %v6317, 0
      %v6409 = vsel %vm212, %v6318, 0
      %v6412 = vsel %vm212, %v6319, 0
      %v6415 = vsel %vm212, %v6320, 0
      %v6418 = vsel %vm212, %v6321, 0
      %v6421 = vsel %vm531, %v6323, 0
      %6423 = vmatprep.subr.mxu0 0.0
      %6424 = vmatpush1.msra.mxu0 0.0
      %6425 = vmatprep.subr.mxu0 0.0
      %6426 = vmatpush1.msra.mxu0 0.0
      %6427 = vmatprep.subr.mxu0 0.0
      %6428 = vmatpush1.msra.mxu0 0.0
      %6429 = vmatprep.subr.mxu0 0.0
      %6430 = vmatpush1.msra.mxu0 0.0
      %6431 = vmatprep.subr.mxu0 0.0
      %6432 = vmatpush1.msra.mxu0 0.0
      %6433 = vmatprep.subr.mxu0 0.0
      %6434 = vmatpush1.msra.mxu0 0.0
      %6435 = vmatprep.subr.mxu0 0.0
      %6436 = vmatpush1.msra.mxu0 0.0
      %6437 = vmatprep.subr.mxu0 0.0
      %6438 = vmatpush1.msra.mxu0 0.0
      %6439 = vmatprep.subr.mxu0 0.0
      %6440 = vmatpush1.msra.mxu0 0.0
      %6441 = vmatprep.subr.mxu0 0.0
      %6442 = vmatpush1.msra.mxu0 0.0
      %6443 = vmatprep.subr.mxu0 0.0
      %6444 = vmatpush1.msra.mxu0 0.0
      %6445 = vmatprep.subr.mxu0 0.0
      %6446 = vmatpush1.msra.mxu0 0.0
      %6447 = vmatprep.subr.mxu0 0.0
      %6448 = vmatpush1.msra.mxu0 0.0
      %6449 = vmatprep.subr.mxu0 0.0
      %6450 = vmatpush1.msra.mxu0 0.0
      %6451 = vmatprep.subr.mxu0 0.0
      %6452 = vmatpush1.msra.mxu0 0.0
      %6453 = vmatprep.subr.mxu0 0.0
      %6454 = vmatpush1.msra.mxu0 %v6421
      %6455 = vmatprep.subr.mxu0 0.0
      %6456 = vmatpush2.msra.mxu0 0.0
      %6457 = vmatprep.subr.mxu0 0.0
      %6458 = vmatpush2.msra.mxu0 0.0
      %6459 = vmatprep.subr.mxu0 0.0
      %6460 = vmatpush2.msra.mxu0 0.0
      %6461 = vmatprep.subr.mxu0 0.0
      %6462 = vmatpush2.msra.mxu0 0.0
      %6463 = vmatprep.subr.mxu0 0.0
      %6464 = vmatpush2.msra.mxu0 0.0
      %6465 = vmatprep.subr.mxu0 0.0
      %6466 = vmatpush2.msra.mxu0 0.0
      %6467 = vmatprep.subr.mxu0 0.0
      %6468 = vmatpush2.msra.mxu0 0.0
      %6469 = vmatprep.subr.mxu0 0.0
      %6470 = vmatpush2.msra.mxu0 0.0
      %6471 = vmatprep.subr.mxu0 0.0
      %6472 = vmatpush2.msra.mxu0 0.0
      %6473 = vmatprep.subr.mxu0 0.0
      %6474 = vmatpush2.msra.mxu0 0.0
      %6475 = vmatprep.subr.mxu0 0.0
      %6476 = vmatpush2.msra.mxu0 0.0
      %6477 = vmatprep.subr.mxu0 0.0
      %6478 = vmatpush2.msra.mxu0 0.0
      %6479 = vmatprep.subr.mxu0 0.0
      %6480 = vmatpush2.msra.mxu0 0.0
      %6481 = vmatprep.subr.mxu0 0.0
      %6482 = vmatpush2.msra.mxu0 0.0
      %6483 = vmatprep.subr.mxu0 0.0
      %6484 = vmatpush2.msra.mxu0 0.0
      %6485 = vmatprep.subr.mxu0 0.0
      %6486 = vmatpush2.msra.mxu0 0.0
      %6487 = vmatprep.mubr.f32.mxu0 0.0
      %6488 = vmatmul.mubr.f32.gmra.mxu0 %v6325
      %v6489 = vpop.f32.mrf.mxu0
      %v6490 = vadd.f32 0.0, %v6489
      %v6491 = vpop.f32.mrf.mxu0
      %6492 = vmatprep.mubr.f32.mxu0 0.0
      %6493 = vmatmul.mubr.f32.gmra.mxu0 %v6328
      %v6494 = vpop.f32.mrf.mxu0
      %v6495 = vadd.f32 0.0, %v6494
      %v6496 = vpop.f32.mrf.mxu0
      %6497 = vmatprep.mubr.f32.mxu0 0.0
      %6498 = vmatmul.mubr.f32.gmra.mxu0 %v6331
      %v6499 = vpop.f32.mrf.mxu0
      %v6500 = vadd.f32 0.0, %v6499
      %v6501 = vpop.f32.mrf.mxu0
      %6502 = vmatprep.mubr.f32.mxu0 0.0
      %6503 = vmatmul.mubr.f32.gmra.mxu0 %v6334
      %v6504 = vpop.f32.mrf.mxu0
      %v6505 = vadd.f32 0.0, %v6504
      %v6506 = vpop.f32.mrf.mxu0
      %6507 = vmatprep.mubr.f32.mxu0 0.0
      %6508 = vmatmul.mubr.f32.gmra.mxu0 %v6337
      %v6509 = vpop.f32.mrf.mxu0
      %v6510 = vadd.f32 0.0, %v6509
      %v6511 = vpop.f32.mrf.mxu0
      %6512 = vmatprep.mubr.f32.mxu0 0.0
      %6513 = vmatmul.mubr.f32.gmra.mxu0 %v6340
      %v6514 = vpop.f32.mrf.mxu0
      %v6515 = vadd.f32 0.0, %v6514
      %v6516 = vpop.f32.mrf.mxu0
      %6517 = vmatprep.mubr.f32.mxu0 0.0
      %6518 = vmatmul.mubr.f32.gmra.mxu0 %v6343
      %v6519 = vpop.f32.mrf.mxu0
      %v6520 = vadd.f32 0.0, %v6519
      %v6521 = vpop.f32.mrf.mxu0
      %6522 = vmatprep.mubr.f32.mxu0 0.0
      %6523 = vmatmul.mubr.f32.gmra.mxu0 %v6346
      %v6524 = vpop.f32.mrf.mxu0
      %v6525 = vadd.f32 0.0, %v6524
      %v6526 = vpop.f32.mrf.mxu0
      %6527 = vmatprep.mubr.f32.mxu0 0.0
      %6528 = vmatmul.mubr.f32.gmra.mxu0 %v6349
      %v6529 = vpop.f32.mrf.mxu0
      %v6530 = vadd.f32 0.0, %v6529
      %v6531 = vpop.f32.mrf.mxu0
      %6532 = vmatprep.mubr.f32.mxu0 0.0
      %6533 = vmatmul.mubr.f32.gmra.mxu0 %v6352
      %v6534 = vpop.f32.mrf.mxu0
      %v6535 = vadd.f32 0.0, %v6534
      %v6536 = vpop.f32.mrf.mxu0
      %6537 = vmatprep.mubr.f32.mxu0 0.0
      %6538 = vmatmul.mubr.f32.gmra.mxu0 %v6355
      %v6539 = vpop.f32.mrf.mxu0
      %v6540 = vadd.f32 0.0, %v6539
      %v6541 = vpop.f32.mrf.mxu0
      %6542 = vmatprep.mubr.f32.mxu0 0.0
      %6543 = vmatmul.mubr.f32.gmra.mxu0 %v6358
      %v6544 = vpop.f32.mrf.mxu0
      %v6545 = vadd.f32 0.0, %v6544
      %v6546 = vpop.f32.mrf.mxu0
      %6547 = vmatprep.mubr.f32.mxu0 0.0
      %6548 = vmatmul.mubr.f32.gmra.mxu0 %v6361
      %v6549 = vpop.f32.mrf.mxu0
      %v6550 = vadd.f32 0.0, %v6549
      %v6551 = vpop.f32.mrf.mxu0
      %6552 = vmatprep.mubr.f32.mxu0 0.0
      %6553 = vmatmul.mubr.f32.gmra.mxu0 %v6364
      %v6554 = vpop.f32.mrf.mxu0
      %v6555 = vadd.f32 0.0, %v6554
      %v6556 = vpop.f32.mrf.mxu0
      %6557 = vmatprep.mubr.f32.mxu0 0.0
      %6558 = vmatmul.mubr.f32.gmra.mxu0 %v6367
      %v6559 = vpop.f32.mrf.mxu0
      %v6560 = vadd.f32 0.0, %v6559
      %v6561 = vpop.f32.mrf.mxu0
      %6562 = vmatprep.mubr.f32.mxu0 0.0
      %6563 = vmatmul.mubr.f32.gmra.mxu0 %v6370
      %v6564 = vpop.f32.mrf.mxu0
      %v6565 = vadd.f32 0.0, %v6564
      %v6566 = vpop.f32.mrf.mxu0
      %6567 = vmatprep.mubr.f32.mxu0 0.0
      %6568 = vmatmul.mubr.f32.gmra.mxu0 %v6373
      %v6569 = vpop.f32.mrf.mxu0
      %v6570 = vadd.f32 0.0, %v6569
      %v6571 = vpop.f32.mrf.mxu0
      %6572 = vmatprep.mubr.f32.mxu0 0.0
      %6573 = vmatmul.mubr.f32.gmra.mxu0 %v6376
      %v6574 = vpop.f32.mrf.mxu0
      %v6575 = vadd.f32 0.0, %v6574
      %v6576 = vpop.f32.mrf.mxu0
      %6577 = vmatprep.mubr.f32.mxu0 0.0
      %6578 = vmatmul.mubr.f32.gmra.mxu0 %v6379
      %v6579 = vpop.f32.mrf.mxu0
      %v6580 = vadd.f32 0.0, %v6579
      %v6581 = vpop.f32.mrf.mxu0
      %6582 = vmatprep.mubr.f32.mxu0 0.0
      %6583 = vmatmul.mubr.f32.gmra.mxu0 %v6382
      %v6584 = vpop.f32.mrf.mxu0
      %v6585 = vadd.f32 0.0, %v6584
      %v6586 = vpop.f32.mrf.mxu0
      %6587 = vmatprep.mubr.f32.mxu0 0.0
      %6588 = vmatmul.mubr.f32.gmra.mxu0 %v6385
      %v6589 = vpop.f32.mrf.mxu0
      %v6590 = vadd.f32 0.0, %v6589
      %v6591 = vpop.f32.mrf.mxu0
      %6592 = vmatprep.mubr.f32.mxu0 0.0
      %6593 = vmatmul.mubr.f32.gmra.mxu0 %v6388
      %v6594 = vpop.f32.mrf.mxu0
      %v6595 = vadd.f32 0.0, %v6594
      %v6596 = vpop.f32.mrf.mxu0
      %6597 = vmatprep.mubr.f32.mxu0 0.0
      %6598 = vmatmul.mubr.f32.gmra.mxu0 %v6391
      %v6599 = vpop.f32.mrf.mxu0
      %v6600 = vadd.f32 0.0, %v6599
      %v6601 = vpop.f32.mrf.mxu0
      %6602 = vmatprep.mubr.f32.mxu0 0.0
      %6603 = vmatmul.mubr.f32.gmra.mxu0 %v6394
      %v6604 = vpop.f32.mrf.mxu0
      %v6605 = vadd.f32 0.0, %v6604
      %v6606 = vpop.f32.mrf.mxu0
      %6607 = vmatprep.mubr.f32.mxu0 0.0
      %6608 = vmatmul.mubr.f32.gmra.mxu0 %v6397
      %v6609 = vpop.f32.mrf.mxu0
      %v6610 = vadd.f32 0.0, %v6609
      %v6611 = vpop.f32.mrf.mxu0
      %6612 = vmatprep.mubr.f32.mxu0 0.0
      %6613 = vmatmul.mubr.f32.gmra.mxu0 %v6400
      %v6614 = vpop.f32.mrf.mxu0
      %v6615 = vadd.f32 0.0, %v6614
      %v6616 = vpop.f32.mrf.mxu0
      %6617 = vmatprep.mubr.f32.mxu0 0.0
      %6618 = vmatmul.mubr.f32.gmra.mxu0 %v6403
      %v6619 = vpop.f32.mrf.mxu0
      %v6620 = vadd.f32 0.0, %v6619
      %v6621 = vpop.f32.mrf.mxu0
      %6622 = vmatprep.mubr.f32.mxu0 0.0
      %6623 = vmatmul.mubr.f32.gmra.mxu0 %v6406
      %v6624 = vpop.f32.mrf.mxu0
      %v6625 = vadd.f32 0.0, %v6624
      %v6626 = vpop.f32.mrf.mxu0
      %6627 = vmatprep.mubr.f32.mxu0 0.0
      %6628 = vmatmul.mubr.f32.gmra.mxu0 %v6409
      %v6629 = vpop.f32.mrf.mxu0
      %v6630 = vadd.f32 0.0, %v6629
      %v6631 = vpop.f32.mrf.mxu0
      %6632 = vmatprep.mubr.f32.mxu0 0.0
      %6633 = vmatmul.mubr.f32.gmra.mxu0 %v6412
      %v6634 = vpop.f32.mrf.mxu0
      %v6635 = vadd.f32 0.0, %v6634
      %v6636 = vpop.f32.mrf.mxu0
      %6637 = vmatprep.mubr.f32.mxu0 0.0
      %6638 = vmatmul.mubr.f32.gmra.mxu0 %v6415
      %v6639 = vpop.f32.mrf.mxu0
      %v6640 = vadd.f32 0.0, %v6639
      %v6641 = vpop.f32.mrf.mxu0
      %6642 = vmatprep.mubr.f32.mxu0 0.0
      %6643 = vmatmul.mubr.f32.gmra.mxu0 %v6418
      %v6644 = vpop.f32.mrf.mxu0
      %v6645 = vadd.f32 0.0, %v6644
      %v6646 = vpop.f32.mrf.mxu0
      %6647 = vdwg.mxu0
      %v6648 = vadd.f32 %v6132, %v6490
      %v6649 = vadd.f32 %v6137, %v6495
      %v6650 = vadd.f32 %v6142, %v6500
      %v6651 = vadd.f32 %v6147, %v6505
      %v6652 = vadd.f32 %v6152, %v6510
      %v6653 = vadd.f32 %v6157, %v6515
      %v6654 = vadd.f32 %v6162, %v6520
      %v6655 = vadd.f32 %v6167, %v6525
      %v6656 = vadd.f32 %v6172, %v6530
      %v6657 = vadd.f32 %v6177, %v6535
      %v6658 = vadd.f32 %v6182, %v6540
      %v6659 = vadd.f32 %v6187, %v6545
      %v6660 = vadd.f32 %v6192, %v6550
      %v6661 = vadd.f32 %v6197, %v6555
      %v6662 = vadd.f32 %v6202, %v6560
      %v6663 = vadd.f32 %v6207, %v6565
      %v6664 = vadd.f32 %v6212, %v6570
      %v6665 = vadd.f32 %v6217, %v6575
      %v6666 = vadd.f32 %v6222, %v6580
      %v6667 = vadd.f32 %v6227, %v6585
      %v6668 = vadd.f32 %v6232, %v6590
      %v6669 = vadd.f32 %v6237, %v6595
      %v6670 = vadd.f32 %v6242, %v6600
      %v6671 = vadd.f32 %v6247, %v6605
      %v6672 = vadd.f32 %v6252, %v6610
      %v6673 = vadd.f32 %v6257, %v6615
      %v6674 = vadd.f32 %v6262, %v6620
      %v6675 = vadd.f32 %v6267, %v6625
      %v6676 = vadd.f32 %v6272, %v6630
      %v6677 = vadd.f32 %v6277, %v6635
      %v6678 = vadd.f32 %v6282, %v6640
      %v6679 = vadd.f32 %v6287, %v6645
      %v6680 = vld [vmem:[%s4556 + $0x2] sm:$0xff]
      %v6681 = vld [vmem:[%s4556 + $0xa] sm:$0xff]
      %v6682 = vld [vmem:[%s4556 + $0x1a] sm:$0xff]
      %v6683 = vld [vmem:[%s4556 + $0x22] sm:$0xff]
      %v6684 = vld [vmem:[%s4556 + $0x32] sm:$0xff]
      %v6685 = vld [vmem:[%s4556 + $0x3a] sm:$0xff]
      %v6686 = vld [vmem:[%s4556 + $0x4a] sm:$0xff]
      %v6687 = vld [vmem:[%s4556 + $0x52] sm:$0xff]
      %v6688 = vld [vmem:[%s4556 + $0x62] sm:$0xff]
      %v6689 = vld [vmem:[%s4556 + $0x6a] sm:$0xff]
      %v6690 = vld [vmem:[%s4556 + $0x7a] sm:$0xff]
      %v6691 = vld [vmem:[%s4556 + $0x82] sm:$0xff]
      %v6692 = vld [vmem:[%s4556 + $0x92] sm:$0xff]
      %v6693 = vld [vmem:[%s4556 + $0x9a] sm:$0xff]
      %v6694 = vld [vmem:[%s4556 + $0xaa] sm:$0xff]
      %v6695 = vld [vmem:[%s4556 + $0xb2] sm:$0xff]
      %v6696 = vld [vmem:[%s4556 + $0xc2] sm:$0xff]
      %v6697 = vld [vmem:[%s4556 + $0xca] sm:$0xff]
      %v6698 = vld [vmem:[%s4556 + $0xda] sm:$0xff]
      %v6699 = vld [vmem:[%s4556 + $0xe2] sm:$0xff]
      %v6700 = vld [vmem:[%s4556 + $0xf2] sm:$0xff]
      %v6701 = vld [vmem:[%s4556 + $0xfa] sm:$0xff]
      %v6702 = vld [vmem:[%s4556 + $0x10a] sm:$0xff]
      %v6703 = vld [vmem:[%s4556 + $0x112] sm:$0xff]
      %v6704 = vld [vmem:[%s4556 + $0x122] sm:$0xff]
      %v6705 = vld [vmem:[%s4556 + $0x12a] sm:$0xff]
      %v6706 = vld [vmem:[%s4556 + $0x13a] sm:$0xff]
      %v6707 = vld [vmem:[%s4556 + $0x142] sm:$0xff]
      %v6708 = vld [vmem:[%s4556 + $0x152] sm:$0xff]
      %v6709 = vld [vmem:[%s4556 + $0x15a] sm:$0xff]
      %v6710 = vld [vmem:[%s4556 + $0x16a] sm:$0xff]
      %v6711 = vld [vmem:[%s4556 + $0x172] sm:$0xff]
      %s6712 = scalar_lea.vmem %s1, 120
      %v6713 = vld [vmem:[%s6712] sm:$0x1f]
      %v6715 = vsel %vm212, %v6680, 0
      %v6718 = vsel %vm212, %v6681, 0
      %v6721 = vsel %vm212, %v6682, 0
      %v6724 = vsel %vm212, %v6683, 0
      %v6727 = vsel %vm212, %v6684, 0
      %v6730 = vsel %vm212, %v6685, 0
      %v6733 = vsel %vm212, %v6686, 0
      %v6736 = vsel %vm212, %v6687, 0
      %v6739 = vsel %vm212, %v6688, 0
      %v6742 = vsel %vm212, %v6689, 0
      %v6745 = vsel %vm212, %v6690, 0
      %v6748 = vsel %vm212, %v6691, 0
      %v6751 = vsel %vm212, %v6692, 0
      %v6754 = vsel %vm212, %v6693, 0
      %v6757 = vsel %vm212, %v6694, 0
      %v6760 = vsel %vm212, %v6695, 0
      %v6763 = vsel %vm212, %v6696, 0
      %v6766 = vsel %vm212, %v6697, 0
      %v6769 = vsel %vm212, %v6698, 0
      %v6772 = vsel %vm212, %v6699, 0
      %v6775 = vsel %vm212, %v6700, 0
      %v6778 = vsel %vm212, %v6701, 0
      %v6781 = vsel %vm212, %v6702, 0
      %v6784 = vsel %vm212, %v6703, 0
      %v6787 = vsel %vm212, %v6704, 0
      %v6790 = vsel %vm212, %v6705, 0
      %v6793 = vsel %vm212, %v6706, 0
      %v6796 = vsel %vm212, %v6707, 0
      %v6799 = vsel %vm212, %v6708, 0
      %v6802 = vsel %vm212, %v6709, 0
      %v6805 = vsel %vm212, %v6710, 0
      %v6808 = vsel %vm212, %v6711, 0
      %v6811 = vsel %vm531, %v6713, 0
      %6813 = vmatprep.subr.mxu0 0.0
      %6814 = vmatpush1.msra.mxu0 0.0
      %6815 = vmatprep.subr.mxu0 0.0
      %6816 = vmatpush1.msra.mxu0 0.0
      %6817 = vmatprep.subr.mxu0 0.0
      %6818 = vmatpush1.msra.mxu0 0.0
      %6819 = vmatprep.subr.mxu0 0.0
      %6820 = vmatpush1.msra.mxu0 0.0
      %6821 = vmatprep.subr.mxu0 0.0
      %6822 = vmatpush1.msra.mxu0 0.0
      %6823 = vmatprep.subr.mxu0 0.0
      %6824 = vmatpush1.msra.mxu0 0.0
      %6825 = vmatprep.subr.mxu0 0.0
      %6826 = vmatpush1.msra.mxu0 0.0
      %6827 = vmatprep.subr.mxu0 0.0
      %6828 = vmatpush1.msra.mxu0 0.0
      %6829 = vmatprep.subr.mxu0 0.0
      %6830 = vmatpush1.msra.mxu0 0.0
      %6831 = vmatprep.subr.mxu0 0.0
      %6832 = vmatpush1.msra.mxu0 0.0
      %6833 = vmatprep.subr.mxu0 0.0
      %6834 = vmatpush1.msra.mxu0 0.0
      %6835 = vmatprep.subr.mxu0 0.0
      %6836 = vmatpush1.msra.mxu0 0.0
      %6837 = vmatprep.subr.mxu0 0.0
      %6838 = vmatpush1.msra.mxu0 0.0
      %6839 = vmatprep.subr.mxu0 0.0
      %6840 = vmatpush1.msra.mxu0 0.0
      %6841 = vmatprep.subr.mxu0 0.0
      %6842 = vmatpush1.msra.mxu0 0.0
      %6843 = vmatprep.subr.mxu0 0.0
      %6844 = vmatpush1.msra.mxu0 %v6811
      %6845 = vmatprep.subr.mxu0 0.0
      %6846 = vmatpush2.msra.mxu0 0.0
      %6847 = vmatprep.subr.mxu0 0.0
      %6848 = vmatpush2.msra.mxu0 0.0
      %6849 = vmatprep.subr.mxu0 0.0
      %6850 = vmatpush2.msra.mxu0 0.0
      %6851 = vmatprep.subr.mxu0 0.0
      %6852 = vmatpush2.msra.mxu0 0.0
      %6853 = vmatprep.subr.mxu0 0.0
      %6854 = vmatpush2.msra.mxu0 0.0
      %6855 = vmatprep.subr.mxu0 0.0
      %6856 = vmatpush2.msra.mxu0 0.0
      %6857 = vmatprep.subr.mxu0 0.0
      %6858 = vmatpush2.msra.mxu0 0.0
      %6859 = vmatprep.subr.mxu0 0.0
      %6860 = vmatpush2.msra.mxu0 0.0
      %6861 = vmatprep.subr.mxu0 0.0
      %6862 = vmatpush2.msra.mxu0 0.0
      %6863 = vmatprep.subr.mxu0 0.0
      %6864 = vmatpush2.msra.mxu0 0.0
      %6865 = vmatprep.subr.mxu0 0.0
      %6866 = vmatpush2.msra.mxu0 0.0
      %6867 = vmatprep.subr.mxu0 0.0
      %6868 = vmatpush2.msra.mxu0 0.0
      %6869 = vmatprep.subr.mxu0 0.0
      %6870 = vmatpush2.msra.mxu0 0.0
      %6871 = vmatprep.subr.mxu0 0.0
      %6872 = vmatpush2.msra.mxu0 0.0
      %6873 = vmatprep.subr.mxu0 0.0
      %6874 = vmatpush2.msra.mxu0 0.0
      %6875 = vmatprep.subr.mxu0 0.0
      %6876 = vmatpush2.msra.mxu0 0.0
      %6877 = vmatprep.mubr.f32.mxu0 0.0
      %6878 = vmatmul.mubr.f32.gmra.mxu0 %v6715
      %v6879 = vpop.f32.mrf.mxu0
      %v6880 = vadd.f32 0.0, %v6879
      %v6881 = vpop.f32.mrf.mxu0
      %6882 = vmatprep.mubr.f32.mxu0 0.0
      %6883 = vmatmul.mubr.f32.gmra.mxu0 %v6718
      %v6884 = vpop.f32.mrf.mxu0
      %v6885 = vadd.f32 0.0, %v6884
      %v6886 = vpop.f32.mrf.mxu0
      %6887 = vmatprep.mubr.f32.mxu0 0.0
      %6888 = vmatmul.mubr.f32.gmra.mxu0 %v6721
      %v6889 = vpop.f32.mrf.mxu0
      %v6890 = vadd.f32 0.0, %v6889
      %v6891 = vpop.f32.mrf.mxu0
      %6892 = vmatprep.mubr.f32.mxu0 0.0
      %6893 = vmatmul.mubr.f32.gmra.mxu0 %v6724
      %v6894 = vpop.f32.mrf.mxu0
      %v6895 = vadd.f32 0.0, %v6894
      %v6896 = vpop.f32.mrf.mxu0
      %6897 = vmatprep.mubr.f32.mxu0 0.0
      %6898 = vmatmul.mubr.f32.gmra.mxu0 %v6727
      %v6899 = vpop.f32.mrf.mxu0
      %v6900 = vadd.f32 0.0, %v6899
      %v6901 = vpop.f32.mrf.mxu0
      %6902 = vmatprep.mubr.f32.mxu0 0.0
      %6903 = vmatmul.mubr.f32.gmra.mxu0 %v6730
      %v6904 = vpop.f32.mrf.mxu0
      %v6905 = vadd.f32 0.0, %v6904
      %v6906 = vpop.f32.mrf.mxu0
      %6907 = vmatprep.mubr.f32.mxu0 0.0
      %6908 = vmatmul.mubr.f32.gmra.mxu0 %v6733
      %v6909 = vpop.f32.mrf.mxu0
      %v6910 = vadd.f32 0.0, %v6909
      %v6911 = vpop.f32.mrf.mxu0
      %6912 = vmatprep.mubr.f32.mxu0 0.0
      %6913 = vmatmul.mubr.f32.gmra.mxu0 %v6736
      %v6914 = vpop.f32.mrf.mxu0
      %v6915 = vadd.f32 0.0, %v6914
      %v6916 = vpop.f32.mrf.mxu0
      %6917 = vmatprep.mubr.f32.mxu0 0.0
      %6918 = vmatmul.mubr.f32.gmra.mxu0 %v6739
      %v6919 = vpop.f32.mrf.mxu0
      %v6920 = vadd.f32 0.0, %v6919
      %v6921 = vpop.f32.mrf.mxu0
      %6922 = vmatprep.mubr.f32.mxu0 0.0
      %6923 = vmatmul.mubr.f32.gmra.mxu0 %v6742
      %v6924 = vpop.f32.mrf.mxu0
      %v6925 = vadd.f32 0.0, %v6924
      %v6926 = vpop.f32.mrf.mxu0
      %6927 = vmatprep.mubr.f32.mxu0 0.0
      %6928 = vmatmul.mubr.f32.gmra.mxu0 %v6745
      %v6929 = vpop.f32.mrf.mxu0
      %v6930 = vadd.f32 0.0, %v6929
      %v6931 = vpop.f32.mrf.mxu0
      %6932 = vmatprep.mubr.f32.mxu0 0.0
      %6933 = vmatmul.mubr.f32.gmra.mxu0 %v6748
      %v6934 = vpop.f32.mrf.mxu0
      %v6935 = vadd.f32 0.0, %v6934
      %v6936 = vpop.f32.mrf.mxu0
      %6937 = vmatprep.mubr.f32.mxu0 0.0
      %6938 = vmatmul.mubr.f32.gmra.mxu0 %v6751
      %v6939 = vpop.f32.mrf.mxu0
      %v6940 = vadd.f32 0.0, %v6939
      %v6941 = vpop.f32.mrf.mxu0
      %6942 = vmatprep.mubr.f32.mxu0 0.0
      %6943 = vmatmul.mubr.f32.gmra.mxu0 %v6754
      %v6944 = vpop.f32.mrf.mxu0
      %v6945 = vadd.f32 0.0, %v6944
      %v6946 = vpop.f32.mrf.mxu0
      %6947 = vmatprep.mubr.f32.mxu0 0.0
      %6948 = vmatmul.mubr.f32.gmra.mxu0 %v6757
      %v6949 = vpop.f32.mrf.mxu0
      %v6950 = vadd.f32 0.0, %v6949
      %v6951 = vpop.f32.mrf.mxu0
      %6952 = vmatprep.mubr.f32.mxu0 0.0
      %6953 = vmatmul.mubr.f32.gmra.mxu0 %v6760
      %v6954 = vpop.f32.mrf.mxu0
      %v6955 = vadd.f32 0.0, %v6954
      %v6956 = vpop.f32.mrf.mxu0
      %6957 = vmatprep.mubr.f32.mxu0 0.0
      %6958 = vmatmul.mubr.f32.gmra.mxu0 %v6763
      %v6959 = vpop.f32.mrf.mxu0
      %v6960 = vadd.f32 0.0, %v6959
      %v6961 = vpop.f32.mrf.mxu0
      %6962 = vmatprep.mubr.f32.mxu0 0.0
      %6963 = vmatmul.mubr.f32.gmra.mxu0 %v6766
      %v6964 = vpop.f32.mrf.mxu0
      %v6965 = vadd.f32 0.0, %v6964
      %v6966 = vpop.f32.mrf.mxu0
      %6967 = vmatprep.mubr.f32.mxu0 0.0
      %6968 = vmatmul.mubr.f32.gmra.mxu0 %v6769
      %v6969 = vpop.f32.mrf.mxu0
      %v6970 = vadd.f32 0.0, %v6969
      %v6971 = vpop.f32.mrf.mxu0
      %6972 = vmatprep.mubr.f32.mxu0 0.0
      %6973 = vmatmul.mubr.f32.gmra.mxu0 %v6772
      %v6974 = vpop.f32.mrf.mxu0
      %v6975 = vadd.f32 0.0, %v6974
      %v6976 = vpop.f32.mrf.mxu0
      %6977 = vmatprep.mubr.f32.mxu0 0.0
      %6978 = vmatmul.mubr.f32.gmra.mxu0 %v6775
      %v6979 = vpop.f32.mrf.mxu0
      %v6980 = vadd.f32 0.0, %v6979
      %v6981 = vpop.f32.mrf.mxu0
      %6982 = vmatprep.mubr.f32.mxu0 0.0
      %6983 = vmatmul.mubr.f32.gmra.mxu0 %v6778
      %v6984 = vpop.f32.mrf.mxu0
      %v6985 = vadd.f32 0.0, %v6984
      %v6986 = vpop.f32.mrf.mxu0
      %6987 = vmatprep.mubr.f32.mxu0 0.0
      %6988 = vmatmul.mubr.f32.gmra.mxu0 %v6781
      %v6989 = vpop.f32.mrf.mxu0
      %v6990 = vadd.f32 0.0, %v6989
      %v6991 = vpop.f32.mrf.mxu0
      %6992 = vmatprep.mubr.f32.mxu0 0.0
      %6993 = vmatmul.mubr.f32.gmra.mxu0 %v6784
      %v6994 = vpop.f32.mrf.mxu0
      %v6995 = vadd.f32 0.0, %v6994
      %v6996 = vpop.f32.mrf.mxu0
      %6997 = vmatprep.mubr.f32.mxu0 0.0
      %6998 = vmatmul.mubr.f32.gmra.mxu0 %v6787
      %v6999 = vpop.f32.mrf.mxu0
      %v7000 = vadd.f32 0.0, %v6999
      %v7001 = vpop.f32.mrf.mxu0
      %7002 = vmatprep.mubr.f32.mxu0 0.0
      %7003 = vmatmul.mubr.f32.gmra.mxu0 %v6790
      %v7004 = vpop.f32.mrf.mxu0
      %v7005 = vadd.f32 0.0, %v7004
      %v7006 = vpop.f32.mrf.mxu0
      %7007 = vmatprep.mubr.f32.mxu0 0.0
      %7008 = vmatmul.mubr.f32.gmra.mxu0 %v6793
      %v7009 = vpop.f32.mrf.mxu0
      %v7010 = vadd.f32 0.0, %v7009
      %v7011 = vpop.f32.mrf.mxu0
      %7012 = vmatprep.mubr.f32.mxu0 0.0
      %7013 = vmatmul.mubr.f32.gmra.mxu0 %v6796
      %v7014 = vpop.f32.mrf.mxu0
      %v7015 = vadd.f32 0.0, %v7014
      %v7016 = vpop.f32.mrf.mxu0
      %7017 = vmatprep.mubr.f32.mxu0 0.0
      %7018 = vmatmul.mubr.f32.gmra.mxu0 %v6799
      %v7019 = vpop.f32.mrf.mxu0
      %v7020 = vadd.f32 0.0, %v7019
      %v7021 = vpop.f32.mrf.mxu0
      %7022 = vmatprep.mubr.f32.mxu0 0.0
      %7023 = vmatmul.mubr.f32.gmra.mxu0 %v6802
      %v7024 = vpop.f32.mrf.mxu0
      %v7025 = vadd.f32 0.0, %v7024
      %v7026 = vpop.f32.mrf.mxu0
      %7027 = vmatprep.mubr.f32.mxu0 0.0
      %7028 = vmatmul.mubr.f32.gmra.mxu0 %v6805
      %v7029 = vpop.f32.mrf.mxu0
      %v7030 = vadd.f32 0.0, %v7029
      %v7031 = vpop.f32.mrf.mxu0
      %7032 = vmatprep.mubr.f32.mxu0 0.0
      %7033 = vmatmul.mubr.f32.gmra.mxu0 %v6808
      %v7034 = vpop.f32.mrf.mxu0
      %v7035 = vadd.f32 0.0, %v7034
      %v7036 = vpop.f32.mrf.mxu0
      %7037 = vdwg.mxu0
      %v7038 = vadd.f32 %v6648, %v6880
      %v7039 = vadd.f32 %v6649, %v6885
      %v7040 = vadd.f32 %v6650, %v6890
      %v7041 = vadd.f32 %v6651, %v6895
      %v7042 = vadd.f32 %v6652, %v6900
      %v7043 = vadd.f32 %v6653, %v6905
      %v7044 = vadd.f32 %v6654, %v6910
      %v7045 = vadd.f32 %v6655, %v6915
      %v7046 = vadd.f32 %v6656, %v6920
      %v7047 = vadd.f32 %v6657, %v6925
      %v7048 = vadd.f32 %v6658, %v6930
      %v7049 = vadd.f32 %v6659, %v6935
      %v7050 = vadd.f32 %v6660, %v6940
      %v7051 = vadd.f32 %v6661, %v6945
      %v7052 = vadd.f32 %v6662, %v6950
      %v7053 = vadd.f32 %v6663, %v6955
      %v7054 = vadd.f32 %v6664, %v6960
      %v7055 = vadd.f32 %v6665, %v6965
      %v7056 = vadd.f32 %v6666, %v6970
      %v7057 = vadd.f32 %v6667, %v6975
      %v7058 = vadd.f32 %v6668, %v6980
      %v7059 = vadd.f32 %v6669, %v6985
      %v7060 = vadd.f32 %v6670, %v6990
      %v7061 = vadd.f32 %v6671, %v6995
      %v7062 = vadd.f32 %v6672, %v7000
      %v7063 = vadd.f32 %v6673, %v7005
      %v7064 = vadd.f32 %v6674, %v7010
      %v7065 = vadd.f32 %v6675, %v7015
      %v7066 = vadd.f32 %v6676, %v7020
      %v7067 = vadd.f32 %v6677, %v7025
      %v7068 = vadd.f32 %v6678, %v7030
      %v7069 = vadd.f32 %v6679, %v7035
      %v7070 = vadd.f32 %v7038, %v1868
      %v7071 = vadd.f32 %v7039, %v1868
      %v7072 = vadd.f32 %v7040, %v1868
      %v7073 = vadd.f32 %v7041, %v1868
      %v7074 = vadd.f32 %v7042, %v1868
      %v7075 = vadd.f32 %v7043, %v1868
      %v7076 = vadd.f32 %v7044, %v1868
      %v7077 = vadd.f32 %v7045, %v1868
      %v7078 = vadd.f32 %v7046, %v1868
      %v7079 = vadd.f32 %v7047, %v1868
      %v7080 = vadd.f32 %v7048, %v1868
      %v7081 = vadd.f32 %v7049, %v1868
      %v7082 = vadd.f32 %v7050, %v1868
      %v7083 = vadd.f32 %v7051, %v1868
      %v7084 = vadd.f32 %v7052, %v1868
      %v7085 = vadd.f32 %v7053, %v1868
      %v7086 = vadd.f32 %v7054, %v1868
      %v7087 = vadd.f32 %v7055, %v1868
      %v7088 = vadd.f32 %v7056, %v1868
      %v7089 = vadd.f32 %v7057, %v1868
      %v7090 = vadd.f32 %v7058, %v1868
      %v7091 = vadd.f32 %v7059, %v1868
      %v7092 = vadd.f32 %v7060, %v1868
      %v7093 = vadd.f32 %v7061, %v1868
      %v7094 = vadd.f32 %v7062, %v1868
      %v7095 = vadd.f32 %v7063, %v1868
      %v7096 = vadd.f32 %v7064, %v1868
      %v7097 = vadd.f32 %v7065, %v1868
      %v7098 = vadd.f32 %v7066, %v1868
      %v7099 = vadd.f32 %v7067, %v1868
      %v7100 = vadd.f32 %v7068, %v1868
      %v7101 = vadd.f32 %v7069, %v1868
      %s7102 = scalar_lea.vmem %s206, 768
      %7103 = vst.msk [vmem:[%s7102] sm:$0xff] %vm1902, %v7070
      %7104 = vst.msk [vmem:[%s7102 + $0x8] sm:$0xff] %vm1902, %v7071
      %7105 = vst.msk [vmem:[%s7102 + $0x10] sm:$0xff] %vm1902, %v7072
      %7106 = vst.msk [vmem:[%s7102 + $0x18] sm:$0xff] %vm1902, %v7073
      %7107 = vst.msk [vmem:[%s7102 + $0x20] sm:$0xff] %vm1902, %v7074
      %7108 = vst.msk [vmem:[%s7102 + $0x28] sm:$0xff] %vm1902, %v7075
      %7109 = vst.msk [vmem:[%s7102 + $0x30] sm:$0xff] %vm1902, %v7076
      %7110 = vst.msk [vmem:[%s7102 + $0x38] sm:$0xff] %vm1902, %v7077
      %7111 = vst.msk [vmem:[%s7102 + $0x40] sm:$0xff] %vm1902, %v7078
      %7112 = vst.msk [vmem:[%s7102 + $0x48] sm:$0xff] %vm1902, %v7079
      %7113 = vst.msk [vmem:[%s7102 + $0x50] sm:$0xff] %vm1902, %v7080
      %7114 = vst.msk [vmem:[%s7102 + $0x58] sm:$0xff] %vm1902, %v7081
      %7115 = vst.msk [vmem:[%s7102 + $0x60] sm:$0xff] %vm1902, %v7082
      %7116 = vst.msk [vmem:[%s7102 + $0x68] sm:$0xff] %vm1902, %v7083
      %7117 = vst.msk [vmem:[%s7102 + $0x70] sm:$0xff] %vm1902, %v7084
      %7118 = vst.msk [vmem:[%s7102 + $0x78] sm:$0xff] %vm1902, %v7085
      %7119 = vst.msk [vmem:[%s7102 + $0x80] sm:$0xff] %vm1902, %v7086
      %7120 = vst.msk [vmem:[%s7102 + $0x88] sm:$0xff] %vm1902, %v7087
      %7121 = vst.msk [vmem:[%s7102 + $0x90] sm:$0xff] %vm1902, %v7088
      %7122 = vst.msk [vmem:[%s7102 + $0x98] sm:$0xff] %vm1902, %v7089
      %7123 = vst.msk [vmem:[%s7102 + $0xa0] sm:$0xff] %vm1902, %v7090
      %7124 = vst.msk [vmem:[%s7102 + $0xa8] sm:$0xff] %vm1902, %v7091
      %7125 = vst.msk [vmem:[%s7102 + $0xb0] sm:$0xff] %vm1902, %v7092
      %7126 = vst.msk [vmem:[%s7102 + $0xb8] sm:$0xff] %vm1902, %v7093
      %7127 = vst.msk [vmem:[%s7102 + $0xc0] sm:$0xff] %vm1902, %v7094
      %7128 = vst.msk [vmem:[%s7102 + $0xc8] sm:$0xff] %vm1902, %v7095
      %7129 = vst.msk [vmem:[%s7102 + $0xd0] sm:$0xff] %vm1902, %v7096
      %7130 = vst.msk [vmem:[%s7102 + $0xd8] sm:$0xff] %vm1902, %v7097
      %7131 = vst.msk [vmem:[%s7102 + $0xe0] sm:$0xff] %vm1902, %v7098
      %7132 = vst.msk [vmem:[%s7102 + $0xe8] sm:$0xff] %vm1902, %v7099
      %7133 = vst.msk [vmem:[%s7102 + $0xf0] sm:$0xff] %vm1902, %v7100
      %7134 = vst.msk [vmem:[%s7102 + $0xf8] sm:$0xff] %vm1902, %v7101
      %v7135 = vsel %vm1902, %v7070, 0.0
      %v7136 = vsel %vm1902, %v7071, 0.0
      %v7137 = vadd.f32 %v7135, %v7136
      %v7138 = vsel %vm1902, %v7072, 0.0
      %v7139 = vadd.f32 %v7137, %v7138
      %v7140 = vsel %vm1902, %v7073, 0.0
      %v7141 = vadd.f32 %v7139, %v7140
      %v7142 = vsel %vm1902, %v7074, 0.0
      %v7143 = vadd.f32 %v7141, %v7142
      %v7144 = vsel %vm1902, %v7075, 0.0
      %v7145 = vadd.f32 %v7143, %v7144
      %v7146 = vsel %vm1902, %v7076, 0.0
      %v7147 = vadd.f32 %v7145, %v7146
      %v7148 = vsel %vm1902, %v7077, 0.0
      %v7149 = vadd.f32 %v7147, %v7148
      %v7150 = vsel %vm1902, %v7078, 0.0
      %v7151 = vadd.f32 %v7149, %v7150
      %v7152 = vsel %vm1902, %v7079, 0.0
      %v7153 = vadd.f32 %v7151, %v7152
      %v7154 = vsel %vm1902, %v7080, 0.0
      %v7155 = vadd.f32 %v7153, %v7154
      %v7156 = vsel %vm1902, %v7081, 0.0
      %v7157 = vadd.f32 %v7155, %v7156
      %v7158 = vsel %vm1902, %v7082, 0.0
      %v7159 = vadd.f32 %v7157, %v7158
      %v7160 = vsel %vm1902, %v7083, 0.0
      %v7161 = vadd.f32 %v7159, %v7160
      %v7162 = vsel %vm1902, %v7084, 0.0
      %v7163 = vadd.f32 %v7161, %v7162
      %v7164 = vsel %vm1902, %v7085, 0.0
      %v7165 = vadd.f32 %v7163, %v7164
      %v7166 = vsel %vm1902, %v7086, 0.0
      %v7167 = vadd.f32 %v7165, %v7166
      %v7168 = vsel %vm1902, %v7087, 0.0
      %v7169 = vadd.f32 %v7167, %v7168
      %v7170 = vsel %vm1902, %v7088, 0.0
      %v7171 = vadd.f32 %v7169, %v7170
      %v7172 = vsel %vm1902, %v7089, 0.0
      %v7173 = vadd.f32 %v7171, %v7172
      %v7174 = vsel %vm1902, %v7090, 0.0
      %v7175 = vadd.f32 %v7173, %v7174
      %v7176 = vsel %vm1902, %v7091, 0.0
      %v7177 = vadd.f32 %v7175, %v7176
      %v7178 = vsel %vm1902, %v7092, 0.0
      %v7179 = vadd.f32 %v7177, %v7178
      %v7180 = vsel %vm1902, %v7093, 0.0
      %v7181 = vadd.f32 %v7179, %v7180
      %v7182 = vsel %vm1902, %v7094, 0.0
      %v7183 = vadd.f32 %v7181, %v7182
      %v7184 = vsel %vm1902, %v7095, 0.0
      %v7185 = vadd.f32 %v7183, %v7184
      %v7186 = vsel %vm1902, %v7096, 0.0
      %v7187 = vadd.f32 %v7185, %v7186
      %v7188 = vsel %vm1902, %v7097, 0.0
      %v7189 = vadd.f32 %v7187, %v7188
      %v7190 = vsel %vm1902, %v7098, 0.0
      %v7191 = vadd.f32 %v7189, %v7190
      %v7192 = vsel %vm1902, %v7099, 0.0
      %v7193 = vadd.f32 %v7191, %v7192
      %v7194 = vsel %vm1902, %v7100, 0.0
      %v7195 = vadd.f32 %v7193, %v7194
      %v7196 = vsel %vm1902, %v7101, 0.0
      %v7197 = vadd.f32 %v7195, %v7196
      %v7198 = vrot.slane %v7197, 4
      %v7199 = vadd.f32 %v7197, %v7198
      %v7200 = vrot.slane %v7199, 2
      %v7201 = vadd.f32 %v7199, %v7200
      %v7202 = vrot.slane %v7201, 1
      %v7203 = vadd.f32 %v7201, %v7202
      %v7204 = vadd.f32 %v5471, %v7203
      %v7205 = vmul.f32 %v7070, %v7070
      %v7206 = vmul.f32 %v7071, %v7071
      %v7207 = vmul.f32 %v7072, %v7072
      %v7208 = vmul.f32 %v7073, %v7073
      %v7209 = vmul.f32 %v7074, %v7074
      %v7210 = vmul.f32 %v7075, %v7075
      %v7211 = vmul.f32 %v7076, %v7076
      %v7212 = vmul.f32 %v7077, %v7077
      %v7213 = vmul.f32 %v7078, %v7078
      %v7214 = vmul.f32 %v7079, %v7079
      %v7215 = vmul.f32 %v7080, %v7080
      %v7216 = vmul.f32 %v7081, %v7081
      %v7217 = vmul.f32 %v7082, %v7082
      %v7218 = vmul.f32 %v7083, %v7083
      %v7219 = vmul.f32 %v7084, %v7084
      %v7220 = vmul.f32 %v7085, %v7085
      %v7221 = vmul.f32 %v7086, %v7086
      %v7222 = vmul.f32 %v7087, %v7087
      %v7223 = vmul.f32 %v7088, %v7088
      %v7224 = vmul.f32 %v7089, %v7089
      %v7225 = vmul.f32 %v7090, %v7090
      %v7226 = vmul.f32 %v7091, %v7091
      %v7227 = vmul.f32 %v7092, %v7092
      %v7228 = vmul.f32 %v7093, %v7093
      %v7229 = vmul.f32 %v7094, %v7094
      %v7230 = vmul.f32 %v7095, %v7095
      %v7231 = vmul.f32 %v7096, %v7096
      %v7232 = vmul.f32 %v7097, %v7097
      %v7233 = vmul.f32 %v7098, %v7098
      %v7234 = vmul.f32 %v7099, %v7099
      %v7235 = vmul.f32 %v7100, %v7100
      %v7236 = vmul.f32 %v7101, %v7101
      %v7237 = vsel %vm1902, %v7205, 0.0
      %v7238 = vsel %vm1902, %v7206, 0.0
      %v7239 = vadd.f32 %v7237, %v7238
      %v7240 = vsel %vm1902, %v7207, 0.0
      %v7241 = vadd.f32 %v7239, %v7240
      %v7242 = vsel %vm1902, %v7208, 0.0
      %v7243 = vadd.f32 %v7241, %v7242
      %v7244 = vsel %vm1902, %v7209, 0.0
      %v7245 = vadd.f32 %v7243, %v7244
      %v7246 = vsel %vm1902, %v7210, 0.0
      %v7247 = vadd.f32 %v7245, %v7246
      %v7248 = vsel %vm1902, %v7211, 0.0
      %v7249 = vadd.f32 %v7247, %v7248
      %v7250 = vsel %vm1902, %v7212, 0.0
      %v7251 = vadd.f32 %v7249, %v7250
      %v7252 = vsel %vm1902, %v7213, 0.0
      %v7253 = vadd.f32 %v7251, %v7252
      %v7254 = vsel %vm1902, %v7214, 0.0
      %v7255 = vadd.f32 %v7253, %v7254
      %v7256 = vsel %vm1902, %v7215, 0.0
      %v7257 = vadd.f32 %v7255, %v7256
      %v7258 = vsel %vm1902, %v7216, 0.0
      %v7259 = vadd.f32 %v7257, %v7258
      %v7260 = vsel %vm1902, %v7217, 0.0
      %v7261 = vadd.f32 %v7259, %v7260
      %v7262 = vsel %vm1902, %v7218, 0.0
      %v7263 = vadd.f32 %v7261, %v7262
      %v7264 = vsel %vm1902, %v7219, 0.0
      %v7265 = vadd.f32 %v7263, %v7264
      %v7266 = vsel %vm1902, %v7220, 0.0
      %v7267 = vadd.f32 %v7265, %v7266
      %v7268 = vsel %vm1902, %v7221, 0.0
      %v7269 = vadd.f32 %v7267, %v7268
      %v7270 = vsel %vm1902, %v7222, 0.0
      %v7271 = vadd.f32 %v7269, %v7270
      %v7272 = vsel %vm1902, %v7223, 0.0
      %v7273 = vadd.f32 %v7271, %v7272
      %v7274 = vsel %vm1902, %v7224, 0.0
      %v7275 = vadd.f32 %v7273, %v7274
      %v7276 = vsel %vm1902, %v7225, 0.0
      %v7277 = vadd.f32 %v7275, %v7276
      %v7278 = vsel %vm1902, %v7226, 0.0
      %v7279 = vadd.f32 %v7277, %v7278
      %v7280 = vsel %vm1902, %v7227, 0.0
      %v7281 = vadd.f32 %v7279, %v7280
      %v7282 = vsel %vm1902, %v7228, 0.0
      %v7283 = vadd.f32 %v7281, %v7282
      %v7284 = vsel %vm1902, %v7229, 0.0
      %v7285 = vadd.f32 %v7283, %v7284
      %v7286 = vsel %vm1902, %v7230, 0.0
      %v7287 = vadd.f32 %v7285, %v7286
      %v7288 = vsel %vm1902, %v7231, 0.0
      %v7289 = vadd.f32 %v7287, %v7288
      %v7290 = vsel %vm1902, %v7232, 0.0
      %v7291 = vadd.f32 %v7289, %v7290
      %v7292 = vsel %vm1902, %v7233, 0.0
      %v7293 = vadd.f32 %v7291, %v7292
      %v7294 = vsel %vm1902, %v7234, 0.0
      %v7295 = vadd.f32 %v7293, %v7294
      %v7296 = vsel %vm1902, %v7235, 0.0
      %v7297 = vadd.f32 %v7295, %v7296
      %v7298 = vsel %vm1902, %v7236, 0.0
      %v7299 = vadd.f32 %v7297, %v7298
      %v7300 = vrot.slane %v7299, 4
      %v7301 = vadd.f32 %v7299, %v7300
      %v7302 = vrot.slane %v7301, 2
      %v7303 = vadd.f32 %v7301, %v7302
      %v7304 = vrot.slane %v7303, 1
      %v7305 = vadd.f32 %v7303, %v7304
      %v7306 = vadd.f32 %v5573, %v7305
      %7307 = vst.msk [vmem:[%s211] sm:$0xff] %vm1902, 0.0
      %vm7308 = vcmask 57344
      %7309 = vst.msk [vmem:[%s211] sm:$0x1] %vm7308, %v7204
      %7310 = vst.msk [vmem:[%s211 + $0x1] sm:$0x1] %vm7308, %v7306
      %s7311 = smul.u32 4, %s16
      %p7312 = scmp.lt.s32.totalorder %s7311, 7
      %s7313 = scalar_select %p7312, %s7311, 7
      %s7314 = smul.addr %s7313, 32
      %s7315 = smul.addr %s7314, 8
      %s7316 = scalar_lea.vmem %s3, %s7315
      %p7317 = scmp.lt.s32.totalorder %s16, 1
      %s7318 = scalar_select %p7317, %s16, 1
      %s7319 = smul.addr %s7318, 8
      %s7320 = scalar_lea.vmem %s4, %s7319
      // Predicated region
      $region33: #{deconv2d_block.2} parent=31 // pred_check
        %p7321 = pneg %p102
      $region34: #{deconv2d_block.2} parent=31 // pred_check_branch
        %7323 = sbr.rel (%p7321) target = $region36
      $region35: #{deconv2d_block.2} parent=31 // pred_region
        %s7324 = smul.u32 4, %s16
      $region36: #{deconv2d_block.2} parent=31 // pred_fallthru
        _
      // Predicated region
      $region37: #{deconv2d_block.2} parent=31 // pred_check
        %p7325 = pneg %p128
      $region38: #{deconv2d_block.2} parent=31 // pred_check_branch
        %7327 = sbr.rel (%p7325) target = $region40
      $region39: #{deconv2d_block.2} parent=31 // pred_region
        _
      $region40: #{deconv2d_block.2} parent=31 // pred_fallthru
        _
    $region32: #{deconv2d_block.2} parent=5 // pred_fallthru
      _
    %p7328 = scmp.le.s32.totalorder 2, %s11
    // Predicated region
    $region41: #{deconv2d_block.2} parent=5 // pred_check
      %p7329 = pneg %p7328
    $region42: #{deconv2d_block.2} parent=5 // pred_check_branch
      %7331 = sbr.rel (%p7329) target = $region44
    $region43: #{deconv2d_block.2} parent=5 // pred_region
      %s7332 = ssub.s32 %s11, 2
      // Predicated region
      $region45: #{deconv2d_block.2} parent=43 // pred_check
        %p7333 = pneg %p108
      $region46: #{deconv2d_block.2} parent=43 // pred_check_branch
        %7335 = sbr.rel (%p7333) target = $region48
      $region47: #{deconv2d_block.2} parent=43 // pred_region
        %s7336 = smul.u32 4, %s17
        %p7337 = scmp.lt.s32.totalorder %s7336, 7
        %s7338 = scalar_select %p7337, %s7336, 7
        %s7339 = smul.addr %s7338, 32
        %s7340 = smul.addr %s7339, 8
        %s7341 = scalar_lea.vmem %s3, %s7340
      $region48: #{deconv2d_block.2} parent=43 // pred_fallthru
        _
      // Predicated region
      $region49: #{deconv2d_block.2} parent=43 // pred_check
        %p7342 = pneg %p134
      $region50: #{deconv2d_block.2} parent=43 // pred_check_branch
        %7344 = sbr.rel (%p7342) target = $region52
      $region51: #{deconv2d_block.2} parent=43 // pred_region
        %p7345 = scmp.lt.s32.totalorder %s17, 1
        %s7346 = scalar_select %p7345, %s17, 1
        %s7347 = smul.addr %s7346, 8
        %s7348 = scalar_lea.vmem %s4, %s7347
      $region52: #{deconv2d_block.2} parent=43 // pred_fallthru
        _
    $region44: #{deconv2d_block.2} parent=5 // pred_fallthru
      _
  $region6: #{deconv2d_block.2} parent=0 // loop_footer
    %s15 = sadd.s32 1, %s11
  $region7: #{deconv2d_block.2} parent=0 // loop_footer_branch
    %10 = sbr.rel target = $region3
  $region8: #{deconv2d_block.2} parent=0 // loop_exit
    _

</llo_original>
